<compile_context>
chip_gen: v5e
topology: v5e:2x2
jax: 0.10.0
libtpu: 0.0.40
codegen_flags: <defaults>
</compile_context>

<pallas_src>
import math

import jax
import jax.numpy as jnp
from jax.experimental import pallas as pl
from jax.experimental.pallas import tpu as pltpu


def _ceil128(n):
    return ((n + 127) // 128) * 128


def _pick_batch_block(B, S, target_rows=256):
    """Size Bblk so Bblk*S approaches the MXU height (128 v5e / 256 v6e,v7x)
    while keeping the grid length >= 2 so v7x's two TensorCores both get work."""
    bblk = max(1, min(B, target_rows // max(S, 1)))
    while bblk > 1 and (B % bblk != 0 or B // bblk < 2):
        bblk -= 1
    if B % bblk != 0:
        bblk = 1
    return bblk


# ----------------------------- fused kernel --------------------------------

def _make_fused_kernel(n_layers, Bblk, S, H, I, nH, dh, C_PAD, eps=1e-12):
    M = Bblk * S
    scale = 1.0 / math.sqrt(dh)
    gelu_c = math.sqrt(2.0 / math.pi)

    OFF_O = _ceil128(3 * H)            # o_w column start (lane-aligned)
    OFF_F1 = OFF_O + _ceil128(H)       # f1_w column start (lane-aligned)
    OFF_CLS = _ceil128(H)              # classifier cols in head-weight slab

    def layernorm(x, g, b):
        mu = jnp.mean(x, axis=-1, keepdims=True)
        d = x - mu
        var = jnp.mean(d * d, axis=-1, keepdims=True)
        return d * jax.lax.rsqrt(var + eps) * g + b

    def kernel(emb_ref, mask_ref, w1_ref, f2_ref, vec_ref, hw_ref, mv_ref, o_ref):
        mv = mv_ref[...]                                       # (4, 128)

        # embedding LayerNorm, flattened to (Bblk*S, H) for all dense math
        x = layernorm(emb_ref[...].reshape(M, H), mv[0:1, 0:H], mv[1:2, 0:H])
        add_mask = mask_ref[...]                               # (Bblk, 1, S)

        for l in range(n_layers):                              # static unroll
            vec = vec_ref[l]                                   # (8, VEC_W)

            # fused Q/K/V projection on the whole batch block: one M x 3H matmul
            qkv = jnp.dot(x, w1_ref[l, :, 0:3 * H],
                          preferred_element_type=jnp.float32) + vec[0:1, 0:3 * H]
            q = qkv[:, 0:H].reshape(Bblk, S, H)
            k = qkv[:, H:2 * H].reshape(Bblk, S, H)
            v = qkv[:, 2 * H:3 * H].reshape(Bblk, S, H)

            # per-head attention; scores/softmax stay per-example but are
            # batched over the Bblk examples in one einsum per head
            ctx_parts = []
            for h in range(nH):
                lo, hi = h * dh, (h + 1) * dh
                s = jnp.einsum('bqd,bkd->bqk', q[:, :, lo:hi], k[:, :, lo:hi],
                               preferred_element_type=jnp.float32) * scale
                s = s + add_mask
                s = s - jnp.max(s, axis=-1, keepdims=True)
                e = jnp.exp(s)
                p = e * pl.reciprocal(jnp.sum(e, axis=-1, keepdims=True),
                                      approx=True)
                ctx_h = jnp.einsum('bqk,bkd->bqd', p, v[:, :, lo:hi],
                                   preferred_element_type=jnp.float32)
                ctx_parts.append(ctx_h.reshape(M, dh))
            ctx = jnp.concatenate(ctx_parts, axis=-1)          # (M, H)

            # ONE output projection for all heads / all examples
            attn = jnp.dot(ctx, w1_ref[l, :, OFF_O:OFF_O + H],
                           preferred_element_type=jnp.float32) + vec[1:2, 0:H]
            x = layernorm(attn + x, vec[2:3, 0:H], vec[3:4, 0:H])

            # feed-forward
            hdn = jnp.dot(x, w1_ref[l, :, OFF_F1:OFF_F1 + I],
                          preferred_element_type=jnp.float32) + vec[4:5, 0:I]
            # TODO(synk): HF BERT uses exact erf-GELU; tanh approximation here.
            hdn = 0.5 * hdn * (1.0 + jnp.tanh(
                gelu_c * (hdn + 0.044715 * hdn * hdn * hdn)))
            ff = jnp.dot(hdn, f2_ref[l],
                         preferred_element_type=jnp.float32) + vec[5:6, 0:H]
            x = layernorm(ff + x, vec[6:7, 0:H], vec[7:8, 0:H])

        # pooler (dense + tanh on Bblk [CLS] rows) -> dropout(eval)=id -> head
        cls = x.reshape(Bblk, S, H)[:, 0, :]                   # (Bblk, H)
        pooled = jnp.tanh(jnp.dot(cls, hw_ref[:, 0:H],
                                  preferred_element_type=jnp.float32)
                          + mv[2:3, 0:H])
        logits = jnp.dot(pooled, hw_ref[:, OFF_CLS:OFF_CLS + C_PAD],
                         preferred_element_type=jnp.float32) + mv[3:4, 0:C_PAD]
        o_ref[0] = logits                                      # (Bblk, 128) lane-dense

    return kernel


# ----------------------------- model definition -----------------------------

class Config:
    vocab_size = 100
    hidden = 64          # bert-base would be 768
    n_layers = 2         # bert-base would be 12
    n_heads = 4          # bert-base would be 12
    intermediate = 128   # bert-base would be 3072
    max_pos = 16
    type_vocab = 2
    n_classes = 3        # len(Constants.TARGET_LIST)


def init_params(key, cfg):
    H, I = cfg.hidden, cfg.intermediate
    keys = iter(jax.random.split(key, 64))

    def nrm(shape):
        return 0.02 * jax.random.normal(next(keys), shape, dtype=jnp.float32)

    params = {
        "word_emb": nrm((cfg.vocab_size, H)),
        "pos_emb": nrm((cfg.max_pos, H)),
        "type_emb": nrm((cfg.type_vocab, H)),
        "emb_ln_g": jnp.ones((H,), jnp.float32),
        "emb_ln_b": jnp.zeros((H,), jnp.float32),
        "layers": [],
        "pool_w": nrm((H, H)),
        "pool_b": jnp.zeros((H,), jnp.float32),
        "cls_w": nrm((H, cfg.n_classes)),
        "cls_b": jnp.zeros((cfg.n_classes,), jnp.float32),
    }
    for _ in range(cfg.n_layers):
        params["layers"].append({
            "q_w": nrm((H, H)), "q_b": jnp.zeros((H,), jnp.float32),
            "k_w": nrm((H, H)), "k_b": jnp.zeros((H,), jnp.float32),
            "v_w": nrm((H, H)), "v_b": jnp.zeros((H,), jnp.float32),
            "o_w": nrm((H, H)), "o_b": jnp.zeros((H,), jnp.float32),
            "ln1_g": jnp.ones((H,), jnp.float32),
            "ln1_b": jnp.zeros((H,), jnp.float32),
            "f1_w": nrm((H, I)), "f1_b": jnp.zeros((I,), jnp.float32),
            "f2_w": nrm((I, H)), "f2_b": jnp.zeros((H,), jnp.float32),
            "ln2_g": jnp.ones((H,), jnp.float32),
            "ln2_b": jnp.zeros((H,), jnp.float32),
        })
    return params


def feedback_prize_forward(params, input_ids, attention_mask, token_type_ids, cfg):
    B, S = input_ids.shape
    H, I = cfg.hidden, cfg.intermediate
    nH = cfg.n_heads
    dh = H // nH
    L = cfg.n_layers
    C_PAD = 128                         # lane-dense padded classifier width

    OFF_O = _ceil128(3 * H)
    OFF_F1 = OFF_O + _ceil128(H)
    W1_COLS = OFF_F1 + _ceil128(I)
    VEC_W = max(_ceil128(3 * H), _ceil128(I), _ceil128(H))
    OFF_CLS = _ceil128(H)

    Bblk = _pick_batch_block(B, S)      # batch block per grid step
    G = B // Bblk

    # --- embeddings (row-gather kept in XLA glue) ---
    # TODO(synk): at real sizes fold this gather into the kernel via
    # PrefetchScalarGridSpec + pl.Element row gather to avoid the extra
    # HBM round-trip of the (B,S,H) embedding tensor.
    emb = (params["word_emb"][input_ids]
           + params["pos_emb"][jnp.arange(S)][None, :, :]
           + params["type_emb"][token_type_ids]).astype(jnp.float32)   # (B,S,H)

    # additive attention mask over key positions: (B, 1, S)
    add_mask = ((1.0 - attention_mask.astype(jnp.float32)) * -10000.0
                ).reshape(B, 1, S)

    # --- consolidate weights into a handful of VMEM-resident slabs ---
    w1_slab = jnp.zeros((L, H, W1_COLS), jnp.float32)   # [qkv | o_w | f1_w] per layer
    f2_slab = jnp.zeros((L, I, H), jnp.float32)
    vec_slab = jnp.zeros((L, 8, VEC_W), jnp.float32)    # all per-layer bias/LN vectors
    for l, lyr in enumerate(params["layers"]):
        qkv_w = jnp.concatenate([lyr["q_w"], lyr["k_w"], lyr["v_w"]], axis=1)
        w1_slab = w1_slab.at[l, :, 0:3 * H].set(qkv_w)
        w1_slab = w1_slab.at[l, :, OFF_O:OFF_O + H].set(lyr["o_w"])
        w1_slab = w1_slab.at[l, :, OFF_F1:OFF_F1 + I].set(lyr["f1_w"])
        f2_slab = f2_slab.at[l].set(lyr["f2_w"])
        qkv_b = jnp.concatenate([lyr["q_b"], lyr["k_b"], lyr["v_b"]])
        vec_slab = vec_slab.at[l, 0, 0:3 * H].set(qkv_b)
        vec_slab = vec_slab.at[l, 1, 0:H].set(lyr["o_b"])
        vec_slab = vec_slab.at[l, 2, 0:H].set(lyr["ln1_g"])
        vec_slab = vec_slab.at[l, 3, 0:H].set(lyr["ln1_b"])
        vec_slab = vec_slab.at[l, 4, 0:I].set(lyr["f1_b"])
        vec_slab = vec_slab.at[l, 5, 0:H].set(lyr["f2_b"])
        vec_slab = vec_slab.at[l, 6, 0:H].set(lyr["ln2_g"])
        vec_slab = vec_slab.at[l, 7, 0:H].set(lyr["ln2_b"])

    head_w = jnp.zeros((H, OFF_CLS + C_PAD), jnp.float32)   # [pool_w | cls_w_pad]
    head_w = head_w.at[:, 0:H].set(params["pool_w"])
    head_w = head_w.at[:, OFF_CLS:OFF_CLS + cfg.n_classes].set(params["cls_w"])

    misc_v = jnp.zeros((4, max(_ceil128(H), C_PAD)), jnp.float32)
    misc_v = misc_v.at[0, 0:H].set(params["emb_ln_g"])
    misc_v = misc_v.at[1, 0:H].set(params["emb_ln_b"])
    misc_v = misc_v.at[2, 0:H].set(params["pool_b"])
    misc_v = misc_v.at[3, 0:cfg.n_classes].set(params["cls_b"])

    weight_inputs = [w1_slab, f2_slab, vec_slab, head_w, misc_v]

    kernel = _make_fused_kernel(L, Bblk, S, H, I, nH, dh, C_PAD)

    emb_spec = pl.BlockSpec((Bblk, S, H), lambda b: (b, 0, 0))
    mask_spec = pl.BlockSpec((Bblk, 1, S), lambda b: (b, 0, 0))

    def run(single_buffer_weights):
        def resident_spec(arr):
            kwargs = ({"pipeline_mode": pl.Buffered(1)}
                      if single_buffer_weights else {})
            return pl.BlockSpec(arr.shape,
                                lambda b, _nd=arr.ndim: (0,) * _nd, **kwargs)

        return pl.pallas_call(
            kernel,
            grid=(G,),
            in_specs=[emb_spec, mask_spec]
                     + [resident_spec(a) for a in weight_inputs],
            out_specs=pl.BlockSpec((1, Bblk, C_PAD), lambda b: (b, 0, 0)),
            out_shape=jax.ShapeDtypeStruct((G, Bblk, C_PAD), jnp.float32),
            compiler_params=pltpu.CompilerParams(
                dimension_semantics=("parallel",),
                vmem_limit_bytes=32 * 1024 * 1024),
        )(emb, add_mask, *weight_inputs)

    try:
        out = jax.block_until_ready(run(True))
    except Exception:
        # Fallback if this JAX build rejects single-buffered (Buffered(1))
        # resident-weight specs; default double-buffering is still correct.
        out = jax.block_until_ready(run(False))

    return out.reshape(B, C_PAD)[:, :cfg.n_classes]             # (B, 3)


# --------------------------------- main --------------------------------------

if __name__ == "__main__":
    cfg = Config()
    key = jax.random.PRNGKey(0)
    pkey, ikey = jax.random.split(key)
    params = init_params(pkey, cfg)

    # B=8 with S=8 -> Bblk=4 per step, grid=(2,) so both v7x TCs get a step.
    B, S = 8, 8
    k1, _ = jax.random.split(ikey)
    input_ids = jax.random.randint(k1, (B, S), 0, cfg.vocab_size, dtype=jnp.int32)
    attention_mask = jnp.ones((B, S), dtype=jnp.int32).at[1, 6:].set(0)
    token_type_ids = jnp.zeros((B, S), dtype=jnp.int32)

    logits = feedback_prize_forward(params, input_ids, attention_mask,
                                    token_type_ids, cfg)
    logits = jax.block_until_ready(logits)
    assert logits.shape == (B, cfg.n_classes)
    assert logits.dtype == jnp.float32
    print("KERNEL_OK")
</pallas_src>

<mosaic_0001>
module attributes {stable_mosaic.version = 11 : i64} {
  func.func @kernel(%arg0: i32, %arg1: memref<4x8x64xf32, #tpu.memory_space<vmem>>, %arg2: memref<4x1x8xf32, #tpu.memory_space<vmem>>, %arg3: memref<2x64x512xf32, #tpu.memory_space<vmem>>, %arg4: memref<2x128x64xf32, #tpu.memory_space<vmem>>, %arg5: memref<2x8x256xf32, #tpu.memory_space<vmem>>, %arg6: memref<64x256xf32, #tpu.memory_space<vmem>>, %arg7: memref<4x128xf32, #tpu.memory_space<vmem>>, %arg8: memref<1x4x128xf32, #tpu.memory_space<vmem>>) attributes {dimension_semantics = [#tpu.dimension_semantics<parallel>], iteration_bounds = array<i64: 2>, scalar_prefetch = 0 : i64, scratch_operands = 0 : i64, tpu.core_type = #tpu.core_type<tc>, window_params = [{transform_indices = @transform_0, window_bounds = array<i64: 4, 8, 64>}, {transform_indices = @transform_1, window_bounds = array<i64: 4, 1, 8>}, {pipeline_mode = #tpu.pipeline_mode<synchronous>, transform_indices = @transform_2, window_bounds = array<i64: 2, 64, 512>}, {pipeline_mode = #tpu.pipeline_mode<synchronous>, transform_indices = @transform_3, window_bounds = array<i64: 2, 128, 64>}, {pipeline_mode = #tpu.pipeline_mode<synchronous>, transform_indices = @transform_4, window_bounds = array<i64: 2, 8, 256>}, {pipeline_mode = #tpu.pipeline_mode<synchronous>, transform_indices = @transform_5, window_bounds = array<i64: 64, 256>}, {pipeline_mode = #tpu.pipeline_mode<synchronous>, transform_indices = @transform_6, window_bounds = array<i64: 4, 128>}, {transform_indices = @transform_7, window_bounds = array<i64: 1, 4, 128>}]} {
    %c0 = arith.constant 0 : index
    %c0_0 = arith.constant 0 : index
    %0 = vector.load %arg7[%c0, %c0_0] : memref<4x128xf32, #tpu.memory_space<vmem>>, vector<4x128xf32>
    %c0_1 = arith.constant 0 : index
    %c0_2 = arith.constant 0 : index
    %c0_3 = arith.constant 0 : index
    %1 = vector.load %arg1[%c0_1, %c0_2, %c0_3] : memref<4x8x64xf32, #tpu.memory_space<vmem>>, vector<4x8x64xf32>
    %2 = vector.shape_cast %1 : vector<4x8x64xf32> to vector<32x64xf32>
    %3 = vector.extract_strided_slice %0 {offsets = [0, 0], sizes = [1, 64], strides = [1, 1]} : vector<4x128xf32> to vector<1x64xf32>
    %4 = vector.extract_strided_slice %0 {offsets = [1, 0], sizes = [1, 64], strides = [1, 1]} : vector<4x128xf32> to vector<1x64xf32>
    %cst = arith.constant dense<0.000000e+00> : vector<32xf32>
    %5 = vector.multi_reduction <add>, %2, %cst [1] : vector<32x64xf32> to vector<32xf32>
    %6 = vector.shape_cast %5 : vector<32xf32> to vector<32x1xf32>
    %cst_4 = arith.constant 6.400000e+01 : f32
    %7 = vector.broadcast %cst_4 : f32 to vector<32x1xf32>
    %8 = arith.divf %6, %7 : vector<32x1xf32>
    %9 = vector.broadcast %8 : vector<32x1xf32> to vector<32x64xf32>
    %10 = arith.subf %2, %9 : vector<32x64xf32>
    %11 = arith.mulf %10, %10 : vector<32x64xf32>
    %cst_5 = arith.constant dense<0.000000e+00> : vector<32xf32>
    %12 = vector.multi_reduction <add>, %11, %cst_5 [1] : vector<32x64xf32> to vector<32xf32>
    %13 = vector.shape_cast %12 : vector<32xf32> to vector<32x1xf32>
    %cst_6 = arith.constant 6.400000e+01 : f32
    %14 = vector.broadcast %cst_6 : f32 to vector<32x1xf32>
    %15 = arith.divf %13, %14 : vector<32x1xf32>
    %cst_7 = arith.constant 9.99999996E-13 : f32
    %16 = vector.broadcast %cst_7 : f32 to vector<32x1xf32>
    %17 = arith.addf %15, %16 : vector<32x1xf32>
    %18 = math.rsqrt %17 : vector<32x1xf32>
    %19 = vector.broadcast %18 : vector<32x1xf32> to vector<32x64xf32>
    %20 = arith.mulf %10, %19 : vector<32x64xf32>
    %21 = vector.broadcast %3 : vector<1x64xf32> to vector<32x64xf32>
    %22 = arith.mulf %20, %21 : vector<32x64xf32>
    %23 = vector.broadcast %4 : vector<1x64xf32> to vector<32x64xf32>
    %24 = arith.addf %22, %23 : vector<32x64xf32>
    %c0_8 = arith.constant 0 : index
    %c0_9 = arith.constant 0 : index
    %c0_10 = arith.constant 0 : index
    %25 = vector.load %arg2[%c0_8, %c0_9, %c0_10] : memref<4x1x8xf32, #tpu.memory_space<vmem>>, vector<4x1x8xf32>
    %c0_11 = arith.constant 0 : index
    %c0_12 = arith.constant 0 : index
    %c0_13 = arith.constant 0 : index
    %26 = vector.load %arg5[%c0_11, %c0_12, %c0_13] : memref<2x8x256xf32, #tpu.memory_space<vmem>>, vector<1x8x256xf32>
    %27 = vector.shape_cast %26 : vector<1x8x256xf32> to vector<8x256xf32>
    %c0_14 = arith.constant 0 : index
    %c0_15 = arith.constant 0 : index
    %c0_16 = arith.constant 0 : index
    %28 = vector.load %arg3[%c0_14, %c0_15, %c0_16] : memref<2x64x512xf32, #tpu.memory_space<vmem>>, vector<1x64x192xf32>
    %29 = vector.shape_cast %28 : vector<1x64x192xf32> to vector<64x192xf32>
    %cst_17 = arith.constant dense<0.000000e+00> : vector<32x192xf32>
    %30 = tpu.matmul %24, %29, %cst_17 {dimension_numbers = #tpu.dot_dimension_numbers<[1], [0], [0], [1], [0, 0, 1, 1], [], []>} : vector<32x64xf32>, vector<64x192xf32>, vector<32x192xf32> -> vector<32x192xf32>
    %31 = vector.extract_strided_slice %27 {offsets = [0, 0], sizes = [1, 192], strides = [1, 1]} : vector<8x256xf32> to vector<1x192xf32>
    %32 = vector.broadcast %31 : vector<1x192xf32> to vector<32x192xf32>
    %33 = arith.addf %30, %32 : vector<32x192xf32>
    %34 = vector.extract_strided_slice %33 {offsets = [0, 0], sizes = [32, 64], strides = [1, 1]} : vector<32x192xf32> to vector<32x64xf32>
    %35 = vector.shape_cast %34 : vector<32x64xf32> to vector<4x8x64xf32>
    %36 = vector.extract_strided_slice %33 {offsets = [0, 64], sizes = [32, 64], strides = [1, 1]} : vector<32x192xf32> to vector<32x64xf32>
    %37 = vector.shape_cast %36 : vector<32x64xf32> to vector<4x8x64xf32>
    %38 = vector.extract_strided_slice %33 {offsets = [0, 128], sizes = [32, 64], strides = [1, 1]} : vector<32x192xf32> to vector<32x64xf32>
    %39 = vector.shape_cast %38 : vector<32x64xf32> to vector<4x8x64xf32>
    %40 = vector.extract_strided_slice %35 {offsets = [0, 0, 0], sizes = [4, 8, 16], strides = [1, 1, 1]} : vector<4x8x64xf32> to vector<4x8x16xf32>
    %41 = vector.extract_strided_slice %37 {offsets = [0, 0, 0], sizes = [4, 8, 16], strides = [1, 1, 1]} : vector<4x8x64xf32> to vector<4x8x16xf32>
    "tpu.trace_start"() <{level = 10 : i32, message = "bqd,bkd->bqk"}> : () -> ()
    %cst_18 = arith.constant dense<0.000000e+00> : vector<4x8x8xf32>
    %42 = tpu.matmul %40, %41, %cst_18 {dimension_numbers = #tpu.dot_dimension_numbers<[2], [2], [1], [1], [0, 0, 0, 1, 1, 1], [0], [0]>} : vector<4x8x16xf32>, vector<4x8x16xf32>, vector<4x8x8xf32> -> vector<4x8x8xf32>
    "tpu.trace_stop"() : () -> ()
    %cst_19 = arith.constant 2.500000e-01 : f32
    %43 = vector.broadcast %cst_19 : f32 to vector<4x8x8xf32>
    %44 = arith.mulf %42, %43 : vector<4x8x8xf32>
    %45 = vector.broadcast %25 : vector<4x1x8xf32> to vector<4x8x8xf32>
    %46 = arith.addf %44, %45 : vector<4x8x8xf32>
    %cst_20 = arith.constant dense<0xFF800000> : vector<4x8xf32>
    %47 = vector.multi_reduction <maximumf>, %46, %cst_20 [2] : vector<4x8x8xf32> to vector<4x8xf32>
    %48 = vector.shape_cast %47 : vector<4x8xf32> to vector<4x8x1xf32>
    %49 = vector.broadcast %48 : vector<4x8x1xf32> to vector<4x8x8xf32>
    %50 = arith.subf %46, %49 : vector<4x8x8xf32>
    %51 = math.exp %50 : vector<4x8x8xf32>
    %cst_21 = arith.constant dense<0.000000e+00> : vector<4x8xf32>
    %52 = vector.multi_reduction <add>, %51, %cst_21 [2] : vector<4x8x8xf32> to vector<4x8xf32>
    %53 = vector.shape_cast %52 : vector<4x8xf32> to vector<4x8x1xf32>
    %54 = tpu.reciprocal %53 {approx = true} : vector<4x8x1xf32> -> vector<4x8x1xf32>
    %55 = vector.broadcast %54 : vector<4x8x1xf32> to vector<4x8x8xf32>
    %56 = arith.mulf %51, %55 : vector<4x8x8xf32>
    %57 = vector.extract_strided_slice %39 {offsets = [0, 0, 0], sizes = [4, 8, 16], strides = [1, 1, 1]} : vector<4x8x64xf32> to vector<4x8x16xf32>
    "tpu.trace_start"() <{level = 10 : i32, message = "bqk,bkd->bqd"}> : () -> ()
    %cst_22 = arith.constant dense<0.000000e+00> : vector<4x8x16xf32>
    %58 = tpu.matmul %56, %57, %cst_22 {dimension_numbers = #tpu.dot_dimension_numbers<[2], [1], [1], [2], [0, 0, 0, 1, 1, 2], [0], [0]>} : vector<4x8x8xf32>, vector<4x8x16xf32>, vector<4x8x16xf32> -> vector<4x8x16xf32>
    "tpu.trace_stop"() : () -> ()
    %59 = vector.shape_cast %58 : vector<4x8x16xf32> to vector<32x16xf32>
    %60 = vector.extract_strided_slice %35 {offsets = [0, 0, 16], sizes = [4, 8, 16], strides = [1, 1, 1]} : vector<4x8x64xf32> to vector<4x8x16xf32>
    %61 = vector.extract_strided_slice %37 {offsets = [0, 0, 16], sizes = [4, 8, 16], strides = [1, 1, 1]} : vector<4x8x64xf32> to vector<4x8x16xf32>
    "tpu.trace_start"() <{level = 10 : i32, message = "bqd,bkd->bqk"}> : () -> ()
    %cst_23 = arith.constant dense<0.000000e+00> : vector<4x8x8xf32>
    %62 = tpu.matmul %60, %61, %cst_23 {dimension_numbers = #tpu.dot_dimension_numbers<[2], [2], [1], [1], [0, 0, 0, 1, 1, 1], [0], [0]>} : vector<4x8x16xf32>, vector<4x8x16xf32>, vector<4x8x8xf32> -> vector<4x8x8xf32>
    "tpu.trace_stop"() : () -> ()
    %cst_24 = arith.constant 2.500000e-01 : f32
    %63 = vector.broadcast %cst_24 : f32 to vector<4x8x8xf32>
    %64 = arith.mulf %62, %63 : vector<4x8x8xf32>
    %65 = vector.broadcast %25 : vector<4x1x8xf32> to vector<4x8x8xf32>
    %66 = arith.addf %64, %65 : vector<4x8x8xf32>
    %cst_25 = arith.constant dense<0xFF800000> : vector<4x8xf32>
    %67 = vector.multi_reduction <maximumf>, %66, %cst_25 [2] : vector<4x8x8xf32> to vector<4x8xf32>
    %68 = vector.shape_cast %67 : vector<4x8xf32> to vector<4x8x1xf32>
    %69 = vector.broadcast %68 : vector<4x8x1xf32> to vector<4x8x8xf32>
    %70 = arith.subf %66, %69 : vector<4x8x8xf32>
    %71 = math.exp %70 : vector<4x8x8xf32>
    %cst_26 = arith.constant dense<0.000000e+00> : vector<4x8xf32>
    %72 = vector.multi_reduction <add>, %71, %cst_26 [2] : vector<4x8x8xf32> to vector<4x8xf32>
    %73 = vector.shape_cast %72 : vector<4x8xf32> to vector<4x8x1xf32>
    %74 = tpu.reciprocal %73 {approx = true} : vector<4x8x1xf32> -> vector<4x8x1xf32>
    %75 = vector.broadcast %74 : vector<4x8x1xf32> to vector<4x8x8xf32>
    %76 = arith.mulf %71, %75 : vector<4x8x8xf32>
    %77 = vector.extract_strided_slice %39 {offsets = [0, 0, 16], sizes = [4, 8, 16], strides = [1, 1, 1]} : vector<4x8x64xf32> to vector<4x8x16xf32>
    "tpu.trace_start"() <{level = 10 : i32, message = "bqk,bkd->bqd"}> : () -> ()
    %cst_27 = arith.constant dense<0.000000e+00> : vector<4x8x16xf32>
    %78 = tpu.matmul %76, %77, %cst_27 {dimension_numbers = #tpu.dot_dimension_numbers<[2], [1], [1], [2], [0, 0, 0, 1, 1, 2], [0], [0]>} : vector<4x8x8xf32>, vector<4x8x16xf32>, vector<4x8x16xf32> -> vector<4x8x16xf32>
    "tpu.trace_stop"() : () -> ()
    %79 = vector.shape_cast %78 : vector<4x8x16xf32> to vector<32x16xf32>
    %80 = vector.extract_strided_slice %35 {offsets = [0, 0, 32], sizes = [4, 8, 16], strides = [1, 1, 1]} : vector<4x8x64xf32> to vector<4x8x16xf32>
    %81 = vector.extract_strided_slice %37 {offsets = [0, 0, 32], sizes = [4, 8, 16], strides = [1, 1, 1]} : vector<4x8x64xf32> to vector<4x8x16xf32>
    "tpu.trace_start"() <{level = 10 : i32, message = "bqd,bkd->bqk"}> : () -> ()
    %cst_28 = arith.constant dense<0.000000e+00> : vector<4x8x8xf32>
    %82 = tpu.matmul %80, %81, %cst_28 {dimension_numbers = #tpu.dot_dimension_numbers<[2], [2], [1], [1], [0, 0, 0, 1, 1, 1], [0], [0]>} : vector<4x8x16xf32>, vector<4x8x16xf32>, vector<4x8x8xf32> -> vector<4x8x8xf32>
    "tpu.trace_stop"() : () -> ()
    %cst_29 = arith.constant 2.500000e-01 : f32
    %83 = vector.broadcast %cst_29 : f32 to vector<4x8x8xf32>
    %84 = arith.mulf %82, %83 : vector<4x8x8xf32>
    %85 = vector.broadcast %25 : vector<4x1x8xf32> to vector<4x8x8xf32>
    %86 = arith.addf %84, %85 : vector<4x8x8xf32>
    %cst_30 = arith.constant dense<0xFF800000> : vector<4x8xf32>
    %87 = vector.multi_reduction <maximumf>, %86, %cst_30 [2] : vector<4x8x8xf32> to vector<4x8xf32>
    %88 = vector.shape_cast %87 : vector<4x8xf32> to vector<4x8x1xf32>
    %89 = vector.broadcast %88 : vector<4x8x1xf32> to vector<4x8x8xf32>
    %90 = arith.subf %86, %89 : vector<4x8x8xf32>
    %91 = math.exp %90 : vector<4x8x8xf32>
    %cst_31 = arith.constant dense<0.000000e+00> : vector<4x8xf32>
    %92 = vector.multi_reduction <add>, %91, %cst_31 [2] : vector<4x8x8xf32> to vector<4x8xf32>
    %93 = vector.shape_cast %92 : vector<4x8xf32> to vector<4x8x1xf32>
    %94 = tpu.reciprocal %93 {approx = true} : vector<4x8x1xf32> -> vector<4x8x1xf32>
    %95 = vector.broadcast %94 : vector<4x8x1xf32> to vector<4x8x8xf32>
    %96 = arith.mulf %91, %95 : vector<4x8x8xf32>
    %97 = vector.extract_strided_slice %39 {offsets = [0, 0, 32], sizes = [4, 8, 16], strides = [1, 1, 1]} : vector<4x8x64xf32> to vector<4x8x16xf32>
    "tpu.trace_start"() <{level = 10 : i32, message = "bqk,bkd->bqd"}> : () -> ()
    %cst_32 = arith.constant dense<0.000000e+00> : vector<4x8x16xf32>
    %98 = tpu.matmul %96, %97, %cst_32 {dimension_numbers = #tpu.dot_dimension_numbers<[2], [1], [1], [2], [0, 0, 0, 1, 1, 2], [0], [0]>} : vector<4x8x8xf32>, vector<4x8x16xf32>, vector<4x8x16xf32> -> vector<4x8x16xf32>
    "tpu.trace_stop"() : () -> ()
    %99 = vector.shape_cast %98 : vector<4x8x16xf32> to vector<32x16xf32>
    %100 = vector.extract_strided_slice %35 {offsets = [0, 0, 48], sizes = [4, 8, 16], strides = [1, 1, 1]} : vector<4x8x64xf32> to vector<4x8x16xf32>
    %101 = vector.extract_strided_slice %37 {offsets = [0, 0, 48], sizes = [4, 8, 16], strides = [1, 1, 1]} : vector<4x8x64xf32> to vector<4x8x16xf32>
    "tpu.trace_start"() <{level = 10 : i32, message = "bqd,bkd->bqk"}> : () -> ()
    %cst_33 = arith.constant dense<0.000000e+00> : vector<4x8x8xf32>
    %102 = tpu.matmul %100, %101, %cst_33 {dimension_numbers = #tpu.dot_dimension_numbers<[2], [2], [1], [1], [0, 0, 0, 1, 1, 1], [0], [0]>} : vector<4x8x16xf32>, vector<4x8x16xf32>, vector<4x8x8xf32> -> vector<4x8x8xf32>
    "tpu.trace_stop"() : () -> ()
    %cst_34 = arith.constant 2.500000e-01 : f32
    %103 = vector.broadcast %cst_34 : f32 to vector<4x8x8xf32>
    %104 = arith.mulf %102, %103 : vector<4x8x8xf32>
    %105 = vector.broadcast %25 : vector<4x1x8xf32> to vector<4x8x8xf32>
    %106 = arith.addf %104, %105 : vector<4x8x8xf32>
    %cst_35 = arith.constant dense<0xFF800000> : vector<4x8xf32>
    %107 = vector.multi_reduction <maximumf>, %106, %cst_35 [2] : vector<4x8x8xf32> to vector<4x8xf32>
    %108 = vector.shape_cast %107 : vector<4x8xf32> to vector<4x8x1xf32>
    %109 = vector.broadcast %108 : vector<4x8x1xf32> to vector<4x8x8xf32>
    %110 = arith.subf %106, %109 : vector<4x8x8xf32>
    %111 = math.exp %110 : vector<4x8x8xf32>
    %cst_36 = arith.constant dense<0.000000e+00> : vector<4x8xf32>
    %112 = vector.multi_reduction <add>, %111, %cst_36 [2] : vector<4x8x8xf32> to vector<4x8xf32>
    %113 = vector.shape_cast %112 : vector<4x8xf32> to vector<4x8x1xf32>
    %114 = tpu.reciprocal %113 {approx = true} : vector<4x8x1xf32> -> vector<4x8x1xf32>
    %115 = vector.broadcast %114 : vector<4x8x1xf32> to vector<4x8x8xf32>
    %116 = arith.mulf %111, %115 : vector<4x8x8xf32>
    %117 = vector.extract_strided_slice %39 {offsets = [0, 0, 48], sizes = [4, 8, 16], strides = [1, 1, 1]} : vector<4x8x64xf32> to vector<4x8x16xf32>
    "tpu.trace_start"() <{level = 10 : i32, message = "bqk,bkd->bqd"}> : () -> ()
    %cst_37 = arith.constant dense<0.000000e+00> : vector<4x8x16xf32>
    %118 = tpu.matmul %116, %117, %cst_37 {dimension_numbers = #tpu.dot_dimension_numbers<[2], [1], [1], [2], [0, 0, 0, 1, 1, 2], [0], [0]>} : vector<4x8x8xf32>, vector<4x8x16xf32>, vector<4x8x16xf32> -> vector<4x8x16xf32>
    "tpu.trace_stop"() : () -> ()
    %119 = vector.shape_cast %118 : vector<4x8x16xf32> to vector<32x16xf32>
    %120 = tpu.concatenate %59, %79, %99, %119 in 1 : vector<32x16xf32>, vector<32x16xf32>, vector<32x16xf32>, vector<32x16xf32> -> vector<32x64xf32>
    %c0_38 = arith.constant 0 : index
    %c0_39 = arith.constant 0 : index
    %c256 = arith.constant 256 : index
    %121 = vector.load %arg3[%c0_38, %c0_39, %c256] : memref<2x64x512xf32, #tpu.memory_space<vmem>>, vector<1x64x64xf32>
    %122 = vector.shape_cast %121 : vector<1x64x64xf32> to vector<64x64xf32>
    %cst_40 = arith.constant dense<0.000000e+00> : vector<32x64xf32>
    %123 = tpu.matmul %120, %122, %cst_40 {dimension_numbers = #tpu.dot_dimension_numbers<[1], [0], [0], [1], [0, 0, 1, 1], [], []>} : vector<32x64xf32>, vector<64x64xf32>, vector<32x64xf32> -> vector<32x64xf32>
    %124 = vector.extract_strided_slice %27 {offsets = [1, 0], sizes = [1, 64], strides = [1, 1]} : vector<8x256xf32> to vector<1x64xf32>
    %125 = vector.broadcast %124 : vector<1x64xf32> to vector<32x64xf32>
    %126 = arith.addf %123, %125 : vector<32x64xf32>
    %127 = arith.addf %126, %24 : vector<32x64xf32>
    %128 = vector.extract_strided_slice %27 {offsets = [2, 0], sizes = [1, 64], strides = [1, 1]} : vector<8x256xf32> to vector<1x64xf32>
    %129 = vector.extract_strided_slice %27 {offsets = [3, 0], sizes = [1, 64], strides = [1, 1]} : vector<8x256xf32> to vector<1x64xf32>
    %cst_41 = arith.constant dense<0.000000e+00> : vector<32xf32>
    %130 = vector.multi_reduction <add>, %127, %cst_41 [1] : vector<32x64xf32> to vector<32xf32>
    %131 = vector.shape_cast %130 : vector<32xf32> to vector<32x1xf32>
    %cst_42 = arith.constant 6.400000e+01 : f32
    %132 = vector.broadcast %cst_42 : f32 to vector<32x1xf32>
    %133 = arith.divf %131, %132 : vector<32x1xf32>
    %134 = vector.broadcast %133 : vector<32x1xf32> to vector<32x64xf32>
    %135 = arith.subf %127, %134 : vector<32x64xf32>
    %136 = arith.mulf %135, %135 : vector<32x64xf32>
    %cst_43 = arith.constant dense<0.000000e+00> : vector<32xf32>
    %137 = vector.multi_reduction <add>, %136, %cst_43 [1] : vector<32x64xf32> to vector<32xf32>
    %138 = vector.shape_cast %137 : vector<32xf32> to vector<32x1xf32>
    %cst_44 = arith.constant 6.400000e+01 : f32
    %139 = vector.broadcast %cst_44 : f32 to vector<32x1xf32>
    %140 = arith.divf %138, %139 : vector<32x1xf32>
    %cst_45 = arith.constant 9.99999996E-13 : f32
    %141 = vector.broadcast %cst_45 : f32 to vector<32x1xf32>
    %142 = arith.addf %140, %141 : vector<32x1xf32>
    %143 = math.rsqrt %142 : vector<32x1xf32>
    %144 = vector.broadcast %143 : vector<32x1xf32> to vector<32x64xf32>
    %145 = arith.mulf %135, %144 : vector<32x64xf32>
    %146 = vector.broadcast %128 : vector<1x64xf32> to vector<32x64xf32>
    %147 = arith.mulf %145, %146 : vector<32x64xf32>
    %148 = vector.broadcast %129 : vector<1x64xf32> to vector<32x64xf32>
    %149 = arith.addf %147, %148 : vector<32x64xf32>
    %c0_46 = arith.constant 0 : index
    %c0_47 = arith.constant 0 : index
    %c384 = arith.constant 384 : index
    %150 = vector.load %arg3[%c0_46, %c0_47, %c384] : memref<2x64x512xf32, #tpu.memory_space<vmem>>, vector<1x64x128xf32>
    %151 = vector.shape_cast %150 : vector<1x64x128xf32> to vector<64x128xf32>
    %cst_48 = arith.constant dense<0.000000e+00> : vector<32x128xf32>
    %152 = tpu.matmul %149, %151, %cst_48 {dimension_numbers = #tpu.dot_dimension_numbers<[1], [0], [0], [1], [0, 0, 1, 1], [], []>} : vector<32x64xf32>, vector<64x128xf32>, vector<32x128xf32> -> vector<32x128xf32>
    %153 = vector.extract_strided_slice %27 {offsets = [4, 0], sizes = [1, 128], strides = [1, 1]} : vector<8x256xf32> to vector<1x128xf32>
    %154 = vector.broadcast %153 : vector<1x128xf32> to vector<32x128xf32>
    %155 = arith.addf %152, %154 : vector<32x128xf32>
    %cst_49 = arith.constant 5.000000e-01 : f32
    %156 = vector.broadcast %cst_49 : f32 to vector<32x128xf32>
    %157 = arith.mulf %156, %155 : vector<32x128xf32>
    %cst_50 = arith.constant 4.471500e-02 : f32
    %158 = vector.broadcast %cst_50 : f32 to vector<32x128xf32>
    %159 = arith.mulf %158, %155 : vector<32x128xf32>
    %160 = arith.mulf %159, %155 : vector<32x128xf32>
    %161 = arith.mulf %160, %155 : vector<32x128xf32>
    %162 = arith.addf %155, %161 : vector<32x128xf32>
    %cst_51 = arith.constant 0.797884583 : f32
    %163 = vector.broadcast %cst_51 : f32 to vector<32x128xf32>
    %164 = arith.mulf %163, %162 : vector<32x128xf32>
    %165 = math.tanh %164 : vector<32x128xf32>
    %cst_52 = arith.constant 1.000000e+00 : f32
    %166 = vector.broadcast %cst_52 : f32 to vector<32x128xf32>
    %167 = arith.addf %166, %165 : vector<32x128xf32>
    %168 = arith.mulf %157, %167 : vector<32x128xf32>
    %c0_53 = arith.constant 0 : index
    %c0_54 = arith.constant 0 : index
    %c0_55 = arith.constant 0 : index
    %169 = vector.load %arg4[%c0_53, %c0_54, %c0_55] : memref<2x128x64xf32, #tpu.memory_space<vmem>>, vector<1x128x64xf32>
    %170 = vector.shape_cast %169 : vector<1x128x64xf32> to vector<128x64xf32>
    %cst_56 = arith.constant dense<0.000000e+00> : vector<32x64xf32>
    %171 = tpu.matmul %168, %170, %cst_56 {dimension_numbers = #tpu.dot_dimension_numbers<[1], [0], [0], [1], [0, 0, 1, 1], [], []>} : vector<32x128xf32>, vector<128x64xf32>, vector<32x64xf32> -> vector<32x64xf32>
    %172 = vector.extract_strided_slice %27 {offsets = [5, 0], sizes = [1, 64], strides = [1, 1]} : vector<8x256xf32> to vector<1x64xf32>
    %173 = vector.broadcast %172 : vector<1x64xf32> to vector<32x64xf32>
    %174 = arith.addf %171, %173 : vector<32x64xf32>
    %175 = arith.addf %174, %149 : vector<32x64xf32>
    %176 = vector.extract_strided_slice %27 {offsets = [6, 0], sizes = [1, 64], strides = [1, 1]} : vector<8x256xf32> to vector<1x64xf32>
    %177 = vector.extract_strided_slice %27 {offsets = [7, 0], sizes = [1, 64], strides = [1, 1]} : vector<8x256xf32> to vector<1x64xf32>
    %cst_57 = arith.constant dense<0.000000e+00> : vector<32xf32>
    %178 = vector.multi_reduction <add>, %175, %cst_57 [1] : vector<32x64xf32> to vector<32xf32>
    %179 = vector.shape_cast %178 : vector<32xf32> to vector<32x1xf32>
    %cst_58 = arith.constant 6.400000e+01 : f32
    %180 = vector.broadcast %cst_58 : f32 to vector<32x1xf32>
    %181 = arith.divf %179, %180 : vector<32x1xf32>
    %182 = vector.broadcast %181 : vector<32x1xf32> to vector<32x64xf32>
    %183 = arith.subf %175, %182 : vector<32x64xf32>
    %184 = arith.mulf %183, %183 : vector<32x64xf32>
    %cst_59 = arith.constant dense<0.000000e+00> : vector<32xf32>
    %185 = vector.multi_reduction <add>, %184, %cst_59 [1] : vector<32x64xf32> to vector<32xf32>
    %186 = vector.shape_cast %185 : vector<32xf32> to vector<32x1xf32>
    %cst_60 = arith.constant 6.400000e+01 : f32
    %187 = vector.broadcast %cst_60 : f32 to vector<32x1xf32>
    %188 = arith.divf %186, %187 : vector<32x1xf32>
    %cst_61 = arith.constant 9.99999996E-13 : f32
    %189 = vector.broadcast %cst_61 : f32 to vector<32x1xf32>
    %190 = arith.addf %188, %189 : vector<32x1xf32>
    %191 = math.rsqrt %190 : vector<32x1xf32>
    %192 = vector.broadcast %191 : vector<32x1xf32> to vector<32x64xf32>
    %193 = arith.mulf %183, %192 : vector<32x64xf32>
    %194 = vector.broadcast %176 : vector<1x64xf32> to vector<32x64xf32>
    %195 = arith.mulf %193, %194 : vector<32x64xf32>
    %196 = vector.broadcast %177 : vector<1x64xf32> to vector<32x64xf32>
    %197 = arith.addf %195, %196 : vector<32x64xf32>
    %c1 = arith.constant 1 : index
    %c0_62 = arith.constant 0 : index
    %c0_63 = arith.constant 0 : index
    %198 = vector.load %arg5[%c1, %c0_62, %c0_63] : memref<2x8x256xf32, #tpu.memory_space<vmem>>, vector<1x8x256xf32>
    %199 = vector.shape_cast %198 : vector<1x8x256xf32> to vector<8x256xf32>
    %c1_64 = arith.constant 1 : index
    %c0_65 = arith.constant 0 : index
    %c0_66 = arith.constant 0 : index
    %200 = vector.load %arg3[%c1_64, %c0_65, %c0_66] : memref<2x64x512xf32, #tpu.memory_space<vmem>>, vector<1x64x192xf32>
    %201 = vector.shape_cast %200 : vector<1x64x192xf32> to vector<64x192xf32>
    %cst_67 = arith.constant dense<0.000000e+00> : vector<32x192xf32>
    %202 = tpu.matmul %197, %201, %cst_67 {dimension_numbers = #tpu.dot_dimension_numbers<[1], [0], [0], [1], [0, 0, 1, 1], [], []>} : vector<32x64xf32>, vector<64x192xf32>, vector<32x192xf32> -> vector<32x192xf32>
    %203 = vector.extract_strided_slice %199 {offsets = [0, 0], sizes = [1, 192], strides = [1, 1]} : vector<8x256xf32> to vector<1x192xf32>
    %204 = vector.broadcast %203 : vector<1x192xf32> to vector<32x192xf32>
    %205 = arith.addf %202, %204 : vector<32x192xf32>
    %206 = vector.extract_strided_slice %205 {offsets = [0, 0], sizes = [32, 64], strides = [1, 1]} : vector<32x192xf32> to vector<32x64xf32>
    %207 = vector.shape_cast %206 : vector<32x64xf32> to vector<4x8x64xf32>
    %208 = vector.extract_strided_slice %205 {offsets = [0, 64], sizes = [32, 64], strides = [1, 1]} : vector<32x192xf32> to vector<32x64xf32>
    %209 = vector.shape_cast %208 : vector<32x64xf32> to vector<4x8x64xf32>
    %210 = vector.extract_strided_slice %205 {offsets = [0, 128], sizes = [32, 64], strides = [1, 1]} : vector<32x192xf32> to vector<32x64xf32>
    %211 = vector.shape_cast %210 : vector<32x64xf32> to vector<4x8x64xf32>
    %212 = vector.extract_strided_slice %207 {offsets = [0, 0, 0], sizes = [4, 8, 16], strides = [1, 1, 1]} : vector<4x8x64xf32> to vector<4x8x16xf32>
    %213 = vector.extract_strided_slice %209 {offsets = [0, 0, 0], sizes = [4, 8, 16], strides = [1, 1, 1]} : vector<4x8x64xf32> to vector<4x8x16xf32>
    "tpu.trace_start"() <{level = 10 : i32, message = "bqd,bkd->bqk"}> : () -> ()
    %cst_68 = arith.constant dense<0.000000e+00> : vector<4x8x8xf32>
    %214 = tpu.matmul %212, %213, %cst_68 {dimension_numbers = #tpu.dot_dimension_numbers<[2], [2], [1], [1], [0, 0, 0, 1, 1, 1], [0], [0]>} : vector<4x8x16xf32>, vector<4x8x16xf32>, vector<4x8x8xf32> -> vector<4x8x8xf32>
    "tpu.trace_stop"() : () -> ()
    %cst_69 = arith.constant 2.500000e-01 : f32
    %215 = vector.broadcast %cst_69 : f32 to vector<4x8x8xf32>
    %216 = arith.mulf %214, %215 : vector<4x8x8xf32>
    %217 = vector.broadcast %25 : vector<4x1x8xf32> to vector<4x8x8xf32>
    %218 = arith.addf %216, %217 : vector<4x8x8xf32>
    %cst_70 = arith.constant dense<0xFF800000> : vector<4x8xf32>
    %219 = vector.multi_reduction <maximumf>, %218, %cst_70 [2] : vector<4x8x8xf32> to vector<4x8xf32>
    %220 = vector.shape_cast %219 : vector<4x8xf32> to vector<4x8x1xf32>
    %221 = vector.broadcast %220 : vector<4x8x1xf32> to vector<4x8x8xf32>
    %222 = arith.subf %218, %221 : vector<4x8x8xf32>
    %223 = math.exp %222 : vector<4x8x8xf32>
    %cst_71 = arith.constant dense<0.000000e+00> : vector<4x8xf32>
    %224 = vector.multi_reduction <add>, %223, %cst_71 [2] : vector<4x8x8xf32> to vector<4x8xf32>
    %225 = vector.shape_cast %224 : vector<4x8xf32> to vector<4x8x1xf32>
    %226 = tpu.reciprocal %225 {approx = true} : vector<4x8x1xf32> -> vector<4x8x1xf32>
    %227 = vector.broadcast %226 : vector<4x8x1xf32> to vector<4x8x8xf32>
    %228 = arith.mulf %223, %227 : vector<4x8x8xf32>
    %229 = vector.extract_strided_slice %211 {offsets = [0, 0, 0], sizes = [4, 8, 16], strides = [1, 1, 1]} : vector<4x8x64xf32> to vector<4x8x16xf32>
    "tpu.trace_start"() <{level = 10 : i32, message = "bqk,bkd->bqd"}> : () -> ()
    %cst_72 = arith.constant dense<0.000000e+00> : vector<4x8x16xf32>
    %230 = tpu.matmul %228, %229, %cst_72 {dimension_numbers = #tpu.dot_dimension_numbers<[2], [1], [1], [2], [0, 0, 0, 1, 1, 2], [0], [0]>} : vector<4x8x8xf32>, vector<4x8x16xf32>, vector<4x8x16xf32> -> vector<4x8x16xf32>
    "tpu.trace_stop"() : () -> ()
    %231 = vector.shape_cast %230 : vector<4x8x16xf32> to vector<32x16xf32>
    %232 = vector.extract_strided_slice %207 {offsets = [0, 0, 16], sizes = [4, 8, 16], strides = [1, 1, 1]} : vector<4x8x64xf32> to vector<4x8x16xf32>
    %233 = vector.extract_strided_slice %209 {offsets = [0, 0, 16], sizes = [4, 8, 16], strides = [1, 1, 1]} : vector<4x8x64xf32> to vector<4x8x16xf32>
    "tpu.trace_start"() <{level = 10 : i32, message = "bqd,bkd->bqk"}> : () -> ()
    %cst_73 = arith.constant dense<0.000000e+00> : vector<4x8x8xf32>
    %234 = tpu.matmul %232, %233, %cst_73 {dimension_numbers = #tpu.dot_dimension_numbers<[2], [2], [1], [1], [0, 0, 0, 1, 1, 1], [0], [0]>} : vector<4x8x16xf32>, vector<4x8x16xf32>, vector<4x8x8xf32> -> vector<4x8x8xf32>
    "tpu.trace_stop"() : () -> ()
    %cst_74 = arith.constant 2.500000e-01 : f32
    %235 = vector.broadcast %cst_74 : f32 to vector<4x8x8xf32>
    %236 = arith.mulf %234, %235 : vector<4x8x8xf32>
    %237 = vector.broadcast %25 : vector<4x1x8xf32> to vector<4x8x8xf32>
    %238 = arith.addf %236, %237 : vector<4x8x8xf32>
    %cst_75 = arith.constant dense<0xFF800000> : vector<4x8xf32>
    %239 = vector.multi_reduction <maximumf>, %238, %cst_75 [2] : vector<4x8x8xf32> to vector<4x8xf32>
    %240 = vector.shape_cast %239 : vector<4x8xf32> to vector<4x8x1xf32>
    %241 = vector.broadcast %240 : vector<4x8x1xf32> to vector<4x8x8xf32>
    %242 = arith.subf %238, %241 : vector<4x8x8xf32>
    %243 = math.exp %242 : vector<4x8x8xf32>
    %cst_76 = arith.constant dense<0.000000e+00> : vector<4x8xf32>
    %244 = vector.multi_reduction <add>, %243, %cst_76 [2] : vector<4x8x8xf32> to vector<4x8xf32>
    %245 = vector.shape_cast %244 : vector<4x8xf32> to vector<4x8x1xf32>
    %246 = tpu.reciprocal %245 {approx = true} : vector<4x8x1xf32> -> vector<4x8x1xf32>
    %247 = vector.broadcast %246 : vector<4x8x1xf32> to vector<4x8x8xf32>
    %248 = arith.mulf %243, %247 : vector<4x8x8xf32>
    %249 = vector.extract_strided_slice %211 {offsets = [0, 0, 16], sizes = [4, 8, 16], strides = [1, 1, 1]} : vector<4x8x64xf32> to vector<4x8x16xf32>
    "tpu.trace_start"() <{level = 10 : i32, message = "bqk,bkd->bqd"}> : () -> ()
    %cst_77 = arith.constant dense<0.000000e+00> : vector<4x8x16xf32>
    %250 = tpu.matmul %248, %249, %cst_77 {dimension_numbers = #tpu.dot_dimension_numbers<[2], [1], [1], [2], [0, 0, 0, 1, 1, 2], [0], [0]>} : vector<4x8x8xf32>, vector<4x8x16xf32>, vector<4x8x16xf32> -> vector<4x8x16xf32>
    "tpu.trace_stop"() : () -> ()
    %251 = vector.shape_cast %250 : vector<4x8x16xf32> to vector<32x16xf32>
    %252 = vector.extract_strided_slice %207 {offsets = [0, 0, 32], sizes = [4, 8, 16], strides = [1, 1, 1]} : vector<4x8x64xf32> to vector<4x8x16xf32>
    %253 = vector.extract_strided_slice %209 {offsets = [0, 0, 32], sizes = [4, 8, 16], strides = [1, 1, 1]} : vector<4x8x64xf32> to vector<4x8x16xf32>
    "tpu.trace_start"() <{level = 10 : i32, message = "bqd,bkd->bqk"}> : () -> ()
    %cst_78 = arith.constant dense<0.000000e+00> : vector<4x8x8xf32>
    %254 = tpu.matmul %252, %253, %cst_78 {dimension_numbers = #tpu.dot_dimension_numbers<[2], [2], [1], [1], [0, 0, 0, 1, 1, 1], [0], [0]>} : vector<4x8x16xf32>, vector<4x8x16xf32>, vector<4x8x8xf32> -> vector<4x8x8xf32>
    "tpu.trace_stop"() : () -> ()
    %cst_79 = arith.constant 2.500000e-01 : f32
    %255 = vector.broadcast %cst_79 : f32 to vector<4x8x8xf32>
    %256 = arith.mulf %254, %255 : vector<4x8x8xf32>
    %257 = vector.broadcast %25 : vector<4x1x8xf32> to vector<4x8x8xf32>
    %258 = arith.addf %256, %257 : vector<4x8x8xf32>
    %cst_80 = arith.constant dense<0xFF800000> : vector<4x8xf32>
    %259 = vector.multi_reduction <maximumf>, %258, %cst_80 [2] : vector<4x8x8xf32> to vector<4x8xf32>
    %260 = vector.shape_cast %259 : vector<4x8xf32> to vector<4x8x1xf32>
    %261 = vector.broadcast %260 : vector<4x8x1xf32> to vector<4x8x8xf32>
    %262 = arith.subf %258, %261 : vector<4x8x8xf32>
    %263 = math.exp %262 : vector<4x8x8xf32>
    %cst_81 = arith.constant dense<0.000000e+00> : vector<4x8xf32>
    %264 = vector.multi_reduction <add>, %263, %cst_81 [2] : vector<4x8x8xf32> to vector<4x8xf32>
    %265 = vector.shape_cast %264 : vector<4x8xf32> to vector<4x8x1xf32>
    %266 = tpu.reciprocal %265 {approx = true} : vector<4x8x1xf32> -> vector<4x8x1xf32>
    %267 = vector.broadcast %266 : vector<4x8x1xf32> to vector<4x8x8xf32>
    %268 = arith.mulf %263, %267 : vector<4x8x8xf32>
    %269 = vector.extract_strided_slice %211 {offsets = [0, 0, 32], sizes = [4, 8, 16], strides = [1, 1, 1]} : vector<4x8x64xf32> to vector<4x8x16xf32>
    "tpu.trace_start"() <{level = 10 : i32, message = "bqk,bkd->bqd"}> : () -> ()
    %cst_82 = arith.constant dense<0.000000e+00> : vector<4x8x16xf32>
    %270 = tpu.matmul %268, %269, %cst_82 {dimension_numbers = #tpu.dot_dimension_numbers<[2], [1], [1], [2], [0, 0, 0, 1, 1, 2], [0], [0]>} : vector<4x8x8xf32>, vector<4x8x16xf32>, vector<4x8x16xf32> -> vector<4x8x16xf32>
    "tpu.trace_stop"() : () -> ()
    %271 = vector.shape_cast %270 : vector<4x8x16xf32> to vector<32x16xf32>
    %272 = vector.extract_strided_slice %207 {offsets = [0, 0, 48], sizes = [4, 8, 16], strides = [1, 1, 1]} : vector<4x8x64xf32> to vector<4x8x16xf32>
    %273 = vector.extract_strided_slice %209 {offsets = [0, 0, 48], sizes = [4, 8, 16], strides = [1, 1, 1]} : vector<4x8x64xf32> to vector<4x8x16xf32>
    "tpu.trace_start"() <{level = 10 : i32, message = "bqd,bkd->bqk"}> : () -> ()
    %cst_83 = arith.constant dense<0.000000e+00> : vector<4x8x8xf32>
    %274 = tpu.matmul %272, %273, %cst_83 {dimension_numbers = #tpu.dot_dimension_numbers<[2], [2], [1], [1], [0, 0, 0, 1, 1, 1], [0], [0]>} : vector<4x8x16xf32>, vector<4x8x16xf32>, vector<4x8x8xf32> -> vector<4x8x8xf32>
    "tpu.trace_stop"() : () -> ()
    %cst_84 = arith.constant 2.500000e-01 : f32
    %275 = vector.broadcast %cst_84 : f32 to vector<4x8x8xf32>
    %276 = arith.mulf %274, %275 : vector<4x8x8xf32>
    %277 = vector.broadcast %25 : vector<4x1x8xf32> to vector<4x8x8xf32>
    %278 = arith.addf %276, %277 : vector<4x8x8xf32>
    %cst_85 = arith.constant dense<0xFF800000> : vector<4x8xf32>
    %279 = vector.multi_reduction <maximumf>, %278, %cst_85 [2] : vector<4x8x8xf32> to vector<4x8xf32>
    %280 = vector.shape_cast %279 : vector<4x8xf32> to vector<4x8x1xf32>
    %281 = vector.broadcast %280 : vector<4x8x1xf32> to vector<4x8x8xf32>
    %282 = arith.subf %278, %281 : vector<4x8x8xf32>
    %283 = math.exp %282 : vector<4x8x8xf32>
    %cst_86 = arith.constant dense<0.000000e+00> : vector<4x8xf32>
    %284 = vector.multi_reduction <add>, %283, %cst_86 [2] : vector<4x8x8xf32> to vector<4x8xf32>
    %285 = vector.shape_cast %284 : vector<4x8xf32> to vector<4x8x1xf32>
    %286 = tpu.reciprocal %285 {approx = true} : vector<4x8x1xf32> -> vector<4x8x1xf32>
    %287 = vector.broadcast %286 : vector<4x8x1xf32> to vector<4x8x8xf32>
    %288 = arith.mulf %283, %287 : vector<4x8x8xf32>
    %289 = vector.extract_strided_slice %211 {offsets = [0, 0, 48], sizes = [4, 8, 16], strides = [1, 1, 1]} : vector<4x8x64xf32> to vector<4x8x16xf32>
    "tpu.trace_start"() <{level = 10 : i32, message = "bqk,bkd->bqd"}> : () -> ()
    %cst_87 = arith.constant dense<0.000000e+00> : vector<4x8x16xf32>
    %290 = tpu.matmul %288, %289, %cst_87 {dimension_numbers = #tpu.dot_dimension_numbers<[2], [1], [1], [2], [0, 0, 0, 1, 1, 2], [0], [0]>} : vector<4x8x8xf32>, vector<4x8x16xf32>, vector<4x8x16xf32> -> vector<4x8x16xf32>
    "tpu.trace_stop"() : () -> ()
    %291 = vector.shape_cast %290 : vector<4x8x16xf32> to vector<32x16xf32>
    %292 = tpu.concatenate %231, %251, %271, %291 in 1 : vector<32x16xf32>, vector<32x16xf32>, vector<32x16xf32>, vector<32x16xf32> -> vector<32x64xf32>
    %c1_88 = arith.constant 1 : index
    %c0_89 = arith.constant 0 : index
    %c256_90 = arith.constant 256 : index
    %293 = vector.load %arg3[%c1_88, %c0_89, %c256_90] : memref<2x64x512xf32, #tpu.memory_space<vmem>>, vector<1x64x64xf32>
    %294 = vector.shape_cast %293 : vector<1x64x64xf32> to vector<64x64xf32>
    %cst_91 = arith.constant dense<0.000000e+00> : vector<32x64xf32>
    %295 = tpu.matmul %292, %294, %cst_91 {dimension_numbers = #tpu.dot_dimension_numbers<[1], [0], [0], [1], [0, 0, 1, 1], [], []>} : vector<32x64xf32>, vector<64x64xf32>, vector<32x64xf32> -> vector<32x64xf32>
    %296 = vector.extract_strided_slice %199 {offsets = [1, 0], sizes = [1, 64], strides = [1, 1]} : vector<8x256xf32> to vector<1x64xf32>
    %297 = vector.broadcast %296 : vector<1x64xf32> to vector<32x64xf32>
    %298 = arith.addf %295, %297 : vector<32x64xf32>
    %299 = arith.addf %298, %197 : vector<32x64xf32>
    %300 = vector.extract_strided_slice %199 {offsets = [2, 0], sizes = [1, 64], strides = [1, 1]} : vector<8x256xf32> to vector<1x64xf32>
    %301 = vector.extract_strided_slice %199 {offsets = [3, 0], sizes = [1, 64], strides = [1, 1]} : vector<8x256xf32> to vector<1x64xf32>
    %cst_92 = arith.constant dense<0.000000e+00> : vector<32xf32>
    %302 = vector.multi_reduction <add>, %299, %cst_92 [1] : vector<32x64xf32> to vector<32xf32>
    %303 = vector.shape_cast %302 : vector<32xf32> to vector<32x1xf32>
    %cst_93 = arith.constant 6.400000e+01 : f32
    %304 = vector.broadcast %cst_93 : f32 to vector<32x1xf32>
    %305 = arith.divf %303, %304 : vector<32x1xf32>
    %306 = vector.broadcast %305 : vector<32x1xf32> to vector<32x64xf32>
    %307 = arith.subf %299, %306 : vector<32x64xf32>
    %308 = arith.mulf %307, %307 : vector<32x64xf32>
    %cst_94 = arith.constant dense<0.000000e+00> : vector<32xf32>
    %309 = vector.multi_reduction <add>, %308, %cst_94 [1] : vector<32x64xf32> to vector<32xf32>
    %310 = vector.shape_cast %309 : vector<32xf32> to vector<32x1xf32>
    %cst_95 = arith.constant 6.400000e+01 : f32
    %311 = vector.broadcast %cst_95 : f32 to vector<32x1xf32>
    %312 = arith.divf %310, %311 : vector<32x1xf32>
    %cst_96 = arith.constant 9.99999996E-13 : f32
    %313 = vector.broadcast %cst_96 : f32 to vector<32x1xf32>
    %314 = arith.addf %312, %313 : vector<32x1xf32>
    %315 = math.rsqrt %314 : vector<32x1xf32>
    %316 = vector.broadcast %315 : vector<32x1xf32> to vector<32x64xf32>
    %317 = arith.mulf %307, %316 : vector<32x64xf32>
    %318 = vector.broadcast %300 : vector<1x64xf32> to vector<32x64xf32>
    %319 = arith.mulf %317, %318 : vector<32x64xf32>
    %320 = vector.broadcast %301 : vector<1x64xf32> to vector<32x64xf32>
    %321 = arith.addf %319, %320 : vector<32x64xf32>
    %c1_97 = arith.constant 1 : index
    %c0_98 = arith.constant 0 : index
    %c384_99 = arith.constant 384 : index
    %322 = vector.load %arg3[%c1_97, %c0_98, %c384_99] : memref<2x64x512xf32, #tpu.memory_space<vmem>>, vector<1x64x128xf32>
    %323 = vector.shape_cast %322 : vector<1x64x128xf32> to vector<64x128xf32>
    %cst_100 = arith.constant dense<0.000000e+00> : vector<32x128xf32>
    %324 = tpu.matmul %321, %323, %cst_100 {dimension_numbers = #tpu.dot_dimension_numbers<[1], [0], [0], [1], [0, 0, 1, 1], [], []>} : vector<32x64xf32>, vector<64x128xf32>, vector<32x128xf32> -> vector<32x128xf32>
    %325 = vector.extract_strided_slice %199 {offsets = [4, 0], sizes = [1, 128], strides = [1, 1]} : vector<8x256xf32> to vector<1x128xf32>
    %326 = vector.broadcast %325 : vector<1x128xf32> to vector<32x128xf32>
    %327 = arith.addf %324, %326 : vector<32x128xf32>
    %cst_101 = arith.constant 5.000000e-01 : f32
    %328 = vector.broadcast %cst_101 : f32 to vector<32x128xf32>
    %329 = arith.mulf %328, %327 : vector<32x128xf32>
    %cst_102 = arith.constant 4.471500e-02 : f32
    %330 = vector.broadcast %cst_102 : f32 to vector<32x128xf32>
    %331 = arith.mulf %330, %327 : vector<32x128xf32>
    %332 = arith.mulf %331, %327 : vector<32x128xf32>
    %333 = arith.mulf %332, %327 : vector<32x128xf32>
    %334 = arith.addf %327, %333 : vector<32x128xf32>
    %cst_103 = arith.constant 0.797884583 : f32
    %335 = vector.broadcast %cst_103 : f32 to vector<32x128xf32>
    %336 = arith.mulf %335, %334 : vector<32x128xf32>
    %337 = math.tanh %336 : vector<32x128xf32>
    %cst_104 = arith.constant 1.000000e+00 : f32
    %338 = vector.broadcast %cst_104 : f32 to vector<32x128xf32>
    %339 = arith.addf %338, %337 : vector<32x128xf32>
    %340 = arith.mulf %329, %339 : vector<32x128xf32>
    %c1_105 = arith.constant 1 : index
    %c0_106 = arith.constant 0 : index
    %c0_107 = arith.constant 0 : index
    %341 = vector.load %arg4[%c1_105, %c0_106, %c0_107] : memref<2x128x64xf32, #tpu.memory_space<vmem>>, vector<1x128x64xf32>
    %342 = vector.shape_cast %341 : vector<1x128x64xf32> to vector<128x64xf32>
    %cst_108 = arith.constant dense<0.000000e+00> : vector<32x64xf32>
    %343 = tpu.matmul %340, %342, %cst_108 {dimension_numbers = #tpu.dot_dimension_numbers<[1], [0], [0], [1], [0, 0, 1, 1], [], []>} : vector<32x128xf32>, vector<128x64xf32>, vector<32x64xf32> -> vector<32x64xf32>
    %344 = vector.extract_strided_slice %199 {offsets = [5, 0], sizes = [1, 64], strides = [1, 1]} : vector<8x256xf32> to vector<1x64xf32>
    %345 = vector.broadcast %344 : vector<1x64xf32> to vector<32x64xf32>
    %346 = arith.addf %343, %345 : vector<32x64xf32>
    %347 = arith.addf %346, %321 : vector<32x64xf32>
    %348 = vector.extract_strided_slice %199 {offsets = [6, 0], sizes = [1, 64], strides = [1, 1]} : vector<8x256xf32> to vector<1x64xf32>
    %349 = vector.extract_strided_slice %199 {offsets = [7, 0], sizes = [1, 64], strides = [1, 1]} : vector<8x256xf32> to vector<1x64xf32>
    %cst_109 = arith.constant dense<0.000000e+00> : vector<32xf32>
    %350 = vector.multi_reduction <add>, %347, %cst_109 [1] : vector<32x64xf32> to vector<32xf32>
    %351 = vector.shape_cast %350 : vector<32xf32> to vector<32x1xf32>
    %cst_110 = arith.constant 6.400000e+01 : f32
    %352 = vector.broadcast %cst_110 : f32 to vector<32x1xf32>
    %353 = arith.divf %351, %352 : vector<32x1xf32>
    %354 = vector.broadcast %353 : vector<32x1xf32> to vector<32x64xf32>
    %355 = arith.subf %347, %354 : vector<32x64xf32>
    %356 = arith.mulf %355, %355 : vector<32x64xf32>
    %cst_111 = arith.constant dense<0.000000e+00> : vector<32xf32>
    %357 = vector.multi_reduction <add>, %356, %cst_111 [1] : vector<32x64xf32> to vector<32xf32>
    %358 = vector.shape_cast %357 : vector<32xf32> to vector<32x1xf32>
    %cst_112 = arith.constant 6.400000e+01 : f32
    %359 = vector.broadcast %cst_112 : f32 to vector<32x1xf32>
    %360 = arith.divf %358, %359 : vector<32x1xf32>
    %cst_113 = arith.constant 9.99999996E-13 : f32
    %361 = vector.broadcast %cst_113 : f32 to vector<32x1xf32>
    %362 = arith.addf %360, %361 : vector<32x1xf32>
    %363 = math.rsqrt %362 : vector<32x1xf32>
    %364 = vector.broadcast %363 : vector<32x1xf32> to vector<32x64xf32>
    %365 = arith.mulf %355, %364 : vector<32x64xf32>
    %366 = vector.broadcast %348 : vector<1x64xf32> to vector<32x64xf32>
    %367 = arith.mulf %365, %366 : vector<32x64xf32>
    %368 = vector.broadcast %349 : vector<1x64xf32> to vector<32x64xf32>
    %369 = arith.addf %367, %368 : vector<32x64xf32>
    %370 = vector.shape_cast %369 : vector<32x64xf32> to vector<4x8x64xf32>
    %371 = vector.extract_strided_slice %370 {offsets = [0, 0, 0], sizes = [4, 1, 64], strides = [1, 1, 1]} : vector<4x8x64xf32> to vector<4x1x64xf32>
    %372 = vector.shape_cast %371 : vector<4x1x64xf32> to vector<4x64xf32>
    %c0_114 = arith.constant 0 : index
    %c0_115 = arith.constant 0 : index
    %373 = vector.load %arg6[%c0_114, %c0_115] : memref<64x256xf32, #tpu.memory_space<vmem>>, vector<64x64xf32>
    %cst_116 = arith.constant dense<0.000000e+00> : vector<4x64xf32>
    %374 = tpu.matmul %372, %373, %cst_116 {dimension_numbers = #tpu.dot_dimension_numbers<[1], [0], [0], [1], [0, 0, 1, 1], [], []>} : vector<4x64xf32>, vector<64x64xf32>, vector<4x64xf32> -> vector<4x64xf32>
    %375 = vector.extract_strided_slice %0 {offsets = [2, 0], sizes = [1, 64], strides = [1, 1]} : vector<4x128xf32> to vector<1x64xf32>
    %376 = vector.broadcast %375 : vector<1x64xf32> to vector<4x64xf32>
    %377 = arith.addf %374, %376 : vector<4x64xf32>
    %378 = math.tanh %377 : vector<4x64xf32>
    %c0_117 = arith.constant 0 : index
    %c128 = arith.constant 128 : index
    %379 = vector.load %arg6[%c0_117, %c128] : memref<64x256xf32, #tpu.memory_space<vmem>>, vector<64x128xf32>
    %cst_118 = arith.constant dense<0.000000e+00> : vector<4x128xf32>
    %380 = tpu.matmul %378, %379, %cst_118 {dimension_numbers = #tpu.dot_dimension_numbers<[1], [0], [0], [1], [0, 0, 1, 1], [], []>} : vector<4x64xf32>, vector<64x128xf32>, vector<4x128xf32> -> vector<4x128xf32>
    %381 = vector.extract_strided_slice %0 {offsets = [3, 0], sizes = [1, 128], strides = [1, 1]} : vector<4x128xf32> to vector<1x128xf32>
    %382 = vector.broadcast %381 : vector<1x128xf32> to vector<4x128xf32>
    %383 = arith.addf %380, %382 : vector<4x128xf32>
    %c0_119 = arith.constant 0 : index
    %c0_120 = arith.constant 0 : index
    %c0_121 = arith.constant 0 : index
    %384 = vector.load %arg8[%c0_119, %c0_120, %c0_121] : memref<1x4x128xf32, #tpu.memory_space<vmem>>, vector<1x4x128xf32>
    %385 = vector.shape_cast %384 : vector<1x4x128xf32> to vector<4x128xf32>
    %386 = vector.shape_cast %383 : vector<4x128xf32> to vector<1x4x128xf32>
    tpu.vector_store %arg8[%c0_119, %c0_120, %c0_121], %386 {strides = array<i32>} : memref<1x4x128xf32, #tpu.memory_space<vmem>>, vector<1x4x128xf32>,
    return
  }
  func.func @transform_0(%arg0: i32) -> (i32, i32, i32) {
    %c0_i32 = arith.constant 0 : i32
    %c0_i32_0 = arith.constant 0 : i32
    %c0_i32_1 = arith.constant 0 : i32
    return %arg0, %c0_i32, %c0_i32_0 : i32, i32, i32
  }
  func.func @transform_1(%arg0: i32) -> (i32, i32, i32) {
    %c0_i32 = arith.constant 0 : i32
    %c0_i32_0 = arith.constant 0 : i32
    %c0_i32_1 = arith.constant 0 : i32
    return %arg0, %c0_i32, %c0_i32_0 : i32, i32, i32
  }
  func.func @transform_2(%arg0: i32) -> (i32, i32, i32) {
    %c0_i32 = arith.constant 0 : i32
    %c0_i32_0 = arith.constant 0 : i32
    %c0_i32_1 = arith.constant 0 : i32
    %c0_i32_2 = arith.constant 0 : i32
    return %c0_i32, %c0_i32_0, %c0_i32_1 : i32, i32, i32
  }
  func.func @transform_3(%arg0: i32) -> (i32, i32, i32) {
    %c0_i32 = arith.constant 0 : i32
    %c0_i32_0 = arith.constant 0 : i32
    %c0_i32_1 = arith.constant 0 : i32
    %c0_i32_2 = arith.constant 0 : i32
    return %c0_i32, %c0_i32_0, %c0_i32_1 : i32, i32, i32
  }
  func.func @transform_4(%arg0: i32) -> (i32, i32, i32) {
    %c0_i32 = arith.constant 0 : i32
    %c0_i32_0 = arith.constant 0 : i32
    %c0_i32_1 = arith.constant 0 : i32
    %c0_i32_2 = arith.constant 0 : i32
    return %c0_i32, %c0_i32_0, %c0_i32_1 : i32, i32, i32
  }
  func.func @transform_5(%arg0: i32) -> (i32, i32) {
    %c0_i32 = arith.constant 0 : i32
    %c0_i32_0 = arith.constant 0 : i32
    %c0_i32_1 = arith.constant 0 : i32
    return %c0_i32, %c0_i32_0 : i32, i32
  }
  func.func @transform_6(%arg0: i32) -> (i32, i32) {
    %c0_i32 = arith.constant 0 : i32
    %c0_i32_0 = arith.constant 0 : i32
    %c0_i32_1 = arith.constant 0 : i32
    return %c0_i32, %c0_i32_0 : i32, i32
  }
  func.func @transform_7(%arg0: i32) -> (i32, i32, i32) {
    %c0_i32 = arith.constant 0 : i32
    %c0_i32_0 = arith.constant 0 : i32
    %c0_i32_1 = arith.constant 0 : i32
    return %arg0, %c0_i32, %c0_i32_0 : i32, i32, i32
  }
}

module attributes {stable_mosaic.version = 11 : i64} {
  func.func @kernel(%arg0: i32, %arg1: memref<4x8x64xf32, #tpu.memory_space<vmem>>, %arg2: memref<4x1x8xf32, #tpu.memory_space<vmem>>, %arg3: memref<2x64x512xf32, #tpu.memory_space<vmem>>, %arg4: memref<2x128x64xf32, #tpu.memory_space<vmem>>, %arg5: memref<2x8x256xf32, #tpu.memory_space<vmem>>, %arg6: memref<64x256xf32, #tpu.memory_space<vmem>>, %arg7: memref<4x128xf32, #tpu.memory_space<vmem>>, %arg8: memref<1x4x128xf32, #tpu.memory_space<vmem>>) attributes {dimension_semantics = [#tpu.dimension_semantics<parallel>], iteration_bounds = array<i64: 2>, scalar_prefetch = 0 : i64, scratch_operands = 0 : i64, tpu.core_type = #tpu.core_type<tc>, window_params = [{transform_indices = @transform_0, window_bounds = array<i64: 4, 8, 64>}, {transform_indices = @transform_1, window_bounds = array<i64: 4, 1, 8>}, {pipeline_mode = #tpu.pipeline_mode<synchronous>, transform_indices = @transform_2, window_bounds = array<i64: 2, 64, 512>}, {pipeline_mode = #tpu.pipeline_mode<synchronous>, transform_indices = @transform_3, window_bounds = array<i64: 2, 128, 64>}, {pipeline_mode = #tpu.pipeline_mode<synchronous>, transform_indices = @transform_4, window_bounds = array<i64: 2, 8, 256>}, {pipeline_mode = #tpu.pipeline_mode<synchronous>, transform_indices = @transform_5, window_bounds = array<i64: 64, 256>}, {pipeline_mode = #tpu.pipeline_mode<synchronous>, transform_indices = @transform_6, window_bounds = array<i64: 4, 128>}, {transform_indices = @transform_7, window_bounds = array<i64: 1, 4, 128>}]} {
    %c0 = arith.constant 0 : index
    %c0_0 = arith.constant 0 : index
    %0 = vector.load %arg7[%c0, %c0_0] : memref<4x128xf32, #tpu.memory_space<vmem>>, vector<4x128xf32>
    %c0_1 = arith.constant 0 : index
    %c0_2 = arith.constant 0 : index
    %c0_3 = arith.constant 0 : index
    %1 = vector.load %arg1[%c0_1, %c0_2, %c0_3] : memref<4x8x64xf32, #tpu.memory_space<vmem>>, vector<4x8x64xf32>
    %2 = vector.shape_cast %1 : vector<4x8x64xf32> to vector<32x64xf32>
    %3 = vector.extract_strided_slice %0 {offsets = [0, 0], sizes = [1, 64], strides = [1, 1]} : vector<4x128xf32> to vector<1x64xf32>
    %4 = vector.extract_strided_slice %0 {offsets = [1, 0], sizes = [1, 64], strides = [1, 1]} : vector<4x128xf32> to vector<1x64xf32>
    %cst = arith.constant dense<0.000000e+00> : vector<32xf32>
    %5 = vector.multi_reduction <add>, %2, %cst [1] : vector<32x64xf32> to vector<32xf32>
    %6 = vector.shape_cast %5 : vector<32xf32> to vector<32x1xf32>
    %cst_4 = arith.constant 6.400000e+01 : f32
    %7 = vector.broadcast %cst_4 : f32 to vector<32x1xf32>
    %8 = arith.divf %6, %7 : vector<32x1xf32>
    %9 = vector.broadcast %8 : vector<32x1xf32> to vector<32x64xf32>
    %10 = arith.subf %2, %9 : vector<32x64xf32>
    %11 = arith.mulf %10, %10 : vector<32x64xf32>
    %cst_5 = arith.constant dense<0.000000e+00> : vector<32xf32>
    %12 = vector.multi_reduction <add>, %11, %cst_5 [1] : vector<32x64xf32> to vector<32xf32>
    %13 = vector.shape_cast %12 : vector<32xf32> to vector<32x1xf32>
    %cst_6 = arith.constant 6.400000e+01 : f32
    %14 = vector.broadcast %cst_6 : f32 to vector<32x1xf32>
    %15 = arith.divf %13, %14 : vector<32x1xf32>
    %cst_7 = arith.constant 9.99999996E-13 : f32
    %16 = vector.broadcast %cst_7 : f32 to vector<32x1xf32>
    %17 = arith.addf %15, %16 : vector<32x1xf32>
    %18 = math.rsqrt %17 : vector<32x1xf32>
    %19 = vector.broadcast %18 : vector<32x1xf32> to vector<32x64xf32>
    %20 = arith.mulf %10, %19 : vector<32x64xf32>
    %21 = vector.broadcast %3 : vector<1x64xf32> to vector<32x64xf32>
    %22 = arith.mulf %20, %21 : vector<32x64xf32>
    %23 = vector.broadcast %4 : vector<1x64xf32> to vector<32x64xf32>
    %24 = arith.addf %22, %23 : vector<32x64xf32>
    %c0_8 = arith.constant 0 : index
    %c0_9 = arith.constant 0 : index
    %c0_10 = arith.constant 0 : index
    %25 = vector.load %arg2[%c0_8, %c0_9, %c0_10] : memref<4x1x8xf32, #tpu.memory_space<vmem>>, vector<4x1x8xf32>
    %c0_11 = arith.constant 0 : index
    %c0_12 = arith.constant 0 : index
    %c0_13 = arith.constant 0 : index
    %26 = vector.load %arg5[%c0_11, %c0_12, %c0_13] : memref<2x8x256xf32, #tpu.memory_space<vmem>>, vector<1x8x256xf32>
    %27 = vector.shape_cast %26 : vector<1x8x256xf32> to vector<8x256xf32>
    %c0_14 = arith.constant 0 : index
    %c0_15 = arith.constant 0 : index
    %c0_16 = arith.constant 0 : index
    %28 = vector.load %arg3[%c0_14, %c0_15, %c0_16] : memref<2x64x512xf32, #tpu.memory_space<vmem>>, vector<1x64x192xf32>
    %29 = vector.shape_cast %28 : vector<1x64x192xf32> to vector<64x192xf32>
    %cst_17 = arith.constant dense<0.000000e+00> : vector<32x192xf32>
    %30 = tpu.matmul %24, %29, %cst_17 {dimension_numbers = #tpu.dot_dimension_numbers<[1], [0], [0], [1], [0, 0, 1, 1], [], []>} : vector<32x64xf32>, vector<64x192xf32>, vector<32x192xf32> -> vector<32x192xf32>
    %31 = vector.extract_strided_slice %27 {offsets = [0, 0], sizes = [1, 192], strides = [1, 1]} : vector<8x256xf32> to vector<1x192xf32>
    %32 = vector.broadcast %31 : vector<1x192xf32> to vector<32x192xf32>
    %33 = arith.addf %30, %32 : vector<32x192xf32>
    %34 = vector.extract_strided_slice %33 {offsets = [0, 0], sizes = [32, 64], strides = [1, 1]} : vector<32x192xf32> to vector<32x64xf32>
    %35 = vector.shape_cast %34 : vector<32x64xf32> to vector<4x8x64xf32>
    %36 = vector.extract_strided_slice %33 {offsets = [0, 64], sizes = [32, 64], strides = [1, 1]} : vector<32x192xf32> to vector<32x64xf32>
    %37 = vector.shape_cast %36 : vector<32x64xf32> to vector<4x8x64xf32>
    %38 = vector.extract_strided_slice %33 {offsets = [0, 128], sizes = [32, 64], strides = [1, 1]} : vector<32x192xf32> to vector<32x64xf32>
    %39 = vector.shape_cast %38 : vector<32x64xf32> to vector<4x8x64xf32>
    %40 = vector.extract_strided_slice %35 {offsets = [0, 0, 0], sizes = [4, 8, 16], strides = [1, 1, 1]} : vector<4x8x64xf32> to vector<4x8x16xf32>
    %41 = vector.extract_strided_slice %37 {offsets = [0, 0, 0], sizes = [4, 8, 16], strides = [1, 1, 1]} : vector<4x8x64xf32> to vector<4x8x16xf32>
    "tpu.trace_start"() <{level = 10 : i32, message = "bqd,bkd->bqk"}> : () -> ()
    %cst_18 = arith.constant dense<0.000000e+00> : vector<4x8x8xf32>
    %42 = tpu.matmul %40, %41, %cst_18 {dimension_numbers = #tpu.dot_dimension_numbers<[2], [2], [1], [1], [0, 0, 0, 1, 1, 1], [0], [0]>} : vector<4x8x16xf32>, vector<4x8x16xf32>, vector<4x8x8xf32> -> vector<4x8x8xf32>
    "tpu.trace_stop"() : () -> ()
    %cst_19 = arith.constant 2.500000e-01 : f32
    %43 = vector.broadcast %cst_19 : f32 to vector<4x8x8xf32>
    %44 = arith.mulf %42, %43 : vector<4x8x8xf32>
    %45 = vector.broadcast %25 : vector<4x1x8xf32> to vector<4x8x8xf32>
    %46 = arith.addf %44, %45 : vector<4x8x8xf32>
    %cst_20 = arith.constant dense<0xFF800000> : vector<4x8xf32>
    %47 = vector.multi_reduction <maximumf>, %46, %cst_20 [2] : vector<4x8x8xf32> to vector<4x8xf32>
    %48 = vector.shape_cast %47 : vector<4x8xf32> to vector<4x8x1xf32>
    %49 = vector.broadcast %48 : vector<4x8x1xf32> to vector<4x8x8xf32>
    %50 = arith.subf %46, %49 : vector<4x8x8xf32>
    %51 = math.exp %50 : vector<4x8x8xf32>
    %cst_21 = arith.constant dense<0.000000e+00> : vector<4x8xf32>
    %52 = vector.multi_reduction <add>, %51, %cst_21 [2] : vector<4x8x8xf32> to vector<4x8xf32>
    %53 = vector.shape_cast %52 : vector<4x8xf32> to vector<4x8x1xf32>
    %54 = tpu.reciprocal %53 {approx = true} : vector<4x8x1xf32> -> vector<4x8x1xf32>
    %55 = vector.broadcast %54 : vector<4x8x1xf32> to vector<4x8x8xf32>
    %56 = arith.mulf %51, %55 : vector<4x8x8xf32>
    %57 = vector.extract_strided_slice %39 {offsets = [0, 0, 0], sizes = [4, 8, 16], strides = [1, 1, 1]} : vector<4x8x64xf32> to vector<4x8x16xf32>
    "tpu.trace_start"() <{level = 10 : i32, message = "bqk,bkd->bqd"}> : () -> ()
    %cst_22 = arith.constant dense<0.000000e+00> : vector<4x8x16xf32>
    %58 = tpu.matmul %56, %57, %cst_22 {dimension_numbers = #tpu.dot_dimension_numbers<[2], [1], [1], [2], [0, 0, 0, 1, 1, 2], [0], [0]>} : vector<4x8x8xf32>, vector<4x8x16xf32>, vector<4x8x16xf32> -> vector<4x8x16xf32>
    "tpu.trace_stop"() : () -> ()
    %59 = vector.shape_cast %58 : vector<4x8x16xf32> to vector<32x16xf32>
    %60 = vector.extract_strided_slice %35 {offsets = [0, 0, 16], sizes = [4, 8, 16], strides = [1, 1, 1]} : vector<4x8x64xf32> to vector<4x8x16xf32>
    %61 = vector.extract_strided_slice %37 {offsets = [0, 0, 16], sizes = [4, 8, 16], strides = [1, 1, 1]} : vector<4x8x64xf32> to vector<4x8x16xf32>
    "tpu.trace_start"() <{level = 10 : i32, message = "bqd,bkd->bqk"}> : () -> ()
    %cst_23 = arith.constant dense<0.000000e+00> : vector<4x8x8xf32>
    %62 = tpu.matmul %60, %61, %cst_23 {dimension_numbers = #tpu.dot_dimension_numbers<[2], [2], [1], [1], [0, 0, 0, 1, 1, 1], [0], [0]>} : vector<4x8x16xf32>, vector<4x8x16xf32>, vector<4x8x8xf32> -> vector<4x8x8xf32>
    "tpu.trace_stop"() : () -> ()
    %cst_24 = arith.constant 2.500000e-01 : f32
    %63 = vector.broadcast %cst_24 : f32 to vector<4x8x8xf32>
    %64 = arith.mulf %62, %63 : vector<4x8x8xf32>
    %65 = vector.broadcast %25 : vector<4x1x8xf32> to vector<4x8x8xf32>
    %66 = arith.addf %64, %65 : vector<4x8x8xf32>
    %cst_25 = arith.constant dense<0xFF800000> : vector<4x8xf32>
    %67 = vector.multi_reduction <maximumf>, %66, %cst_25 [2] : vector<4x8x8xf32> to vector<4x8xf32>
    %68 = vector.shape_cast %67 : vector<4x8xf32> to vector<4x8x1xf32>
    %69 = vector.broadcast %68 : vector<4x8x1xf32> to vector<4x8x8xf32>
    %70 = arith.subf %66, %69 : vector<4x8x8xf32>
    %71 = math.exp %70 : vector<4x8x8xf32>
    %cst_26 = arith.constant dense<0.000000e+00> : vector<4x8xf32>
    %72 = vector.multi_reduction <add>, %71, %cst_26 [2] : vector<4x8x8xf32> to vector<4x8xf32>
    %73 = vector.shape_cast %72 : vector<4x8xf32> to vector<4x8x1xf32>
    %74 = tpu.reciprocal %73 {approx = true} : vector<4x8x1xf32> -> vector<4x8x1xf32>
    %75 = vector.broadcast %74 : vector<4x8x1xf32> to vector<4x8x8xf32>
    %76 = arith.mulf %71, %75 : vector<4x8x8xf32>
    %77 = vector.extract_strided_slice %39 {offsets = [0, 0, 16], sizes = [4, 8, 16], strides = [1, 1, 1]} : vector<4x8x64xf32> to vector<4x8x16xf32>
    "tpu.trace_start"() <{level = 10 : i32, message = "bqk,bkd->bqd"}> : () -> ()
    %cst_27 = arith.constant dense<0.000000e+00> : vector<4x8x16xf32>
    %78 = tpu.matmul %76, %77, %cst_27 {dimension_numbers = #tpu.dot_dimension_numbers<[2], [1], [1], [2], [0, 0, 0, 1, 1, 2], [0], [0]>} : vector<4x8x8xf32>, vector<4x8x16xf32>, vector<4x8x16xf32> -> vector<4x8x16xf32>
    "tpu.trace_stop"() : () -> ()
    %79 = vector.shape_cast %78 : vector<4x8x16xf32> to vector<32x16xf32>
    %80 = vector.extract_strided_slice %35 {offsets = [0, 0, 32], sizes = [4, 8, 16], strides = [1, 1, 1]} : vector<4x8x64xf32> to vector<4x8x16xf32>
    %81 = vector.extract_strided_slice %37 {offsets = [0, 0, 32], sizes = [4, 8, 16], strides = [1, 1, 1]} : vector<4x8x64xf32> to vector<4x8x16xf32>
    "tpu.trace_start"() <{level = 10 : i32, message = "bqd,bkd->bqk"}> : () -> ()
    %cst_28 = arith.constant dense<0.000000e+00> : vector<4x8x8xf32>
    %82 = tpu.matmul %80, %81, %cst_28 {dimension_numbers = #tpu.dot_dimension_numbers<[2], [2], [1], [1], [0, 0, 0, 1, 1, 1], [0], [0]>} : vector<4x8x16xf32>, vector<4x8x16xf32>, vector<4x8x8xf32> -> vector<4x8x8xf32>
    "tpu.trace_stop"() : () -> ()
    %cst_29 = arith.constant 2.500000e-01 : f32
    %83 = vector.broadcast %cst_29 : f32 to vector<4x8x8xf32>
    %84 = arith.mulf %82, %83 : vector<4x8x8xf32>
    %85 = vector.broadcast %25 : vector<4x1x8xf32> to vector<4x8x8xf32>
    %86 = arith.addf %84, %85 : vector<4x8x8xf32>
    %cst_30 = arith.constant dense<0xFF800000> : vector<4x8xf32>
    %87 = vector.multi_reduction <maximumf>, %86, %cst_30 [2] : vector<4x8x8xf32> to vector<4x8xf32>
    %88 = vector.shape_cast %87 : vector<4x8xf32> to vector<4x8x1xf32>
    %89 = vector.broadcast %88 : vector<4x8x1xf32> to vector<4x8x8xf32>
    %90 = arith.subf %86, %89 : vector<4x8x8xf32>
    %91 = math.exp %90 : vector<4x8x8xf32>
    %cst_31 = arith.constant dense<0.000000e+00> : vector<4x8xf32>
    %92 = vector.multi_reduction <add>, %91, %cst_31 [2] : vector<4x8x8xf32> to vector<4x8xf32>
    %93 = vector.shape_cast %92 : vector<4x8xf32> to vector<4x8x1xf32>
    %94 = tpu.reciprocal %93 {approx = true} : vector<4x8x1xf32> -> vector<4x8x1xf32>
    %95 = vector.broadcast %94 : vector<4x8x1xf32> to vector<4x8x8xf32>
    %96 = arith.mulf %91, %95 : vector<4x8x8xf32>
    %97 = vector.extract_strided_slice %39 {offsets = [0, 0, 32], sizes = [4, 8, 16], strides = [1, 1, 1]} : vector<4x8x64xf32> to vector<4x8x16xf32>
    "tpu.trace_start"() <{level = 10 : i32, message = "bqk,bkd->bqd"}> : () -> ()
    %cst_32 = arith.constant dense<0.000000e+00> : vector<4x8x16xf32>
    %98 = tpu.matmul %96, %97, %cst_32 {dimension_numbers = #tpu.dot_dimension_numbers<[2], [1], [1], [2], [0, 0, 0, 1, 1, 2], [0], [0]>} : vector<4x8x8xf32>, vector<4x8x16xf32>, vector<4x8x16xf32> -> vector<4x8x16xf32>
    "tpu.trace_stop"() : () -> ()
    %99 = vector.shape_cast %98 : vector<4x8x16xf32> to vector<32x16xf32>
    %100 = vector.extract_strided_slice %35 {offsets = [0, 0, 48], sizes = [4, 8, 16], strides = [1, 1, 1]} : vector<4x8x64xf32> to vector<4x8x16xf32>
    %101 = vector.extract_strided_slice %37 {offsets = [0, 0, 48], sizes = [4, 8, 16], strides = [1, 1, 1]} : vector<4x8x64xf32> to vector<4x8x16xf32>
    "tpu.trace_start"() <{level = 10 : i32, message = "bqd,bkd->bqk"}> : () -> ()
    %cst_33 = arith.constant dense<0.000000e+00> : vector<4x8x8xf32>
    %102 = tpu.matmul %100, %101, %cst_33 {dimension_numbers = #tpu.dot_dimension_numbers<[2], [2], [1], [1], [0, 0, 0, 1, 1, 1], [0], [0]>} : vector<4x8x16xf32>, vector<4x8x16xf32>, vector<4x8x8xf32> -> vector<4x8x8xf32>
    "tpu.trace_stop"() : () -> ()
    %cst_34 = arith.constant 2.500000e-01 : f32
    %103 = vector.broadcast %cst_34 : f32 to vector<4x8x8xf32>
    %104 = arith.mulf %102, %103 : vector<4x8x8xf32>
    %105 = vector.broadcast %25 : vector<4x1x8xf32> to vector<4x8x8xf32>
    %106 = arith.addf %104, %105 : vector<4x8x8xf32>
    %cst_35 = arith.constant dense<0xFF800000> : vector<4x8xf32>
    %107 = vector.multi_reduction <maximumf>, %106, %cst_35 [2] : vector<4x8x8xf32> to vector<4x8xf32>
    %108 = vector.shape_cast %107 : vector<4x8xf32> to vector<4x8x1xf32>
    %109 = vector.broadcast %108 : vector<4x8x1xf32> to vector<4x8x8xf32>
    %110 = arith.subf %106, %109 : vector<4x8x8xf32>
    %111 = math.exp %110 : vector<4x8x8xf32>
    %cst_36 = arith.constant dense<0.000000e+00> : vector<4x8xf32>
    %112 = vector.multi_reduction <add>, %111, %cst_36 [2] : vector<4x8x8xf32> to vector<4x8xf32>
    %113 = vector.shape_cast %112 : vector<4x8xf32> to vector<4x8x1xf32>
    %114 = tpu.reciprocal %113 {approx = true} : vector<4x8x1xf32> -> vector<4x8x1xf32>
    %115 = vector.broadcast %114 : vector<4x8x1xf32> to vector<4x8x8xf32>
    %116 = arith.mulf %111, %115 : vector<4x8x8xf32>
    %117 = vector.extract_strided_slice %39 {offsets = [0, 0, 48], sizes = [4, 8, 16], strides = [1, 1, 1]} : vector<4x8x64xf32> to vector<4x8x16xf32>
    "tpu.trace_start"() <{level = 10 : i32, message = "bqk,bkd->bqd"}> : () -> ()
    %cst_37 = arith.constant dense<0.000000e+00> : vector<4x8x16xf32>
    %118 = tpu.matmul %116, %117, %cst_37 {dimension_numbers = #tpu.dot_dimension_numbers<[2], [1], [1], [2], [0, 0, 0, 1, 1, 2], [0], [0]>} : vector<4x8x8xf32>, vector<4x8x16xf32>, vector<4x8x16xf32> -> vector<4x8x16xf32>
    "tpu.trace_stop"() : () -> ()
    %119 = vector.shape_cast %118 : vector<4x8x16xf32> to vector<32x16xf32>
    %120 = tpu.concatenate %59, %79, %99, %119 in 1 : vector<32x16xf32>, vector<32x16xf32>, vector<32x16xf32>, vector<32x16xf32> -> vector<32x64xf32>
    %c0_38 = arith.constant 0 : index
    %c0_39 = arith.constant 0 : index
    %c256 = arith.constant 256 : index
    %121 = vector.load %arg3[%c0_38, %c0_39, %c256] : memref<2x64x512xf32, #tpu.memory_space<vmem>>, vector<1x64x64xf32>
    %122 = vector.shape_cast %121 : vector<1x64x64xf32> to vector<64x64xf32>
    %cst_40 = arith.constant dense<0.000000e+00> : vector<32x64xf32>
    %123 = tpu.matmul %120, %122, %cst_40 {dimension_numbers = #tpu.dot_dimension_numbers<[1], [0], [0], [1], [0, 0, 1, 1], [], []>} : vector<32x64xf32>, vector<64x64xf32>, vector<32x64xf32> -> vector<32x64xf32>
    %124 = vector.extract_strided_slice %27 {offsets = [1, 0], sizes = [1, 64], strides = [1, 1]} : vector<8x256xf32> to vector<1x64xf32>
    %125 = vector.broadcast %124 : vector<1x64xf32> to vector<32x64xf32>
    %126 = arith.addf %123, %125 : vector<32x64xf32>
    %127 = arith.addf %126, %24 : vector<32x64xf32>
    %128 = vector.extract_strided_slice %27 {offsets = [2, 0], sizes = [1, 64], strides = [1, 1]} : vector<8x256xf32> to vector<1x64xf32>
    %129 = vector.extract_strided_slice %27 {offsets = [3, 0], sizes = [1, 64], strides = [1, 1]} : vector<8x256xf32> to vector<1x64xf32>
    %cst_41 = arith.constant dense<0.000000e+00> : vector<32xf32>
    %130 = vector.multi_reduction <add>, %127, %cst_41 [1] : vector<32x64xf32> to vector<32xf32>
    %131 = vector.shape_cast %130 : vector<32xf32> to vector<32x1xf32>
    %cst_42 = arith.constant 6.400000e+01 : f32
    %132 = vector.broadcast %cst_42 : f32 to vector<32x1xf32>
    %133 = arith.divf %131, %132 : vector<32x1xf32>
    %134 = vector.broadcast %133 : vector<32x1xf32> to vector<32x64xf32>
    %135 = arith.subf %127, %134 : vector<32x64xf32>
    %136 = arith.mulf %135, %135 : vector<32x64xf32>
    %cst_43 = arith.constant dense<0.000000e+00> : vector<32xf32>
    %137 = vector.multi_reduction <add>, %136, %cst_43 [1] : vector<32x64xf32> to vector<32xf32>
    %138 = vector.shape_cast %137 : vector<32xf32> to vector<32x1xf32>
    %cst_44 = arith.constant 6.400000e+01 : f32
    %139 = vector.broadcast %cst_44 : f32 to vector<32x1xf32>
    %140 = arith.divf %138, %139 : vector<32x1xf32>
    %cst_45 = arith.constant 9.99999996E-13 : f32
    %141 = vector.broadcast %cst_45 : f32 to vector<32x1xf32>
    %142 = arith.addf %140, %141 : vector<32x1xf32>
    %143 = math.rsqrt %142 : vector<32x1xf32>
    %144 = vector.broadcast %143 : vector<32x1xf32> to vector<32x64xf32>
    %145 = arith.mulf %135, %144 : vector<32x64xf32>
    %146 = vector.broadcast %128 : vector<1x64xf32> to vector<32x64xf32>
    %147 = arith.mulf %145, %146 : vector<32x64xf32>
    %148 = vector.broadcast %129 : vector<1x64xf32> to vector<32x64xf32>
    %149 = arith.addf %147, %148 : vector<32x64xf32>
    %c0_46 = arith.constant 0 : index
    %c0_47 = arith.constant 0 : index
    %c384 = arith.constant 384 : index
    %150 = vector.load %arg3[%c0_46, %c0_47, %c384] : memref<2x64x512xf32, #tpu.memory_space<vmem>>, vector<1x64x128xf32>
    %151 = vector.shape_cast %150 : vector<1x64x128xf32> to vector<64x128xf32>
    %cst_48 = arith.constant dense<0.000000e+00> : vector<32x128xf32>
    %152 = tpu.matmul %149, %151, %cst_48 {dimension_numbers = #tpu.dot_dimension_numbers<[1], [0], [0], [1], [0, 0, 1, 1], [], []>} : vector<32x64xf32>, vector<64x128xf32>, vector<32x128xf32> -> vector<32x128xf32>
    %153 = vector.extract_strided_slice %27 {offsets = [4, 0], sizes = [1, 128], strides = [1, 1]} : vector<8x256xf32> to vector<1x128xf32>
    %154 = vector.broadcast %153 : vector<1x128xf32> to vector<32x128xf32>
    %155 = arith.addf %152, %154 : vector<32x128xf32>
    %cst_49 = arith.constant 5.000000e-01 : f32
    %156 = vector.broadcast %cst_49 : f32 to vector<32x128xf32>
    %157 = arith.mulf %156, %155 : vector<32x128xf32>
    %cst_50 = arith.constant 4.471500e-02 : f32
    %158 = vector.broadcast %cst_50 : f32 to vector<32x128xf32>
    %159 = arith.mulf %158, %155 : vector<32x128xf32>
    %160 = arith.mulf %159, %155 : vector<32x128xf32>
    %161 = arith.mulf %160, %155 : vector<32x128xf32>
    %162 = arith.addf %155, %161 : vector<32x128xf32>
    %cst_51 = arith.constant 0.797884583 : f32
    %163 = vector.broadcast %cst_51 : f32 to vector<32x128xf32>
    %164 = arith.mulf %163, %162 : vector<32x128xf32>
    %165 = math.tanh %164 : vector<32x128xf32>
    %cst_52 = arith.constant 1.000000e+00 : f32
    %166 = vector.broadcast %cst_52 : f32 to vector<32x128xf32>
    %167 = arith.addf %166, %165 : vector<32x128xf32>
    %168 = arith.mulf %157, %167 : vector<32x128xf32>
    %c0_53 = arith.constant 0 : index
    %c0_54 = arith.constant 0 : index
    %c0_55 = arith.constant 0 : index
    %169 = vector.load %arg4[%c0_53, %c0_54, %c0_55] : memref<2x128x64xf32, #tpu.memory_space<vmem>>, vector<1x128x64xf32>
    %170 = vector.shape_cast %169 : vector<1x128x64xf32> to vector<128x64xf32>
    %cst_56 = arith.constant dense<0.000000e+00> : vector<32x64xf32>
    %171 = tpu.matmul %168, %170, %cst_56 {dimension_numbers = #tpu.dot_dimension_numbers<[1], [0], [0], [1], [0, 0, 1, 1], [], []>} : vector<32x128xf32>, vector<128x64xf32>, vector<32x64xf32> -> vector<32x64xf32>
    %172 = vector.extract_strided_slice %27 {offsets = [5, 0], sizes = [1, 64], strides = [1, 1]} : vector<8x256xf32> to vector<1x64xf32>
    %173 = vector.broadcast %172 : vector<1x64xf32> to vector<32x64xf32>
    %174 = arith.addf %171, %173 : vector<32x64xf32>
    %175 = arith.addf %174, %149 : vector<32x64xf32>
    %176 = vector.extract_strided_slice %27 {offsets = [6, 0], sizes = [1, 64], strides = [1, 1]} : vector<8x256xf32> to vector<1x64xf32>
    %177 = vector.extract_strided_slice %27 {offsets = [7, 0], sizes = [1, 64], strides = [1, 1]} : vector<8x256xf32> to vector<1x64xf32>
    %cst_57 = arith.constant dense<0.000000e+00> : vector<32xf32>
    %178 = vector.multi_reduction <add>, %175, %cst_57 [1] : vector<32x64xf32> to vector<32xf32>
    %179 = vector.shape_cast %178 : vector<32xf32> to vector<32x1xf32>
    %cst_58 = arith.constant 6.400000e+01 : f32
    %180 = vector.broadcast %cst_58 : f32 to vector<32x1xf32>
    %181 = arith.divf %179, %180 : vector<32x1xf32>
    %182 = vector.broadcast %181 : vector<32x1xf32> to vector<32x64xf32>
    %183 = arith.subf %175, %182 : vector<32x64xf32>
    %184 = arith.mulf %183, %183 : vector<32x64xf32>
    %cst_59 = arith.constant dense<0.000000e+00> : vector<32xf32>
    %185 = vector.multi_reduction <add>, %184, %cst_59 [1] : vector<32x64xf32> to vector<32xf32>
    %186 = vector.shape_cast %185 : vector<32xf32> to vector<32x1xf32>
    %cst_60 = arith.constant 6.400000e+01 : f32
    %187 = vector.broadcast %cst_60 : f32 to vector<32x1xf32>
    %188 = arith.divf %186, %187 : vector<32x1xf32>
    %cst_61 = arith.constant 9.99999996E-13 : f32
    %189 = vector.broadcast %cst_61 : f32 to vector<32x1xf32>
    %190 = arith.addf %188, %189 : vector<32x1xf32>
    %191 = math.rsqrt %190 : vector<32x1xf32>
    %192 = vector.broadcast %191 : vector<32x1xf32> to vector<32x64xf32>
    %193 = arith.mulf %183, %192 : vector<32x64xf32>
    %194 = vector.broadcast %176 : vector<1x64xf32> to vector<32x64xf32>
    %195 = arith.mulf %193, %194 : vector<32x64xf32>
    %196 = vector.broadcast %177 : vector<1x64xf32> to vector<32x64xf32>
    %197 = arith.addf %195, %196 : vector<32x64xf32>
    %c1 = arith.constant 1 : index
    %c0_62 = arith.constant 0 : index
    %c0_63 = arith.constant 0 : index
    %198 = vector.load %arg5[%c1, %c0_62, %c0_63] : memref<2x8x256xf32, #tpu.memory_space<vmem>>, vector<1x8x256xf32>
    %199 = vector.shape_cast %198 : vector<1x8x256xf32> to vector<8x256xf32>
    %c1_64 = arith.constant 1 : index
    %c0_65 = arith.constant 0 : index
    %c0_66 = arith.constant 0 : index
    %200 = vector.load %arg3[%c1_64, %c0_65, %c0_66] : memref<2x64x512xf32, #tpu.memory_space<vmem>>, vector<1x64x192xf32>
    %201 = vector.shape_cast %200 : vector<1x64x192xf32> to vector<64x192xf32>
    %cst_67 = arith.constant dense<0.000000e+00> : vector<32x192xf32>
    %202 = tpu.matmul %197, %201, %cst_67 {dimension_numbers = #tpu.dot_dimension_numbers<[1], [0], [0], [1], [0, 0, 1, 1], [], []>} : vector<32x64xf32>, vector<64x192xf32>, vector<32x192xf32> -> vector<32x192xf32>
    %203 = vector.extract_strided_slice %199 {offsets = [0, 0], sizes = [1, 192], strides = [1, 1]} : vector<8x256xf32> to vector<1x192xf32>
    %204 = vector.broadcast %203 : vector<1x192xf32> to vector<32x192xf32>
    %205 = arith.addf %202, %204 : vector<32x192xf32>
    %206 = vector.extract_strided_slice %205 {offsets = [0, 0], sizes = [32, 64], strides = [1, 1]} : vector<32x192xf32> to vector<32x64xf32>
    %207 = vector.shape_cast %206 : vector<32x64xf32> to vector<4x8x64xf32>
    %208 = vector.extract_strided_slice %205 {offsets = [0, 64], sizes = [32, 64], strides = [1, 1]} : vector<32x192xf32> to vector<32x64xf32>
    %209 = vector.shape_cast %208 : vector<32x64xf32> to vector<4x8x64xf32>
    %210 = vector.extract_strided_slice %205 {offsets = [0, 128], sizes = [32, 64], strides = [1, 1]} : vector<32x192xf32> to vector<32x64xf32>
    %211 = vector.shape_cast %210 : vector<32x64xf32> to vector<4x8x64xf32>
    %212 = vector.extract_strided_slice %207 {offsets = [0, 0, 0], sizes = [4, 8, 16], strides = [1, 1, 1]} : vector<4x8x64xf32> to vector<4x8x16xf32>
    %213 = vector.extract_strided_slice %209 {offsets = [0, 0, 0], sizes = [4, 8, 16], strides = [1, 1, 1]} : vector<4x8x64xf32> to vector<4x8x16xf32>
    "tpu.trace_start"() <{level = 10 : i32, message = "bqd,bkd->bqk"}> : () -> ()
    %cst_68 = arith.constant dense<0.000000e+00> : vector<4x8x8xf32>
    %214 = tpu.matmul %212, %213, %cst_68 {dimension_numbers = #tpu.dot_dimension_numbers<[2], [2], [1], [1], [0, 0, 0, 1, 1, 1], [0], [0]>} : vector<4x8x16xf32>, vector<4x8x16xf32>, vector<4x8x8xf32> -> vector<4x8x8xf32>
    "tpu.trace_stop"() : () -> ()
    %cst_69 = arith.constant 2.500000e-01 : f32
    %215 = vector.broadcast %cst_69 : f32 to vector<4x8x8xf32>
    %216 = arith.mulf %214, %215 : vector<4x8x8xf32>
    %217 = vector.broadcast %25 : vector<4x1x8xf32> to vector<4x8x8xf32>
    %218 = arith.addf %216, %217 : vector<4x8x8xf32>
    %cst_70 = arith.constant dense<0xFF800000> : vector<4x8xf32>
    %219 = vector.multi_reduction <maximumf>, %218, %cst_70 [2] : vector<4x8x8xf32> to vector<4x8xf32>
    %220 = vector.shape_cast %219 : vector<4x8xf32> to vector<4x8x1xf32>
    %221 = vector.broadcast %220 : vector<4x8x1xf32> to vector<4x8x8xf32>
    %222 = arith.subf %218, %221 : vector<4x8x8xf32>
    %223 = math.exp %222 : vector<4x8x8xf32>
    %cst_71 = arith.constant dense<0.000000e+00> : vector<4x8xf32>
    %224 = vector.multi_reduction <add>, %223, %cst_71 [2] : vector<4x8x8xf32> to vector<4x8xf32>
    %225 = vector.shape_cast %224 : vector<4x8xf32> to vector<4x8x1xf32>
    %226 = tpu.reciprocal %225 {approx = true} : vector<4x8x1xf32> -> vector<4x8x1xf32>
    %227 = vector.broadcast %226 : vector<4x8x1xf32> to vector<4x8x8xf32>
    %228 = arith.mulf %223, %227 : vector<4x8x8xf32>
    %229 = vector.extract_strided_slice %211 {offsets = [0, 0, 0], sizes = [4, 8, 16], strides = [1, 1, 1]} : vector<4x8x64xf32> to vector<4x8x16xf32>
    "tpu.trace_start"() <{level = 10 : i32, message = "bqk,bkd->bqd"}> : () -> ()
    %cst_72 = arith.constant dense<0.000000e+00> : vector<4x8x16xf32>
    %230 = tpu.matmul %228, %229, %cst_72 {dimension_numbers = #tpu.dot_dimension_numbers<[2], [1], [1], [2], [0, 0, 0, 1, 1, 2], [0], [0]>} : vector<4x8x8xf32>, vector<4x8x16xf32>, vector<4x8x16xf32> -> vector<4x8x16xf32>
    "tpu.trace_stop"() : () -> ()
    %231 = vector.shape_cast %230 : vector<4x8x16xf32> to vector<32x16xf32>
    %232 = vector.extract_strided_slice %207 {offsets = [0, 0, 16], sizes = [4, 8, 16], strides = [1, 1, 1]} : vector<4x8x64xf32> to vector<4x8x16xf32>
    %233 = vector.extract_strided_slice %209 {offsets = [0, 0, 16], sizes = [4, 8, 16], strides = [1, 1, 1]} : vector<4x8x64xf32> to vector<4x8x16xf32>
    "tpu.trace_start"() <{level = 10 : i32, message = "bqd,bkd->bqk"}> : () -> ()
    %cst_73 = arith.constant dense<0.000000e+00> : vector<4x8x8xf32>
    %234 = tpu.matmul %232, %233, %cst_73 {dimension_numbers = #tpu.dot_dimension_numbers<[2], [2], [1], [1], [0, 0, 0, 1, 1, 1], [0], [0]>} : vector<4x8x16xf32>, vector<4x8x16xf32>, vector<4x8x8xf32> -> vector<4x8x8xf32>
    "tpu.trace_stop"() : () -> ()
    %cst_74 = arith.constant 2.500000e-01 : f32
    %235 = vector.broadcast %cst_74 : f32 to vector<4x8x8xf32>
    %236 = arith.mulf %234, %235 : vector<4x8x8xf32>
    %237 = vector.broadcast %25 : vector<4x1x8xf32> to vector<4x8x8xf32>
    %238 = arith.addf %236, %237 : vector<4x8x8xf32>
    %cst_75 = arith.constant dense<0xFF800000> : vector<4x8xf32>
    %239 = vector.multi_reduction <maximumf>, %238, %cst_75 [2] : vector<4x8x8xf32> to vector<4x8xf32>
    %240 = vector.shape_cast %239 : vector<4x8xf32> to vector<4x8x1xf32>
    %241 = vector.broadcast %240 : vector<4x8x1xf32> to vector<4x8x8xf32>
    %242 = arith.subf %238, %241 : vector<4x8x8xf32>
    %243 = math.exp %242 : vector<4x8x8xf32>
    %cst_76 = arith.constant dense<0.000000e+00> : vector<4x8xf32>
    %244 = vector.multi_reduction <add>, %243, %cst_76 [2] : vector<4x8x8xf32> to vector<4x8xf32>
    %245 = vector.shape_cast %244 : vector<4x8xf32> to vector<4x8x1xf32>
    %246 = tpu.reciprocal %245 {approx = true} : vector<4x8x1xf32> -> vector<4x8x1xf32>
    %247 = vector.broadcast %246 : vector<4x8x1xf32> to vector<4x8x8xf32>
    %248 = arith.mulf %243, %247 : vector<4x8x8xf32>
    %249 = vector.extract_strided_slice %211 {offsets = [0, 0, 16], sizes = [4, 8, 16], strides = [1, 1, 1]} : vector<4x8x64xf32> to vector<4x8x16xf32>
    "tpu.trace_start"() <{level = 10 : i32, message = "bqk,bkd->bqd"}> : () -> ()
    %cst_77 = arith.constant dense<0.000000e+00> : vector<4x8x16xf32>
    %250 = tpu.matmul %248, %249, %cst_77 {dimension_numbers = #tpu.dot_dimension_numbers<[2], [1], [1], [2], [0, 0, 0, 1, 1, 2], [0], [0]>} : vector<4x8x8xf32>, vector<4x8x16xf32>, vector<4x8x16xf32> -> vector<4x8x16xf32>
    "tpu.trace_stop"() : () -> ()
    %251 = vector.shape_cast %250 : vector<4x8x16xf32> to vector<32x16xf32>
    %252 = vector.extract_strided_slice %207 {offsets = [0, 0, 32], sizes = [4, 8, 16], strides = [1, 1, 1]} : vector<4x8x64xf32> to vector<4x8x16xf32>
    %253 = vector.extract_strided_slice %209 {offsets = [0, 0, 32], sizes = [4, 8, 16], strides = [1, 1, 1]} : vector<4x8x64xf32> to vector<4x8x16xf32>
    "tpu.trace_start"() <{level = 10 : i32, message = "bqd,bkd->bqk"}> : () -> ()
    %cst_78 = arith.constant dense<0.000000e+00> : vector<4x8x8xf32>
    %254 = tpu.matmul %252, %253, %cst_78 {dimension_numbers = #tpu.dot_dimension_numbers<[2], [2], [1], [1], [0, 0, 0, 1, 1, 1], [0], [0]>} : vector<4x8x16xf32>, vector<4x8x16xf32>, vector<4x8x8xf32> -> vector<4x8x8xf32>
    "tpu.trace_stop"() : () -> ()
    %cst_79 = arith.constant 2.500000e-01 : f32
    %255 = vector.broadcast %cst_79 : f32 to vector<4x8x8xf32>
    %256 = arith.mulf %254, %255 : vector<4x8x8xf32>
    %257 = vector.broadcast %25 : vector<4x1x8xf32> to vector<4x8x8xf32>
    %258 = arith.addf %256, %257 : vector<4x8x8xf32>
    %cst_80 = arith.constant dense<0xFF800000> : vector<4x8xf32>
    %259 = vector.multi_reduction <maximumf>, %258, %cst_80 [2] : vector<4x8x8xf32> to vector<4x8xf32>
    %260 = vector.shape_cast %259 : vector<4x8xf32> to vector<4x8x1xf32>
    %261 = vector.broadcast %260 : vector<4x8x1xf32> to vector<4x8x8xf32>
    %262 = arith.subf %258, %261 : vector<4x8x8xf32>
    %263 = math.exp %262 : vector<4x8x8xf32>
    %cst_81 = arith.constant dense<0.000000e+00> : vector<4x8xf32>
    %264 = vector.multi_reduction <add>, %263, %cst_81 [2] : vector<4x8x8xf32> to vector<4x8xf32>
    %265 = vector.shape_cast %264 : vector<4x8xf32> to vector<4x8x1xf32>
    %266 = tpu.reciprocal %265 {approx = true} : vector<4x8x1xf32> -> vector<4x8x1xf32>
    %267 = vector.broadcast %266 : vector<4x8x1xf32> to vector<4x8x8xf32>
    %268 = arith.mulf %263, %267 : vector<4x8x8xf32>
    %269 = vector.extract_strided_slice %211 {offsets = [0, 0, 32], sizes = [4, 8, 16], strides = [1, 1, 1]} : vector<4x8x64xf32> to vector<4x8x16xf32>
    "tpu.trace_start"() <{level = 10 : i32, message = "bqk,bkd->bqd"}> : () -> ()
    %cst_82 = arith.constant dense<0.000000e+00> : vector<4x8x16xf32>
    %270 = tpu.matmul %268, %269, %cst_82 {dimension_numbers = #tpu.dot_dimension_numbers<[2], [1], [1], [2], [0, 0, 0, 1, 1, 2], [0], [0]>} : vector<4x8x8xf32>, vector<4x8x16xf32>, vector<4x8x16xf32> -> vector<4x8x16xf32>
    "tpu.trace_stop"() : () -> ()
    %271 = vector.shape_cast %270 : vector<4x8x16xf32> to vector<32x16xf32>
    %272 = vector.extract_strided_slice %207 {offsets = [0, 0, 48], sizes = [4, 8, 16], strides = [1, 1, 1]} : vector<4x8x64xf32> to vector<4x8x16xf32>
    %273 = vector.extract_strided_slice %209 {offsets = [0, 0, 48], sizes = [4, 8, 16], strides = [1, 1, 1]} : vector<4x8x64xf32> to vector<4x8x16xf32>
    "tpu.trace_start"() <{level = 10 : i32, message = "bqd,bkd->bqk"}> : () -> ()
    %cst_83 = arith.constant dense<0.000000e+00> : vector<4x8x8xf32>
    %274 = tpu.matmul %272, %273, %cst_83 {dimension_numbers = #tpu.dot_dimension_numbers<[2], [2], [1], [1], [0, 0, 0, 1, 1, 1], [0], [0]>} : vector<4x8x16xf32>, vector<4x8x16xf32>, vector<4x8x8xf32> -> vector<4x8x8xf32>
    "tpu.trace_stop"() : () -> ()
    %cst_84 = arith.constant 2.500000e-01 : f32
    %275 = vector.broadcast %cst_84 : f32 to vector<4x8x8xf32>
    %276 = arith.mulf %274, %275 : vector<4x8x8xf32>
    %277 = vector.broadcast %25 : vector<4x1x8xf32> to vector<4x8x8xf32>
    %278 = arith.addf %276, %277 : vector<4x8x8xf32>
    %cst_85 = arith.constant dense<0xFF800000> : vector<4x8xf32>
    %279 = vector.multi_reduction <maximumf>, %278, %cst_85 [2] : vector<4x8x8xf32> to vector<4x8xf32>
    %280 = vector.shape_cast %279 : vector<4x8xf32> to vector<4x8x1xf32>
    %281 = vector.broadcast %280 : vector<4x8x1xf32> to vector<4x8x8xf32>
    %282 = arith.subf %278, %281 : vector<4x8x8xf32>
    %283 = math.exp %282 : vector<4x8x8xf32>
    %cst_86 = arith.constant dense<0.000000e+00> : vector<4x8xf32>
    %284 = vector.multi_reduction <add>, %283, %cst_86 [2] : vector<4x8x8xf32> to vector<4x8xf32>
    %285 = vector.shape_cast %284 : vector<4x8xf32> to vector<4x8x1xf32>
    %286 = tpu.reciprocal %285 {approx = true} : vector<4x8x1xf32> -> vector<4x8x1xf32>
    %287 = vector.broadcast %286 : vector<4x8x1xf32> to vector<4x8x8xf32>
    %288 = arith.mulf %283, %287 : vector<4x8x8xf32>
    %289 = vector.extract_strided_slice %211 {offsets = [0, 0, 48], sizes = [4, 8, 16], strides = [1, 1, 1]} : vector<4x8x64xf32> to vector<4x8x16xf32>
    "tpu.trace_start"() <{level = 10 : i32, message = "bqk,bkd->bqd"}> : () -> ()
    %cst_87 = arith.constant dense<0.000000e+00> : vector<4x8x16xf32>
    %290 = tpu.matmul %288, %289, %cst_87 {dimension_numbers = #tpu.dot_dimension_numbers<[2], [1], [1], [2], [0, 0, 0, 1, 1, 2], [0], [0]>} : vector<4x8x8xf32>, vector<4x8x16xf32>, vector<4x8x16xf32> -> vector<4x8x16xf32>
    "tpu.trace_stop"() : () -> ()
    %291 = vector.shape_cast %290 : vector<4x8x16xf32> to vector<32x16xf32>
    %292 = tpu.concatenate %231, %251, %271, %291 in 1 : vector<32x16xf32>, vector<32x16xf32>, vector<32x16xf32>, vector<32x16xf32> -> vector<32x64xf32>
    %c1_88 = arith.constant 1 : index
    %c0_89 = arith.constant 0 : index
    %c256_90 = arith.constant 256 : index
    %293 = vector.load %arg3[%c1_88, %c0_89, %c256_90] : memref<2x64x512xf32, #tpu.memory_space<vmem>>, vector<1x64x64xf32>
    %294 = vector.shape_cast %293 : vector<1x64x64xf32> to vector<64x64xf32>
    %cst_91 = arith.constant dense<0.000000e+00> : vector<32x64xf32>
    %295 = tpu.matmul %292, %294, %cst_91 {dimension_numbers = #tpu.dot_dimension_numbers<[1], [0], [0], [1], [0, 0, 1, 1], [], []>} : vector<32x64xf32>, vector<64x64xf32>, vector<32x64xf32> -> vector<32x64xf32>
    %296 = vector.extract_strided_slice %199 {offsets = [1, 0], sizes = [1, 64], strides = [1, 1]} : vector<8x256xf32> to vector<1x64xf32>
    %297 = vector.broadcast %296 : vector<1x64xf32> to vector<32x64xf32>
    %298 = arith.addf %295, %297 : vector<32x64xf32>
    %299 = arith.addf %298, %197 : vector<32x64xf32>
    %300 = vector.extract_strided_slice %199 {offsets = [2, 0], sizes = [1, 64], strides = [1, 1]} : vector<8x256xf32> to vector<1x64xf32>
    %301 = vector.extract_strided_slice %199 {offsets = [3, 0], sizes = [1, 64], strides = [1, 1]} : vector<8x256xf32> to vector<1x64xf32>
    %cst_92 = arith.constant dense<0.000000e+00> : vector<32xf32>
    %302 = vector.multi_reduction <add>, %299, %cst_92 [1] : vector<32x64xf32> to vector<32xf32>
    %303 = vector.shape_cast %302 : vector<32xf32> to vector<32x1xf32>
    %cst_93 = arith.constant 6.400000e+01 : f32
    %304 = vector.broadcast %cst_93 : f32 to vector<32x1xf32>
    %305 = arith.divf %303, %304 : vector<32x1xf32>
    %306 = vector.broadcast %305 : vector<32x1xf32> to vector<32x64xf32>
    %307 = arith.subf %299, %306 : vector<32x64xf32>
    %308 = arith.mulf %307, %307 : vector<32x64xf32>
    %cst_94 = arith.constant dense<0.000000e+00> : vector<32xf32>
    %309 = vector.multi_reduction <add>, %308, %cst_94 [1] : vector<32x64xf32> to vector<32xf32>
    %310 = vector.shape_cast %309 : vector<32xf32> to vector<32x1xf32>
    %cst_95 = arith.constant 6.400000e+01 : f32
    %311 = vector.broadcast %cst_95 : f32 to vector<32x1xf32>
    %312 = arith.divf %310, %311 : vector<32x1xf32>
    %cst_96 = arith.constant 9.99999996E-13 : f32
    %313 = vector.broadcast %cst_96 : f32 to vector<32x1xf32>
    %314 = arith.addf %312, %313 : vector<32x1xf32>
    %315 = math.rsqrt %314 : vector<32x1xf32>
    %316 = vector.broadcast %315 : vector<32x1xf32> to vector<32x64xf32>
    %317 = arith.mulf %307, %316 : vector<32x64xf32>
    %318 = vector.broadcast %300 : vector<1x64xf32> to vector<32x64xf32>
    %319 = arith.mulf %317, %318 : vector<32x64xf32>
    %320 = vector.broadcast %301 : vector<1x64xf32> to vector<32x64xf32>
    %321 = arith.addf %319, %320 : vector<32x64xf32>
    %c1_97 = arith.constant 1 : index
    %c0_98 = arith.constant 0 : index
    %c384_99 = arith.constant 384 : index
    %322 = vector.load %arg3[%c1_97, %c0_98, %c384_99] : memref<2x64x512xf32, #tpu.memory_space<vmem>>, vector<1x64x128xf32>
    %323 = vector.shape_cast %322 : vector<1x64x128xf32> to vector<64x128xf32>
    %cst_100 = arith.constant dense<0.000000e+00> : vector<32x128xf32>
    %324 = tpu.matmul %321, %323, %cst_100 {dimension_numbers = #tpu.dot_dimension_numbers<[1], [0], [0], [1], [0, 0, 1, 1], [], []>} : vector<32x64xf32>, vector<64x128xf32>, vector<32x128xf32> -> vector<32x128xf32>
    %325 = vector.extract_strided_slice %199 {offsets = [4, 0], sizes = [1, 128], strides = [1, 1]} : vector<8x256xf32> to vector<1x128xf32>
    %326 = vector.broadcast %325 : vector<1x128xf32> to vector<32x128xf32>
    %327 = arith.addf %324, %326 : vector<32x128xf32>
    %cst_101 = arith.constant 5.000000e-01 : f32
    %328 = vector.broadcast %cst_101 : f32 to vector<32x128xf32>
    %329 = arith.mulf %328, %327 : vector<32x128xf32>
    %cst_102 = arith.constant 4.471500e-02 : f32
    %330 = vector.broadcast %cst_102 : f32 to vector<32x128xf32>
    %331 = arith.mulf %330, %327 : vector<32x128xf32>
    %332 = arith.mulf %331, %327 : vector<32x128xf32>
    %333 = arith.mulf %332, %327 : vector<32x128xf32>
    %334 = arith.addf %327, %333 : vector<32x128xf32>
    %cst_103 = arith.constant 0.797884583 : f32
    %335 = vector.broadcast %cst_103 : f32 to vector<32x128xf32>
    %336 = arith.mulf %335, %334 : vector<32x128xf32>
    %337 = math.tanh %336 : vector<32x128xf32>
    %cst_104 = arith.constant 1.000000e+00 : f32
    %338 = vector.broadcast %cst_104 : f32 to vector<32x128xf32>
    %339 = arith.addf %338, %337 : vector<32x128xf32>
    %340 = arith.mulf %329, %339 : vector<32x128xf32>
    %c1_105 = arith.constant 1 : index
    %c0_106 = arith.constant 0 : index
    %c0_107 = arith.constant 0 : index
    %341 = vector.load %arg4[%c1_105, %c0_106, %c0_107] : memref<2x128x64xf32, #tpu.memory_space<vmem>>, vector<1x128x64xf32>
    %342 = vector.shape_cast %341 : vector<1x128x64xf32> to vector<128x64xf32>
    %cst_108 = arith.constant dense<0.000000e+00> : vector<32x64xf32>
    %343 = tpu.matmul %340, %342, %cst_108 {dimension_numbers = #tpu.dot_dimension_numbers<[1], [0], [0], [1], [0, 0, 1, 1], [], []>} : vector<32x128xf32>, vector<128x64xf32>, vector<32x64xf32> -> vector<32x64xf32>
    %344 = vector.extract_strided_slice %199 {offsets = [5, 0], sizes = [1, 64], strides = [1, 1]} : vector<8x256xf32> to vector<1x64xf32>
    %345 = vector.broadcast %344 : vector<1x64xf32> to vector<32x64xf32>
    %346 = arith.addf %343, %345 : vector<32x64xf32>
    %347 = arith.addf %346, %321 : vector<32x64xf32>
    %348 = vector.extract_strided_slice %199 {offsets = [6, 0], sizes = [1, 64], strides = [1, 1]} : vector<8x256xf32> to vector<1x64xf32>
    %349 = vector.extract_strided_slice %199 {offsets = [7, 0], sizes = [1, 64], strides = [1, 1]} : vector<8x256xf32> to vector<1x64xf32>
    %cst_109 = arith.constant dense<0.000000e+00> : vector<32xf32>
    %350 = vector.multi_reduction <add>, %347, %cst_109 [1] : vector<32x64xf32> to vector<32xf32>
    %351 = vector.shape_cast %350 : vector<32xf32> to vector<32x1xf32>
    %cst_110 = arith.constant 6.400000e+01 : f32
    %352 = vector.broadcast %cst_110 : f32 to vector<32x1xf32>
    %353 = arith.divf %351, %352 : vector<32x1xf32>
    %354 = vector.broadcast %353 : vector<32x1xf32> to vector<32x64xf32>
    %355 = arith.subf %347, %354 : vector<32x64xf32>
    %356 = arith.mulf %355, %355 : vector<32x64xf32>
    %cst_111 = arith.constant dense<0.000000e+00> : vector<32xf32>
    %357 = vector.multi_reduction <add>, %356, %cst_111 [1] : vector<32x64xf32> to vector<32xf32>
    %358 = vector.shape_cast %357 : vector<32xf32> to vector<32x1xf32>
    %cst_112 = arith.constant 6.400000e+01 : f32
    %359 = vector.broadcast %cst_112 : f32 to vector<32x1xf32>
    %360 = arith.divf %358, %359 : vector<32x1xf32>
    %cst_113 = arith.constant 9.99999996E-13 : f32
    %361 = vector.broadcast %cst_113 : f32 to vector<32x1xf32>
    %362 = arith.addf %360, %361 : vector<32x1xf32>
    %363 = math.rsqrt %362 : vector<32x1xf32>
    %364 = vector.broadcast %363 : vector<32x1xf32> to vector<32x64xf32>
    %365 = arith.mulf %355, %364 : vector<32x64xf32>
    %366 = vector.broadcast %348 : vector<1x64xf32> to vector<32x64xf32>
    %367 = arith.mulf %365, %366 : vector<32x64xf32>
    %368 = vector.broadcast %349 : vector<1x64xf32> to vector<32x64xf32>
    %369 = arith.addf %367, %368 : vector<32x64xf32>
    %370 = vector.shape_cast %369 : vector<32x64xf32> to vector<4x8x64xf32>
    %371 = vector.extract_strided_slice %370 {offsets = [0, 0, 0], sizes = [4, 1, 64], strides = [1, 1, 1]} : vector<4x8x64xf32> to vector<4x1x64xf32>
    %372 = vector.shape_cast %371 : vector<4x1x64xf32> to vector<4x64xf32>
    %c0_114 = arith.constant 0 : index
    %c0_115 = arith.constant 0 : index
    %373 = vector.load %arg6[%c0_114, %c0_115] : memref<64x256xf32, #tpu.memory_space<vmem>>, vector<64x64xf32>
    %cst_116 = arith.constant dense<0.000000e+00> : vector<4x64xf32>
    %374 = tpu.matmul %372, %373, %cst_116 {dimension_numbers = #tpu.dot_dimension_numbers<[1], [0], [0], [1], [0, 0, 1, 1], [], []>} : vector<4x64xf32>, vector<64x64xf32>, vector<4x64xf32> -> vector<4x64xf32>
    %375 = vector.extract_strided_slice %0 {offsets = [2, 0], sizes = [1, 64], strides = [1, 1]} : vector<4x128xf32> to vector<1x64xf32>
    %376 = vector.broadcast %375 : vector<1x64xf32> to vector<4x64xf32>
    %377 = arith.addf %374, %376 : vector<4x64xf32>
    %378 = math.tanh %377 : vector<4x64xf32>
    %c0_117 = arith.constant 0 : index
    %c128 = arith.constant 128 : index
    %379 = vector.load %arg6[%c0_117, %c128] : memref<64x256xf32, #tpu.memory_space<vmem>>, vector<64x128xf32>
    %cst_118 = arith.constant dense<0.000000e+00> : vector<4x128xf32>
    %380 = tpu.matmul %378, %379, %cst_118 {dimension_numbers = #tpu.dot_dimension_numbers<[1], [0], [0], [1], [0, 0, 1, 1], [], []>} : vector<4x64xf32>, vector<64x128xf32>, vector<4x128xf32> -> vector<4x128xf32>
    %381 = vector.extract_strided_slice %0 {offsets = [3, 0], sizes = [1, 128], strides = [1, 1]} : vector<4x128xf32> to vector<1x128xf32>
    %382 = vector.broadcast %381 : vector<1x128xf32> to vector<4x128xf32>
    %383 = arith.addf %380, %382 : vector<4x128xf32>
    %c0_119 = arith.constant 0 : index
    %c0_120 = arith.constant 0 : index
    %c0_121 = arith.constant 0 : index
    %384 = vector.load %arg8[%c0_119, %c0_120, %c0_121] : memref<1x4x128xf32, #tpu.memory_space<vmem>>, vector<1x4x128xf32>
    %385 = vector.shape_cast %384 : vector<1x4x128xf32> to vector<4x128xf32>
    %386 = vector.shape_cast %383 : vector<4x128xf32> to vector<1x4x128xf32>
    tpu.vector_store %arg8[%c0_119, %c0_120, %c0_121], %386 {strides = array<i32>} : memref<1x4x128xf32, #tpu.memory_space<vmem>>, vector<1x4x128xf32>,
    return
  }
  func.func @transform_0(%arg0: i32) -> (i32, i32, i32) {
    %c0_i32 = arith.constant 0 : i32
    %c0_i32_0 = arith.constant 0 : i32
    %c0_i32_1 = arith.constant 0 : i32
    return %arg0, %c0_i32, %c0_i32_0 : i32, i32, i32
  }
  func.func @transform_1(%arg0: i32) -> (i32, i32, i32) {
    %c0_i32 = arith.constant 0 : i32
    %c0_i32_0 = arith.constant 0 : i32
    %c0_i32_1 = arith.constant 0 : i32
    return %arg0, %c0_i32, %c0_i32_0 : i32, i32, i32
  }
  func.func @transform_2(%arg0: i32) -> (i32, i32, i32) {
    %c0_i32 = arith.constant 0 : i32
    %c0_i32_0 = arith.constant 0 : i32
    %c0_i32_1 = arith.constant 0 : i32
    %c0_i32_2 = arith.constant 0 : i32
    return %c0_i32, %c0_i32_0, %c0_i32_1 : i32, i32, i32
  }
  func.func @transform_3(%arg0: i32) -> (i32, i32, i32) {
    %c0_i32 = arith.constant 0 : i32
    %c0_i32_0 = arith.constant 0 : i32
    %c0_i32_1 = arith.constant 0 : i32
    %c0_i32_2 = arith.constant 0 : i32
    return %c0_i32, %c0_i32_0, %c0_i32_1 : i32, i32, i32
  }
  func.func @transform_4(%arg0: i32) -> (i32, i32, i32) {
    %c0_i32 = arith.constant 0 : i32
    %c0_i32_0 = arith.constant 0 : i32
    %c0_i32_1 = arith.constant 0 : i32
    %c0_i32_2 = arith.constant 0 : i32
    return %c0_i32, %c0_i32_0, %c0_i32_1 : i32, i32, i32
  }
  func.func @transform_5(%arg0: i32) -> (i32, i32) {
    %c0_i32 = arith.constant 0 : i32
    %c0_i32_0 = arith.constant 0 : i32
    %c0_i32_1 = arith.constant 0 : i32
    return %c0_i32, %c0_i32_0 : i32, i32
  }
  func.func @transform_6(%arg0: i32) -> (i32, i32) {
    %c0_i32 = arith.constant 0 : i32
    %c0_i32_0 = arith.constant 0 : i32
    %c0_i32_1 = arith.constant 0 : i32
    return %c0_i32, %c0_i32_0 : i32, i32
  }
  func.func @transform_7(%arg0: i32) -> (i32, i32, i32) {
    %c0_i32 = arith.constant 0 : i32
    %c0_i32_0 = arith.constant 0 : i32
    %c0_i32_1 = arith.constant 0 : i32
    return %arg0, %c0_i32, %c0_i32_0 : i32, i32, i32
  }
}

</mosaic_0001>

<llo_original>
// kernel: tpu_custom_call.1
$region0: #{tpu_custom_call.1}
  #allocation0 [shape = 'u32[]', space=smem, size = 0x4, offset = 0x4, fixed_abs, tag = 'smem constant byte address 0x4 - core index']
  #allocation1 [shape = 'u32[72,128]{1,0:T(1,128)}', space=vmem, size = 0x9000, scoped, tag = 'internal scratch']
  %s0 = inlined_call_operand.vmem [shape: f32[8,8,64], index: 0, kind: input, shape index: {}]
  %s1 = inlined_call_operand.vmem [shape: f32[8,1,8], index: 1, kind: input, shape index: {}]
  %s2 = inlined_call_operand.hbm [shape: f32[2,64,512], index: 2, kind: input, shape index: {}]
  %s3 = inlined_call_operand.vmem [shape: f32[2,128,64], index: 3, kind: input, shape index: {}]
  %s4 = inlined_call_operand.vmem [shape: f32[2,8,256], index: 4, kind: input, shape index: {}]
  %s5 = inlined_call_operand.vmem [shape: f32[64,256], index: 5, kind: input, shape index: {}]
  %s6 = inlined_call_operand.vmem [shape: f32[4,128], index: 6, kind: input, shape index: {}]
  %s7 = inlined_call_operand.hbm [shape: f32[2,4,128], index: 7, kind: output, shape index: {}]
  %s8 = sld [smem:[#allocation0]]
  $region65: #{tpu_custom_call.1} parent=0
    _
  %s10 = ssub.s32 1, %s8
  %s11 = scalar_select 0, %s10, %s8
  $region1: #{tpu_custom_call.1} parent=0
    #allocation2 [shape = 'u8[262144]{0}', space=vmem, size = 0x40000, scoped, tag = 'input window, operand 2, single buffered']
    #allocation3 [shape = 's32[2]{0}', space=sflag, size = 0x8, scoped, tag = 'scoped memory for tpu_custom_call.1']
    #allocation4 [shape = 's32[2]{0}', space=sflag, size = 0x8, scoped, tag = 'scoped memory for tpu_custom_call.1']
    #allocation5 [shape = 'u8[4096]{0}', space=vmem, size = 0x1000, scoped, tag = 'output window, operand 0']
    %12 = vsyncpa [#allocation3], 0
    %13 = vsyncpa [#allocation4], 0
    %s14 = scalar_lea.sflag [#allocation4], 1
    %15 = vsyncpa %s14, 0
    loop: start=0, step=1, limit=4
    $region2: #{tpu_custom_call.1} parent=1 // loop_pre_header
      _
    $region3: #{tpu_custom_call.1} parent=1 // loop_header
      %s17 = sphi 0, %s21
      %p18 = scmp.ge.s32.totalorder %s17, 4
      %s27 = sphi 0, %s29
      %s30 = sphi 0, %s27
      %s31 = sphi 0, %s30
      %s47 = sphi 0, %s31
      %s53 = sphi 0, %s55
      %s56 = sphi 0, %s53
      %s57 = sphi 0, %s56
      %s73 = sphi 0, %s57
      %s77 = sphi 0, %s77
      %s79 = sphi 0, %s77
      %s80 = sphi 0, %s79
      %s94 = sphi 0, %s80
      %s98 = sphi 0, %s98
      %s100 = sphi 0, %s98
      %s101 = sphi 0, %s100
      %s115 = sphi 0, %s101
      %s119 = sphi 0, %s119
      %s121 = sphi 0, %s119
      %s122 = sphi 0, %s121
      %s136 = sphi 0, %s122
      %s140 = sphi 0, %s140
      %s142 = sphi 0, %s140
      %s143 = sphi 0, %s142
      %s157 = sphi 0, %s143
      %s161 = sphi 0, %s161
      %s163 = sphi 0, %s161
      %s164 = sphi 0, %s163
      %s178 = sphi 0, %s164
      %s184 = sphi 0, %s186
      %s187 = sphi 0, %s184
      %s188 = sphi 0, %s187
      %s204 = sphi 0, %s188
    $region4: #{tpu_custom_call.1} parent=1 // loop_header_branch
      %20 = sbr.rel (%p18) target = $region8
    $region5: #{tpu_custom_call.1} parent=1 // loop_body
      %s22 = ssub.s32 %s17, 1
      %s23 = ssub.s32 %s17, 2
      %s24 = sadd.s32 %s17, 1
      %s25 = ssub.s32 %s17, %s24
      %p26 = scmp.eq.s32.totalorder %s25, 0
      %s28 = sadd.s32 %s27, 1
      %s29 = scalar_select %p26, %s27, %s28
      %p32 = pneg %p26
      %p33 = scmp.eq.s32.totalorder %s17, 1
      %p34 = por %p32, %p33
      %p35 = scmp.ne.s32.totalorder %s27, %s30
      %p36 = scmp.eq.s32.totalorder %s17, 0
      %p37 = por %p35, %p36
      %p38 = scmp.ne.s32.totalorder %s27, %s30
      %p39 = scmp.eq.s32.totalorder %s22, 1
      %p40 = por %p38, %p39
      %p41 = scmp.ne.s32.totalorder %s30, %s31
      %p42 = scmp.eq.s32.totalorder %s22, 0
      %p43 = por %p41, %p42
      %p44 = scmp.ne.s32.totalorder %s30, %s31
      %p45 = scmp.eq.s32.totalorder %s23, 1
      %p46 = por %p44, %p45
      %p48 = scmp.ne.s32.totalorder %s31, %s47
      %p49 = scmp.eq.s32.totalorder %s23, 0
      %p50 = por %p48, %p49
      %s51 = ssub.s32 %s17, %s24
      %p52 = scmp.eq.s32.totalorder %s51, 0
      %s54 = sadd.s32 %s53, 1
      %s55 = scalar_select %p52, %s53, %s54
      %p58 = pneg %p52
      %p59 = scmp.eq.s32.totalorder %s17, 1
      %p60 = por %p58, %p59
      %p61 = scmp.ne.s32.totalorder %s53, %s56
      %p62 = scmp.eq.s32.totalorder %s17, 0
      %p63 = por %p61, %p62
      %p64 = scmp.ne.s32.totalorder %s53, %s56
      %p65 = scmp.eq.s32.totalorder %s22, 1
      %p66 = por %p64, %p65
      %p67 = scmp.ne.s32.totalorder %s56, %s57
      %p68 = scmp.eq.s32.totalorder %s22, 0
      %p69 = por %p67, %p68
      %p70 = scmp.ne.s32.totalorder %s56, %s57
      %p71 = scmp.eq.s32.totalorder %s23, 1
      %p72 = por %p70, %p71
      %p74 = scmp.ne.s32.totalorder %s57, %s73
      %p75 = scmp.eq.s32.totalorder %s23, 0
      %p76 = por %p74, %p75
      %s78 = sadd.s32 %s77, 1
      %p81 = scmp.eq.s32.totalorder %s17, 1
      %p82 = scmp.ne.s32.totalorder %s77, %s79
      %p83 = scmp.eq.s32.totalorder %s17, 0
      %p84 = por %p82, %p83
      %p85 = scmp.ne.s32.totalorder %s77, %s79
      %p86 = scmp.eq.s32.totalorder %s22, 1
      %p87 = por %p85, %p86
      %p88 = scmp.ne.s32.totalorder %s79, %s80
      %p89 = scmp.eq.s32.totalorder %s22, 0
      %p90 = por %p88, %p89
      %p91 = scmp.ne.s32.totalorder %s79, %s80
      %p92 = scmp.eq.s32.totalorder %s23, 1
      %p93 = por %p91, %p92
      %p95 = scmp.ne.s32.totalorder %s80, %s94
      %p96 = scmp.eq.s32.totalorder %s23, 0
      %p97 = por %p95, %p96
      %s99 = sadd.s32 %s98, 1
      %p102 = scmp.eq.s32.totalorder %s17, 1
      %p103 = scmp.ne.s32.totalorder %s98, %s100
      %p104 = scmp.eq.s32.totalorder %s17, 0
      %p105 = por %p103, %p104
      %p106 = scmp.ne.s32.totalorder %s98, %s100
      %p107 = scmp.eq.s32.totalorder %s22, 1
      %p108 = por %p106, %p107
      %p109 = scmp.ne.s32.totalorder %s100, %s101
      %p110 = scmp.eq.s32.totalorder %s22, 0
      %p111 = por %p109, %p110
      %p112 = scmp.ne.s32.totalorder %s100, %s101
      %p113 = scmp.eq.s32.totalorder %s23, 1
      %p114 = por %p112, %p113
      %p116 = scmp.ne.s32.totalorder %s101, %s115
      %p117 = scmp.eq.s32.totalorder %s23, 0
      %p118 = por %p116, %p117
      %s120 = sadd.s32 %s119, 1
      %p123 = scmp.eq.s32.totalorder %s17, 1
      %p124 = scmp.ne.s32.totalorder %s119, %s121
      %p125 = scmp.eq.s32.totalorder %s17, 0
      %p126 = por %p124, %p125
      %p127 = scmp.ne.s32.totalorder %s119, %s121
      %p128 = scmp.eq.s32.totalorder %s22, 1
      %p129 = por %p127, %p128
      %p130 = scmp.ne.s32.totalorder %s121, %s122
      %p131 = scmp.eq.s32.totalorder %s22, 0
      %p132 = por %p130, %p131
      %p133 = scmp.ne.s32.totalorder %s121, %s122
      %p134 = scmp.eq.s32.totalorder %s23, 1
      %p135 = por %p133, %p134
      %p137 = scmp.ne.s32.totalorder %s122, %s136
      %p138 = scmp.eq.s32.totalorder %s23, 0
      %p139 = por %p137, %p138
      %s141 = sadd.s32 %s140, 1
      %p144 = scmp.eq.s32.totalorder %s17, 1
      %p145 = scmp.ne.s32.totalorder %s140, %s142
      %p146 = scmp.eq.s32.totalorder %s17, 0
      %p147 = por %p145, %p146
      %p148 = scmp.ne.s32.totalorder %s140, %s142
      %p149 = scmp.eq.s32.totalorder %s22, 1
      %p150 = por %p148, %p149
      %p151 = scmp.ne.s32.totalorder %s142, %s143
      %p152 = scmp.eq.s32.totalorder %s22, 0
      %p153 = por %p151, %p152
      %p154 = scmp.ne.s32.totalorder %s142, %s143
      %p155 = scmp.eq.s32.totalorder %s23, 1
      %p156 = por %p154, %p155
      %p158 = scmp.ne.s32.totalorder %s143, %s157
      %p159 = scmp.eq.s32.totalorder %s23, 0
      %p160 = por %p158, %p159
      %s162 = sadd.s32 %s161, 1
      %p165 = scmp.eq.s32.totalorder %s17, 1
      %p166 = scmp.ne.s32.totalorder %s161, %s163
      %p167 = scmp.eq.s32.totalorder %s17, 0
      %p168 = por %p166, %p167
      %p169 = scmp.ne.s32.totalorder %s161, %s163
      %p170 = scmp.eq.s32.totalorder %s22, 1
      %p171 = por %p169, %p170
      %p172 = scmp.ne.s32.totalorder %s163, %s164
      %p173 = scmp.eq.s32.totalorder %s22, 0
      %p174 = por %p172, %p173
      %p175 = scmp.ne.s32.totalorder %s163, %s164
      %p176 = scmp.eq.s32.totalorder %s23, 1
      %p177 = por %p175, %p176
      %p179 = scmp.ne.s32.totalorder %s164, %s178
      %p180 = scmp.eq.s32.totalorder %s23, 0
      %p181 = por %p179, %p180
      %s182 = ssub.s32 %s17, %s24
      %p183 = scmp.eq.s32.totalorder %s182, 0
      %s185 = sadd.s32 %s184, 1
      %s186 = scalar_select %p183, %s184, %s185
      %p189 = pneg %p183
      %p190 = scmp.eq.s32.totalorder %s17, 1
      %p191 = por %p189, %p190
      %p192 = scmp.ne.s32.totalorder %s184, %s187
      %p193 = scmp.eq.s32.totalorder %s17, 0
      %p194 = por %p192, %p193
      %p195 = scmp.ne.s32.totalorder %s184, %s187
      %p196 = scmp.eq.s32.totalorder %s22, 1
      %p197 = por %p195, %p196
      %p198 = scmp.ne.s32.totalorder %s187, %s188
      %p199 = scmp.eq.s32.totalorder %s22, 0
      %p200 = por %p198, %p199
      %p201 = scmp.ne.s32.totalorder %s187, %s188
      %p202 = scmp.eq.s32.totalorder %s23, 1
      %p203 = por %p201, %p202
      %p205 = scmp.ne.s32.totalorder %s188, %s204
      %p206 = scmp.eq.s32.totalorder %s23, 0
      %p207 = por %p205, %p206
      %p208 = scmp.le.s32.totalorder 1, %s17
      %p209 = scmp.lt.s32.totalorder %s17, 3
      %p210 = pnand %p208, %p209
      %p211 = pneg %p210
      // Predicated region
      $region9: #{tpu_custom_call.1} parent=5 // pred_check
        _
      $region10: #{tpu_custom_call.1} parent=5 // pred_check_branch
        %213 = sbr.rel (%p210) target = $region12
      $region11: #{tpu_custom_call.1} parent=5 // pred_region
        %s214 = ssub.s32 %s17, 1
        // Predicated region
        $region13: #{tpu_custom_call.1} parent=11 // pred_check
          %p215 = pneg %p90
        $region14: #{tpu_custom_call.1} parent=11 // pred_check_branch
          %217 = sbr.rel (%p215) target = $region16
        $region15: #{tpu_custom_call.1} parent=11 // pred_region
          %219 = vsyncadd [#allocation3], 0
          %s220 = sshll.u32 %s2, 4
          %s221 = int_to_ptr.hbm [resolvable:$true] %s220
          %s222 = sshll.u32 [#allocation2], 4
          %s223 = int_to_ptr.vmem [resolvable:$true] %s222
          %228 = dma.hbm_to_vmem [thread:$0]  %s221, 8192, %s223, [#allocation3], 512, 512, 32
        $region16: #{tpu_custom_call.1} parent=11 // pred_fallthru
          _
        // Predicated region
        $region17: #{tpu_custom_call.1} parent=11 // pred_check
          %p229 = pneg %p111
        $region18: #{tpu_custom_call.1} parent=11 // pred_check_branch
          %231 = sbr.rel (%p229) target = $region20
        $region19: #{tpu_custom_call.1} parent=11 // pred_region
          _
        $region20: #{tpu_custom_call.1} parent=11 // pred_fallthru
          _
        // Predicated region
        $region21: #{tpu_custom_call.1} parent=11 // pred_check
          %p232 = pneg %p132
        $region22: #{tpu_custom_call.1} parent=11 // pred_check_branch
          %234 = sbr.rel (%p232) target = $region24
        $region23: #{tpu_custom_call.1} parent=11 // pred_region
          _
        $region24: #{tpu_custom_call.1} parent=11 // pred_fallthru
          _
        // Predicated region
        $region25: #{tpu_custom_call.1} parent=11 // pred_check
          %p235 = pneg %p153
        $region26: #{tpu_custom_call.1} parent=11 // pred_check_branch
          %237 = sbr.rel (%p235) target = $region28
        $region27: #{tpu_custom_call.1} parent=11 // pred_region
          _
        $region28: #{tpu_custom_call.1} parent=11 // pred_fallthru
          _
        // Predicated region
        $region29: #{tpu_custom_call.1} parent=11 // pred_check
          %p238 = pneg %p174
        $region30: #{tpu_custom_call.1} parent=11 // pred_check_branch
          %240 = sbr.rel (%p238) target = $region32
        $region31: #{tpu_custom_call.1} parent=11 // pred_region
          _
        $region32: #{tpu_custom_call.1} parent=11 // pred_fallthru
          _
      $region12: #{tpu_custom_call.1} parent=5 // pred_fallthru
        _
      %p241 = scmp.lt.s32.totalorder %s17, 2
      // Predicated region
      $region33: #{tpu_custom_call.1} parent=5 // pred_check
        %p242 = pneg %p241
      $region34: #{tpu_custom_call.1} parent=5 // pred_check_branch
        %244 = sbr.rel (%p242) target = $region36
      $region35: #{tpu_custom_call.1} parent=5 // pred_region
        // Predicated region
        $region37: #{tpu_custom_call.1} parent=35 // pred_check
          %p245 = pneg %p37
        $region38: #{tpu_custom_call.1} parent=35 // pred_check_branch
          %247 = sbr.rel (%p245) target = $region40
        $region39: #{tpu_custom_call.1} parent=35 // pred_region
          %s248 = smul.u32 4, %s17
          %p249 = scmp.lt.s32.totalorder %s248, 7
          %s250 = scalar_select %p249, %s248, 7
          %s251 = smul.addr %s250, 8
          %s252 = scalar_lea.vmem %s0, %s251
          %s253 = smul.u32 4, %s17
        $region40: #{tpu_custom_call.1} parent=35 // pred_fallthru
          _
        // Predicated region
        $region41: #{tpu_custom_call.1} parent=35 // pred_check
          %p254 = pneg %p63
        $region42: #{tpu_custom_call.1} parent=35 // pred_check_branch
          %256 = sbr.rel (%p254) target = $region44
        $region43: #{tpu_custom_call.1} parent=35 // pred_region
          %s257 = smul.u32 4, %s17
          %p258 = scmp.lt.s32.totalorder %s257, 7
          %s259 = scalar_select %p258, %s257, 7
          %s260 = scalar_lea.vmem %s1, %s259
          %s261 = smul.u32 4, %s17
        $region44: #{tpu_custom_call.1} parent=35 // pred_fallthru
          _
      $region36: #{tpu_custom_call.1} parent=5 // pred_fallthru
        _
      %p262 = scmp.le.s32.totalorder 1, %s17
      %p263 = scmp.lt.s32.totalorder %s17, 3
      %p264 = pnand %p262, %p263
      %p265 = pneg %p264
      // Predicated region
      $region45: #{tpu_custom_call.1} parent=5 // pred_check
        _
      $region46: #{tpu_custom_call.1} parent=5 // pred_check_branch
        %267 = sbr.rel (%p264) target = $region48
      $region47: #{tpu_custom_call.1} parent=5 // pred_region
        %s268 = ssub.s32 %s17, 1
        // Predicated region
        $region49: #{tpu_custom_call.1} parent=47 // pred_check
          %p269 = pneg %p90
        $region50: #{tpu_custom_call.1} parent=47 // pred_check_branch
          %271 = sbr.rel (%p269) target = $region52
        $region51: #{tpu_custom_call.1} parent=47 // pred_region
          %273 = dma.done [#allocation3], 8192
        $region52: #{tpu_custom_call.1} parent=47 // pred_fallthru
          _
        %s274 = smul.u32 4, %s22
        %p275 = scmp.lt.s32.totalorder %s274, 7
        %s276 = scalar_select %p275, %s274, 7
        %s277 = smul.addr %s276, 8
        %s278 = scalar_lea.vmem %s0, %s277
        %p279 = pneg %p43
        %p280 = pneg %p40
        %s281 = smul.u32 4, %s22
        %p282 = scmp.lt.s32.totalorder %s281, 7
        %s283 = scalar_select %p282, %s281, 7
        %s284 = scalar_lea.vmem %s1, %s283
        %p285 = pneg %p69
        %p286 = pneg %p66
        %p287 = pneg %p90
        %p288 = pneg %p87
        %p289 = pneg %p111
        %p290 = pneg %p108
        %p291 = pneg %p132
        %p292 = pneg %p129
        %p293 = pneg %p153
        %p294 = pneg %p150
        %p295 = pneg %p174
        %p296 = pneg %p171
        %p297 = pneg %p200
        %p298 = pneg %p197
        %s299 = sand.u32 %s187, 1
        %s300 = scalar_lea.sflag [#allocation4], %s299
        %s301 = sand.u32 %s187, 1
        %s302 = smul.addr %s301, 4
        %s303 = scalar_lea.vmem [#allocation5], %s302
        %s304 = smul.u32 4, %s22
        %p305 = scmp.lt.s32.totalorder %s304, 7
        %s306 = scalar_select %p305, %s304, 7
        %s307 = smul.addr %s306, 8
        %s308 = scalar_lea.vmem %s0, %s307
        %s309 = smul.u32 4, %s22
        %s310 = smul.u32 4, %s22
        %p311 = scmp.lt.s32.totalorder %s310, 7
        %s312 = scalar_select %p311, %s310, 7
        %s313 = scalar_lea.vmem %s1, %s312
        %s314 = smul.u32 4, %s22
        %v315 = vld [vmem:[%s6] sm:$0xf]
        %v316 = vld [vmem:[%s308] sm:$0xff]
        %v317 = vld [vmem:[%s308 + $0x8] sm:$0xff]
        %v318 = vld [vmem:[%s308 + $0x10] sm:$0xff]
        %v319 = vld [vmem:[%s308 + $0x18] sm:$0xff]
        %vm320 = vcmask 523264
        %v321 = vsel %vm320, %v316, 0.0
        %322 = vadd.xlane.f32.xlu0 %v321
        %v323 = vpop.xlane.xlu0 %322
        %v324 = vsel %vm320, %v317, 0.0
        %325 = vadd.xlane.f32.xlu0 %v324
        %v326 = vpop.xlane.xlu0 %325
        %v327 = vsel %vm320, %v318, 0.0
        %328 = vadd.xlane.f32.xlu0 %v327
        %v329 = vpop.xlane.xlu0 %328
        %v330 = vsel %vm320, %v319, 0.0
        %331 = vadd.xlane.f32.xlu0 %v330
        %v332 = vpop.xlane.xlu0 %331
        %v333 = vrcp.pop 64.0
        %v334 = vmul.f32 64.0, %v333
        %v335 = vsub.f32 1.0, %v334
        %v336 = vmul.f32 %v333, %v335
        %v337 = vadd.f32 %v333, %v336
        %vm338 = vweird.f32 %v333
        %v339 = vsel %vm338, %v333, %v337
        %v340 = vmul.f32 %v323, %v339
        %v341 = vmul.f32 %v326, %v339
        %v342 = vmul.f32 %v329, %v339
        %v343 = vmul.f32 %v332, %v339
        %v344 = vsub.f32 %v316, %v340
        %v345 = vsub.f32 %v317, %v341
        %v346 = vsub.f32 %v318, %v342
        %v347 = vsub.f32 %v319, %v343
        %v348 = vmul.f32 %v344, %v344
        %v349 = vmul.f32 %v345, %v345
        %v350 = vmul.f32 %v346, %v346
        %v351 = vmul.f32 %v347, %v347
        %v352 = vsel %vm320, %v348, 0.0
        %353 = vadd.xlane.f32.xlu0 %v352
        %v354 = vpop.xlane.xlu0 %353
        %v355 = vsel %vm320, %v349, 0.0
        %356 = vadd.xlane.f32.xlu0 %v355
        %v357 = vpop.xlane.xlu0 %356
        %v358 = vsel %vm320, %v350, 0.0
        %359 = vadd.xlane.f32.xlu0 %v358
        %v360 = vpop.xlane.xlu0 %359
        %v361 = vsel %vm320, %v351, 0.0
        %362 = vadd.xlane.f32.xlu0 %v361
        %v363 = vpop.xlane.xlu0 %362
        %v364 = vmul.f32 %v354, %v339
        %v365 = vmul.f32 %v357, %v339
        %v366 = vmul.f32 %v360, %v339
        %v367 = vmul.f32 %v363, %v339
        %v368 = vadd.f32 %v364, 1e-12
        %v369 = vadd.f32 %v365, 1e-12
        %v370 = vadd.f32 %v366, 1e-12
        %v371 = vadd.f32 %v367, 1e-12
        %v372 = vrsqrt.pop %v368
        %v373 = vmul.f32 %v372, %v368
        %v374 = vmul.f32 %v373, %v372
        %v375 = vmul.f32 0.5, %v374
        %v376 = vsub.f32 1.5, %v375
        %v377 = vmul.f32 %v372, %v376
        %vm378 = vweird.f32 %v368
        %vm379 = vweird.f32 %v372
        %vm380 = vmor %vm378, %vm379
        %v381 = vsel %vm380, %v372, %v377
        %v382 = vrsqrt.pop %v369
        %v383 = vmul.f32 %v382, %v369
        %v384 = vmul.f32 %v383, %v382
        %v385 = vmul.f32 0.5, %v384
        %v386 = vsub.f32 1.5, %v385
        %v387 = vmul.f32 %v382, %v386
        %vm388 = vweird.f32 %v369
        %vm389 = vweird.f32 %v382
        %vm390 = vmor %vm388, %vm389
        %v391 = vsel %vm390, %v382, %v387
        %v392 = vrsqrt.pop %v370
        %v393 = vmul.f32 %v392, %v370
        %v394 = vmul.f32 %v393, %v392
        %v395 = vmul.f32 0.5, %v394
        %v396 = vsub.f32 1.5, %v395
        %v397 = vmul.f32 %v392, %v396
        %vm398 = vweird.f32 %v370
        %vm399 = vweird.f32 %v392
        %vm400 = vmor %vm398, %vm399
        %v401 = vsel %vm400, %v392, %v397
        %v402 = vrsqrt.pop %v371
        %v403 = vmul.f32 %v402, %v371
        %v404 = vmul.f32 %v403, %v402
        %v405 = vmul.f32 0.5, %v404
        %v406 = vsub.f32 1.5, %v405
        %v407 = vmul.f32 %v402, %v406
        %vm408 = vweird.f32 %v371
        %vm409 = vweird.f32 %v402
        %vm410 = vmor %vm408, %vm409
        %v411 = vsel %vm410, %v402, %v407
        %v412 = vmul.f32 %v344, %v381
        %v413 = vmul.f32 %v345, %v391
        %v414 = vmul.f32 %v346, %v401
        %v415 = vmul.f32 %v347, %v411
        %v416 = vperm.slane %v315, 0
        %v417 = vmul.f32 %v412, %v416
        %v418 = vmul.f32 %v413, %v416
        %v419 = vmul.f32 %v414, %v416
        %v420 = vmul.f32 %v415, %v416
        %v421 = vperm.slane %v315, 1
        %v422 = vadd.f32 %v417, %v421
        %v423 = vadd.f32 %v418, %v421
        %v424 = vadd.f32 %v419, %v421
        %v425 = vadd.f32 %v420, %v421
        %v426 = vld [vmem:[%s313] sm:$0x1]
        %v427 = vld [vmem:[%s313 + $0x1] sm:$0x1]
        %v428 = vld [vmem:[%s313 + $0x2] sm:$0x1]
        %v429 = vld [vmem:[%s313 + $0x3] sm:$0x1]
        %v430 = vld [vmem:[%s4] sm:$0xff]
        %v431 = vld [vmem:[%s4 + $0x8] sm:$0xff]
        %v432 = vld [vmem:[#allocation2] sm:$0xff]
        %v433 = vld [vmem:[#allocation2 + $0x8] sm:$0xff]
        %v434 = vld [vmem:[#allocation2 + $0x20] sm:$0xff]
        %v435 = vld [vmem:[#allocation2 + $0x28] sm:$0xff]
        %v436 = vld [vmem:[#allocation2 + $0x40] sm:$0xff]
        %v437 = vld [vmem:[#allocation2 + $0x48] sm:$0xff]
        %v438 = vld [vmem:[#allocation2 + $0x60] sm:$0xff]
        %v439 = vld [vmem:[#allocation2 + $0x68] sm:$0xff]
        %v440 = vld [vmem:[#allocation2 + $0x80] sm:$0xff]
        %v441 = vld [vmem:[#allocation2 + $0x88] sm:$0xff]
        %v442 = vld [vmem:[#allocation2 + $0xa0] sm:$0xff]
        %v443 = vld [vmem:[#allocation2 + $0xa8] sm:$0xff]
        %v444 = vld [vmem:[#allocation2 + $0xc0] sm:$0xff]
        %v445 = vld [vmem:[#allocation2 + $0xc8] sm:$0xff]
        %v446 = vld [vmem:[#allocation2 + $0xe0] sm:$0xff]
        %v447 = vld [vmem:[#allocation2 + $0xe8] sm:$0xff]
        %v448 = vperm.slane %v430, 0
        %v449 = vperm.slane %v431, 0
        %v451 = vsel %vm320, %v422, 0
        %v454 = vsel %vm320, %v423, 0
        %v457 = vsel %vm320, %v424, 0
        %v460 = vsel %vm320, %v425, 0
        %462 = vmatpush.msra.mxu0 0.0
        %463 = vmatpush.msra.mxu0 0.0
        %464 = vmatpush.msra.mxu0 0.0
        %465 = vmatpush.msra.mxu0 0.0
        %466 = vmatpush.msra.mxu0 0.0
        %467 = vmatpush.msra.mxu0 0.0
        %468 = vmatpush.msra.mxu0 0.0
        %469 = vmatpush.msra.mxu0 0.0
        %470 = vmatpush.msra.mxu0 %v446
        %471 = vmatpush.msra.mxu0 %v444
        %472 = vmatpush.msra.mxu0 %v442
        %473 = vmatpush.msra.mxu0 %v440
        %474 = vmatpush.msra.mxu0 %v438
        %475 = vmatpush.msra.mxu0 %v436
        %476 = vmatpush.msra.mxu0 %v434
        %477 = vmatpush.msra.mxu0 %v432
        %478 = vmatmul.f32.gmra.mxu0 %v451
        %v479 = vpop.f32.mrf.mxu0
        %v480 = vadd.f32 %v448, %v479
        %481 = vmatmul.f32.gmra.mxu0 %v454
        %v482 = vpop.f32.mrf.mxu0
        %v483 = vadd.f32 %v448, %v482
        %484 = vmatmul.f32.gmra.mxu0 %v457
        %v485 = vpop.f32.mrf.mxu0
        %v486 = vadd.f32 %v448, %v485
        %487 = vmatmul.f32.gmra.mxu0 %v460
        %v488 = vpop.f32.mrf.mxu0
        %v489 = vadd.f32 %v448, %v488
        %490 = vdwg.mxu0
        %491 = vmatpush.msra.mxu0 0.0
        %492 = vmatpush.msra.mxu0 0.0
        %493 = vmatpush.msra.mxu0 0.0
        %494 = vmatpush.msra.mxu0 0.0
        %495 = vmatpush.msra.mxu0 0.0
        %496 = vmatpush.msra.mxu0 0.0
        %497 = vmatpush.msra.mxu0 0.0
        %498 = vmatpush.msra.mxu0 0.0
        %499 = vmatpush.msra.mxu0 %v447
        %500 = vmatpush.msra.mxu0 %v445
        %501 = vmatpush.msra.mxu0 %v443
        %502 = vmatpush.msra.mxu0 %v441
        %503 = vmatpush.msra.mxu0 %v439
        %504 = vmatpush.msra.mxu0 %v437
        %505 = vmatpush.msra.mxu0 %v435
        %506 = vmatpush.msra.mxu0 %v433
        %507 = vmatmul.f32.gmra.mxu0 %v451
        %v508 = vpop.f32.mrf.mxu0
        %v509 = vadd.f32 %v449, %v508
        %510 = vmatmul.f32.gmra.mxu0 %v454
        %v511 = vpop.f32.mrf.mxu0
        %v512 = vadd.f32 %v449, %v511
        %513 = vmatmul.f32.gmra.mxu0 %v457
        %v514 = vpop.f32.mrf.mxu0
        %v515 = vadd.f32 %v449, %v514
        %516 = vmatmul.f32.gmra.mxu0 %v460
        %v517 = vpop.f32.mrf.mxu0
        %v518 = vadd.f32 %v449, %v517
        %519 = vdwg.mxu0
        %521 = vrot.lane.b32.xlu0 %v480, 64
        %v522 = vpop.permute.xlu0 %521
        %vm523 = vcmask 130048
        %v524 = vsel %vm523, %v480, 0
        %v526 = vsel %vm523, %v522, 0
        %528 = vmatpush.xpose.msra.mxu0 0.0
        %529 = vmatpush.xpose.msra.mxu0 0.0
        %530 = vmatpush.xpose.msra.mxu0 0.0
        %531 = vmatpush.xpose.msra.mxu0 0.0
        %532 = vmatpush.xpose.msra.mxu0 0.0
        %533 = vmatpush.xpose.msra.mxu0 0.0
        %534 = vmatpush.xpose.msra.mxu0 0.0
        %535 = vmatpush.xpose.msra.mxu0 0.0
        %536 = vmatpush.xpose.msra.mxu0 0.0
        %537 = vmatpush.xpose.msra.mxu0 0.0
        %538 = vmatpush.xpose.msra.mxu0 0.0
        %539 = vmatpush.xpose.msra.mxu0 0.0
        %540 = vmatpush.xpose.msra.mxu0 0.0
        %541 = vmatpush.xpose.msra.mxu0 0.0
        %542 = vmatpush.xpose.msra.mxu0 0.0
        %543 = vmatpush.xpose.msra.mxu0 %v526
        %544 = vmatmul.f32.gmra.mxu0 %v524
        %v545 = vpop.f32.mrf.mxu0
        %v546 = vadd.f32 0.0, %v545
        %547 = vdwg.mxu0
        %549 = vrot.lane.b32.xlu0 %v483, 64
        %v550 = vpop.permute.xlu0 %549
        %v551 = vsel %vm523, %v483, 0
        %v553 = vsel %vm523, %v550, 0
        %555 = vmatpush.xpose.msra.mxu0 0.0
        %556 = vmatpush.xpose.msra.mxu0 0.0
        %557 = vmatpush.xpose.msra.mxu0 0.0
        %558 = vmatpush.xpose.msra.mxu0 0.0
        %559 = vmatpush.xpose.msra.mxu0 0.0
        %560 = vmatpush.xpose.msra.mxu0 0.0
        %561 = vmatpush.xpose.msra.mxu0 0.0
        %562 = vmatpush.xpose.msra.mxu0 0.0
        %563 = vmatpush.xpose.msra.mxu0 0.0
        %564 = vmatpush.xpose.msra.mxu0 0.0
        %565 = vmatpush.xpose.msra.mxu0 0.0
        %566 = vmatpush.xpose.msra.mxu0 0.0
        %567 = vmatpush.xpose.msra.mxu0 0.0
        %568 = vmatpush.xpose.msra.mxu0 0.0
        %569 = vmatpush.xpose.msra.mxu0 0.0
        %570 = vmatpush.xpose.msra.mxu0 %v553
        %571 = vmatmul.f32.gmra.mxu0 %v551
        %v572 = vpop.f32.mrf.mxu0
        %v573 = vadd.f32 0.0, %v572
        %574 = vdwg.mxu0
        %576 = vrot.lane.b32.xlu0 %v486, 64
        %v577 = vpop.permute.xlu0 %576
        %v578 = vsel %vm523, %v486, 0
        %v580 = vsel %vm523, %v577, 0
        %582 = vmatpush.xpose.msra.mxu0 0.0
        %583 = vmatpush.xpose.msra.mxu0 0.0
        %584 = vmatpush.xpose.msra.mxu0 0.0
        %585 = vmatpush.xpose.msra.mxu0 0.0
        %586 = vmatpush.xpose.msra.mxu0 0.0
        %587 = vmatpush.xpose.msra.mxu0 0.0
        %588 = vmatpush.xpose.msra.mxu0 0.0
        %589 = vmatpush.xpose.msra.mxu0 0.0
        %590 = vmatpush.xpose.msra.mxu0 0.0
        %591 = vmatpush.xpose.msra.mxu0 0.0
        %592 = vmatpush.xpose.msra.mxu0 0.0
        %593 = vmatpush.xpose.msra.mxu0 0.0
        %594 = vmatpush.xpose.msra.mxu0 0.0
        %595 = vmatpush.xpose.msra.mxu0 0.0
        %596 = vmatpush.xpose.msra.mxu0 0.0
        %597 = vmatpush.xpose.msra.mxu0 %v580
        %598 = vmatmul.f32.gmra.mxu0 %v578
        %v599 = vpop.f32.mrf.mxu0
        %v600 = vadd.f32 0.0, %v599
        %601 = vdwg.mxu0
        %603 = vrot.lane.b32.xlu0 %v489, 64
        %v604 = vpop.permute.xlu0 %603
        %v605 = vsel %vm523, %v489, 0
        %v607 = vsel %vm523, %v604, 0
        %609 = vmatpush.xpose.msra.mxu0 0.0
        %610 = vmatpush.xpose.msra.mxu0 0.0
        %611 = vmatpush.xpose.msra.mxu0 0.0
        %612 = vmatpush.xpose.msra.mxu0 0.0
        %613 = vmatpush.xpose.msra.mxu0 0.0
        %614 = vmatpush.xpose.msra.mxu0 0.0
        %615 = vmatpush.xpose.msra.mxu0 0.0
        %616 = vmatpush.xpose.msra.mxu0 0.0
        %617 = vmatpush.xpose.msra.mxu0 0.0
        %618 = vmatpush.xpose.msra.mxu0 0.0
        %619 = vmatpush.xpose.msra.mxu0 0.0
        %620 = vmatpush.xpose.msra.mxu0 0.0
        %621 = vmatpush.xpose.msra.mxu0 0.0
        %622 = vmatpush.xpose.msra.mxu0 0.0
        %623 = vmatpush.xpose.msra.mxu0 0.0
        %624 = vmatpush.xpose.msra.mxu0 %v607
        %625 = vmatmul.f32.gmra.mxu0 %v605
        %v626 = vpop.f32.mrf.mxu0
        %v627 = vadd.f32 0.0, %v626
        %628 = vdwg.mxu0
        %v629 = vmul.f32 %v546, 0.25
        %v630 = vmul.f32 %v573, 0.25
        %v631 = vmul.f32 %v600, 0.25
        %v632 = vmul.f32 %v627, 0.25
        %v637 = vperm.slane %v426, 0
        %v638 = vperm.slane %v427, 0
        %v639 = vperm.slane %v428, 0
        %v640 = vperm.slane %v429, 0
        %v645 = vadd.f32 %v629, %v637
        %v646 = vadd.f32 %v630, %v638
        %v647 = vadd.f32 %v631, %v639
        %v648 = vadd.f32 %v632, %v640
        %vm649 = vcmask 64512
        %v650 = vsel %vm649, %v645, -inf
        %651 = vmax.xlane.f32.xlu0 %v650
        %v652 = vpop.xlane.xlu0 %651
        %v653 = vsel %vm649, %v646, -inf
        %654 = vmax.xlane.f32.xlu0 %v653
        %v655 = vpop.xlane.xlu0 %654
        %v656 = vsel %vm649, %v647, -inf
        %657 = vmax.xlane.f32.xlu0 %v656
        %v658 = vpop.xlane.xlu0 %657
        %v659 = vsel %vm649, %v648, -inf
        %660 = vmax.xlane.f32.xlu0 %v659
        %v661 = vpop.xlane.xlu0 %660
        %v662 = vsub.f32 %v645, %v652
        %v663 = vsub.f32 %v646, %v655
        %v664 = vsub.f32 %v647, %v658
        %v665 = vsub.f32 %v648, %v661
        %v666 = vmul.f32 %v662, 1.442695
        %v667 = vpow.pop %v666
        %v668 = vmul.f32 %v663, 1.442695
        %v669 = vpow.pop %v668
        %v670 = vmul.f32 %v664, 1.442695
        %v671 = vpow.pop %v670
        %v672 = vmul.f32 %v665, 1.442695
        %v673 = vpow.pop %v672
        %v674 = vsel %vm649, %v667, 0.0
        %675 = vadd.xlane.f32.xlu0 %v674
        %v676 = vpop.xlane.xlu0 %675
        %v677 = vsel %vm649, %v669, 0.0
        %678 = vadd.xlane.f32.xlu0 %v677
        %v679 = vpop.xlane.xlu0 %678
        %v680 = vsel %vm649, %v671, 0.0
        %681 = vadd.xlane.f32.xlu0 %v680
        %v682 = vpop.xlane.xlu0 %681
        %v683 = vsel %vm649, %v673, 0.0
        %684 = vadd.xlane.f32.xlu0 %v683
        %v685 = vpop.xlane.xlu0 %684
        %v686 = vrcp.pop %v676
        %v687 = vrcp.pop %v679
        %v688 = vrcp.pop %v682
        %v689 = vrcp.pop %v685
        %v690 = vmul.f32 %v667, %v686
        %v691 = vmul.f32 %v669, %v687
        %v692 = vmul.f32 %v671, %v688
        %v693 = vmul.f32 %v673, %v689
        %v695 = vsel %vm649, %v690, 0
        %697 = vmatpush.msra.mxu0 0.0
        %698 = vmatpush.msra.mxu0 0.0
        %699 = vmatpush.msra.mxu0 0.0
        %700 = vmatpush.msra.mxu0 0.0
        %701 = vmatpush.msra.mxu0 0.0
        %702 = vmatpush.msra.mxu0 0.0
        %703 = vmatpush.msra.mxu0 0.0
        %704 = vmatpush.msra.mxu0 0.0
        %705 = vmatpush.msra.mxu0 0.0
        %706 = vmatpush.msra.mxu0 0.0
        %707 = vmatpush.msra.mxu0 0.0
        %708 = vmatpush.msra.mxu0 0.0
        %709 = vmatpush.msra.mxu0 0.0
        %710 = vmatpush.msra.mxu0 0.0
        %711 = vmatpush.msra.mxu0 0.0
        %712 = vmatpush.msra.mxu0 %v509
        %713 = vmatmul.f32.gmra.mxu0 %v695
        %v714 = vpop.f32.mrf.mxu0
        %v715 = vadd.f32 0.0, %v714
        %716 = vdwg.mxu0
        %v718 = vsel %vm649, %v691, 0
        %720 = vmatpush.msra.mxu0 0.0
        %721 = vmatpush.msra.mxu0 0.0
        %722 = vmatpush.msra.mxu0 0.0
        %723 = vmatpush.msra.mxu0 0.0
        %724 = vmatpush.msra.mxu0 0.0
        %725 = vmatpush.msra.mxu0 0.0
        %726 = vmatpush.msra.mxu0 0.0
        %727 = vmatpush.msra.mxu0 0.0
        %728 = vmatpush.msra.mxu0 0.0
        %729 = vmatpush.msra.mxu0 0.0
        %730 = vmatpush.msra.mxu0 0.0
        %731 = vmatpush.msra.mxu0 0.0
        %732 = vmatpush.msra.mxu0 0.0
        %733 = vmatpush.msra.mxu0 0.0
        %734 = vmatpush.msra.mxu0 0.0
        %735 = vmatpush.msra.mxu0 %v512
        %736 = vmatmul.f32.gmra.mxu0 %v718
        %v737 = vpop.f32.mrf.mxu0
        %v738 = vadd.f32 0.0, %v737
        %739 = vdwg.mxu0
        %v741 = vsel %vm649, %v692, 0
        %743 = vmatpush.msra.mxu0 0.0
        %744 = vmatpush.msra.mxu0 0.0
        %745 = vmatpush.msra.mxu0 0.0
        %746 = vmatpush.msra.mxu0 0.0
        %747 = vmatpush.msra.mxu0 0.0
        %748 = vmatpush.msra.mxu0 0.0
        %749 = vmatpush.msra.mxu0 0.0
        %750 = vmatpush.msra.mxu0 0.0
        %751 = vmatpush.msra.mxu0 0.0
        %752 = vmatpush.msra.mxu0 0.0
        %753 = vmatpush.msra.mxu0 0.0
        %754 = vmatpush.msra.mxu0 0.0
        %755 = vmatpush.msra.mxu0 0.0
        %756 = vmatpush.msra.mxu0 0.0
        %757 = vmatpush.msra.mxu0 0.0
        %758 = vmatpush.msra.mxu0 %v515
        %759 = vmatmul.f32.gmra.mxu0 %v741
        %v760 = vpop.f32.mrf.mxu0
        %v761 = vadd.f32 0.0, %v760
        %762 = vdwg.mxu0
        %v764 = vsel %vm649, %v693, 0
        %766 = vmatpush.msra.mxu0 0.0
        %767 = vmatpush.msra.mxu0 0.0
        %768 = vmatpush.msra.mxu0 0.0
        %769 = vmatpush.msra.mxu0 0.0
        %770 = vmatpush.msra.mxu0 0.0
        %771 = vmatpush.msra.mxu0 0.0
        %772 = vmatpush.msra.mxu0 0.0
        %773 = vmatpush.msra.mxu0 0.0
        %774 = vmatpush.msra.mxu0 0.0
        %775 = vmatpush.msra.mxu0 0.0
        %776 = vmatpush.msra.mxu0 0.0
        %777 = vmatpush.msra.mxu0 0.0
        %778 = vmatpush.msra.mxu0 0.0
        %779 = vmatpush.msra.mxu0 0.0
        %780 = vmatpush.msra.mxu0 0.0
        %781 = vmatpush.msra.mxu0 %v518
        %782 = vmatmul.f32.gmra.mxu0 %v764
        %v783 = vpop.f32.mrf.mxu0
        %v784 = vadd.f32 0.0, %v783
        %785 = vdwg.mxu0
        %786 = vrot.lane.b32.xlu0 %v480, 112
        %v787 = vpop.permute.xlu0 %786
        %788 = vrot.lane.b32.xlu0 %v480, 48
        %v789 = vpop.permute.xlu0 %788
        %v790 = vsel %vm523, %v787, 0
        %v792 = vsel %vm523, %v789, 0
        %794 = vmatpush.xpose.msra.mxu0 0.0
        %795 = vmatpush.xpose.msra.mxu0 0.0
        %796 = vmatpush.xpose.msra.mxu0 0.0
        %797 = vmatpush.xpose.msra.mxu0 0.0
        %798 = vmatpush.xpose.msra.mxu0 0.0
        %799 = vmatpush.xpose.msra.mxu0 0.0
        %800 = vmatpush.xpose.msra.mxu0 0.0
        %801 = vmatpush.xpose.msra.mxu0 0.0
        %802 = vmatpush.xpose.msra.mxu0 0.0
        %803 = vmatpush.xpose.msra.mxu0 0.0
        %804 = vmatpush.xpose.msra.mxu0 0.0
        %805 = vmatpush.xpose.msra.mxu0 0.0
        %806 = vmatpush.xpose.msra.mxu0 0.0
        %807 = vmatpush.xpose.msra.mxu0 0.0
        %808 = vmatpush.xpose.msra.mxu0 0.0
        %809 = vmatpush.xpose.msra.mxu0 %v792
        %810 = vmatmul.f32.gmra.mxu0 %v790
        %v811 = vpop.f32.mrf.mxu0
        %v812 = vadd.f32 0.0, %v811
        %813 = vdwg.mxu0
        %814 = vrot.lane.b32.xlu0 %v483, 112
        %v815 = vpop.permute.xlu0 %814
        %816 = vrot.lane.b32.xlu0 %v483, 48
        %v817 = vpop.permute.xlu0 %816
        %v818 = vsel %vm523, %v815, 0
        %v820 = vsel %vm523, %v817, 0
        %822 = vmatpush.xpose.msra.mxu0 0.0
        %823 = vmatpush.xpose.msra.mxu0 0.0
        %824 = vmatpush.xpose.msra.mxu0 0.0
        %825 = vmatpush.xpose.msra.mxu0 0.0
        %826 = vmatpush.xpose.msra.mxu0 0.0
        %827 = vmatpush.xpose.msra.mxu0 0.0
        %828 = vmatpush.xpose.msra.mxu0 0.0
        %829 = vmatpush.xpose.msra.mxu0 0.0
        %830 = vmatpush.xpose.msra.mxu0 0.0
        %831 = vmatpush.xpose.msra.mxu0 0.0
        %832 = vmatpush.xpose.msra.mxu0 0.0
        %833 = vmatpush.xpose.msra.mxu0 0.0
        %834 = vmatpush.xpose.msra.mxu0 0.0
        %835 = vmatpush.xpose.msra.mxu0 0.0
        %836 = vmatpush.xpose.msra.mxu0 0.0
        %837 = vmatpush.xpose.msra.mxu0 %v820
        %838 = vmatmul.f32.gmra.mxu0 %v818
        %v839 = vpop.f32.mrf.mxu0
        %v840 = vadd.f32 0.0, %v839
        %841 = vdwg.mxu0
        %842 = vrot.lane.b32.xlu0 %v486, 112
        %v843 = vpop.permute.xlu0 %842
        %844 = vrot.lane.b32.xlu0 %v486, 48
        %v845 = vpop.permute.xlu0 %844
        %v846 = vsel %vm523, %v843, 0
        %v848 = vsel %vm523, %v845, 0
        %850 = vmatpush.xpose.msra.mxu0 0.0
        %851 = vmatpush.xpose.msra.mxu0 0.0
        %852 = vmatpush.xpose.msra.mxu0 0.0
        %853 = vmatpush.xpose.msra.mxu0 0.0
        %854 = vmatpush.xpose.msra.mxu0 0.0
        %855 = vmatpush.xpose.msra.mxu0 0.0
        %856 = vmatpush.xpose.msra.mxu0 0.0
        %857 = vmatpush.xpose.msra.mxu0 0.0
        %858 = vmatpush.xpose.msra.mxu0 0.0
        %859 = vmatpush.xpose.msra.mxu0 0.0
        %860 = vmatpush.xpose.msra.mxu0 0.0
        %861 = vmatpush.xpose.msra.mxu0 0.0
        %862 = vmatpush.xpose.msra.mxu0 0.0
        %863 = vmatpush.xpose.msra.mxu0 0.0
        %864 = vmatpush.xpose.msra.mxu0 0.0
        %865 = vmatpush.xpose.msra.mxu0 %v848
        %866 = vmatmul.f32.gmra.mxu0 %v846
        %v867 = vpop.f32.mrf.mxu0
        %v868 = vadd.f32 0.0, %v867
        %869 = vdwg.mxu0
        %870 = vrot.lane.b32.xlu0 %v489, 112
        %v871 = vpop.permute.xlu0 %870
        %872 = vrot.lane.b32.xlu0 %v489, 48
        %v873 = vpop.permute.xlu0 %872
        %v874 = vsel %vm523, %v871, 0
        %v876 = vsel %vm523, %v873, 0
        %878 = vmatpush.xpose.msra.mxu0 0.0
        %879 = vmatpush.xpose.msra.mxu0 0.0
        %880 = vmatpush.xpose.msra.mxu0 0.0
        %881 = vmatpush.xpose.msra.mxu0 0.0
        %882 = vmatpush.xpose.msra.mxu0 0.0
        %883 = vmatpush.xpose.msra.mxu0 0.0
        %884 = vmatpush.xpose.msra.mxu0 0.0
        %885 = vmatpush.xpose.msra.mxu0 0.0
        %886 = vmatpush.xpose.msra.mxu0 0.0
        %887 = vmatpush.xpose.msra.mxu0 0.0
        %888 = vmatpush.xpose.msra.mxu0 0.0
        %889 = vmatpush.xpose.msra.mxu0 0.0
        %890 = vmatpush.xpose.msra.mxu0 0.0
        %891 = vmatpush.xpose.msra.mxu0 0.0
        %892 = vmatpush.xpose.msra.mxu0 0.0
        %893 = vmatpush.xpose.msra.mxu0 %v876
        %894 = vmatmul.f32.gmra.mxu0 %v874
        %v895 = vpop.f32.mrf.mxu0
        %v896 = vadd.f32 0.0, %v895
        %897 = vdwg.mxu0
        %v898 = vmul.f32 %v812, 0.25
        %v899 = vmul.f32 %v840, 0.25
        %v900 = vmul.f32 %v868, 0.25
        %v901 = vmul.f32 %v896, 0.25
        %v902 = vadd.f32 %v898, %v637
        %v903 = vadd.f32 %v899, %v638
        %v904 = vadd.f32 %v900, %v639
        %v905 = vadd.f32 %v901, %v640
        %v906 = vsel %vm649, %v902, -inf
        %907 = vmax.xlane.f32.xlu0 %v906
        %v908 = vpop.xlane.xlu0 %907
        %v909 = vsel %vm649, %v903, -inf
        %910 = vmax.xlane.f32.xlu0 %v909
        %v911 = vpop.xlane.xlu0 %910
        %v912 = vsel %vm649, %v904, -inf
        %913 = vmax.xlane.f32.xlu0 %v912
        %v914 = vpop.xlane.xlu0 %913
        %v915 = vsel %vm649, %v905, -inf
        %916 = vmax.xlane.f32.xlu0 %v915
        %v917 = vpop.xlane.xlu0 %916
        %v918 = vsub.f32 %v902, %v908
        %v919 = vsub.f32 %v903, %v911
        %v920 = vsub.f32 %v904, %v914
        %v921 = vsub.f32 %v905, %v917
        %v922 = vmul.f32 %v918, 1.442695
        %v923 = vpow.pop %v922
        %v924 = vmul.f32 %v919, 1.442695
        %v925 = vpow.pop %v924
        %v926 = vmul.f32 %v920, 1.442695
        %v927 = vpow.pop %v926
        %v928 = vmul.f32 %v921, 1.442695
        %v929 = vpow.pop %v928
        %v930 = vsel %vm649, %v923, 0.0
        %931 = vadd.xlane.f32.xlu0 %v930
        %v932 = vpop.xlane.xlu0 %931
        %v933 = vsel %vm649, %v925, 0.0
        %934 = vadd.xlane.f32.xlu0 %v933
        %v935 = vpop.xlane.xlu0 %934
        %v936 = vsel %vm649, %v927, 0.0
        %937 = vadd.xlane.f32.xlu0 %v936
        %v938 = vpop.xlane.xlu0 %937
        %v939 = vsel %vm649, %v929, 0.0
        %940 = vadd.xlane.f32.xlu0 %v939
        %v941 = vpop.xlane.xlu0 %940
        %v942 = vrcp.pop %v932
        %v943 = vrcp.pop %v935
        %v944 = vrcp.pop %v938
        %v945 = vrcp.pop %v941
        %v946 = vmul.f32 %v923, %v942
        %v947 = vmul.f32 %v925, %v943
        %v948 = vmul.f32 %v927, %v944
        %v949 = vmul.f32 %v929, %v945
        %951 = vrot.lane.b32.xlu0 %v509, 112
        %v952 = vpop.permute.xlu0 %951
        %v955 = vsel %vm649, %v946, 0
        %957 = vmatpush.msra.mxu0 0.0
        %958 = vmatpush.msra.mxu0 0.0
        %959 = vmatpush.msra.mxu0 0.0
        %960 = vmatpush.msra.mxu0 0.0
        %961 = vmatpush.msra.mxu0 0.0
        %962 = vmatpush.msra.mxu0 0.0
        %963 = vmatpush.msra.mxu0 0.0
        %964 = vmatpush.msra.mxu0 0.0
        %965 = vmatpush.msra.mxu0 0.0
        %966 = vmatpush.msra.mxu0 0.0
        %967 = vmatpush.msra.mxu0 0.0
        %968 = vmatpush.msra.mxu0 0.0
        %969 = vmatpush.msra.mxu0 0.0
        %970 = vmatpush.msra.mxu0 0.0
        %971 = vmatpush.msra.mxu0 0.0
        %972 = vmatpush.msra.mxu0 %v952
        %973 = vmatmul.f32.gmra.mxu0 %v955
        %v974 = vpop.f32.mrf.mxu0
        %v975 = vadd.f32 0.0, %v974
        %976 = vdwg.mxu0
        %978 = vrot.lane.b32.xlu0 %v512, 112
        %v979 = vpop.permute.xlu0 %978
        %v982 = vsel %vm649, %v947, 0
        %984 = vmatpush.msra.mxu0 0.0
        %985 = vmatpush.msra.mxu0 0.0
        %986 = vmatpush.msra.mxu0 0.0
        %987 = vmatpush.msra.mxu0 0.0
        %988 = vmatpush.msra.mxu0 0.0
        %989 = vmatpush.msra.mxu0 0.0
        %990 = vmatpush.msra.mxu0 0.0
        %991 = vmatpush.msra.mxu0 0.0
        %992 = vmatpush.msra.mxu0 0.0
        %993 = vmatpush.msra.mxu0 0.0
        %994 = vmatpush.msra.mxu0 0.0
        %995 = vmatpush.msra.mxu0 0.0
        %996 = vmatpush.msra.mxu0 0.0
        %997 = vmatpush.msra.mxu0 0.0
        %998 = vmatpush.msra.mxu0 0.0
        %999 = vmatpush.msra.mxu0 %v979
        %1000 = vmatmul.f32.gmra.mxu0 %v982
        %v1001 = vpop.f32.mrf.mxu0
        %v1002 = vadd.f32 0.0, %v1001
        %1003 = vdwg.mxu0
        %1005 = vrot.lane.b32.xlu0 %v515, 112
        %v1006 = vpop.permute.xlu0 %1005
        %v1009 = vsel %vm649, %v948, 0
        %1011 = vmatpush.msra.mxu0 0.0
        %1012 = vmatpush.msra.mxu0 0.0
        %1013 = vmatpush.msra.mxu0 0.0
        %1014 = vmatpush.msra.mxu0 0.0
        %1015 = vmatpush.msra.mxu0 0.0
        %1016 = vmatpush.msra.mxu0 0.0
        %1017 = vmatpush.msra.mxu0 0.0
        %1018 = vmatpush.msra.mxu0 0.0
        %1019 = vmatpush.msra.mxu0 0.0
        %1020 = vmatpush.msra.mxu0 0.0
        %1021 = vmatpush.msra.mxu0 0.0
        %1022 = vmatpush.msra.mxu0 0.0
        %1023 = vmatpush.msra.mxu0 0.0
        %1024 = vmatpush.msra.mxu0 0.0
        %1025 = vmatpush.msra.mxu0 0.0
        %1026 = vmatpush.msra.mxu0 %v1006
        %1027 = vmatmul.f32.gmra.mxu0 %v1009
        %v1028 = vpop.f32.mrf.mxu0
        %v1029 = vadd.f32 0.0, %v1028
        %1030 = vdwg.mxu0
        %1032 = vrot.lane.b32.xlu0 %v518, 112
        %v1033 = vpop.permute.xlu0 %1032
        %v1036 = vsel %vm649, %v949, 0
        %1038 = vmatpush.msra.mxu0 0.0
        %1039 = vmatpush.msra.mxu0 0.0
        %1040 = vmatpush.msra.mxu0 0.0
        %1041 = vmatpush.msra.mxu0 0.0
        %1042 = vmatpush.msra.mxu0 0.0
        %1043 = vmatpush.msra.mxu0 0.0
        %1044 = vmatpush.msra.mxu0 0.0
        %1045 = vmatpush.msra.mxu0 0.0
        %1046 = vmatpush.msra.mxu0 0.0
        %1047 = vmatpush.msra.mxu0 0.0
        %1048 = vmatpush.msra.mxu0 0.0
        %1049 = vmatpush.msra.mxu0 0.0
        %1050 = vmatpush.msra.mxu0 0.0
        %1051 = vmatpush.msra.mxu0 0.0
        %1052 = vmatpush.msra.mxu0 0.0
        %1053 = vmatpush.msra.mxu0 %v1033
        %1054 = vmatmul.f32.gmra.mxu0 %v1036
        %v1055 = vpop.f32.mrf.mxu0
        %v1056 = vadd.f32 0.0, %v1055
        %1057 = vdwg.mxu0
        %1058 = vrot.lane.b32.xlu0 %v480, 96
        %v1059 = vpop.permute.xlu0 %1058
        %1060 = vrot.lane.b32.xlu0 %v480, 32
        %v1061 = vpop.permute.xlu0 %1060
        %v1062 = vsel %vm523, %v1059, 0
        %v1064 = vsel %vm523, %v1061, 0
        %1066 = vmatpush.xpose.msra.mxu0 0.0
        %1067 = vmatpush.xpose.msra.mxu0 0.0
        %1068 = vmatpush.xpose.msra.mxu0 0.0
        %1069 = vmatpush.xpose.msra.mxu0 0.0
        %1070 = vmatpush.xpose.msra.mxu0 0.0
        %1071 = vmatpush.xpose.msra.mxu0 0.0
        %1072 = vmatpush.xpose.msra.mxu0 0.0
        %1073 = vmatpush.xpose.msra.mxu0 0.0
        %1074 = vmatpush.xpose.msra.mxu0 0.0
        %1075 = vmatpush.xpose.msra.mxu0 0.0
        %1076 = vmatpush.xpose.msra.mxu0 0.0
        %1077 = vmatpush.xpose.msra.mxu0 0.0
        %1078 = vmatpush.xpose.msra.mxu0 0.0
        %1079 = vmatpush.xpose.msra.mxu0 0.0
        %1080 = vmatpush.xpose.msra.mxu0 0.0
        %1081 = vmatpush.xpose.msra.mxu0 %v1064
        %1082 = vmatmul.f32.gmra.mxu0 %v1062
        %v1083 = vpop.f32.mrf.mxu0
        %v1084 = vadd.f32 0.0, %v1083
        %1085 = vdwg.mxu0
        %1086 = vrot.lane.b32.xlu0 %v483, 96
        %v1087 = vpop.permute.xlu0 %1086
        %1088 = vrot.lane.b32.xlu0 %v483, 32
        %v1089 = vpop.permute.xlu0 %1088
        %v1090 = vsel %vm523, %v1087, 0
        %v1092 = vsel %vm523, %v1089, 0
        %1094 = vmatpush.xpose.msra.mxu0 0.0
        %1095 = vmatpush.xpose.msra.mxu0 0.0
        %1096 = vmatpush.xpose.msra.mxu0 0.0
        %1097 = vmatpush.xpose.msra.mxu0 0.0
        %1098 = vmatpush.xpose.msra.mxu0 0.0
        %1099 = vmatpush.xpose.msra.mxu0 0.0
        %1100 = vmatpush.xpose.msra.mxu0 0.0
        %1101 = vmatpush.xpose.msra.mxu0 0.0
        %1102 = vmatpush.xpose.msra.mxu0 0.0
        %1103 = vmatpush.xpose.msra.mxu0 0.0
        %1104 = vmatpush.xpose.msra.mxu0 0.0
        %1105 = vmatpush.xpose.msra.mxu0 0.0
        %1106 = vmatpush.xpose.msra.mxu0 0.0
        %1107 = vmatpush.xpose.msra.mxu0 0.0
        %1108 = vmatpush.xpose.msra.mxu0 0.0
        %1109 = vmatpush.xpose.msra.mxu0 %v1092
        %1110 = vmatmul.f32.gmra.mxu0 %v1090
        %v1111 = vpop.f32.mrf.mxu0
        %v1112 = vadd.f32 0.0, %v1111
        %1113 = vdwg.mxu0
        %1114 = vrot.lane.b32.xlu0 %v486, 96
        %v1115 = vpop.permute.xlu0 %1114
        %1116 = vrot.lane.b32.xlu0 %v486, 32
        %v1117 = vpop.permute.xlu0 %1116
        %v1118 = vsel %vm523, %v1115, 0
        %v1120 = vsel %vm523, %v1117, 0
        %1122 = vmatpush.xpose.msra.mxu0 0.0
        %1123 = vmatpush.xpose.msra.mxu0 0.0
        %1124 = vmatpush.xpose.msra.mxu0 0.0
        %1125 = vmatpush.xpose.msra.mxu0 0.0
        %1126 = vmatpush.xpose.msra.mxu0 0.0
        %1127 = vmatpush.xpose.msra.mxu0 0.0
        %1128 = vmatpush.xpose.msra.mxu0 0.0
        %1129 = vmatpush.xpose.msra.mxu0 0.0
        %1130 = vmatpush.xpose.msra.mxu0 0.0
        %1131 = vmatpush.xpose.msra.mxu0 0.0
        %1132 = vmatpush.xpose.msra.mxu0 0.0
        %1133 = vmatpush.xpose.msra.mxu0 0.0
        %1134 = vmatpush.xpose.msra.mxu0 0.0
        %1135 = vmatpush.xpose.msra.mxu0 0.0
        %1136 = vmatpush.xpose.msra.mxu0 0.0
        %1137 = vmatpush.xpose.msra.mxu0 %v1120
        %1138 = vmatmul.f32.gmra.mxu0 %v1118
        %v1139 = vpop.f32.mrf.mxu0
        %v1140 = vadd.f32 0.0, %v1139
        %1141 = vdwg.mxu0
        %1142 = vrot.lane.b32.xlu0 %v489, 96
        %v1143 = vpop.permute.xlu0 %1142
        %1144 = vrot.lane.b32.xlu0 %v489, 32
        %v1145 = vpop.permute.xlu0 %1144
        %v1146 = vsel %vm523, %v1143, 0
        %v1148 = vsel %vm523, %v1145, 0
        %1150 = vmatpush.xpose.msra.mxu0 0.0
        %1151 = vmatpush.xpose.msra.mxu0 0.0
        %1152 = vmatpush.xpose.msra.mxu0 0.0
        %1153 = vmatpush.xpose.msra.mxu0 0.0
        %1154 = vmatpush.xpose.msra.mxu0 0.0
        %1155 = vmatpush.xpose.msra.mxu0 0.0
        %1156 = vmatpush.xpose.msra.mxu0 0.0
        %1157 = vmatpush.xpose.msra.mxu0 0.0
        %1158 = vmatpush.xpose.msra.mxu0 0.0
        %1159 = vmatpush.xpose.msra.mxu0 0.0
        %1160 = vmatpush.xpose.msra.mxu0 0.0
        %1161 = vmatpush.xpose.msra.mxu0 0.0
        %1162 = vmatpush.xpose.msra.mxu0 0.0
        %1163 = vmatpush.xpose.msra.mxu0 0.0
        %1164 = vmatpush.xpose.msra.mxu0 0.0
        %1165 = vmatpush.xpose.msra.mxu0 %v1148
        %1166 = vmatmul.f32.gmra.mxu0 %v1146
        %v1167 = vpop.f32.mrf.mxu0
        %v1168 = vadd.f32 0.0, %v1167
        %1169 = vdwg.mxu0
        %v1170 = vmul.f32 %v1084, 0.25
        %v1171 = vmul.f32 %v1112, 0.25
        %v1172 = vmul.f32 %v1140, 0.25
        %v1173 = vmul.f32 %v1168, 0.25
        %v1174 = vadd.f32 %v1170, %v637
        %v1175 = vadd.f32 %v1171, %v638
        %v1176 = vadd.f32 %v1172, %v639
        %v1177 = vadd.f32 %v1173, %v640
        %v1178 = vsel %vm649, %v1174, -inf
        %1179 = vmax.xlane.f32.xlu0 %v1178
        %v1180 = vpop.xlane.xlu0 %1179
        %v1181 = vsel %vm649, %v1175, -inf
        %1182 = vmax.xlane.f32.xlu0 %v1181
        %v1183 = vpop.xlane.xlu0 %1182
        %v1184 = vsel %vm649, %v1176, -inf
        %1185 = vmax.xlane.f32.xlu0 %v1184
        %v1186 = vpop.xlane.xlu0 %1185
        %v1187 = vsel %vm649, %v1177, -inf
        %1188 = vmax.xlane.f32.xlu0 %v1187
        %v1189 = vpop.xlane.xlu0 %1188
        %v1190 = vsub.f32 %v1174, %v1180
        %v1191 = vsub.f32 %v1175, %v1183
        %v1192 = vsub.f32 %v1176, %v1186
        %v1193 = vsub.f32 %v1177, %v1189
        %v1194 = vmul.f32 %v1190, 1.442695
        %v1195 = vpow.pop %v1194
        %v1196 = vmul.f32 %v1191, 1.442695
        %v1197 = vpow.pop %v1196
        %v1198 = vmul.f32 %v1192, 1.442695
        %v1199 = vpow.pop %v1198
        %v1200 = vmul.f32 %v1193, 1.442695
        %v1201 = vpow.pop %v1200
        %v1202 = vsel %vm649, %v1195, 0.0
        %1203 = vadd.xlane.f32.xlu0 %v1202
        %v1204 = vpop.xlane.xlu0 %1203
        %v1205 = vsel %vm649, %v1197, 0.0
        %1206 = vadd.xlane.f32.xlu0 %v1205
        %v1207 = vpop.xlane.xlu0 %1206
        %v1208 = vsel %vm649, %v1199, 0.0
        %1209 = vadd.xlane.f32.xlu0 %v1208
        %v1210 = vpop.xlane.xlu0 %1209
        %v1211 = vsel %vm649, %v1201, 0.0
        %1212 = vadd.xlane.f32.xlu0 %v1211
        %v1213 = vpop.xlane.xlu0 %1212
        %v1214 = vrcp.pop %v1204
        %v1215 = vrcp.pop %v1207
        %v1216 = vrcp.pop %v1210
        %v1217 = vrcp.pop %v1213
        %v1218 = vmul.f32 %v1195, %v1214
        %v1219 = vmul.f32 %v1197, %v1215
        %v1220 = vmul.f32 %v1199, %v1216
        %v1221 = vmul.f32 %v1201, %v1217
        %1222 = vrot.lane.b32.xlu0 %v509, 96
        %v1223 = vpop.permute.xlu0 %1222
        %v1226 = vsel %vm649, %v1218, 0
        %1228 = vmatpush.msra.mxu0 0.0
        %1229 = vmatpush.msra.mxu0 0.0
        %1230 = vmatpush.msra.mxu0 0.0
        %1231 = vmatpush.msra.mxu0 0.0
        %1232 = vmatpush.msra.mxu0 0.0
        %1233 = vmatpush.msra.mxu0 0.0
        %1234 = vmatpush.msra.mxu0 0.0
        %1235 = vmatpush.msra.mxu0 0.0
        %1236 = vmatpush.msra.mxu0 0.0
        %1237 = vmatpush.msra.mxu0 0.0
        %1238 = vmatpush.msra.mxu0 0.0
        %1239 = vmatpush.msra.mxu0 0.0
        %1240 = vmatpush.msra.mxu0 0.0
        %1241 = vmatpush.msra.mxu0 0.0
        %1242 = vmatpush.msra.mxu0 0.0
        %1243 = vmatpush.msra.mxu0 %v1223
        %1244 = vmatmul.f32.gmra.mxu0 %v1226
        %v1245 = vpop.f32.mrf.mxu0
        %v1246 = vadd.f32 0.0, %v1245
        %1247 = vdwg.mxu0
        %1248 = vrot.lane.b32.xlu0 %v512, 96
        %v1249 = vpop.permute.xlu0 %1248
        %v1252 = vsel %vm649, %v1219, 0
        %1254 = vmatpush.msra.mxu0 0.0
        %1255 = vmatpush.msra.mxu0 0.0
        %1256 = vmatpush.msra.mxu0 0.0
        %1257 = vmatpush.msra.mxu0 0.0
        %1258 = vmatpush.msra.mxu0 0.0
        %1259 = vmatpush.msra.mxu0 0.0
        %1260 = vmatpush.msra.mxu0 0.0
        %1261 = vmatpush.msra.mxu0 0.0
        %1262 = vmatpush.msra.mxu0 0.0
        %1263 = vmatpush.msra.mxu0 0.0
        %1264 = vmatpush.msra.mxu0 0.0
        %1265 = vmatpush.msra.mxu0 0.0
        %1266 = vmatpush.msra.mxu0 0.0
        %1267 = vmatpush.msra.mxu0 0.0
        %1268 = vmatpush.msra.mxu0 0.0
        %1269 = vmatpush.msra.mxu0 %v1249
        %1270 = vmatmul.f32.gmra.mxu0 %v1252
        %v1271 = vpop.f32.mrf.mxu0
        %v1272 = vadd.f32 0.0, %v1271
        %1273 = vdwg.mxu0
        %1274 = vrot.lane.b32.xlu0 %v515, 96
        %v1275 = vpop.permute.xlu0 %1274
        %v1278 = vsel %vm649, %v1220, 0
        %1280 = vmatpush.msra.mxu0 0.0
        %1281 = vmatpush.msra.mxu0 0.0
        %1282 = vmatpush.msra.mxu0 0.0
        %1283 = vmatpush.msra.mxu0 0.0
        %1284 = vmatpush.msra.mxu0 0.0
        %1285 = vmatpush.msra.mxu0 0.0
        %1286 = vmatpush.msra.mxu0 0.0
        %1287 = vmatpush.msra.mxu0 0.0
        %1288 = vmatpush.msra.mxu0 0.0
        %1289 = vmatpush.msra.mxu0 0.0
        %1290 = vmatpush.msra.mxu0 0.0
        %1291 = vmatpush.msra.mxu0 0.0
        %1292 = vmatpush.msra.mxu0 0.0
        %1293 = vmatpush.msra.mxu0 0.0
        %1294 = vmatpush.msra.mxu0 0.0
        %1295 = vmatpush.msra.mxu0 %v1275
        %1296 = vmatmul.f32.gmra.mxu0 %v1278
        %v1297 = vpop.f32.mrf.mxu0
        %v1298 = vadd.f32 0.0, %v1297
        %1299 = vdwg.mxu0
        %1300 = vrot.lane.b32.xlu0 %v518, 96
        %v1301 = vpop.permute.xlu0 %1300
        %v1304 = vsel %vm649, %v1221, 0
        %1306 = vmatpush.msra.mxu0 0.0
        %1307 = vmatpush.msra.mxu0 0.0
        %1308 = vmatpush.msra.mxu0 0.0
        %1309 = vmatpush.msra.mxu0 0.0
        %1310 = vmatpush.msra.mxu0 0.0
        %1311 = vmatpush.msra.mxu0 0.0
        %1312 = vmatpush.msra.mxu0 0.0
        %1313 = vmatpush.msra.mxu0 0.0
        %1314 = vmatpush.msra.mxu0 0.0
        %1315 = vmatpush.msra.mxu0 0.0
        %1316 = vmatpush.msra.mxu0 0.0
        %1317 = vmatpush.msra.mxu0 0.0
        %1318 = vmatpush.msra.mxu0 0.0
        %1319 = vmatpush.msra.mxu0 0.0
        %1320 = vmatpush.msra.mxu0 0.0
        %1321 = vmatpush.msra.mxu0 %v1301
        %1322 = vmatmul.f32.gmra.mxu0 %v1304
        %v1323 = vpop.f32.mrf.mxu0
        %v1324 = vadd.f32 0.0, %v1323
        %1325 = vdwg.mxu0
        %1326 = vrot.lane.b32.xlu0 %v480, 80
        %v1327 = vpop.permute.xlu0 %1326
        %1328 = vrot.lane.b32.xlu0 %v480, 16
        %v1329 = vpop.permute.xlu0 %1328
        %v1330 = vsel %vm523, %v1327, 0
        %v1332 = vsel %vm523, %v1329, 0
        %1334 = vmatpush.xpose.msra.mxu0 0.0
        %1335 = vmatpush.xpose.msra.mxu0 0.0
        %1336 = vmatpush.xpose.msra.mxu0 0.0
        %1337 = vmatpush.xpose.msra.mxu0 0.0
        %1338 = vmatpush.xpose.msra.mxu0 0.0
        %1339 = vmatpush.xpose.msra.mxu0 0.0
        %1340 = vmatpush.xpose.msra.mxu0 0.0
        %1341 = vmatpush.xpose.msra.mxu0 0.0
        %1342 = vmatpush.xpose.msra.mxu0 0.0
        %1343 = vmatpush.xpose.msra.mxu0 0.0
        %1344 = vmatpush.xpose.msra.mxu0 0.0
        %1345 = vmatpush.xpose.msra.mxu0 0.0
        %1346 = vmatpush.xpose.msra.mxu0 0.0
        %1347 = vmatpush.xpose.msra.mxu0 0.0
        %1348 = vmatpush.xpose.msra.mxu0 0.0
        %1349 = vmatpush.xpose.msra.mxu0 %v1332
        %1350 = vmatmul.f32.gmra.mxu0 %v1330
        %v1351 = vpop.f32.mrf.mxu0
        %v1352 = vadd.f32 0.0, %v1351
        %1353 = vdwg.mxu0
        %1354 = vrot.lane.b32.xlu0 %v483, 80
        %v1355 = vpop.permute.xlu0 %1354
        %1356 = vrot.lane.b32.xlu0 %v483, 16
        %v1357 = vpop.permute.xlu0 %1356
        %v1358 = vsel %vm523, %v1355, 0
        %v1360 = vsel %vm523, %v1357, 0
        %1362 = vmatpush.xpose.msra.mxu0 0.0
        %1363 = vmatpush.xpose.msra.mxu0 0.0
        %1364 = vmatpush.xpose.msra.mxu0 0.0
        %1365 = vmatpush.xpose.msra.mxu0 0.0
        %1366 = vmatpush.xpose.msra.mxu0 0.0
        %1367 = vmatpush.xpose.msra.mxu0 0.0
        %1368 = vmatpush.xpose.msra.mxu0 0.0
        %1369 = vmatpush.xpose.msra.mxu0 0.0
        %1370 = vmatpush.xpose.msra.mxu0 0.0
        %1371 = vmatpush.xpose.msra.mxu0 0.0
        %1372 = vmatpush.xpose.msra.mxu0 0.0
        %1373 = vmatpush.xpose.msra.mxu0 0.0
        %1374 = vmatpush.xpose.msra.mxu0 0.0
        %1375 = vmatpush.xpose.msra.mxu0 0.0
        %1376 = vmatpush.xpose.msra.mxu0 0.0
        %1377 = vmatpush.xpose.msra.mxu0 %v1360
        %1378 = vmatmul.f32.gmra.mxu0 %v1358
        %v1379 = vpop.f32.mrf.mxu0
        %v1380 = vadd.f32 0.0, %v1379
        %1381 = vdwg.mxu0
        %1382 = vrot.lane.b32.xlu0 %v486, 80
        %v1383 = vpop.permute.xlu0 %1382
        %1384 = vrot.lane.b32.xlu0 %v486, 16
        %v1385 = vpop.permute.xlu0 %1384
        %v1386 = vsel %vm523, %v1383, 0
        %v1388 = vsel %vm523, %v1385, 0
        %1390 = vmatpush.xpose.msra.mxu0 0.0
        %1391 = vmatpush.xpose.msra.mxu0 0.0
        %1392 = vmatpush.xpose.msra.mxu0 0.0
        %1393 = vmatpush.xpose.msra.mxu0 0.0
        %1394 = vmatpush.xpose.msra.mxu0 0.0
        %1395 = vmatpush.xpose.msra.mxu0 0.0
        %1396 = vmatpush.xpose.msra.mxu0 0.0
        %1397 = vmatpush.xpose.msra.mxu0 0.0
        %1398 = vmatpush.xpose.msra.mxu0 0.0
        %1399 = vmatpush.xpose.msra.mxu0 0.0
        %1400 = vmatpush.xpose.msra.mxu0 0.0
        %1401 = vmatpush.xpose.msra.mxu0 0.0
        %1402 = vmatpush.xpose.msra.mxu0 0.0
        %1403 = vmatpush.xpose.msra.mxu0 0.0
        %1404 = vmatpush.xpose.msra.mxu0 0.0
        %1405 = vmatpush.xpose.msra.mxu0 %v1388
        %1406 = vmatmul.f32.gmra.mxu0 %v1386
        %v1407 = vpop.f32.mrf.mxu0
        %v1408 = vadd.f32 0.0, %v1407
        %1409 = vdwg.mxu0
        %1410 = vrot.lane.b32.xlu0 %v489, 80
        %v1411 = vpop.permute.xlu0 %1410
        %1412 = vrot.lane.b32.xlu0 %v489, 16
        %v1413 = vpop.permute.xlu0 %1412
        %v1414 = vsel %vm523, %v1411, 0
        %v1416 = vsel %vm523, %v1413, 0
        %1418 = vmatpush.xpose.msra.mxu0 0.0
        %1419 = vmatpush.xpose.msra.mxu0 0.0
        %1420 = vmatpush.xpose.msra.mxu0 0.0
        %1421 = vmatpush.xpose.msra.mxu0 0.0
        %1422 = vmatpush.xpose.msra.mxu0 0.0
        %1423 = vmatpush.xpose.msra.mxu0 0.0
        %1424 = vmatpush.xpose.msra.mxu0 0.0
        %1425 = vmatpush.xpose.msra.mxu0 0.0
        %1426 = vmatpush.xpose.msra.mxu0 0.0
        %1427 = vmatpush.xpose.msra.mxu0 0.0
        %1428 = vmatpush.xpose.msra.mxu0 0.0
        %1429 = vmatpush.xpose.msra.mxu0 0.0
        %1430 = vmatpush.xpose.msra.mxu0 0.0
        %1431 = vmatpush.xpose.msra.mxu0 0.0
        %1432 = vmatpush.xpose.msra.mxu0 0.0
        %1433 = vmatpush.xpose.msra.mxu0 %v1416
        %1434 = vmatmul.f32.gmra.mxu0 %v1414
        %v1435 = vpop.f32.mrf.mxu0
        %v1436 = vadd.f32 0.0, %v1435
        %1437 = vdwg.mxu0
        %v1438 = vmul.f32 %v1352, 0.25
        %v1439 = vmul.f32 %v1380, 0.25
        %v1440 = vmul.f32 %v1408, 0.25
        %v1441 = vmul.f32 %v1436, 0.25
        %v1442 = vadd.f32 %v1438, %v637
        %v1443 = vadd.f32 %v1439, %v638
        %v1444 = vadd.f32 %v1440, %v639
        %v1445 = vadd.f32 %v1441, %v640
        %v1446 = vsel %vm649, %v1442, -inf
        %1447 = vmax.xlane.f32.xlu0 %v1446
        %v1448 = vpop.xlane.xlu0 %1447
        %v1449 = vsel %vm649, %v1443, -inf
        %1450 = vmax.xlane.f32.xlu0 %v1449
        %v1451 = vpop.xlane.xlu0 %1450
        %v1452 = vsel %vm649, %v1444, -inf
        %1453 = vmax.xlane.f32.xlu0 %v1452
        %v1454 = vpop.xlane.xlu0 %1453
        %v1455 = vsel %vm649, %v1445, -inf
        %1456 = vmax.xlane.f32.xlu0 %v1455
        %v1457 = vpop.xlane.xlu0 %1456
        %v1458 = vsub.f32 %v1442, %v1448
        %v1459 = vsub.f32 %v1443, %v1451
        %v1460 = vsub.f32 %v1444, %v1454
        %v1461 = vsub.f32 %v1445, %v1457
        %v1462 = vmul.f32 %v1458, 1.442695
        %v1463 = vpow.pop %v1462
        %v1464 = vmul.f32 %v1459, 1.442695
        %v1465 = vpow.pop %v1464
        %v1466 = vmul.f32 %v1460, 1.442695
        %v1467 = vpow.pop %v1466
        %v1468 = vmul.f32 %v1461, 1.442695
        %v1469 = vpow.pop %v1468
        %v1470 = vsel %vm649, %v1463, 0.0
        %1471 = vadd.xlane.f32.xlu0 %v1470
        %v1472 = vpop.xlane.xlu0 %1471
        %v1473 = vsel %vm649, %v1465, 0.0
        %1474 = vadd.xlane.f32.xlu0 %v1473
        %v1475 = vpop.xlane.xlu0 %1474
        %v1476 = vsel %vm649, %v1467, 0.0
        %1477 = vadd.xlane.f32.xlu0 %v1476
        %v1478 = vpop.xlane.xlu0 %1477
        %v1479 = vsel %vm649, %v1469, 0.0
        %1480 = vadd.xlane.f32.xlu0 %v1479
        %v1481 = vpop.xlane.xlu0 %1480
        %v1482 = vrcp.pop %v1472
        %v1483 = vrcp.pop %v1475
        %v1484 = vrcp.pop %v1478
        %v1485 = vrcp.pop %v1481
        %v1486 = vmul.f32 %v1463, %v1482
        %v1487 = vmul.f32 %v1465, %v1483
        %v1488 = vmul.f32 %v1467, %v1484
        %v1489 = vmul.f32 %v1469, %v1485
        %1490 = vrot.lane.b32.xlu0 %v509, 80
        %v1491 = vpop.permute.xlu0 %1490
        %v1494 = vsel %vm649, %v1486, 0
        %1496 = vmatpush.msra.mxu0 0.0
        %1497 = vmatpush.msra.mxu0 0.0
        %1498 = vmatpush.msra.mxu0 0.0
        %1499 = vmatpush.msra.mxu0 0.0
        %1500 = vmatpush.msra.mxu0 0.0
        %1501 = vmatpush.msra.mxu0 0.0
        %1502 = vmatpush.msra.mxu0 0.0
        %1503 = vmatpush.msra.mxu0 0.0
        %1504 = vmatpush.msra.mxu0 0.0
        %1505 = vmatpush.msra.mxu0 0.0
        %1506 = vmatpush.msra.mxu0 0.0
        %1507 = vmatpush.msra.mxu0 0.0
        %1508 = vmatpush.msra.mxu0 0.0
        %1509 = vmatpush.msra.mxu0 0.0
        %1510 = vmatpush.msra.mxu0 0.0
        %1511 = vmatpush.msra.mxu0 %v1491
        %1512 = vmatmul.f32.gmra.mxu0 %v1494
        %v1513 = vpop.f32.mrf.mxu0
        %v1514 = vadd.f32 0.0, %v1513
        %1515 = vdwg.mxu0
        %1516 = vrot.lane.b32.xlu0 %v512, 80
        %v1517 = vpop.permute.xlu0 %1516
        %v1520 = vsel %vm649, %v1487, 0
        %1522 = vmatpush.msra.mxu0 0.0
        %1523 = vmatpush.msra.mxu0 0.0
        %1524 = vmatpush.msra.mxu0 0.0
        %1525 = vmatpush.msra.mxu0 0.0
        %1526 = vmatpush.msra.mxu0 0.0
        %1527 = vmatpush.msra.mxu0 0.0
        %1528 = vmatpush.msra.mxu0 0.0
        %1529 = vmatpush.msra.mxu0 0.0
        %1530 = vmatpush.msra.mxu0 0.0
        %1531 = vmatpush.msra.mxu0 0.0
        %1532 = vmatpush.msra.mxu0 0.0
        %1533 = vmatpush.msra.mxu0 0.0
        %1534 = vmatpush.msra.mxu0 0.0
        %1535 = vmatpush.msra.mxu0 0.0
        %1536 = vmatpush.msra.mxu0 0.0
        %1537 = vmatpush.msra.mxu0 %v1517
        %1538 = vmatmul.f32.gmra.mxu0 %v1520
        %v1539 = vpop.f32.mrf.mxu0
        %v1540 = vadd.f32 0.0, %v1539
        %1541 = vdwg.mxu0
        %1542 = vrot.lane.b32.xlu0 %v515, 80
        %v1543 = vpop.permute.xlu0 %1542
        %v1546 = vsel %vm649, %v1488, 0
        %1548 = vmatpush.msra.mxu0 0.0
        %1549 = vmatpush.msra.mxu0 0.0
        %1550 = vmatpush.msra.mxu0 0.0
        %1551 = vmatpush.msra.mxu0 0.0
        %1552 = vmatpush.msra.mxu0 0.0
        %1553 = vmatpush.msra.mxu0 0.0
        %1554 = vmatpush.msra.mxu0 0.0
        %1555 = vmatpush.msra.mxu0 0.0
        %1556 = vmatpush.msra.mxu0 0.0
        %1557 = vmatpush.msra.mxu0 0.0
        %1558 = vmatpush.msra.mxu0 0.0
        %1559 = vmatpush.msra.mxu0 0.0
        %1560 = vmatpush.msra.mxu0 0.0
        %1561 = vmatpush.msra.mxu0 0.0
        %1562 = vmatpush.msra.mxu0 0.0
        %1563 = vmatpush.msra.mxu0 %v1543
        %1564 = vmatmul.f32.gmra.mxu0 %v1546
        %v1565 = vpop.f32.mrf.mxu0
        %v1566 = vadd.f32 0.0, %v1565
        %1567 = vdwg.mxu0
        %1568 = vrot.lane.b32.xlu0 %v518, 80
        %v1569 = vpop.permute.xlu0 %1568
        %v1572 = vsel %vm649, %v1489, 0
        %1574 = vmatpush.msra.mxu0 0.0
        %1575 = vmatpush.msra.mxu0 0.0
        %1576 = vmatpush.msra.mxu0 0.0
        %1577 = vmatpush.msra.mxu0 0.0
        %1578 = vmatpush.msra.mxu0 0.0
        %1579 = vmatpush.msra.mxu0 0.0
        %1580 = vmatpush.msra.mxu0 0.0
        %1581 = vmatpush.msra.mxu0 0.0
        %1582 = vmatpush.msra.mxu0 0.0
        %1583 = vmatpush.msra.mxu0 0.0
        %1584 = vmatpush.msra.mxu0 0.0
        %1585 = vmatpush.msra.mxu0 0.0
        %1586 = vmatpush.msra.mxu0 0.0
        %1587 = vmatpush.msra.mxu0 0.0
        %1588 = vmatpush.msra.mxu0 0.0
        %1589 = vmatpush.msra.mxu0 %v1569
        %1590 = vmatmul.f32.gmra.mxu0 %v1572
        %v1591 = vpop.f32.mrf.mxu0
        %v1592 = vadd.f32 0.0, %v1591
        %1593 = vdwg.mxu0
        %1598 = vrot.lane.b32.xlu0 %v975, 16
        %v1599 = vpop.permute.xlu0 %1598
        %1600 = vrot.lane.b32.xlu0 %v1002, 16
        %v1601 = vpop.permute.xlu0 %1600
        %1602 = vrot.lane.b32.xlu0 %v1029, 16
        %v1603 = vpop.permute.xlu0 %1602
        %1604 = vrot.lane.b32.xlu0 %v1056, 16
        %v1605 = vpop.permute.xlu0 %1604
        %1614 = vrot.lane.b32.xlu0 %v1246, 32
        %v1615 = vpop.permute.xlu0 %1614
        %1616 = vrot.lane.b32.xlu0 %v1272, 32
        %v1617 = vpop.permute.xlu0 %1616
        %1618 = vrot.lane.b32.xlu0 %v1298, 32
        %v1619 = vpop.permute.xlu0 %1618
        %1620 = vrot.lane.b32.xlu0 %v1324, 32
        %v1621 = vpop.permute.xlu0 %1620
        %1630 = vrot.lane.b32.xlu0 %v1514, 48
        %v1631 = vpop.permute.xlu0 %1630
        %1632 = vrot.lane.b32.xlu0 %v1540, 48
        %v1633 = vpop.permute.xlu0 %1632
        %1634 = vrot.lane.b32.xlu0 %v1566, 48
        %v1635 = vpop.permute.xlu0 %1634
        %1636 = vrot.lane.b32.xlu0 %v1592, 48
        %v1637 = vpop.permute.xlu0 %1636
        %v1642 = vsel %vm523, %v715, %v1599
        %v1643 = vsel %vm523, %v738, %v1601
        %v1644 = vsel %vm523, %v761, %v1603
        %v1645 = vsel %vm523, %v784, %v1605
        %vm1646 = vcmask 261120
        %v1647 = vsel %vm1646, %v1642, %v1615
        %v1648 = vsel %vm1646, %v1643, %v1617
        %v1649 = vsel %vm1646, %v1644, %v1619
        %v1650 = vsel %vm1646, %v1645, %v1621
        %vm1651 = vcmask 392192
        %v1652 = vsel %vm1651, %v1647, %v1631
        %v1653 = vsel %vm1651, %v1648, %v1633
        %v1654 = vsel %vm1651, %v1649, %v1635
        %v1655 = vsel %vm1651, %v1650, %v1637
        %v1656 = vld [vmem:[#allocation2 + $0x10] sm:$0xff]
        %v1657 = vld [vmem:[#allocation2 + $0x30] sm:$0xff]
        %v1658 = vld [vmem:[#allocation2 + $0x50] sm:$0xff]
        %v1659 = vld [vmem:[#allocation2 + $0x70] sm:$0xff]
        %v1660 = vld [vmem:[#allocation2 + $0x90] sm:$0xff]
        %v1661 = vld [vmem:[#allocation2 + $0xb0] sm:$0xff]
        %v1662 = vld [vmem:[#allocation2 + $0xd0] sm:$0xff]
        %v1663 = vld [vmem:[#allocation2 + $0xf0] sm:$0xff]
        %v1664 = vperm.slane %v430, 1
        %v1666 = vsel %vm320, %v1652, 0
        %v1669 = vsel %vm320, %v1653, 0
        %v1672 = vsel %vm320, %v1654, 0
        %v1675 = vsel %vm320, %v1655, 0
        %1677 = vmatpush.msra.mxu0 0.0
        %1678 = vmatpush.msra.mxu0 0.0
        %1679 = vmatpush.msra.mxu0 0.0
        %1680 = vmatpush.msra.mxu0 0.0
        %1681 = vmatpush.msra.mxu0 0.0
        %1682 = vmatpush.msra.mxu0 0.0
        %1683 = vmatpush.msra.mxu0 0.0
        %1684 = vmatpush.msra.mxu0 0.0
        %1685 = vmatpush.msra.mxu0 %v1663
        %1686 = vmatpush.msra.mxu0 %v1662
        %1687 = vmatpush.msra.mxu0 %v1661
        %1688 = vmatpush.msra.mxu0 %v1660
        %1689 = vmatpush.msra.mxu0 %v1659
        %1690 = vmatpush.msra.mxu0 %v1658
        %1691 = vmatpush.msra.mxu0 %v1657
        %1692 = vmatpush.msra.mxu0 %v1656
        %1693 = vmatmul.f32.gmra.mxu0 %v1666
        %v1694 = vpop.f32.mrf.mxu0
        %v1695 = vadd.f32 %v1664, %v1694
        %1696 = vmatmul.f32.gmra.mxu0 %v1669
        %v1697 = vpop.f32.mrf.mxu0
        %v1698 = vadd.f32 %v1664, %v1697
        %1699 = vmatmul.f32.gmra.mxu0 %v1672
        %v1700 = vpop.f32.mrf.mxu0
        %v1701 = vadd.f32 %v1664, %v1700
        %1702 = vmatmul.f32.gmra.mxu0 %v1675
        %v1703 = vpop.f32.mrf.mxu0
        %v1704 = vadd.f32 %v1664, %v1703
        %1705 = vdwg.mxu0
        %v1706 = vadd.f32 %v1695, %v422
        %v1707 = vadd.f32 %v1698, %v423
        %v1708 = vadd.f32 %v1701, %v424
        %v1709 = vadd.f32 %v1704, %v425
        %v1710 = vsel %vm320, %v1706, 0.0
        %1711 = vadd.xlane.f32.xlu0 %v1710
        %v1712 = vpop.xlane.xlu0 %1711
        %v1713 = vsel %vm320, %v1707, 0.0
        %1714 = vadd.xlane.f32.xlu0 %v1713
        %v1715 = vpop.xlane.xlu0 %1714
        %v1716 = vsel %vm320, %v1708, 0.0
        %1717 = vadd.xlane.f32.xlu0 %v1716
        %v1718 = vpop.xlane.xlu0 %1717
        %v1719 = vsel %vm320, %v1709, 0.0
        %1720 = vadd.xlane.f32.xlu0 %v1719
        %v1721 = vpop.xlane.xlu0 %1720
        %v1722 = vmul.f32 %v1712, %v339
        %v1723 = vmul.f32 %v1715, %v339
        %v1724 = vmul.f32 %v1718, %v339
        %v1725 = vmul.f32 %v1721, %v339
        %v1726 = vsub.f32 %v1706, %v1722
        %v1727 = vsub.f32 %v1707, %v1723
        %v1728 = vsub.f32 %v1708, %v1724
        %v1729 = vsub.f32 %v1709, %v1725
        %v1730 = vmul.f32 %v1726, %v1726
        %v1731 = vmul.f32 %v1727, %v1727
        %v1732 = vmul.f32 %v1728, %v1728
        %v1733 = vmul.f32 %v1729, %v1729
        %v1734 = vsel %vm320, %v1730, 0.0
        %1735 = vadd.xlane.f32.xlu0 %v1734
        %v1736 = vpop.xlane.xlu0 %1735
        %v1737 = vsel %vm320, %v1731, 0.0
        %1738 = vadd.xlane.f32.xlu0 %v1737
        %v1739 = vpop.xlane.xlu0 %1738
        %v1740 = vsel %vm320, %v1732, 0.0
        %1741 = vadd.xlane.f32.xlu0 %v1740
        %v1742 = vpop.xlane.xlu0 %1741
        %v1743 = vsel %vm320, %v1733, 0.0
        %1744 = vadd.xlane.f32.xlu0 %v1743
        %v1745 = vpop.xlane.xlu0 %1744
        %v1746 = vmul.f32 %v1736, %v339
        %v1747 = vmul.f32 %v1739, %v339
        %v1748 = vmul.f32 %v1742, %v339
        %v1749 = vmul.f32 %v1745, %v339
        %v1750 = vadd.f32 %v1746, 1e-12
        %v1751 = vadd.f32 %v1747, 1e-12
        %v1752 = vadd.f32 %v1748, 1e-12
        %v1753 = vadd.f32 %v1749, 1e-12
        %v1754 = vrsqrt.pop %v1750
        %v1755 = vmul.f32 %v1754, %v1750
        %v1756 = vmul.f32 %v1755, %v1754
        %v1757 = vmul.f32 0.5, %v1756
        %v1758 = vsub.f32 1.5, %v1757
        %v1759 = vmul.f32 %v1754, %v1758
        %vm1760 = vweird.f32 %v1750
        %vm1761 = vweird.f32 %v1754
        %vm1762 = vmor %vm1760, %vm1761
        %v1763 = vsel %vm1762, %v1754, %v1759
        %v1764 = vrsqrt.pop %v1751
        %v1765 = vmul.f32 %v1764, %v1751
        %v1766 = vmul.f32 %v1765, %v1764
        %v1767 = vmul.f32 0.5, %v1766
        %v1768 = vsub.f32 1.5, %v1767
        %v1769 = vmul.f32 %v1764, %v1768
        %vm1770 = vweird.f32 %v1751
        %vm1771 = vweird.f32 %v1764
        %vm1772 = vmor %vm1770, %vm1771
        %v1773 = vsel %vm1772, %v1764, %v1769
        %v1774 = vrsqrt.pop %v1752
        %v1775 = vmul.f32 %v1774, %v1752
        %v1776 = vmul.f32 %v1775, %v1774
        %v1777 = vmul.f32 0.5, %v1776
        %v1778 = vsub.f32 1.5, %v1777
        %v1779 = vmul.f32 %v1774, %v1778
        %vm1780 = vweird.f32 %v1752
        %vm1781 = vweird.f32 %v1774
        %vm1782 = vmor %vm1780, %vm1781
        %v1783 = vsel %vm1782, %v1774, %v1779
        %v1784 = vrsqrt.pop %v1753
        %v1785 = vmul.f32 %v1784, %v1753
        %v1786 = vmul.f32 %v1785, %v1784
        %v1787 = vmul.f32 0.5, %v1786
        %v1788 = vsub.f32 1.5, %v1787
        %v1789 = vmul.f32 %v1784, %v1788
        %vm1790 = vweird.f32 %v1753
        %vm1791 = vweird.f32 %v1784
        %vm1792 = vmor %vm1790, %vm1791
        %v1793 = vsel %vm1792, %v1784, %v1789
        %v1794 = vmul.f32 %v1726, %v1763
        %v1795 = vmul.f32 %v1727, %v1773
        %v1796 = vmul.f32 %v1728, %v1783
        %v1797 = vmul.f32 %v1729, %v1793
        %v1798 = vperm.slane %v430, 2
        %v1799 = vmul.f32 %v1794, %v1798
        %v1800 = vmul.f32 %v1795, %v1798
        %v1801 = vmul.f32 %v1796, %v1798
        %v1802 = vmul.f32 %v1797, %v1798
        %v1803 = vperm.slane %v430, 3
        %v1804 = vadd.f32 %v1799, %v1803
        %v1805 = vadd.f32 %v1800, %v1803
        %v1806 = vadd.f32 %v1801, %v1803
        %v1807 = vadd.f32 %v1802, %v1803
        %v1808 = vld [vmem:[#allocation2 + $0x18] sm:$0xff]
        %v1809 = vld [vmem:[#allocation2 + $0x38] sm:$0xff]
        %v1810 = vld [vmem:[#allocation2 + $0x58] sm:$0xff]
        %v1811 = vld [vmem:[#allocation2 + $0x78] sm:$0xff]
        %v1812 = vld [vmem:[#allocation2 + $0x98] sm:$0xff]
        %v1813 = vld [vmem:[#allocation2 + $0xb8] sm:$0xff]
        %v1814 = vld [vmem:[#allocation2 + $0xd8] sm:$0xff]
        %v1815 = vld [vmem:[#allocation2 + $0xf8] sm:$0xff]
        %v1816 = vperm.slane %v430, 4
        %v1818 = vsel %vm320, %v1804, 0
        %v1821 = vsel %vm320, %v1805, 0
        %v1824 = vsel %vm320, %v1806, 0
        %v1827 = vsel %vm320, %v1807, 0
        %1829 = vmatpush.msra.mxu0 0.0
        %1830 = vmatpush.msra.mxu0 0.0
        %1831 = vmatpush.msra.mxu0 0.0
        %1832 = vmatpush.msra.mxu0 0.0
        %1833 = vmatpush.msra.mxu0 0.0
        %1834 = vmatpush.msra.mxu0 0.0
        %1835 = vmatpush.msra.mxu0 0.0
        %1836 = vmatpush.msra.mxu0 0.0
        %1837 = vmatpush.msra.mxu0 %v1815
        %1838 = vmatpush.msra.mxu0 %v1814
        %1839 = vmatpush.msra.mxu0 %v1813
        %1840 = vmatpush.msra.mxu0 %v1812
        %1841 = vmatpush.msra.mxu0 %v1811
        %1842 = vmatpush.msra.mxu0 %v1810
        %1843 = vmatpush.msra.mxu0 %v1809
        %1844 = vmatpush.msra.mxu0 %v1808
        %1845 = vmatmul.f32.gmra.mxu0 %v1818
        %v1846 = vpop.f32.mrf.mxu0
        %v1847 = vadd.f32 %v1816, %v1846
        %1848 = vmatmul.f32.gmra.mxu0 %v1821
        %v1849 = vpop.f32.mrf.mxu0
        %v1850 = vadd.f32 %v1816, %v1849
        %1851 = vmatmul.f32.gmra.mxu0 %v1824
        %v1852 = vpop.f32.mrf.mxu0
        %v1853 = vadd.f32 %v1816, %v1852
        %1854 = vmatmul.f32.gmra.mxu0 %v1827
        %v1855 = vpop.f32.mrf.mxu0
        %v1856 = vadd.f32 %v1816, %v1855
        %1857 = vdwg.mxu0
        %v1858 = vmul.f32 %v1847, 0.5
        %v1859 = vmul.f32 %v1850, 0.5
        %v1860 = vmul.f32 %v1853, 0.5
        %v1861 = vmul.f32 %v1856, 0.5
        %v1862 = vmul.f32 %v1847, 0.044715
        %v1863 = vmul.f32 %v1850, 0.044715
        %v1864 = vmul.f32 %v1853, 0.044715
        %v1865 = vmul.f32 %v1856, 0.044715
        %v1866 = vmul.f32 %v1862, %v1847
        %v1867 = vmul.f32 %v1863, %v1850
        %v1868 = vmul.f32 %v1864, %v1853
        %v1869 = vmul.f32 %v1865, %v1856
        %v1870 = vmul.f32 %v1866, %v1847
        %v1871 = vmul.f32 %v1867, %v1850
        %v1872 = vmul.f32 %v1868, %v1853
        %v1873 = vmul.f32 %v1869, %v1856
        %v1874 = vadd.f32 %v1847, %v1870
        %v1875 = vadd.f32 %v1850, %v1871
        %v1876 = vadd.f32 %v1853, %v1872
        %v1877 = vadd.f32 %v1856, %v1873
        %v1878 = vmul.f32 %v1874, 0.7978846
        %v1879 = vmul.f32 %v1875, 0.7978846
        %v1880 = vmul.f32 %v1876, 0.7978846
        %v1881 = vmul.f32 %v1877, 0.7978846
        %v1882 = vtanh.pop %v1878
        %v1883 = vtanh.pop %v1879
        %v1884 = vtanh.pop %v1880
        %v1885 = vtanh.pop %v1881
        %v1886 = vadd.f32 %v1882, 1.0
        %v1887 = vadd.f32 %v1883, 1.0
        %v1888 = vadd.f32 %v1884, 1.0
        %v1889 = vadd.f32 %v1885, 1.0
        %v1890 = vmul.f32 %v1858, %v1886
        %v1891 = vmul.f32 %v1859, %v1887
        %v1892 = vmul.f32 %v1860, %v1888
        %v1893 = vmul.f32 %v1861, %v1889
        %v1894 = vld [vmem:[%s3] sm:$0xff]
        %v1895 = vld [vmem:[%s3 + $0x8] sm:$0xff]
        %v1896 = vld [vmem:[%s3 + $0x10] sm:$0xff]
        %v1897 = vld [vmem:[%s3 + $0x18] sm:$0xff]
        %v1898 = vld [vmem:[%s3 + $0x20] sm:$0xff]
        %v1899 = vld [vmem:[%s3 + $0x28] sm:$0xff]
        %v1900 = vld [vmem:[%s3 + $0x30] sm:$0xff]
        %v1901 = vld [vmem:[%s3 + $0x38] sm:$0xff]
        %v1902 = vld [vmem:[%s3 + $0x40] sm:$0xff]
        %v1903 = vld [vmem:[%s3 + $0x48] sm:$0xff]
        %v1904 = vld [vmem:[%s3 + $0x50] sm:$0xff]
        %v1905 = vld [vmem:[%s3 + $0x58] sm:$0xff]
        %v1906 = vld [vmem:[%s3 + $0x60] sm:$0xff]
        %v1907 = vld [vmem:[%s3 + $0x68] sm:$0xff]
        %v1908 = vld [vmem:[%s3 + $0x70] sm:$0xff]
        %v1909 = vld [vmem:[%s3 + $0x78] sm:$0xff]
        %v1910 = vperm.slane %v430, 5
        %1911 = vmatpush.msra.mxu0 %v1909
        %1912 = vmatpush.msra.mxu0 %v1908
        %1913 = vmatpush.msra.mxu0 %v1907
        %1914 = vmatpush.msra.mxu0 %v1906
        %1915 = vmatpush.msra.mxu0 %v1905
        %1916 = vmatpush.msra.mxu0 %v1904
        %1917 = vmatpush.msra.mxu0 %v1903
        %1918 = vmatpush.msra.mxu0 %v1902
        %1919 = vmatpush.msra.mxu0 %v1901
        %1920 = vmatpush.msra.mxu0 %v1900
        %1921 = vmatpush.msra.mxu0 %v1899
        %1922 = vmatpush.msra.mxu0 %v1898
        %1923 = vmatpush.msra.mxu0 %v1897
        %1924 = vmatpush.msra.mxu0 %v1896
        %1925 = vmatpush.msra.mxu0 %v1895
        %1926 = vmatpush.msra.mxu0 %v1894
        %1927 = vmatmul.f32.gmra.mxu0 %v1890
        %v1928 = vpop.f32.mrf.mxu0
        %v1929 = vadd.f32 %v1910, %v1928
        %1930 = vmatmul.f32.gmra.mxu0 %v1891
        %v1931 = vpop.f32.mrf.mxu0
        %v1932 = vadd.f32 %v1910, %v1931
        %1933 = vmatmul.f32.gmra.mxu0 %v1892
        %v1934 = vpop.f32.mrf.mxu0
        %v1935 = vadd.f32 %v1910, %v1934
        %1936 = vmatmul.f32.gmra.mxu0 %v1893
        %v1937 = vpop.f32.mrf.mxu0
        %v1938 = vadd.f32 %v1910, %v1937
        %1939 = vdwg.mxu0
        %v1940 = vadd.f32 %v1929, %v1804
        %v1941 = vadd.f32 %v1932, %v1805
        %v1942 = vadd.f32 %v1935, %v1806
        %v1943 = vadd.f32 %v1938, %v1807
        %v1944 = vsel %vm320, %v1940, 0.0
        %1945 = vadd.xlane.f32.xlu0 %v1944
        %v1946 = vpop.xlane.xlu0 %1945
        %v1947 = vsel %vm320, %v1941, 0.0
        %1948 = vadd.xlane.f32.xlu0 %v1947
        %v1949 = vpop.xlane.xlu0 %1948
        %v1950 = vsel %vm320, %v1942, 0.0
        %1951 = vadd.xlane.f32.xlu0 %v1950
        %v1952 = vpop.xlane.xlu0 %1951
        %v1953 = vsel %vm320, %v1943, 0.0
        %1954 = vadd.xlane.f32.xlu0 %v1953
        %v1955 = vpop.xlane.xlu0 %1954
        %v1956 = vmul.f32 %v1946, %v339
        %v1957 = vmul.f32 %v1949, %v339
        %v1958 = vmul.f32 %v1952, %v339
        %v1959 = vmul.f32 %v1955, %v339
        %v1960 = vsub.f32 %v1940, %v1956
        %v1961 = vsub.f32 %v1941, %v1957
        %v1962 = vsub.f32 %v1942, %v1958
        %v1963 = vsub.f32 %v1943, %v1959
        %v1964 = vmul.f32 %v1960, %v1960
        %v1965 = vmul.f32 %v1961, %v1961
        %v1966 = vmul.f32 %v1962, %v1962
        %v1967 = vmul.f32 %v1963, %v1963
        %v1968 = vsel %vm320, %v1964, 0.0
        %1969 = vadd.xlane.f32.xlu0 %v1968
        %v1970 = vpop.xlane.xlu0 %1969
        %v1971 = vsel %vm320, %v1965, 0.0
        %1972 = vadd.xlane.f32.xlu0 %v1971
        %v1973 = vpop.xlane.xlu0 %1972
        %v1974 = vsel %vm320, %v1966, 0.0
        %1975 = vadd.xlane.f32.xlu0 %v1974
        %v1976 = vpop.xlane.xlu0 %1975
        %v1977 = vsel %vm320, %v1967, 0.0
        %1978 = vadd.xlane.f32.xlu0 %v1977
        %v1979 = vpop.xlane.xlu0 %1978
        %v1980 = vmul.f32 %v1970, %v339
        %v1981 = vmul.f32 %v1973, %v339
        %v1982 = vmul.f32 %v1976, %v339
        %v1983 = vmul.f32 %v1979, %v339
        %v1984 = vadd.f32 %v1980, 1e-12
        %v1985 = vadd.f32 %v1981, 1e-12
        %v1986 = vadd.f32 %v1982, 1e-12
        %v1987 = vadd.f32 %v1983, 1e-12
        %v1988 = vrsqrt.pop %v1984
        %v1989 = vmul.f32 %v1988, %v1984
        %v1990 = vmul.f32 %v1989, %v1988
        %v1991 = vmul.f32 0.5, %v1990
        %v1992 = vsub.f32 1.5, %v1991
        %v1993 = vmul.f32 %v1988, %v1992
        %vm1994 = vweird.f32 %v1984
        %vm1995 = vweird.f32 %v1988
        %vm1996 = vmor %vm1994, %vm1995
        %v1997 = vsel %vm1996, %v1988, %v1993
        %v1998 = vrsqrt.pop %v1985
        %v1999 = vmul.f32 %v1998, %v1985
        %v2000 = vmul.f32 %v1999, %v1998
        %v2001 = vmul.f32 0.5, %v2000
        %v2002 = vsub.f32 1.5, %v2001
        %v2003 = vmul.f32 %v1998, %v2002
        %vm2004 = vweird.f32 %v1985
        %vm2005 = vweird.f32 %v1998
        %vm2006 = vmor %vm2004, %vm2005
        %v2007 = vsel %vm2006, %v1998, %v2003
        %v2008 = vrsqrt.pop %v1986
        %v2009 = vmul.f32 %v2008, %v1986
        %v2010 = vmul.f32 %v2009, %v2008
        %v2011 = vmul.f32 0.5, %v2010
        %v2012 = vsub.f32 1.5, %v2011
        %v2013 = vmul.f32 %v2008, %v2012
        %vm2014 = vweird.f32 %v1986
        %vm2015 = vweird.f32 %v2008
        %vm2016 = vmor %vm2014, %vm2015
        %v2017 = vsel %vm2016, %v2008, %v2013
        %v2018 = vrsqrt.pop %v1987
        %v2019 = vmul.f32 %v2018, %v1987
        %v2020 = vmul.f32 %v2019, %v2018
        %v2021 = vmul.f32 0.5, %v2020
        %v2022 = vsub.f32 1.5, %v2021
        %v2023 = vmul.f32 %v2018, %v2022
        %vm2024 = vweird.f32 %v1987
        %vm2025 = vweird.f32 %v2018
        %vm2026 = vmor %vm2024, %vm2025
        %v2027 = vsel %vm2026, %v2018, %v2023
        %v2028 = vmul.f32 %v1960, %v1997
        %v2029 = vmul.f32 %v1961, %v2007
        %v2030 = vmul.f32 %v1962, %v2017
        %v2031 = vmul.f32 %v1963, %v2027
        %v2032 = vperm.slane %v430, 6
        %v2033 = vmul.f32 %v2028, %v2032
        %v2034 = vmul.f32 %v2029, %v2032
        %v2035 = vmul.f32 %v2030, %v2032
        %v2036 = vmul.f32 %v2031, %v2032
        %v2037 = vperm.slane %v430, 7
        %v2038 = vadd.f32 %v2033, %v2037
        %v2039 = vadd.f32 %v2034, %v2037
        %v2040 = vadd.f32 %v2035, %v2037
        %v2041 = vadd.f32 %v2036, %v2037
        %s2042 = scalar_lea.vmem %s4, 16
        %v2043 = vld [vmem:[%s2042] sm:$0xff]
        %v2044 = vld [vmem:[%s2042 + $0x8] sm:$0xff]
        %s2045 = scalar_lea.vmem [#allocation2], 256
        %v2046 = vld [vmem:[%s2045] sm:$0xff]
        %v2047 = vld [vmem:[%s2045 + $0x8] sm:$0xff]
        %v2048 = vld [vmem:[%s2045 + $0x20] sm:$0xff]
        %v2049 = vld [vmem:[%s2045 + $0x28] sm:$0xff]
        %v2050 = vld [vmem:[%s2045 + $0x40] sm:$0xff]
        %v2051 = vld [vmem:[%s2045 + $0x48] sm:$0xff]
        %v2052 = vld [vmem:[%s2045 + $0x60] sm:$0xff]
        %v2053 = vld [vmem:[%s2045 + $0x68] sm:$0xff]
        %v2054 = vld [vmem:[%s2045 + $0x80] sm:$0xff]
        %v2055 = vld [vmem:[%s2045 + $0x88] sm:$0xff]
        %v2056 = vld [vmem:[%s2045 + $0xa0] sm:$0xff]
        %v2057 = vld [vmem:[%s2045 + $0xa8] sm:$0xff]
        %v2058 = vld [vmem:[%s2045 + $0xc0] sm:$0xff]
        %v2059 = vld [vmem:[%s2045 + $0xc8] sm:$0xff]
        %v2060 = vld [vmem:[%s2045 + $0xe0] sm:$0xff]
        %v2061 = vld [vmem:[%s2045 + $0xe8] sm:$0xff]
        %v2062 = vperm.slane %v2043, 0
        %v2063 = vperm.slane %v2044, 0
        %v2065 = vsel %vm320, %v2038, 0
        %v2068 = vsel %vm320, %v2039, 0
        %v2071 = vsel %vm320, %v2040, 0
        %v2074 = vsel %vm320, %v2041, 0
        %2076 = vmatpush.msra.mxu0 0.0
        %2077 = vmatpush.msra.mxu0 0.0
        %2078 = vmatpush.msra.mxu0 0.0
        %2079 = vmatpush.msra.mxu0 0.0
        %2080 = vmatpush.msra.mxu0 0.0
        %2081 = vmatpush.msra.mxu0 0.0
        %2082 = vmatpush.msra.mxu0 0.0
        %2083 = vmatpush.msra.mxu0 0.0
        %2084 = vmatpush.msra.mxu0 %v2060
        %2085 = vmatpush.msra.mxu0 %v2058
        %2086 = vmatpush.msra.mxu0 %v2056
        %2087 = vmatpush.msra.mxu0 %v2054
        %2088 = vmatpush.msra.mxu0 %v2052
        %2089 = vmatpush.msra.mxu0 %v2050
        %2090 = vmatpush.msra.mxu0 %v2048
        %2091 = vmatpush.msra.mxu0 %v2046
        %2092 = vmatmul.f32.gmra.mxu0 %v2065
        %v2093 = vpop.f32.mrf.mxu0
        %v2094 = vadd.f32 %v2062, %v2093
        %2095 = vmatmul.f32.gmra.mxu0 %v2068
        %v2096 = vpop.f32.mrf.mxu0
        %v2097 = vadd.f32 %v2062, %v2096
        %2098 = vmatmul.f32.gmra.mxu0 %v2071
        %v2099 = vpop.f32.mrf.mxu0
        %v2100 = vadd.f32 %v2062, %v2099
        %2101 = vmatmul.f32.gmra.mxu0 %v2074
        %v2102 = vpop.f32.mrf.mxu0
        %v2103 = vadd.f32 %v2062, %v2102
        %2104 = vdwg.mxu0
        %2105 = vmatpush.msra.mxu0 0.0
        %2106 = vmatpush.msra.mxu0 0.0
        %2107 = vmatpush.msra.mxu0 0.0
        %2108 = vmatpush.msra.mxu0 0.0
        %2109 = vmatpush.msra.mxu0 0.0
        %2110 = vmatpush.msra.mxu0 0.0
        %2111 = vmatpush.msra.mxu0 0.0
        %2112 = vmatpush.msra.mxu0 0.0
        %2113 = vmatpush.msra.mxu0 %v2061
        %2114 = vmatpush.msra.mxu0 %v2059
        %2115 = vmatpush.msra.mxu0 %v2057
        %2116 = vmatpush.msra.mxu0 %v2055
        %2117 = vmatpush.msra.mxu0 %v2053
        %2118 = vmatpush.msra.mxu0 %v2051
        %2119 = vmatpush.msra.mxu0 %v2049
        %2120 = vmatpush.msra.mxu0 %v2047
        %2121 = vmatmul.f32.gmra.mxu0 %v2065
        %v2122 = vpop.f32.mrf.mxu0
        %v2123 = vadd.f32 %v2063, %v2122
        %2124 = vmatmul.f32.gmra.mxu0 %v2068
        %v2125 = vpop.f32.mrf.mxu0
        %v2126 = vadd.f32 %v2063, %v2125
        %2127 = vmatmul.f32.gmra.mxu0 %v2071
        %v2128 = vpop.f32.mrf.mxu0
        %v2129 = vadd.f32 %v2063, %v2128
        %2130 = vmatmul.f32.gmra.mxu0 %v2074
        %v2131 = vpop.f32.mrf.mxu0
        %v2132 = vadd.f32 %v2063, %v2131
        %2133 = vdwg.mxu0
        %2135 = vrot.lane.b32.xlu0 %v2094, 64
        %v2136 = vpop.permute.xlu0 %2135
        %v2137 = vsel %vm523, %v2094, 0
        %v2139 = vsel %vm523, %v2136, 0
        %2141 = vmatpush.xpose.msra.mxu0 0.0
        %2142 = vmatpush.xpose.msra.mxu0 0.0
        %2143 = vmatpush.xpose.msra.mxu0 0.0
        %2144 = vmatpush.xpose.msra.mxu0 0.0
        %2145 = vmatpush.xpose.msra.mxu0 0.0
        %2146 = vmatpush.xpose.msra.mxu0 0.0
        %2147 = vmatpush.xpose.msra.mxu0 0.0
        %2148 = vmatpush.xpose.msra.mxu0 0.0
        %2149 = vmatpush.xpose.msra.mxu0 0.0
        %2150 = vmatpush.xpose.msra.mxu0 0.0
        %2151 = vmatpush.xpose.msra.mxu0 0.0
        %2152 = vmatpush.xpose.msra.mxu0 0.0
        %2153 = vmatpush.xpose.msra.mxu0 0.0
        %2154 = vmatpush.xpose.msra.mxu0 0.0
        %2155 = vmatpush.xpose.msra.mxu0 0.0
        %2156 = vmatpush.xpose.msra.mxu0 %v2139
        %2157 = vmatmul.f32.gmra.mxu0 %v2137
        %v2158 = vpop.f32.mrf.mxu0
        %v2159 = vadd.f32 0.0, %v2158
        %2160 = vdwg.mxu0
        %2162 = vrot.lane.b32.xlu0 %v2097, 64
        %v2163 = vpop.permute.xlu0 %2162
        %v2164 = vsel %vm523, %v2097, 0
        %v2166 = vsel %vm523, %v2163, 0
        %2168 = vmatpush.xpose.msra.mxu0 0.0
        %2169 = vmatpush.xpose.msra.mxu0 0.0
        %2170 = vmatpush.xpose.msra.mxu0 0.0
        %2171 = vmatpush.xpose.msra.mxu0 0.0
        %2172 = vmatpush.xpose.msra.mxu0 0.0
        %2173 = vmatpush.xpose.msra.mxu0 0.0
        %2174 = vmatpush.xpose.msra.mxu0 0.0
        %2175 = vmatpush.xpose.msra.mxu0 0.0
        %2176 = vmatpush.xpose.msra.mxu0 0.0
        %2177 = vmatpush.xpose.msra.mxu0 0.0
        %2178 = vmatpush.xpose.msra.mxu0 0.0
        %2179 = vmatpush.xpose.msra.mxu0 0.0
        %2180 = vmatpush.xpose.msra.mxu0 0.0
        %2181 = vmatpush.xpose.msra.mxu0 0.0
        %2182 = vmatpush.xpose.msra.mxu0 0.0
        %2183 = vmatpush.xpose.msra.mxu0 %v2166
        %2184 = vmatmul.f32.gmra.mxu0 %v2164
        %v2185 = vpop.f32.mrf.mxu0
        %v2186 = vadd.f32 0.0, %v2185
        %2187 = vdwg.mxu0
        %2189 = vrot.lane.b32.xlu0 %v2100, 64
        %v2190 = vpop.permute.xlu0 %2189
        %v2191 = vsel %vm523, %v2100, 0
        %v2193 = vsel %vm523, %v2190, 0
        %2195 = vmatpush.xpose.msra.mxu0 0.0
        %2196 = vmatpush.xpose.msra.mxu0 0.0
        %2197 = vmatpush.xpose.msra.mxu0 0.0
        %2198 = vmatpush.xpose.msra.mxu0 0.0
        %2199 = vmatpush.xpose.msra.mxu0 0.0
        %2200 = vmatpush.xpose.msra.mxu0 0.0
        %2201 = vmatpush.xpose.msra.mxu0 0.0
        %2202 = vmatpush.xpose.msra.mxu0 0.0
        %2203 = vmatpush.xpose.msra.mxu0 0.0
        %2204 = vmatpush.xpose.msra.mxu0 0.0
        %2205 = vmatpush.xpose.msra.mxu0 0.0
        %2206 = vmatpush.xpose.msra.mxu0 0.0
        %2207 = vmatpush.xpose.msra.mxu0 0.0
        %2208 = vmatpush.xpose.msra.mxu0 0.0
        %2209 = vmatpush.xpose.msra.mxu0 0.0
        %2210 = vmatpush.xpose.msra.mxu0 %v2193
        %2211 = vmatmul.f32.gmra.mxu0 %v2191
        %v2212 = vpop.f32.mrf.mxu0
        %v2213 = vadd.f32 0.0, %v2212
        %2214 = vdwg.mxu0
        %2216 = vrot.lane.b32.xlu0 %v2103, 64
        %v2217 = vpop.permute.xlu0 %2216
        %v2218 = vsel %vm523, %v2103, 0
        %v2220 = vsel %vm523, %v2217, 0
        %2222 = vmatpush.xpose.msra.mxu0 0.0
        %2223 = vmatpush.xpose.msra.mxu0 0.0
        %2224 = vmatpush.xpose.msra.mxu0 0.0
        %2225 = vmatpush.xpose.msra.mxu0 0.0
        %2226 = vmatpush.xpose.msra.mxu0 0.0
        %2227 = vmatpush.xpose.msra.mxu0 0.0
        %2228 = vmatpush.xpose.msra.mxu0 0.0
        %2229 = vmatpush.xpose.msra.mxu0 0.0
        %2230 = vmatpush.xpose.msra.mxu0 0.0
        %2231 = vmatpush.xpose.msra.mxu0 0.0
        %2232 = vmatpush.xpose.msra.mxu0 0.0
        %2233 = vmatpush.xpose.msra.mxu0 0.0
        %2234 = vmatpush.xpose.msra.mxu0 0.0
        %2235 = vmatpush.xpose.msra.mxu0 0.0
        %2236 = vmatpush.xpose.msra.mxu0 0.0
        %2237 = vmatpush.xpose.msra.mxu0 %v2220
        %2238 = vmatmul.f32.gmra.mxu0 %v2218
        %v2239 = vpop.f32.mrf.mxu0
        %v2240 = vadd.f32 0.0, %v2239
        %2241 = vdwg.mxu0
        %v2242 = vmul.f32 %v2159, 0.25
        %v2243 = vmul.f32 %v2186, 0.25
        %v2244 = vmul.f32 %v2213, 0.25
        %v2245 = vmul.f32 %v2240, 0.25
        %v2246 = vadd.f32 %v2242, %v637
        %v2247 = vadd.f32 %v2243, %v638
        %v2248 = vadd.f32 %v2244, %v639
        %v2249 = vadd.f32 %v2245, %v640
        %v2250 = vsel %vm649, %v2246, -inf
        %2251 = vmax.xlane.f32.xlu0 %v2250
        %v2252 = vpop.xlane.xlu0 %2251
        %v2253 = vsel %vm649, %v2247, -inf
        %2254 = vmax.xlane.f32.xlu0 %v2253
        %v2255 = vpop.xlane.xlu0 %2254
        %v2256 = vsel %vm649, %v2248, -inf
        %2257 = vmax.xlane.f32.xlu0 %v2256
        %v2258 = vpop.xlane.xlu0 %2257
        %v2259 = vsel %vm649, %v2249, -inf
        %2260 = vmax.xlane.f32.xlu0 %v2259
        %v2261 = vpop.xlane.xlu0 %2260
        %v2262 = vsub.f32 %v2246, %v2252
        %v2263 = vsub.f32 %v2247, %v2255
        %v2264 = vsub.f32 %v2248, %v2258
        %v2265 = vsub.f32 %v2249, %v2261
        %v2266 = vmul.f32 %v2262, 1.442695
        %v2267 = vpow.pop %v2266
        %v2268 = vmul.f32 %v2263, 1.442695
        %v2269 = vpow.pop %v2268
        %v2270 = vmul.f32 %v2264, 1.442695
        %v2271 = vpow.pop %v2270
        %v2272 = vmul.f32 %v2265, 1.442695
        %v2273 = vpow.pop %v2272
        %v2274 = vsel %vm649, %v2267, 0.0
        %2275 = vadd.xlane.f32.xlu0 %v2274
        %v2276 = vpop.xlane.xlu0 %2275
        %v2277 = vsel %vm649, %v2269, 0.0
        %2278 = vadd.xlane.f32.xlu0 %v2277
        %v2279 = vpop.xlane.xlu0 %2278
        %v2280 = vsel %vm649, %v2271, 0.0
        %2281 = vadd.xlane.f32.xlu0 %v2280
        %v2282 = vpop.xlane.xlu0 %2281
        %v2283 = vsel %vm649, %v2273, 0.0
        %2284 = vadd.xlane.f32.xlu0 %v2283
        %v2285 = vpop.xlane.xlu0 %2284
        %v2286 = vrcp.pop %v2276
        %v2287 = vrcp.pop %v2279
        %v2288 = vrcp.pop %v2282
        %v2289 = vrcp.pop %v2285
        %v2290 = vmul.f32 %v2267, %v2286
        %v2291 = vmul.f32 %v2269, %v2287
        %v2292 = vmul.f32 %v2271, %v2288
        %v2293 = vmul.f32 %v2273, %v2289
        %v2295 = vsel %vm649, %v2290, 0
        %2297 = vmatpush.msra.mxu0 0.0
        %2298 = vmatpush.msra.mxu0 0.0
        %2299 = vmatpush.msra.mxu0 0.0
        %2300 = vmatpush.msra.mxu0 0.0
        %2301 = vmatpush.msra.mxu0 0.0
        %2302 = vmatpush.msra.mxu0 0.0
        %2303 = vmatpush.msra.mxu0 0.0
        %2304 = vmatpush.msra.mxu0 0.0
        %2305 = vmatpush.msra.mxu0 0.0
        %2306 = vmatpush.msra.mxu0 0.0
        %2307 = vmatpush.msra.mxu0 0.0
        %2308 = vmatpush.msra.mxu0 0.0
        %2309 = vmatpush.msra.mxu0 0.0
        %2310 = vmatpush.msra.mxu0 0.0
        %2311 = vmatpush.msra.mxu0 0.0
        %2312 = vmatpush.msra.mxu0 %v2123
        %2313 = vmatmul.f32.gmra.mxu0 %v2295
        %v2314 = vpop.f32.mrf.mxu0
        %v2315 = vadd.f32 0.0, %v2314
        %2316 = vdwg.mxu0
        %v2318 = vsel %vm649, %v2291, 0
        %2320 = vmatpush.msra.mxu0 0.0
        %2321 = vmatpush.msra.mxu0 0.0
        %2322 = vmatpush.msra.mxu0 0.0
        %2323 = vmatpush.msra.mxu0 0.0
        %2324 = vmatpush.msra.mxu0 0.0
        %2325 = vmatpush.msra.mxu0 0.0
        %2326 = vmatpush.msra.mxu0 0.0
        %2327 = vmatpush.msra.mxu0 0.0
        %2328 = vmatpush.msra.mxu0 0.0
        %2329 = vmatpush.msra.mxu0 0.0
        %2330 = vmatpush.msra.mxu0 0.0
        %2331 = vmatpush.msra.mxu0 0.0
        %2332 = vmatpush.msra.mxu0 0.0
        %2333 = vmatpush.msra.mxu0 0.0
        %2334 = vmatpush.msra.mxu0 0.0
        %2335 = vmatpush.msra.mxu0 %v2126
        %2336 = vmatmul.f32.gmra.mxu0 %v2318
        %v2337 = vpop.f32.mrf.mxu0
        %v2338 = vadd.f32 0.0, %v2337
        %2339 = vdwg.mxu0
        %v2341 = vsel %vm649, %v2292, 0
        %2343 = vmatpush.msra.mxu0 0.0
        %2344 = vmatpush.msra.mxu0 0.0
        %2345 = vmatpush.msra.mxu0 0.0
        %2346 = vmatpush.msra.mxu0 0.0
        %2347 = vmatpush.msra.mxu0 0.0
        %2348 = vmatpush.msra.mxu0 0.0
        %2349 = vmatpush.msra.mxu0 0.0
        %2350 = vmatpush.msra.mxu0 0.0
        %2351 = vmatpush.msra.mxu0 0.0
        %2352 = vmatpush.msra.mxu0 0.0
        %2353 = vmatpush.msra.mxu0 0.0
        %2354 = vmatpush.msra.mxu0 0.0
        %2355 = vmatpush.msra.mxu0 0.0
        %2356 = vmatpush.msra.mxu0 0.0
        %2357 = vmatpush.msra.mxu0 0.0
        %2358 = vmatpush.msra.mxu0 %v2129
        %2359 = vmatmul.f32.gmra.mxu0 %v2341
        %v2360 = vpop.f32.mrf.mxu0
        %v2361 = vadd.f32 0.0, %v2360
        %2362 = vdwg.mxu0
        %v2364 = vsel %vm649, %v2293, 0
        %2366 = vmatpush.msra.mxu0 0.0
        %2367 = vmatpush.msra.mxu0 0.0
        %2368 = vmatpush.msra.mxu0 0.0
        %2369 = vmatpush.msra.mxu0 0.0
        %2370 = vmatpush.msra.mxu0 0.0
        %2371 = vmatpush.msra.mxu0 0.0
        %2372 = vmatpush.msra.mxu0 0.0
        %2373 = vmatpush.msra.mxu0 0.0
        %2374 = vmatpush.msra.mxu0 0.0
        %2375 = vmatpush.msra.mxu0 0.0
        %2376 = vmatpush.msra.mxu0 0.0
        %2377 = vmatpush.msra.mxu0 0.0
        %2378 = vmatpush.msra.mxu0 0.0
        %2379 = vmatpush.msra.mxu0 0.0
        %2380 = vmatpush.msra.mxu0 0.0
        %2381 = vmatpush.msra.mxu0 %v2132
        %2382 = vmatmul.f32.gmra.mxu0 %v2364
        %v2383 = vpop.f32.mrf.mxu0
        %v2384 = vadd.f32 0.0, %v2383
        %2385 = vdwg.mxu0
        %2386 = vrot.lane.b32.xlu0 %v2094, 112
        %v2387 = vpop.permute.xlu0 %2386
        %2388 = vrot.lane.b32.xlu0 %v2094, 48
        %v2389 = vpop.permute.xlu0 %2388
        %v2390 = vsel %vm523, %v2387, 0
        %v2392 = vsel %vm523, %v2389, 0
        %2394 = vmatpush.xpose.msra.mxu0 0.0
        %2395 = vmatpush.xpose.msra.mxu0 0.0
        %2396 = vmatpush.xpose.msra.mxu0 0.0
        %2397 = vmatpush.xpose.msra.mxu0 0.0
        %2398 = vmatpush.xpose.msra.mxu0 0.0
        %2399 = vmatpush.xpose.msra.mxu0 0.0
        %2400 = vmatpush.xpose.msra.mxu0 0.0
        %2401 = vmatpush.xpose.msra.mxu0 0.0
        %2402 = vmatpush.xpose.msra.mxu0 0.0
        %2403 = vmatpush.xpose.msra.mxu0 0.0
        %2404 = vmatpush.xpose.msra.mxu0 0.0
        %2405 = vmatpush.xpose.msra.mxu0 0.0
        %2406 = vmatpush.xpose.msra.mxu0 0.0
        %2407 = vmatpush.xpose.msra.mxu0 0.0
        %2408 = vmatpush.xpose.msra.mxu0 0.0
        %2409 = vmatpush.xpose.msra.mxu0 %v2392
        %2410 = vmatmul.f32.gmra.mxu0 %v2390
        %v2411 = vpop.f32.mrf.mxu0
        %v2412 = vadd.f32 0.0, %v2411
        %2413 = vdwg.mxu0
        %2414 = vrot.lane.b32.xlu0 %v2097, 112
        %v2415 = vpop.permute.xlu0 %2414
        %2416 = vrot.lane.b32.xlu0 %v2097, 48
        %v2417 = vpop.permute.xlu0 %2416
        %v2418 = vsel %vm523, %v2415, 0
        %v2420 = vsel %vm523, %v2417, 0
        %2422 = vmatpush.xpose.msra.mxu0 0.0
        %2423 = vmatpush.xpose.msra.mxu0 0.0
        %2424 = vmatpush.xpose.msra.mxu0 0.0
        %2425 = vmatpush.xpose.msra.mxu0 0.0
        %2426 = vmatpush.xpose.msra.mxu0 0.0
        %2427 = vmatpush.xpose.msra.mxu0 0.0
        %2428 = vmatpush.xpose.msra.mxu0 0.0
        %2429 = vmatpush.xpose.msra.mxu0 0.0
        %2430 = vmatpush.xpose.msra.mxu0 0.0
        %2431 = vmatpush.xpose.msra.mxu0 0.0
        %2432 = vmatpush.xpose.msra.mxu0 0.0
        %2433 = vmatpush.xpose.msra.mxu0 0.0
        %2434 = vmatpush.xpose.msra.mxu0 0.0
        %2435 = vmatpush.xpose.msra.mxu0 0.0
        %2436 = vmatpush.xpose.msra.mxu0 0.0
        %2437 = vmatpush.xpose.msra.mxu0 %v2420
        %2438 = vmatmul.f32.gmra.mxu0 %v2418
        %v2439 = vpop.f32.mrf.mxu0
        %v2440 = vadd.f32 0.0, %v2439
        %2441 = vdwg.mxu0
        %2442 = vrot.lane.b32.xlu0 %v2100, 112
        %v2443 = vpop.permute.xlu0 %2442
        %2444 = vrot.lane.b32.xlu0 %v2100, 48
        %v2445 = vpop.permute.xlu0 %2444
        %v2446 = vsel %vm523, %v2443, 0
        %v2448 = vsel %vm523, %v2445, 0
        %2450 = vmatpush.xpose.msra.mxu0 0.0
        %2451 = vmatpush.xpose.msra.mxu0 0.0
        %2452 = vmatpush.xpose.msra.mxu0 0.0
        %2453 = vmatpush.xpose.msra.mxu0 0.0
        %2454 = vmatpush.xpose.msra.mxu0 0.0
        %2455 = vmatpush.xpose.msra.mxu0 0.0
        %2456 = vmatpush.xpose.msra.mxu0 0.0
        %2457 = vmatpush.xpose.msra.mxu0 0.0
        %2458 = vmatpush.xpose.msra.mxu0 0.0
        %2459 = vmatpush.xpose.msra.mxu0 0.0
        %2460 = vmatpush.xpose.msra.mxu0 0.0
        %2461 = vmatpush.xpose.msra.mxu0 0.0
        %2462 = vmatpush.xpose.msra.mxu0 0.0
        %2463 = vmatpush.xpose.msra.mxu0 0.0
        %2464 = vmatpush.xpose.msra.mxu0 0.0
        %2465 = vmatpush.xpose.msra.mxu0 %v2448
        %2466 = vmatmul.f32.gmra.mxu0 %v2446
        %v2467 = vpop.f32.mrf.mxu0
        %v2468 = vadd.f32 0.0, %v2467
        %2469 = vdwg.mxu0
        %2470 = vrot.lane.b32.xlu0 %v2103, 112
        %v2471 = vpop.permute.xlu0 %2470
        %2472 = vrot.lane.b32.xlu0 %v2103, 48
        %v2473 = vpop.permute.xlu0 %2472
        %v2474 = vsel %vm523, %v2471, 0
        %v2476 = vsel %vm523, %v2473, 0
        %2478 = vmatpush.xpose.msra.mxu0 0.0
        %2479 = vmatpush.xpose.msra.mxu0 0.0
        %2480 = vmatpush.xpose.msra.mxu0 0.0
        %2481 = vmatpush.xpose.msra.mxu0 0.0
        %2482 = vmatpush.xpose.msra.mxu0 0.0
        %2483 = vmatpush.xpose.msra.mxu0 0.0
        %2484 = vmatpush.xpose.msra.mxu0 0.0
        %2485 = vmatpush.xpose.msra.mxu0 0.0
        %2486 = vmatpush.xpose.msra.mxu0 0.0
        %2487 = vmatpush.xpose.msra.mxu0 0.0
        %2488 = vmatpush.xpose.msra.mxu0 0.0
        %2489 = vmatpush.xpose.msra.mxu0 0.0
        %2490 = vmatpush.xpose.msra.mxu0 0.0
        %2491 = vmatpush.xpose.msra.mxu0 0.0
        %2492 = vmatpush.xpose.msra.mxu0 0.0
        %2493 = vmatpush.xpose.msra.mxu0 %v2476
        %2494 = vmatmul.f32.gmra.mxu0 %v2474
        %v2495 = vpop.f32.mrf.mxu0
        %v2496 = vadd.f32 0.0, %v2495
        %2497 = vdwg.mxu0
        %v2498 = vmul.f32 %v2412, 0.25
        %v2499 = vmul.f32 %v2440, 0.25
        %v2500 = vmul.f32 %v2468, 0.25
        %v2501 = vmul.f32 %v2496, 0.25
        %v2502 = vadd.f32 %v2498, %v637
        %v2503 = vadd.f32 %v2499, %v638
        %v2504 = vadd.f32 %v2500, %v639
        %v2505 = vadd.f32 %v2501, %v640
        %v2506 = vsel %vm649, %v2502, -inf
        %2507 = vmax.xlane.f32.xlu0 %v2506
        %v2508 = vpop.xlane.xlu0 %2507
        %v2509 = vsel %vm649, %v2503, -inf
        %2510 = vmax.xlane.f32.xlu0 %v2509
        %v2511 = vpop.xlane.xlu0 %2510
        %v2512 = vsel %vm649, %v2504, -inf
        %2513 = vmax.xlane.f32.xlu0 %v2512
        %v2514 = vpop.xlane.xlu0 %2513
        %v2515 = vsel %vm649, %v2505, -inf
        %2516 = vmax.xlane.f32.xlu0 %v2515
        %v2517 = vpop.xlane.xlu0 %2516
        %v2518 = vsub.f32 %v2502, %v2508
        %v2519 = vsub.f32 %v2503, %v2511
        %v2520 = vsub.f32 %v2504, %v2514
        %v2521 = vsub.f32 %v2505, %v2517
        %v2522 = vmul.f32 %v2518, 1.442695
        %v2523 = vpow.pop %v2522
        %v2524 = vmul.f32 %v2519, 1.442695
        %v2525 = vpow.pop %v2524
        %v2526 = vmul.f32 %v2520, 1.442695
        %v2527 = vpow.pop %v2526
        %v2528 = vmul.f32 %v2521, 1.442695
        %v2529 = vpow.pop %v2528
        %v2530 = vsel %vm649, %v2523, 0.0
        %2531 = vadd.xlane.f32.xlu0 %v2530
        %v2532 = vpop.xlane.xlu0 %2531
        %v2533 = vsel %vm649, %v2525, 0.0
        %2534 = vadd.xlane.f32.xlu0 %v2533
        %v2535 = vpop.xlane.xlu0 %2534
        %v2536 = vsel %vm649, %v2527, 0.0
        %2537 = vadd.xlane.f32.xlu0 %v2536
        %v2538 = vpop.xlane.xlu0 %2537
        %v2539 = vsel %vm649, %v2529, 0.0
        %2540 = vadd.xlane.f32.xlu0 %v2539
        %v2541 = vpop.xlane.xlu0 %2540
        %v2542 = vrcp.pop %v2532
        %v2543 = vrcp.pop %v2535
        %v2544 = vrcp.pop %v2538
        %v2545 = vrcp.pop %v2541
        %v2546 = vmul.f32 %v2523, %v2542
        %v2547 = vmul.f32 %v2525, %v2543
        %v2548 = vmul.f32 %v2527, %v2544
        %v2549 = vmul.f32 %v2529, %v2545
        %2551 = vrot.lane.b32.xlu0 %v2123, 112
        %v2552 = vpop.permute.xlu0 %2551
        %v2555 = vsel %vm649, %v2546, 0
        %2557 = vmatpush.msra.mxu0 0.0
        %2558 = vmatpush.msra.mxu0 0.0
        %2559 = vmatpush.msra.mxu0 0.0
        %2560 = vmatpush.msra.mxu0 0.0
        %2561 = vmatpush.msra.mxu0 0.0
        %2562 = vmatpush.msra.mxu0 0.0
        %2563 = vmatpush.msra.mxu0 0.0
        %2564 = vmatpush.msra.mxu0 0.0
        %2565 = vmatpush.msra.mxu0 0.0
        %2566 = vmatpush.msra.mxu0 0.0
        %2567 = vmatpush.msra.mxu0 0.0
        %2568 = vmatpush.msra.mxu0 0.0
        %2569 = vmatpush.msra.mxu0 0.0
        %2570 = vmatpush.msra.mxu0 0.0
        %2571 = vmatpush.msra.mxu0 0.0
        %2572 = vmatpush.msra.mxu0 %v2552
        %2573 = vmatmul.f32.gmra.mxu0 %v2555
        %v2574 = vpop.f32.mrf.mxu0
        %v2575 = vadd.f32 0.0, %v2574
        %2576 = vdwg.mxu0
        %2578 = vrot.lane.b32.xlu0 %v2126, 112
        %v2579 = vpop.permute.xlu0 %2578
        %v2582 = vsel %vm649, %v2547, 0
        %2584 = vmatpush.msra.mxu0 0.0
        %2585 = vmatpush.msra.mxu0 0.0
        %2586 = vmatpush.msra.mxu0 0.0
        %2587 = vmatpush.msra.mxu0 0.0
        %2588 = vmatpush.msra.mxu0 0.0
        %2589 = vmatpush.msra.mxu0 0.0
        %2590 = vmatpush.msra.mxu0 0.0
        %2591 = vmatpush.msra.mxu0 0.0
        %2592 = vmatpush.msra.mxu0 0.0
        %2593 = vmatpush.msra.mxu0 0.0
        %2594 = vmatpush.msra.mxu0 0.0
        %2595 = vmatpush.msra.mxu0 0.0
        %2596 = vmatpush.msra.mxu0 0.0
        %2597 = vmatpush.msra.mxu0 0.0
        %2598 = vmatpush.msra.mxu0 0.0
        %2599 = vmatpush.msra.mxu0 %v2579
        %2600 = vmatmul.f32.gmra.mxu0 %v2582
        %v2601 = vpop.f32.mrf.mxu0
        %v2602 = vadd.f32 0.0, %v2601
        %2603 = vdwg.mxu0
        %2605 = vrot.lane.b32.xlu0 %v2129, 112
        %v2606 = vpop.permute.xlu0 %2605
        %v2609 = vsel %vm649, %v2548, 0
        %2611 = vmatpush.msra.mxu0 0.0
        %2612 = vmatpush.msra.mxu0 0.0
        %2613 = vmatpush.msra.mxu0 0.0
        %2614 = vmatpush.msra.mxu0 0.0
        %2615 = vmatpush.msra.mxu0 0.0
        %2616 = vmatpush.msra.mxu0 0.0
        %2617 = vmatpush.msra.mxu0 0.0
        %2618 = vmatpush.msra.mxu0 0.0
        %2619 = vmatpush.msra.mxu0 0.0
        %2620 = vmatpush.msra.mxu0 0.0
        %2621 = vmatpush.msra.mxu0 0.0
        %2622 = vmatpush.msra.mxu0 0.0
        %2623 = vmatpush.msra.mxu0 0.0
        %2624 = vmatpush.msra.mxu0 0.0
        %2625 = vmatpush.msra.mxu0 0.0
        %2626 = vmatpush.msra.mxu0 %v2606
        %2627 = vmatmul.f32.gmra.mxu0 %v2609
        %v2628 = vpop.f32.mrf.mxu0
        %v2629 = vadd.f32 0.0, %v2628
        %2630 = vdwg.mxu0
        %2632 = vrot.lane.b32.xlu0 %v2132, 112
        %v2633 = vpop.permute.xlu0 %2632
        %v2636 = vsel %vm649, %v2549, 0
        %2638 = vmatpush.msra.mxu0 0.0
        %2639 = vmatpush.msra.mxu0 0.0
        %2640 = vmatpush.msra.mxu0 0.0
        %2641 = vmatpush.msra.mxu0 0.0
        %2642 = vmatpush.msra.mxu0 0.0
        %2643 = vmatpush.msra.mxu0 0.0
        %2644 = vmatpush.msra.mxu0 0.0
        %2645 = vmatpush.msra.mxu0 0.0
        %2646 = vmatpush.msra.mxu0 0.0
        %2647 = vmatpush.msra.mxu0 0.0
        %2648 = vmatpush.msra.mxu0 0.0
        %2649 = vmatpush.msra.mxu0 0.0
        %2650 = vmatpush.msra.mxu0 0.0
        %2651 = vmatpush.msra.mxu0 0.0
        %2652 = vmatpush.msra.mxu0 0.0
        %2653 = vmatpush.msra.mxu0 %v2633
        %2654 = vmatmul.f32.gmra.mxu0 %v2636
        %v2655 = vpop.f32.mrf.mxu0
        %v2656 = vadd.f32 0.0, %v2655
        %2657 = vdwg.mxu0
        %2658 = vrot.lane.b32.xlu0 %v2094, 96
        %v2659 = vpop.permute.xlu0 %2658
        %2660 = vrot.lane.b32.xlu0 %v2094, 32
        %v2661 = vpop.permute.xlu0 %2660
        %v2662 = vsel %vm523, %v2659, 0
        %v2664 = vsel %vm523, %v2661, 0
        %2666 = vmatpush.xpose.msra.mxu0 0.0
        %2667 = vmatpush.xpose.msra.mxu0 0.0
        %2668 = vmatpush.xpose.msra.mxu0 0.0
        %2669 = vmatpush.xpose.msra.mxu0 0.0
        %2670 = vmatpush.xpose.msra.mxu0 0.0
        %2671 = vmatpush.xpose.msra.mxu0 0.0
        %2672 = vmatpush.xpose.msra.mxu0 0.0
        %2673 = vmatpush.xpose.msra.mxu0 0.0
        %2674 = vmatpush.xpose.msra.mxu0 0.0
        %2675 = vmatpush.xpose.msra.mxu0 0.0
        %2676 = vmatpush.xpose.msra.mxu0 0.0
        %2677 = vmatpush.xpose.msra.mxu0 0.0
        %2678 = vmatpush.xpose.msra.mxu0 0.0
        %2679 = vmatpush.xpose.msra.mxu0 0.0
        %2680 = vmatpush.xpose.msra.mxu0 0.0
        %2681 = vmatpush.xpose.msra.mxu0 %v2664
        %2682 = vmatmul.f32.gmra.mxu0 %v2662
        %v2683 = vpop.f32.mrf.mxu0
        %v2684 = vadd.f32 0.0, %v2683
        %2685 = vdwg.mxu0
        %2686 = vrot.lane.b32.xlu0 %v2097, 96
        %v2687 = vpop.permute.xlu0 %2686
        %2688 = vrot.lane.b32.xlu0 %v2097, 32
        %v2689 = vpop.permute.xlu0 %2688
        %v2690 = vsel %vm523, %v2687, 0
        %v2692 = vsel %vm523, %v2689, 0
        %2694 = vmatpush.xpose.msra.mxu0 0.0
        %2695 = vmatpush.xpose.msra.mxu0 0.0
        %2696 = vmatpush.xpose.msra.mxu0 0.0
        %2697 = vmatpush.xpose.msra.mxu0 0.0
        %2698 = vmatpush.xpose.msra.mxu0 0.0
        %2699 = vmatpush.xpose.msra.mxu0 0.0
        %2700 = vmatpush.xpose.msra.mxu0 0.0
        %2701 = vmatpush.xpose.msra.mxu0 0.0
        %2702 = vmatpush.xpose.msra.mxu0 0.0
        %2703 = vmatpush.xpose.msra.mxu0 0.0
        %2704 = vmatpush.xpose.msra.mxu0 0.0
        %2705 = vmatpush.xpose.msra.mxu0 0.0
        %2706 = vmatpush.xpose.msra.mxu0 0.0
        %2707 = vmatpush.xpose.msra.mxu0 0.0
        %2708 = vmatpush.xpose.msra.mxu0 0.0
        %2709 = vmatpush.xpose.msra.mxu0 %v2692
        %2710 = vmatmul.f32.gmra.mxu0 %v2690
        %v2711 = vpop.f32.mrf.mxu0
        %v2712 = vadd.f32 0.0, %v2711
        %2713 = vdwg.mxu0
        %2714 = vrot.lane.b32.xlu0 %v2100, 96
        %v2715 = vpop.permute.xlu0 %2714
        %2716 = vrot.lane.b32.xlu0 %v2100, 32
        %v2717 = vpop.permute.xlu0 %2716
        %v2718 = vsel %vm523, %v2715, 0
        %v2720 = vsel %vm523, %v2717, 0
        %2722 = vmatpush.xpose.msra.mxu0 0.0
        %2723 = vmatpush.xpose.msra.mxu0 0.0
        %2724 = vmatpush.xpose.msra.mxu0 0.0
        %2725 = vmatpush.xpose.msra.mxu0 0.0
        %2726 = vmatpush.xpose.msra.mxu0 0.0
        %2727 = vmatpush.xpose.msra.mxu0 0.0
        %2728 = vmatpush.xpose.msra.mxu0 0.0
        %2729 = vmatpush.xpose.msra.mxu0 0.0
        %2730 = vmatpush.xpose.msra.mxu0 0.0
        %2731 = vmatpush.xpose.msra.mxu0 0.0
        %2732 = vmatpush.xpose.msra.mxu0 0.0
        %2733 = vmatpush.xpose.msra.mxu0 0.0
        %2734 = vmatpush.xpose.msra.mxu0 0.0
        %2735 = vmatpush.xpose.msra.mxu0 0.0
        %2736 = vmatpush.xpose.msra.mxu0 0.0
        %2737 = vmatpush.xpose.msra.mxu0 %v2720
        %2738 = vmatmul.f32.gmra.mxu0 %v2718
        %v2739 = vpop.f32.mrf.mxu0
        %v2740 = vadd.f32 0.0, %v2739
        %2741 = vdwg.mxu0
        %2742 = vrot.lane.b32.xlu0 %v2103, 96
        %v2743 = vpop.permute.xlu0 %2742
        %2744 = vrot.lane.b32.xlu0 %v2103, 32
        %v2745 = vpop.permute.xlu0 %2744
        %v2746 = vsel %vm523, %v2743, 0
        %v2748 = vsel %vm523, %v2745, 0
        %2750 = vmatpush.xpose.msra.mxu0 0.0
        %2751 = vmatpush.xpose.msra.mxu0 0.0
        %2752 = vmatpush.xpose.msra.mxu0 0.0
        %2753 = vmatpush.xpose.msra.mxu0 0.0
        %2754 = vmatpush.xpose.msra.mxu0 0.0
        %2755 = vmatpush.xpose.msra.mxu0 0.0
        %2756 = vmatpush.xpose.msra.mxu0 0.0
        %2757 = vmatpush.xpose.msra.mxu0 0.0
        %2758 = vmatpush.xpose.msra.mxu0 0.0
        %2759 = vmatpush.xpose.msra.mxu0 0.0
        %2760 = vmatpush.xpose.msra.mxu0 0.0
        %2761 = vmatpush.xpose.msra.mxu0 0.0
        %2762 = vmatpush.xpose.msra.mxu0 0.0
        %2763 = vmatpush.xpose.msra.mxu0 0.0
        %2764 = vmatpush.xpose.msra.mxu0 0.0
        %2765 = vmatpush.xpose.msra.mxu0 %v2748
        %2766 = vmatmul.f32.gmra.mxu0 %v2746
        %v2767 = vpop.f32.mrf.mxu0
        %v2768 = vadd.f32 0.0, %v2767
        %2769 = vdwg.mxu0
        %v2770 = vmul.f32 %v2684, 0.25
        %v2771 = vmul.f32 %v2712, 0.25
        %v2772 = vmul.f32 %v2740, 0.25
        %v2773 = vmul.f32 %v2768, 0.25
        %v2774 = vadd.f32 %v2770, %v637
        %v2775 = vadd.f32 %v2771, %v638
        %v2776 = vadd.f32 %v2772, %v639
        %v2777 = vadd.f32 %v2773, %v640
        %v2778 = vsel %vm649, %v2774, -inf
        %2779 = vmax.xlane.f32.xlu0 %v2778
        %v2780 = vpop.xlane.xlu0 %2779
        %v2781 = vsel %vm649, %v2775, -inf
        %2782 = vmax.xlane.f32.xlu0 %v2781
        %v2783 = vpop.xlane.xlu0 %2782
        %v2784 = vsel %vm649, %v2776, -inf
        %2785 = vmax.xlane.f32.xlu0 %v2784
        %v2786 = vpop.xlane.xlu0 %2785
        %v2787 = vsel %vm649, %v2777, -inf
        %2788 = vmax.xlane.f32.xlu0 %v2787
        %v2789 = vpop.xlane.xlu0 %2788
        %v2790 = vsub.f32 %v2774, %v2780
        %v2791 = vsub.f32 %v2775, %v2783
        %v2792 = vsub.f32 %v2776, %v2786
        %v2793 = vsub.f32 %v2777, %v2789
        %v2794 = vmul.f32 %v2790, 1.442695
        %v2795 = vpow.pop %v2794
        %v2796 = vmul.f32 %v2791, 1.442695
        %v2797 = vpow.pop %v2796
        %v2798 = vmul.f32 %v2792, 1.442695
        %v2799 = vpow.pop %v2798
        %v2800 = vmul.f32 %v2793, 1.442695
        %v2801 = vpow.pop %v2800
        %v2802 = vsel %vm649, %v2795, 0.0
        %2803 = vadd.xlane.f32.xlu0 %v2802
        %v2804 = vpop.xlane.xlu0 %2803
        %v2805 = vsel %vm649, %v2797, 0.0
        %2806 = vadd.xlane.f32.xlu0 %v2805
        %v2807 = vpop.xlane.xlu0 %2806
        %v2808 = vsel %vm649, %v2799, 0.0
        %2809 = vadd.xlane.f32.xlu0 %v2808
        %v2810 = vpop.xlane.xlu0 %2809
        %v2811 = vsel %vm649, %v2801, 0.0
        %2812 = vadd.xlane.f32.xlu0 %v2811
        %v2813 = vpop.xlane.xlu0 %2812
        %v2814 = vrcp.pop %v2804
        %v2815 = vrcp.pop %v2807
        %v2816 = vrcp.pop %v2810
        %v2817 = vrcp.pop %v2813
        %v2818 = vmul.f32 %v2795, %v2814
        %v2819 = vmul.f32 %v2797, %v2815
        %v2820 = vmul.f32 %v2799, %v2816
        %v2821 = vmul.f32 %v2801, %v2817
        %2822 = vrot.lane.b32.xlu0 %v2123, 96
        %v2823 = vpop.permute.xlu0 %2822
        %v2826 = vsel %vm649, %v2818, 0
        %2828 = vmatpush.msra.mxu0 0.0
        %2829 = vmatpush.msra.mxu0 0.0
        %2830 = vmatpush.msra.mxu0 0.0
        %2831 = vmatpush.msra.mxu0 0.0
        %2832 = vmatpush.msra.mxu0 0.0
        %2833 = vmatpush.msra.mxu0 0.0
        %2834 = vmatpush.msra.mxu0 0.0
        %2835 = vmatpush.msra.mxu0 0.0
        %2836 = vmatpush.msra.mxu0 0.0
        %2837 = vmatpush.msra.mxu0 0.0
        %2838 = vmatpush.msra.mxu0 0.0
        %2839 = vmatpush.msra.mxu0 0.0
        %2840 = vmatpush.msra.mxu0 0.0
        %2841 = vmatpush.msra.mxu0 0.0
        %2842 = vmatpush.msra.mxu0 0.0
        %2843 = vmatpush.msra.mxu0 %v2823
        %2844 = vmatmul.f32.gmra.mxu0 %v2826
        %v2845 = vpop.f32.mrf.mxu0
        %v2846 = vadd.f32 0.0, %v2845
        %2847 = vdwg.mxu0
        %2848 = vrot.lane.b32.xlu0 %v2126, 96
        %v2849 = vpop.permute.xlu0 %2848
        %v2852 = vsel %vm649, %v2819, 0
        %2854 = vmatpush.msra.mxu0 0.0
        %2855 = vmatpush.msra.mxu0 0.0
        %2856 = vmatpush.msra.mxu0 0.0
        %2857 = vmatpush.msra.mxu0 0.0
        %2858 = vmatpush.msra.mxu0 0.0
        %2859 = vmatpush.msra.mxu0 0.0
        %2860 = vmatpush.msra.mxu0 0.0
        %2861 = vmatpush.msra.mxu0 0.0
        %2862 = vmatpush.msra.mxu0 0.0
        %2863 = vmatpush.msra.mxu0 0.0
        %2864 = vmatpush.msra.mxu0 0.0
        %2865 = vmatpush.msra.mxu0 0.0
        %2866 = vmatpush.msra.mxu0 0.0
        %2867 = vmatpush.msra.mxu0 0.0
        %2868 = vmatpush.msra.mxu0 0.0
        %2869 = vmatpush.msra.mxu0 %v2849
        %2870 = vmatmul.f32.gmra.mxu0 %v2852
        %v2871 = vpop.f32.mrf.mxu0
        %v2872 = vadd.f32 0.0, %v2871
        %2873 = vdwg.mxu0
        %2874 = vrot.lane.b32.xlu0 %v2129, 96
        %v2875 = vpop.permute.xlu0 %2874
        %v2878 = vsel %vm649, %v2820, 0
        %2880 = vmatpush.msra.mxu0 0.0
        %2881 = vmatpush.msra.mxu0 0.0
        %2882 = vmatpush.msra.mxu0 0.0
        %2883 = vmatpush.msra.mxu0 0.0
        %2884 = vmatpush.msra.mxu0 0.0
        %2885 = vmatpush.msra.mxu0 0.0
        %2886 = vmatpush.msra.mxu0 0.0
        %2887 = vmatpush.msra.mxu0 0.0
        %2888 = vmatpush.msra.mxu0 0.0
        %2889 = vmatpush.msra.mxu0 0.0
        %2890 = vmatpush.msra.mxu0 0.0
        %2891 = vmatpush.msra.mxu0 0.0
        %2892 = vmatpush.msra.mxu0 0.0
        %2893 = vmatpush.msra.mxu0 0.0
        %2894 = vmatpush.msra.mxu0 0.0
        %2895 = vmatpush.msra.mxu0 %v2875
        %2896 = vmatmul.f32.gmra.mxu0 %v2878
        %v2897 = vpop.f32.mrf.mxu0
        %v2898 = vadd.f32 0.0, %v2897
        %2899 = vdwg.mxu0
        %2900 = vrot.lane.b32.xlu0 %v2132, 96
        %v2901 = vpop.permute.xlu0 %2900
        %v2904 = vsel %vm649, %v2821, 0
        %2906 = vmatpush.msra.mxu0 0.0
        %2907 = vmatpush.msra.mxu0 0.0
        %2908 = vmatpush.msra.mxu0 0.0
        %2909 = vmatpush.msra.mxu0 0.0
        %2910 = vmatpush.msra.mxu0 0.0
        %2911 = vmatpush.msra.mxu0 0.0
        %2912 = vmatpush.msra.mxu0 0.0
        %2913 = vmatpush.msra.mxu0 0.0
        %2914 = vmatpush.msra.mxu0 0.0
        %2915 = vmatpush.msra.mxu0 0.0
        %2916 = vmatpush.msra.mxu0 0.0
        %2917 = vmatpush.msra.mxu0 0.0
        %2918 = vmatpush.msra.mxu0 0.0
        %2919 = vmatpush.msra.mxu0 0.0
        %2920 = vmatpush.msra.mxu0 0.0
        %2921 = vmatpush.msra.mxu0 %v2901
        %2922 = vmatmul.f32.gmra.mxu0 %v2904
        %v2923 = vpop.f32.mrf.mxu0
        %v2924 = vadd.f32 0.0, %v2923
        %2925 = vdwg.mxu0
        %2926 = vrot.lane.b32.xlu0 %v2094, 80
        %v2927 = vpop.permute.xlu0 %2926
        %2928 = vrot.lane.b32.xlu0 %v2094, 16
        %v2929 = vpop.permute.xlu0 %2928
        %v2930 = vsel %vm523, %v2927, 0
        %v2932 = vsel %vm523, %v2929, 0
        %2934 = vmatpush.xpose.msra.mxu0 0.0
        %2935 = vmatpush.xpose.msra.mxu0 0.0
        %2936 = vmatpush.xpose.msra.mxu0 0.0
        %2937 = vmatpush.xpose.msra.mxu0 0.0
        %2938 = vmatpush.xpose.msra.mxu0 0.0
        %2939 = vmatpush.xpose.msra.mxu0 0.0
        %2940 = vmatpush.xpose.msra.mxu0 0.0
        %2941 = vmatpush.xpose.msra.mxu0 0.0
        %2942 = vmatpush.xpose.msra.mxu0 0.0
        %2943 = vmatpush.xpose.msra.mxu0 0.0
        %2944 = vmatpush.xpose.msra.mxu0 0.0
        %2945 = vmatpush.xpose.msra.mxu0 0.0
        %2946 = vmatpush.xpose.msra.mxu0 0.0
        %2947 = vmatpush.xpose.msra.mxu0 0.0
        %2948 = vmatpush.xpose.msra.mxu0 0.0
        %2949 = vmatpush.xpose.msra.mxu0 %v2932
        %2950 = vmatmul.f32.gmra.mxu0 %v2930
        %v2951 = vpop.f32.mrf.mxu0
        %v2952 = vadd.f32 0.0, %v2951
        %2953 = vdwg.mxu0
        %2954 = vrot.lane.b32.xlu0 %v2097, 80
        %v2955 = vpop.permute.xlu0 %2954
        %2956 = vrot.lane.b32.xlu0 %v2097, 16
        %v2957 = vpop.permute.xlu0 %2956
        %v2958 = vsel %vm523, %v2955, 0
        %v2960 = vsel %vm523, %v2957, 0
        %2962 = vmatpush.xpose.msra.mxu0 0.0
        %2963 = vmatpush.xpose.msra.mxu0 0.0
        %2964 = vmatpush.xpose.msra.mxu0 0.0
        %2965 = vmatpush.xpose.msra.mxu0 0.0
        %2966 = vmatpush.xpose.msra.mxu0 0.0
        %2967 = vmatpush.xpose.msra.mxu0 0.0
        %2968 = vmatpush.xpose.msra.mxu0 0.0
        %2969 = vmatpush.xpose.msra.mxu0 0.0
        %2970 = vmatpush.xpose.msra.mxu0 0.0
        %2971 = vmatpush.xpose.msra.mxu0 0.0
        %2972 = vmatpush.xpose.msra.mxu0 0.0
        %2973 = vmatpush.xpose.msra.mxu0 0.0
        %2974 = vmatpush.xpose.msra.mxu0 0.0
        %2975 = vmatpush.xpose.msra.mxu0 0.0
        %2976 = vmatpush.xpose.msra.mxu0 0.0
        %2977 = vmatpush.xpose.msra.mxu0 %v2960
        %2978 = vmatmul.f32.gmra.mxu0 %v2958
        %v2979 = vpop.f32.mrf.mxu0
        %v2980 = vadd.f32 0.0, %v2979
        %2981 = vdwg.mxu0
        %2982 = vrot.lane.b32.xlu0 %v2100, 80
        %v2983 = vpop.permute.xlu0 %2982
        %2984 = vrot.lane.b32.xlu0 %v2100, 16
        %v2985 = vpop.permute.xlu0 %2984
        %v2986 = vsel %vm523, %v2983, 0
        %v2988 = vsel %vm523, %v2985, 0
        %2990 = vmatpush.xpose.msra.mxu0 0.0
        %2991 = vmatpush.xpose.msra.mxu0 0.0
        %2992 = vmatpush.xpose.msra.mxu0 0.0
        %2993 = vmatpush.xpose.msra.mxu0 0.0
        %2994 = vmatpush.xpose.msra.mxu0 0.0
        %2995 = vmatpush.xpose.msra.mxu0 0.0
        %2996 = vmatpush.xpose.msra.mxu0 0.0
        %2997 = vmatpush.xpose.msra.mxu0 0.0
        %2998 = vmatpush.xpose.msra.mxu0 0.0
        %2999 = vmatpush.xpose.msra.mxu0 0.0
        %3000 = vmatpush.xpose.msra.mxu0 0.0
        %3001 = vmatpush.xpose.msra.mxu0 0.0
        %3002 = vmatpush.xpose.msra.mxu0 0.0
        %3003 = vmatpush.xpose.msra.mxu0 0.0
        %3004 = vmatpush.xpose.msra.mxu0 0.0
        %3005 = vmatpush.xpose.msra.mxu0 %v2988
        %3006 = vmatmul.f32.gmra.mxu0 %v2986
        %v3007 = vpop.f32.mrf.mxu0
        %v3008 = vadd.f32 0.0, %v3007
        %3009 = vdwg.mxu0
        %3010 = vrot.lane.b32.xlu0 %v2103, 80
        %v3011 = vpop.permute.xlu0 %3010
        %3012 = vrot.lane.b32.xlu0 %v2103, 16
        %v3013 = vpop.permute.xlu0 %3012
        %v3014 = vsel %vm523, %v3011, 0
        %v3016 = vsel %vm523, %v3013, 0
        %3018 = vmatpush.xpose.msra.mxu0 0.0
        %3019 = vmatpush.xpose.msra.mxu0 0.0
        %3020 = vmatpush.xpose.msra.mxu0 0.0
        %3021 = vmatpush.xpose.msra.mxu0 0.0
        %3022 = vmatpush.xpose.msra.mxu0 0.0
        %3023 = vmatpush.xpose.msra.mxu0 0.0
        %3024 = vmatpush.xpose.msra.mxu0 0.0
        %3025 = vmatpush.xpose.msra.mxu0 0.0
        %3026 = vmatpush.xpose.msra.mxu0 0.0
        %3027 = vmatpush.xpose.msra.mxu0 0.0
        %3028 = vmatpush.xpose.msra.mxu0 0.0
        %3029 = vmatpush.xpose.msra.mxu0 0.0
        %3030 = vmatpush.xpose.msra.mxu0 0.0
        %3031 = vmatpush.xpose.msra.mxu0 0.0
        %3032 = vmatpush.xpose.msra.mxu0 0.0
        %3033 = vmatpush.xpose.msra.mxu0 %v3016
        %3034 = vmatmul.f32.gmra.mxu0 %v3014
        %v3035 = vpop.f32.mrf.mxu0
        %v3036 = vadd.f32 0.0, %v3035
        %3037 = vdwg.mxu0
        %v3038 = vmul.f32 %v2952, 0.25
        %v3039 = vmul.f32 %v2980, 0.25
        %v3040 = vmul.f32 %v3008, 0.25
        %v3041 = vmul.f32 %v3036, 0.25
        %v3042 = vadd.f32 %v3038, %v637
        %v3043 = vadd.f32 %v3039, %v638
        %v3044 = vadd.f32 %v3040, %v639
        %v3045 = vadd.f32 %v3041, %v640
        %v3046 = vsel %vm649, %v3042, -inf
        %3047 = vmax.xlane.f32.xlu0 %v3046
        %v3048 = vpop.xlane.xlu0 %3047
        %v3049 = vsel %vm649, %v3043, -inf
        %3050 = vmax.xlane.f32.xlu0 %v3049
        %v3051 = vpop.xlane.xlu0 %3050
        %v3052 = vsel %vm649, %v3044, -inf
        %3053 = vmax.xlane.f32.xlu0 %v3052
        %v3054 = vpop.xlane.xlu0 %3053
        %v3055 = vsel %vm649, %v3045, -inf
        %3056 = vmax.xlane.f32.xlu0 %v3055
        %v3057 = vpop.xlane.xlu0 %3056
        %v3058 = vsub.f32 %v3042, %v3048
        %v3059 = vsub.f32 %v3043, %v3051
        %v3060 = vsub.f32 %v3044, %v3054
        %v3061 = vsub.f32 %v3045, %v3057
        %v3062 = vmul.f32 %v3058, 1.442695
        %v3063 = vpow.pop %v3062
        %v3064 = vmul.f32 %v3059, 1.442695
        %v3065 = vpow.pop %v3064
        %v3066 = vmul.f32 %v3060, 1.442695
        %v3067 = vpow.pop %v3066
        %v3068 = vmul.f32 %v3061, 1.442695
        %v3069 = vpow.pop %v3068
        %v3070 = vsel %vm649, %v3063, 0.0
        %3071 = vadd.xlane.f32.xlu0 %v3070
        %v3072 = vpop.xlane.xlu0 %3071
        %v3073 = vsel %vm649, %v3065, 0.0
        %3074 = vadd.xlane.f32.xlu0 %v3073
        %v3075 = vpop.xlane.xlu0 %3074
        %v3076 = vsel %vm649, %v3067, 0.0
        %3077 = vadd.xlane.f32.xlu0 %v3076
        %v3078 = vpop.xlane.xlu0 %3077
        %v3079 = vsel %vm649, %v3069, 0.0
        %3080 = vadd.xlane.f32.xlu0 %v3079
        %v3081 = vpop.xlane.xlu0 %3080
        %v3082 = vrcp.pop %v3072
        %v3083 = vrcp.pop %v3075
        %v3084 = vrcp.pop %v3078
        %v3085 = vrcp.pop %v3081
        %v3086 = vmul.f32 %v3063, %v3082
        %v3087 = vmul.f32 %v3065, %v3083
        %v3088 = vmul.f32 %v3067, %v3084
        %v3089 = vmul.f32 %v3069, %v3085
        %3090 = vrot.lane.b32.xlu0 %v2123, 80
        %v3091 = vpop.permute.xlu0 %3090
        %v3094 = vsel %vm649, %v3086, 0
        %3096 = vmatpush.msra.mxu0 0.0
        %3097 = vmatpush.msra.mxu0 0.0
        %3098 = vmatpush.msra.mxu0 0.0
        %3099 = vmatpush.msra.mxu0 0.0
        %3100 = vmatpush.msra.mxu0 0.0
        %3101 = vmatpush.msra.mxu0 0.0
        %3102 = vmatpush.msra.mxu0 0.0
        %3103 = vmatpush.msra.mxu0 0.0
        %3104 = vmatpush.msra.mxu0 0.0
        %3105 = vmatpush.msra.mxu0 0.0
        %3106 = vmatpush.msra.mxu0 0.0
        %3107 = vmatpush.msra.mxu0 0.0
        %3108 = vmatpush.msra.mxu0 0.0
        %3109 = vmatpush.msra.mxu0 0.0
        %3110 = vmatpush.msra.mxu0 0.0
        %3111 = vmatpush.msra.mxu0 %v3091
        %3112 = vmatmul.f32.gmra.mxu0 %v3094
        %v3113 = vpop.f32.mrf.mxu0
        %v3114 = vadd.f32 0.0, %v3113
        %3115 = vdwg.mxu0
        %3116 = vrot.lane.b32.xlu0 %v2126, 80
        %v3117 = vpop.permute.xlu0 %3116
        %v3120 = vsel %vm649, %v3087, 0
        %3122 = vmatpush.msra.mxu0 0.0
        %3123 = vmatpush.msra.mxu0 0.0
        %3124 = vmatpush.msra.mxu0 0.0
        %3125 = vmatpush.msra.mxu0 0.0
        %3126 = vmatpush.msra.mxu0 0.0
        %3127 = vmatpush.msra.mxu0 0.0
        %3128 = vmatpush.msra.mxu0 0.0
        %3129 = vmatpush.msra.mxu0 0.0
        %3130 = vmatpush.msra.mxu0 0.0
        %3131 = vmatpush.msra.mxu0 0.0
        %3132 = vmatpush.msra.mxu0 0.0
        %3133 = vmatpush.msra.mxu0 0.0
        %3134 = vmatpush.msra.mxu0 0.0
        %3135 = vmatpush.msra.mxu0 0.0
        %3136 = vmatpush.msra.mxu0 0.0
        %3137 = vmatpush.msra.mxu0 %v3117
        %3138 = vmatmul.f32.gmra.mxu0 %v3120
        %v3139 = vpop.f32.mrf.mxu0
        %v3140 = vadd.f32 0.0, %v3139
        %3141 = vdwg.mxu0
        %3142 = vrot.lane.b32.xlu0 %v2129, 80
        %v3143 = vpop.permute.xlu0 %3142
        %v3146 = vsel %vm649, %v3088, 0
        %3148 = vmatpush.msra.mxu0 0.0
        %3149 = vmatpush.msra.mxu0 0.0
        %3150 = vmatpush.msra.mxu0 0.0
        %3151 = vmatpush.msra.mxu0 0.0
        %3152 = vmatpush.msra.mxu0 0.0
        %3153 = vmatpush.msra.mxu0 0.0
        %3154 = vmatpush.msra.mxu0 0.0
        %3155 = vmatpush.msra.mxu0 0.0
        %3156 = vmatpush.msra.mxu0 0.0
        %3157 = vmatpush.msra.mxu0 0.0
        %3158 = vmatpush.msra.mxu0 0.0
        %3159 = vmatpush.msra.mxu0 0.0
        %3160 = vmatpush.msra.mxu0 0.0
        %3161 = vmatpush.msra.mxu0 0.0
        %3162 = vmatpush.msra.mxu0 0.0
        %3163 = vmatpush.msra.mxu0 %v3143
        %3164 = vmatmul.f32.gmra.mxu0 %v3146
        %v3165 = vpop.f32.mrf.mxu0
        %v3166 = vadd.f32 0.0, %v3165
        %3167 = vdwg.mxu0
        %3168 = vrot.lane.b32.xlu0 %v2132, 80
        %v3169 = vpop.permute.xlu0 %3168
        %v3172 = vsel %vm649, %v3089, 0
        %3174 = vmatpush.msra.mxu0 0.0
        %3175 = vmatpush.msra.mxu0 0.0
        %3176 = vmatpush.msra.mxu0 0.0
        %3177 = vmatpush.msra.mxu0 0.0
        %3178 = vmatpush.msra.mxu0 0.0
        %3179 = vmatpush.msra.mxu0 0.0
        %3180 = vmatpush.msra.mxu0 0.0
        %3181 = vmatpush.msra.mxu0 0.0
        %3182 = vmatpush.msra.mxu0 0.0
        %3183 = vmatpush.msra.mxu0 0.0
        %3184 = vmatpush.msra.mxu0 0.0
        %3185 = vmatpush.msra.mxu0 0.0
        %3186 = vmatpush.msra.mxu0 0.0
        %3187 = vmatpush.msra.mxu0 0.0
        %3188 = vmatpush.msra.mxu0 0.0
        %3189 = vmatpush.msra.mxu0 %v3169
        %3190 = vmatmul.f32.gmra.mxu0 %v3172
        %v3191 = vpop.f32.mrf.mxu0
        %v3192 = vadd.f32 0.0, %v3191
        %3193 = vdwg.mxu0
        %3198 = vrot.lane.b32.xlu0 %v2575, 16
        %v3199 = vpop.permute.xlu0 %3198
        %3200 = vrot.lane.b32.xlu0 %v2602, 16
        %v3201 = vpop.permute.xlu0 %3200
        %3202 = vrot.lane.b32.xlu0 %v2629, 16
        %v3203 = vpop.permute.xlu0 %3202
        %3204 = vrot.lane.b32.xlu0 %v2656, 16
        %v3205 = vpop.permute.xlu0 %3204
        %3214 = vrot.lane.b32.xlu0 %v2846, 32
        %v3215 = vpop.permute.xlu0 %3214
        %3216 = vrot.lane.b32.xlu0 %v2872, 32
        %v3217 = vpop.permute.xlu0 %3216
        %3218 = vrot.lane.b32.xlu0 %v2898, 32
        %v3219 = vpop.permute.xlu0 %3218
        %3220 = vrot.lane.b32.xlu0 %v2924, 32
        %v3221 = vpop.permute.xlu0 %3220
        %3230 = vrot.lane.b32.xlu0 %v3114, 48
        %v3231 = vpop.permute.xlu0 %3230
        %3232 = vrot.lane.b32.xlu0 %v3140, 48
        %v3233 = vpop.permute.xlu0 %3232
        %3234 = vrot.lane.b32.xlu0 %v3166, 48
        %v3235 = vpop.permute.xlu0 %3234
        %3236 = vrot.lane.b32.xlu0 %v3192, 48
        %v3237 = vpop.permute.xlu0 %3236
        %v3242 = vsel %vm523, %v2315, %v3199
        %v3243 = vsel %vm523, %v2338, %v3201
        %v3244 = vsel %vm523, %v2361, %v3203
        %v3245 = vsel %vm523, %v2384, %v3205
        %v3246 = vsel %vm1646, %v3242, %v3215
        %v3247 = vsel %vm1646, %v3243, %v3217
        %v3248 = vsel %vm1646, %v3244, %v3219
        %v3249 = vsel %vm1646, %v3245, %v3221
        %v3250 = vsel %vm1651, %v3246, %v3231
        %v3251 = vsel %vm1651, %v3247, %v3233
        %v3252 = vsel %vm1651, %v3248, %v3235
        %v3253 = vsel %vm1651, %v3249, %v3237
        %v3254 = vld [vmem:[%s2045 + $0x10] sm:$0xff]
        %v3255 = vld [vmem:[%s2045 + $0x30] sm:$0xff]
        %v3256 = vld [vmem:[%s2045 + $0x50] sm:$0xff]
        %v3257 = vld [vmem:[%s2045 + $0x70] sm:$0xff]
        %v3258 = vld [vmem:[%s2045 + $0x90] sm:$0xff]
        %v3259 = vld [vmem:[%s2045 + $0xb0] sm:$0xff]
        %v3260 = vld [vmem:[%s2045 + $0xd0] sm:$0xff]
        %v3261 = vld [vmem:[%s2045 + $0xf0] sm:$0xff]
        %v3262 = vperm.slane %v2043, 1
        %v3264 = vsel %vm320, %v3250, 0
        %v3267 = vsel %vm320, %v3251, 0
        %v3270 = vsel %vm320, %v3252, 0
        %v3273 = vsel %vm320, %v3253, 0
        %3275 = vmatpush.msra.mxu0 0.0
        %3276 = vmatpush.msra.mxu0 0.0
        %3277 = vmatpush.msra.mxu0 0.0
        %3278 = vmatpush.msra.mxu0 0.0
        %3279 = vmatpush.msra.mxu0 0.0
        %3280 = vmatpush.msra.mxu0 0.0
        %3281 = vmatpush.msra.mxu0 0.0
        %3282 = vmatpush.msra.mxu0 0.0
        %3283 = vmatpush.msra.mxu0 %v3261
        %3284 = vmatpush.msra.mxu0 %v3260
        %3285 = vmatpush.msra.mxu0 %v3259
        %3286 = vmatpush.msra.mxu0 %v3258
        %3287 = vmatpush.msra.mxu0 %v3257
        %3288 = vmatpush.msra.mxu0 %v3256
        %3289 = vmatpush.msra.mxu0 %v3255
        %3290 = vmatpush.msra.mxu0 %v3254
        %3291 = vmatmul.f32.gmra.mxu0 %v3264
        %v3292 = vpop.f32.mrf.mxu0
        %v3293 = vadd.f32 %v3262, %v3292
        %3294 = vmatmul.f32.gmra.mxu0 %v3267
        %v3295 = vpop.f32.mrf.mxu0
        %v3296 = vadd.f32 %v3262, %v3295
        %3297 = vmatmul.f32.gmra.mxu0 %v3270
        %v3298 = vpop.f32.mrf.mxu0
        %v3299 = vadd.f32 %v3262, %v3298
        %3300 = vmatmul.f32.gmra.mxu0 %v3273
        %v3301 = vpop.f32.mrf.mxu0
        %v3302 = vadd.f32 %v3262, %v3301
        %3303 = vdwg.mxu0
        %v3304 = vadd.f32 %v3293, %v2038
        %v3305 = vadd.f32 %v3296, %v2039
        %v3306 = vadd.f32 %v3299, %v2040
        %v3307 = vadd.f32 %v3302, %v2041
        %v3308 = vsel %vm320, %v3304, 0.0
        %3309 = vadd.xlane.f32.xlu0 %v3308
        %v3310 = vpop.xlane.xlu0 %3309
        %v3311 = vsel %vm320, %v3305, 0.0
        %3312 = vadd.xlane.f32.xlu0 %v3311
        %v3313 = vpop.xlane.xlu0 %3312
        %v3314 = vsel %vm320, %v3306, 0.0
        %3315 = vadd.xlane.f32.xlu0 %v3314
        %v3316 = vpop.xlane.xlu0 %3315
        %v3317 = vsel %vm320, %v3307, 0.0
        %3318 = vadd.xlane.f32.xlu0 %v3317
        %v3319 = vpop.xlane.xlu0 %3318
        %v3320 = vmul.f32 %v3310, %v339
        %v3321 = vmul.f32 %v3313, %v339
        %v3322 = vmul.f32 %v3316, %v339
        %v3323 = vmul.f32 %v3319, %v339
        %v3324 = vsub.f32 %v3304, %v3320
        %v3325 = vsub.f32 %v3305, %v3321
        %v3326 = vsub.f32 %v3306, %v3322
        %v3327 = vsub.f32 %v3307, %v3323
        %v3328 = vmul.f32 %v3324, %v3324
        %v3329 = vmul.f32 %v3325, %v3325
        %v3330 = vmul.f32 %v3326, %v3326
        %v3331 = vmul.f32 %v3327, %v3327
        %v3332 = vsel %vm320, %v3328, 0.0
        %3333 = vadd.xlane.f32.xlu0 %v3332
        %v3334 = vpop.xlane.xlu0 %3333
        %v3335 = vsel %vm320, %v3329, 0.0
        %3336 = vadd.xlane.f32.xlu0 %v3335
        %v3337 = vpop.xlane.xlu0 %3336
        %v3338 = vsel %vm320, %v3330, 0.0
        %3339 = vadd.xlane.f32.xlu0 %v3338
        %v3340 = vpop.xlane.xlu0 %3339
        %v3341 = vsel %vm320, %v3331, 0.0
        %3342 = vadd.xlane.f32.xlu0 %v3341
        %v3343 = vpop.xlane.xlu0 %3342
        %v3344 = vmul.f32 %v3334, %v339
        %v3345 = vmul.f32 %v3337, %v339
        %v3346 = vmul.f32 %v3340, %v339
        %v3347 = vmul.f32 %v3343, %v339
        %v3348 = vadd.f32 %v3344, 1e-12
        %v3349 = vadd.f32 %v3345, 1e-12
        %v3350 = vadd.f32 %v3346, 1e-12
        %v3351 = vadd.f32 %v3347, 1e-12
        %v3352 = vrsqrt.pop %v3348
        %v3353 = vmul.f32 %v3352, %v3348
        %v3354 = vmul.f32 %v3353, %v3352
        %v3355 = vmul.f32 0.5, %v3354
        %v3356 = vsub.f32 1.5, %v3355
        %v3357 = vmul.f32 %v3352, %v3356
        %vm3358 = vweird.f32 %v3348
        %vm3359 = vweird.f32 %v3352
        %vm3360 = vmor %vm3358, %vm3359
        %v3361 = vsel %vm3360, %v3352, %v3357
        %v3362 = vrsqrt.pop %v3349
        %v3363 = vmul.f32 %v3362, %v3349
        %v3364 = vmul.f32 %v3363, %v3362
        %v3365 = vmul.f32 0.5, %v3364
        %v3366 = vsub.f32 1.5, %v3365
        %v3367 = vmul.f32 %v3362, %v3366
        %vm3368 = vweird.f32 %v3349
        %vm3369 = vweird.f32 %v3362
        %vm3370 = vmor %vm3368, %vm3369
        %v3371 = vsel %vm3370, %v3362, %v3367
        %v3372 = vrsqrt.pop %v3350
        %v3373 = vmul.f32 %v3372, %v3350
        %v3374 = vmul.f32 %v3373, %v3372
        %v3375 = vmul.f32 0.5, %v3374
        %v3376 = vsub.f32 1.5, %v3375
        %v3377 = vmul.f32 %v3372, %v3376
        %vm3378 = vweird.f32 %v3350
        %vm3379 = vweird.f32 %v3372
        %vm3380 = vmor %vm3378, %vm3379
        %v3381 = vsel %vm3380, %v3372, %v3377
        %v3382 = vrsqrt.pop %v3351
        %v3383 = vmul.f32 %v3382, %v3351
        %v3384 = vmul.f32 %v3383, %v3382
        %v3385 = vmul.f32 0.5, %v3384
        %v3386 = vsub.f32 1.5, %v3385
        %v3387 = vmul.f32 %v3382, %v3386
        %vm3388 = vweird.f32 %v3351
        %vm3389 = vweird.f32 %v3382
        %vm3390 = vmor %vm3388, %vm3389
        %v3391 = vsel %vm3390, %v3382, %v3387
        %v3392 = vmul.f32 %v3324, %v3361
        %v3393 = vmul.f32 %v3325, %v3371
        %v3394 = vmul.f32 %v3326, %v3381
        %v3395 = vmul.f32 %v3327, %v3391
        %v3396 = vperm.slane %v2043, 2
        %v3397 = vmul.f32 %v3392, %v3396
        %v3398 = vmul.f32 %v3393, %v3396
        %v3399 = vmul.f32 %v3394, %v3396
        %v3400 = vmul.f32 %v3395, %v3396
        %v3401 = vperm.slane %v2043, 3
        %v3402 = vadd.f32 %v3397, %v3401
        %v3403 = vadd.f32 %v3398, %v3401
        %v3404 = vadd.f32 %v3399, %v3401
        %v3405 = vadd.f32 %v3400, %v3401
        %v3406 = vld [vmem:[%s2045 + $0x18] sm:$0xff]
        %v3407 = vld [vmem:[%s2045 + $0x38] sm:$0xff]
        %v3408 = vld [vmem:[%s2045 + $0x58] sm:$0xff]
        %v3409 = vld [vmem:[%s2045 + $0x78] sm:$0xff]
        %v3410 = vld [vmem:[%s2045 + $0x98] sm:$0xff]
        %v3411 = vld [vmem:[%s2045 + $0xb8] sm:$0xff]
        %v3412 = vld [vmem:[%s2045 + $0xd8] sm:$0xff]
        %v3413 = vld [vmem:[%s2045 + $0xf8] sm:$0xff]
        %v3414 = vperm.slane %v2043, 4
        %v3416 = vsel %vm320, %v3402, 0
        %v3419 = vsel %vm320, %v3403, 0
        %v3422 = vsel %vm320, %v3404, 0
        %v3425 = vsel %vm320, %v3405, 0
        %3427 = vmatpush.msra.mxu0 0.0
        %3428 = vmatpush.msra.mxu0 0.0
        %3429 = vmatpush.msra.mxu0 0.0
        %3430 = vmatpush.msra.mxu0 0.0
        %3431 = vmatpush.msra.mxu0 0.0
        %3432 = vmatpush.msra.mxu0 0.0
        %3433 = vmatpush.msra.mxu0 0.0
        %3434 = vmatpush.msra.mxu0 0.0
        %3435 = vmatpush.msra.mxu0 %v3413
        %3436 = vmatpush.msra.mxu0 %v3412
        %3437 = vmatpush.msra.mxu0 %v3411
        %3438 = vmatpush.msra.mxu0 %v3410
        %3439 = vmatpush.msra.mxu0 %v3409
        %3440 = vmatpush.msra.mxu0 %v3408
        %3441 = vmatpush.msra.mxu0 %v3407
        %3442 = vmatpush.msra.mxu0 %v3406
        %3443 = vmatmul.f32.gmra.mxu0 %v3416
        %v3444 = vpop.f32.mrf.mxu0
        %v3445 = vadd.f32 %v3414, %v3444
        %3446 = vmatmul.f32.gmra.mxu0 %v3419
        %v3447 = vpop.f32.mrf.mxu0
        %v3448 = vadd.f32 %v3414, %v3447
        %3449 = vmatmul.f32.gmra.mxu0 %v3422
        %v3450 = vpop.f32.mrf.mxu0
        %v3451 = vadd.f32 %v3414, %v3450
        %3452 = vmatmul.f32.gmra.mxu0 %v3425
        %v3453 = vpop.f32.mrf.mxu0
        %v3454 = vadd.f32 %v3414, %v3453
        %3455 = vdwg.mxu0
        %v3456 = vmul.f32 %v3445, 0.5
        %v3457 = vmul.f32 %v3448, 0.5
        %v3458 = vmul.f32 %v3451, 0.5
        %v3459 = vmul.f32 %v3454, 0.5
        %v3460 = vmul.f32 %v3445, 0.044715
        %v3461 = vmul.f32 %v3448, 0.044715
        %v3462 = vmul.f32 %v3451, 0.044715
        %v3463 = vmul.f32 %v3454, 0.044715
        %v3464 = vmul.f32 %v3460, %v3445
        %v3465 = vmul.f32 %v3461, %v3448
        %v3466 = vmul.f32 %v3462, %v3451
        %v3467 = vmul.f32 %v3463, %v3454
        %v3468 = vmul.f32 %v3464, %v3445
        %v3469 = vmul.f32 %v3465, %v3448
        %v3470 = vmul.f32 %v3466, %v3451
        %v3471 = vmul.f32 %v3467, %v3454
        %v3472 = vadd.f32 %v3445, %v3468
        %v3473 = vadd.f32 %v3448, %v3469
        %v3474 = vadd.f32 %v3451, %v3470
        %v3475 = vadd.f32 %v3454, %v3471
        %v3476 = vmul.f32 %v3472, 0.7978846
        %v3477 = vmul.f32 %v3473, 0.7978846
        %v3478 = vmul.f32 %v3474, 0.7978846
        %v3479 = vmul.f32 %v3475, 0.7978846
        %v3480 = vtanh.pop %v3476
        %v3481 = vtanh.pop %v3477
        %v3482 = vtanh.pop %v3478
        %v3483 = vtanh.pop %v3479
        %v3484 = vadd.f32 %v3480, 1.0
        %v3485 = vadd.f32 %v3481, 1.0
        %v3486 = vadd.f32 %v3482, 1.0
        %v3487 = vadd.f32 %v3483, 1.0
        %v3488 = vmul.f32 %v3456, %v3484
        %v3489 = vmul.f32 %v3457, %v3485
        %v3490 = vmul.f32 %v3458, %v3486
        %v3491 = vmul.f32 %v3459, %v3487
        %s3492 = scalar_lea.vmem %s3, 128
        %v3493 = vld [vmem:[%s3492] sm:$0xff]
        %v3494 = vld [vmem:[%s3492 + $0x8] sm:$0xff]
        %v3495 = vld [vmem:[%s3492 + $0x10] sm:$0xff]
        %v3496 = vld [vmem:[%s3492 + $0x18] sm:$0xff]
        %v3497 = vld [vmem:[%s3492 + $0x20] sm:$0xff]
        %v3498 = vld [vmem:[%s3492 + $0x28] sm:$0xff]
        %v3499 = vld [vmem:[%s3492 + $0x30] sm:$0xff]
        %v3500 = vld [vmem:[%s3492 + $0x38] sm:$0xff]
        %v3501 = vld [vmem:[%s3492 + $0x40] sm:$0xff]
        %v3502 = vld [vmem:[%s3492 + $0x48] sm:$0xff]
        %v3503 = vld [vmem:[%s3492 + $0x50] sm:$0xff]
        %v3504 = vld [vmem:[%s3492 + $0x58] sm:$0xff]
        %v3505 = vld [vmem:[%s3492 + $0x60] sm:$0xff]
        %v3506 = vld [vmem:[%s3492 + $0x68] sm:$0xff]
        %v3507 = vld [vmem:[%s3492 + $0x70] sm:$0xff]
        %v3508 = vld [vmem:[%s3492 + $0x78] sm:$0xff]
        %v3509 = vperm.slane %v2043, 5
        %3510 = vmatpush.msra.mxu0 %v3508
        %3511 = vmatpush.msra.mxu0 %v3507
        %3512 = vmatpush.msra.mxu0 %v3506
        %3513 = vmatpush.msra.mxu0 %v3505
        %3514 = vmatpush.msra.mxu0 %v3504
        %3515 = vmatpush.msra.mxu0 %v3503
        %3516 = vmatpush.msra.mxu0 %v3502
        %3517 = vmatpush.msra.mxu0 %v3501
        %3518 = vmatpush.msra.mxu0 %v3500
        %3519 = vmatpush.msra.mxu0 %v3499
        %3520 = vmatpush.msra.mxu0 %v3498
        %3521 = vmatpush.msra.mxu0 %v3497
        %3522 = vmatpush.msra.mxu0 %v3496
        %3523 = vmatpush.msra.mxu0 %v3495
        %3524 = vmatpush.msra.mxu0 %v3494
        %3525 = vmatpush.msra.mxu0 %v3493
        %3526 = vmatmul.f32.gmra.mxu0 %v3488
        %v3527 = vpop.f32.mrf.mxu0
        %v3528 = vadd.f32 %v3509, %v3527
        %3529 = vmatmul.f32.gmra.mxu0 %v3489
        %v3530 = vpop.f32.mrf.mxu0
        %v3531 = vadd.f32 %v3509, %v3530
        %3532 = vmatmul.f32.gmra.mxu0 %v3490
        %v3533 = vpop.f32.mrf.mxu0
        %v3534 = vadd.f32 %v3509, %v3533
        %3535 = vmatmul.f32.gmra.mxu0 %v3491
        %v3536 = vpop.f32.mrf.mxu0
        %v3537 = vadd.f32 %v3509, %v3536
        %3538 = vdwg.mxu0
        %v3539 = vadd.f32 %v3528, %v3402
        %v3540 = vadd.f32 %v3531, %v3403
        %v3541 = vadd.f32 %v3534, %v3404
        %v3542 = vadd.f32 %v3537, %v3405
        %v3543 = vsel %vm320, %v3539, 0.0
        %3544 = vadd.xlane.f32.xlu0 %v3543
        %v3545 = vpop.xlane.xlu0 %3544
        %v3546 = vsel %vm320, %v3540, 0.0
        %3547 = vadd.xlane.f32.xlu0 %v3546
        %v3548 = vpop.xlane.xlu0 %3547
        %v3549 = vsel %vm320, %v3541, 0.0
        %3550 = vadd.xlane.f32.xlu0 %v3549
        %v3551 = vpop.xlane.xlu0 %3550
        %v3552 = vsel %vm320, %v3542, 0.0
        %3553 = vadd.xlane.f32.xlu0 %v3552
        %v3554 = vpop.xlane.xlu0 %3553
        %v3555 = vmul.f32 %v3545, %v339
        %v3556 = vmul.f32 %v3548, %v339
        %v3557 = vmul.f32 %v3551, %v339
        %v3558 = vmul.f32 %v3554, %v339
        %v3559 = vsub.f32 %v3539, %v3555
        %v3560 = vsub.f32 %v3540, %v3556
        %v3561 = vsub.f32 %v3541, %v3557
        %v3562 = vsub.f32 %v3542, %v3558
        %v3563 = vmul.f32 %v3559, %v3559
        %v3564 = vmul.f32 %v3560, %v3560
        %v3565 = vmul.f32 %v3561, %v3561
        %v3566 = vmul.f32 %v3562, %v3562
        %v3567 = vsel %vm320, %v3563, 0.0
        %3568 = vadd.xlane.f32.xlu0 %v3567
        %v3569 = vpop.xlane.xlu0 %3568
        %v3570 = vsel %vm320, %v3564, 0.0
        %3571 = vadd.xlane.f32.xlu0 %v3570
        %v3572 = vpop.xlane.xlu0 %3571
        %v3573 = vsel %vm320, %v3565, 0.0
        %3574 = vadd.xlane.f32.xlu0 %v3573
        %v3575 = vpop.xlane.xlu0 %3574
        %v3576 = vsel %vm320, %v3566, 0.0
        %3577 = vadd.xlane.f32.xlu0 %v3576
        %v3578 = vpop.xlane.xlu0 %3577
        %v3579 = vmul.f32 %v3569, %v339
        %v3580 = vmul.f32 %v3572, %v339
        %v3581 = vmul.f32 %v3575, %v339
        %v3582 = vmul.f32 %v3578, %v339
        %v3583 = vadd.f32 %v3579, 1e-12
        %v3584 = vadd.f32 %v3580, 1e-12
        %v3585 = vadd.f32 %v3581, 1e-12
        %v3586 = vadd.f32 %v3582, 1e-12
        %v3587 = vrsqrt.pop %v3583
        %v3588 = vmul.f32 %v3587, %v3583
        %v3589 = vmul.f32 %v3588, %v3587
        %v3590 = vmul.f32 0.5, %v3589
        %v3591 = vsub.f32 1.5, %v3590
        %v3592 = vmul.f32 %v3587, %v3591
        %vm3593 = vweird.f32 %v3583
        %vm3594 = vweird.f32 %v3587
        %vm3595 = vmor %vm3593, %vm3594
        %v3596 = vsel %vm3595, %v3587, %v3592
        %v3597 = vrsqrt.pop %v3584
        %v3598 = vmul.f32 %v3597, %v3584
        %v3599 = vmul.f32 %v3598, %v3597
        %v3600 = vmul.f32 0.5, %v3599
        %v3601 = vsub.f32 1.5, %v3600
        %v3602 = vmul.f32 %v3597, %v3601
        %vm3603 = vweird.f32 %v3584
        %vm3604 = vweird.f32 %v3597
        %vm3605 = vmor %vm3603, %vm3604
        %v3606 = vsel %vm3605, %v3597, %v3602
        %v3607 = vrsqrt.pop %v3585
        %v3608 = vmul.f32 %v3607, %v3585
        %v3609 = vmul.f32 %v3608, %v3607
        %v3610 = vmul.f32 0.5, %v3609
        %v3611 = vsub.f32 1.5, %v3610
        %v3612 = vmul.f32 %v3607, %v3611
        %vm3613 = vweird.f32 %v3585
        %vm3614 = vweird.f32 %v3607
        %vm3615 = vmor %vm3613, %vm3614
        %v3616 = vsel %vm3615, %v3607, %v3612
        %v3617 = vrsqrt.pop %v3586
        %v3618 = vmul.f32 %v3617, %v3586
        %v3619 = vmul.f32 %v3618, %v3617
        %v3620 = vmul.f32 0.5, %v3619
        %v3621 = vsub.f32 1.5, %v3620
        %v3622 = vmul.f32 %v3617, %v3621
        %vm3623 = vweird.f32 %v3586
        %vm3624 = vweird.f32 %v3617
        %vm3625 = vmor %vm3623, %vm3624
        %v3626 = vsel %vm3625, %v3617, %v3622
        %v3627 = vmul.f32 %v3559, %v3596
        %v3628 = vmul.f32 %v3560, %v3606
        %v3629 = vmul.f32 %v3561, %v3616
        %v3630 = vmul.f32 %v3562, %v3626
        %v3631 = vperm.slane %v2043, 6
        %v3632 = vmul.f32 %v3627, %v3631
        %v3633 = vmul.f32 %v3628, %v3631
        %v3634 = vmul.f32 %v3629, %v3631
        %v3635 = vmul.f32 %v3630, %v3631
        %v3636 = vperm.slane %v2043, 7
        %v3637 = vadd.f32 %v3632, %v3636
        %v3638 = vadd.f32 %v3633, %v3636
        %v3639 = vadd.f32 %v3634, %v3636
        %v3640 = vadd.f32 %v3635, %v3636
        %v3641 = vld [vmem:[%s5] sm:$0xff]
        %v3642 = vld [vmem:[%s5 + $0x10] sm:$0xff]
        %v3643 = vld [vmem:[%s5 + $0x20] sm:$0xff]
        %v3644 = vld [vmem:[%s5 + $0x30] sm:$0xff]
        %v3645 = vld [vmem:[%s5 + $0x40] sm:$0xff]
        %v3646 = vld [vmem:[%s5 + $0x50] sm:$0xff]
        %v3647 = vld [vmem:[%s5 + $0x60] sm:$0xff]
        %v3648 = vld [vmem:[%s5 + $0x70] sm:$0xff]
        %v3649 = vperm.slane %v315, 2
        %v3654 = vrot.slane %v3638, 7
        %vm3655 = vcmask 1041409
        %v3656 = vsel %vm3655, %v3654, %v3637
        %v3657 = vrot.slane %v3639, 6
        %vm3658 = vcmask 1042434
        %v3659 = vsel %vm3658, %v3657, %v3656
        %v3660 = vrot.slane %v3640, 5
        %vm3661 = vcmask 1043459
        %v3662 = vsel %vm3661, %v3660, %v3659
        %v3663 = vsel %vm320, %v3662, 0
        %3665 = vmatpush.msra.mxu0 0.0
        %3666 = vmatpush.msra.mxu0 0.0
        %3667 = vmatpush.msra.mxu0 0.0
        %3668 = vmatpush.msra.mxu0 0.0
        %3669 = vmatpush.msra.mxu0 0.0
        %3670 = vmatpush.msra.mxu0 0.0
        %3671 = vmatpush.msra.mxu0 0.0
        %3672 = vmatpush.msra.mxu0 0.0
        %3673 = vmatpush.msra.mxu0 %v3648
        %3674 = vmatpush.msra.mxu0 %v3647
        %3675 = vmatpush.msra.mxu0 %v3646
        %3676 = vmatpush.msra.mxu0 %v3645
        %3677 = vmatpush.msra.mxu0 %v3644
        %3678 = vmatpush.msra.mxu0 %v3643
        %3679 = vmatpush.msra.mxu0 %v3642
        %3680 = vmatpush.msra.mxu0 %v3641
        %3681 = vmatmul.f32.gmra.mxu0 %v3663
        %v3682 = vpop.f32.mrf.mxu0
        %v3683 = vadd.f32 %v3649, %v3682
        %3684 = vdwg.mxu0
        %v3685 = vtanh.pop %v3683
        %v3686 = vld [vmem:[%s5 + $0x8] sm:$0xff]
        %v3687 = vld [vmem:[%s5 + $0x18] sm:$0xff]
        %v3688 = vld [vmem:[%s5 + $0x28] sm:$0xff]
        %v3689 = vld [vmem:[%s5 + $0x38] sm:$0xff]
        %v3690 = vld [vmem:[%s5 + $0x48] sm:$0xff]
        %v3691 = vld [vmem:[%s5 + $0x58] sm:$0xff]
        %v3692 = vld [vmem:[%s5 + $0x68] sm:$0xff]
        %v3693 = vld [vmem:[%s5 + $0x78] sm:$0xff]
        %v3694 = vperm.slane %v315, 3
        %v3696 = vsel %vm320, %v3685, 0
        %3698 = vmatpush.msra.mxu0 0.0
        %3699 = vmatpush.msra.mxu0 0.0
        %3700 = vmatpush.msra.mxu0 0.0
        %3701 = vmatpush.msra.mxu0 0.0
        %3702 = vmatpush.msra.mxu0 0.0
        %3703 = vmatpush.msra.mxu0 0.0
        %3704 = vmatpush.msra.mxu0 0.0
        %3705 = vmatpush.msra.mxu0 0.0
        %3706 = vmatpush.msra.mxu0 %v3693
        %3707 = vmatpush.msra.mxu0 %v3692
        %3708 = vmatpush.msra.mxu0 %v3691
        %3709 = vmatpush.msra.mxu0 %v3690
        %3710 = vmatpush.msra.mxu0 %v3689
        %3711 = vmatpush.msra.mxu0 %v3688
        %3712 = vmatpush.msra.mxu0 %v3687
        %3713 = vmatpush.msra.mxu0 %v3686
        %3714 = vmatmul.f32.gmra.mxu0 %v3696
        %v3715 = vpop.f32.mrf.mxu0
        %v3716 = vadd.f32 %v3694, %v3715
        %3717 = vdwg.mxu0
        %3718 = vst [vmem:[%s303] sm:$0xf] %v3716
        %s3719 = sand.u32 %s187, 1
        %s3720 = scalar_lea.sflag [#allocation4], %s3719
        %s3721 = sand.u32 %s187, 1
        %s3722 = smul.addr %s3721, 4
        %s3723 = scalar_lea.vmem [#allocation5], %s3722
        // Predicated region
        $region53: #{tpu_custom_call.1} parent=47 // pred_check
          %p3724 = pneg %p197
        $region54: #{tpu_custom_call.1} parent=47 // pred_check_branch
          %3726 = sbr.rel (%p3724) target = $region56
        $region55: #{tpu_custom_call.1} parent=47 // pred_region
          %3728 = vsyncadd %s3720, 0
          %s3729 = smul.addr %s22, 4
          %s3730 = scalar_lea.hbm %s7, %s3729
          %s3732 = sshll.u32 %s3723, 4
          %s3733 = int_to_ptr.vmem [resolvable:$true] %s3732
          %s3734 = sshll.u32 %s3730, 4
          %s3735 = int_to_ptr.hbm [resolvable:$true] %s3734
          %3737 = dma.vmem_to_hbm [thread:$0]  %s3733, 64, %s3735, %s3720
        $region56: #{tpu_custom_call.1} parent=47 // pred_fallthru
          _
      $region48: #{tpu_custom_call.1} parent=5 // pred_fallthru
        _
      %p3738 = scmp.le.s32.totalorder 2, %s17
      // Predicated region
      $region57: #{tpu_custom_call.1} parent=5 // pred_check
        %p3739 = pneg %p3738
      $region58: #{tpu_custom_call.1} parent=5 // pred_check_branch
        %3741 = sbr.rel (%p3739) target = $region60
      $region59: #{tpu_custom_call.1} parent=5 // pred_region
        %s3742 = ssub.s32 %s17, 2
        // Predicated region
        $region61: #{tpu_custom_call.1} parent=59 // pred_check
          %p3743 = pneg %p203
        $region62: #{tpu_custom_call.1} parent=59 // pred_check_branch
          %3745 = sbr.rel (%p3743) target = $region64
        $region63: #{tpu_custom_call.1} parent=59 // pred_region
          %s3746 = sand.u32 %s188, 1
          %s3747 = scalar_lea.sflag [#allocation4], %s3746
          %s3748 = sand.u32 %s188, 1
          %s3749 = smul.addr %s3748, 4
          %s3750 = scalar_lea.vmem [#allocation5], %s3749
          %3752 = dma.done %s3747, 64
        $region64: #{tpu_custom_call.1} parent=59 // pred_fallthru
          _
      $region60: #{tpu_custom_call.1} parent=5 // pred_fallthru
        _
    $region6: #{tpu_custom_call.1} parent=1 // loop_footer
      %s21 = sadd.s32 1, %s17
    $region7: #{tpu_custom_call.1} parent=1 // loop_footer_branch
      %16 = sbr.rel target = $region3
    $region8: #{tpu_custom_call.1} parent=1 // loop_exit
      _
    %3753 = vsyncpa [#allocation3], 1
    %s3754 = scalar_lea.sflag [#allocation3], 1
    %3755 = vsyncpa %s3754, 1
    %3756 = vsyncpa [#allocation4], 1
    %s3757 = scalar_lea.sflag [#allocation4], 1
    %3758 = vsyncpa %s3757, 1

// kernel: tpu_custom_call.1
$region0: #{tpu_custom_call.1}
  #allocation0 [shape = 'u32[]', space=smem, size = 0x4, offset = 0x4, fixed_abs, tag = 'smem constant byte address 0x4 - core index']
  #allocation1 [shape = 'u32[72,128]{1,0:T(1,128)}', space=vmem, size = 0x9000, scoped, tag = 'internal scratch']
  %s0 = inlined_call_operand.vmem [shape: f32[8,8,64], index: 0, kind: input, shape index: {}]
  %s1 = inlined_call_operand.vmem [shape: f32[8,1,8], index: 1, kind: input, shape index: {}]
  %s2 = inlined_call_operand.hbm [shape: f32[2,64,512], index: 2, kind: input, shape index: {}]
  %s3 = inlined_call_operand.vmem [shape: f32[2,128,64], index: 3, kind: input, shape index: {}]
  %s4 = inlined_call_operand.vmem [shape: f32[2,8,256], index: 4, kind: input, shape index: {}]
  %s5 = inlined_call_operand.vmem [shape: f32[64,256], index: 5, kind: input, shape index: {}]
  %s6 = inlined_call_operand.vmem [shape: f32[4,128], index: 6, kind: input, shape index: {}]
  %s7 = inlined_call_operand.hbm [shape: f32[2,4,128], index: 7, kind: output, shape index: {}]
  %s8 = sld [smem:[#allocation0]]
  $region65: #{tpu_custom_call.1} parent=0
    _
  %s10 = ssub.s32 1, %s8
  %s11 = scalar_select 0, %s10, %s8
  $region1: #{tpu_custom_call.1} parent=0
    #allocation2 [shape = 'u8[262144]{0}', space=vmem, size = 0x40000, scoped, tag = 'input window, operand 2, single buffered']
    #allocation3 [shape = 's32[2]{0}', space=sflag, size = 0x8, scoped, tag = 'scoped memory for tpu_custom_call.1']
    #allocation4 [shape = 's32[2]{0}', space=sflag, size = 0x8, scoped, tag = 'scoped memory for tpu_custom_call.1']
    #allocation5 [shape = 'u8[4096]{0}', space=vmem, size = 0x1000, scoped, tag = 'output window, operand 0']
    %12 = vsyncpa [#allocation3], 0
    %13 = vsyncpa [#allocation4], 0
    %s14 = scalar_lea.sflag [#allocation4], 1
    %15 = vsyncpa %s14, 0
    loop: start=0, step=1, limit=4
    $region2: #{tpu_custom_call.1} parent=1 // loop_pre_header
      _
    $region3: #{tpu_custom_call.1} parent=1 // loop_header
      %s17 = sphi 0, %s21
      %p18 = scmp.ge.s32.totalorder %s17, 4
      %s27 = sphi 0, %s29
      %s30 = sphi 0, %s27
      %s31 = sphi 0, %s30
      %s47 = sphi 0, %s31
      %s53 = sphi 0, %s55
      %s56 = sphi 0, %s53
      %s57 = sphi 0, %s56
      %s73 = sphi 0, %s57
      %s77 = sphi 0, %s77
      %s79 = sphi 0, %s77
      %s80 = sphi 0, %s79
      %s94 = sphi 0, %s80
      %s98 = sphi 0, %s98
      %s100 = sphi 0, %s98
      %s101 = sphi 0, %s100
      %s115 = sphi 0, %s101
      %s119 = sphi 0, %s119
      %s121 = sphi 0, %s119
      %s122 = sphi 0, %s121
      %s136 = sphi 0, %s122
      %s140 = sphi 0, %s140
      %s142 = sphi 0, %s140
      %s143 = sphi 0, %s142
      %s157 = sphi 0, %s143
      %s161 = sphi 0, %s161
      %s163 = sphi 0, %s161
      %s164 = sphi 0, %s163
      %s178 = sphi 0, %s164
      %s184 = sphi 0, %s186
      %s187 = sphi 0, %s184
      %s188 = sphi 0, %s187
      %s204 = sphi 0, %s188
    $region4: #{tpu_custom_call.1} parent=1 // loop_header_branch
      %20 = sbr.rel (%p18) target = $region8
    $region5: #{tpu_custom_call.1} parent=1 // loop_body
      %s22 = ssub.s32 %s17, 1
      %s23 = ssub.s32 %s17, 2
      %s24 = sadd.s32 %s17, 1
      %s25 = ssub.s32 %s17, %s24
      %p26 = scmp.eq.s32.totalorder %s25, 0
      %s28 = sadd.s32 %s27, 1
      %s29 = scalar_select %p26, %s27, %s28
      %p32 = pneg %p26
      %p33 = scmp.eq.s32.totalorder %s17, 1
      %p34 = por %p32, %p33
      %p35 = scmp.ne.s32.totalorder %s27, %s30
      %p36 = scmp.eq.s32.totalorder %s17, 0
      %p37 = por %p35, %p36
      %p38 = scmp.ne.s32.totalorder %s27, %s30
      %p39 = scmp.eq.s32.totalorder %s22, 1
      %p40 = por %p38, %p39
      %p41 = scmp.ne.s32.totalorder %s30, %s31
      %p42 = scmp.eq.s32.totalorder %s22, 0
      %p43 = por %p41, %p42
      %p44 = scmp.ne.s32.totalorder %s30, %s31
      %p45 = scmp.eq.s32.totalorder %s23, 1
      %p46 = por %p44, %p45
      %p48 = scmp.ne.s32.totalorder %s31, %s47
      %p49 = scmp.eq.s32.totalorder %s23, 0
      %p50 = por %p48, %p49
      %s51 = ssub.s32 %s17, %s24
      %p52 = scmp.eq.s32.totalorder %s51, 0
      %s54 = sadd.s32 %s53, 1
      %s55 = scalar_select %p52, %s53, %s54
      %p58 = pneg %p52
      %p59 = scmp.eq.s32.totalorder %s17, 1
      %p60 = por %p58, %p59
      %p61 = scmp.ne.s32.totalorder %s53, %s56
      %p62 = scmp.eq.s32.totalorder %s17, 0
      %p63 = por %p61, %p62
      %p64 = scmp.ne.s32.totalorder %s53, %s56
      %p65 = scmp.eq.s32.totalorder %s22, 1
      %p66 = por %p64, %p65
      %p67 = scmp.ne.s32.totalorder %s56, %s57
      %p68 = scmp.eq.s32.totalorder %s22, 0
      %p69 = por %p67, %p68
      %p70 = scmp.ne.s32.totalorder %s56, %s57
      %p71 = scmp.eq.s32.totalorder %s23, 1
      %p72 = por %p70, %p71
      %p74 = scmp.ne.s32.totalorder %s57, %s73
      %p75 = scmp.eq.s32.totalorder %s23, 0
      %p76 = por %p74, %p75
      %s78 = sadd.s32 %s77, 1
      %p81 = scmp.eq.s32.totalorder %s17, 1
      %p82 = scmp.ne.s32.totalorder %s77, %s79
      %p83 = scmp.eq.s32.totalorder %s17, 0
      %p84 = por %p82, %p83
      %p85 = scmp.ne.s32.totalorder %s77, %s79
      %p86 = scmp.eq.s32.totalorder %s22, 1
      %p87 = por %p85, %p86
      %p88 = scmp.ne.s32.totalorder %s79, %s80
      %p89 = scmp.eq.s32.totalorder %s22, 0
      %p90 = por %p88, %p89
      %p91 = scmp.ne.s32.totalorder %s79, %s80
      %p92 = scmp.eq.s32.totalorder %s23, 1
      %p93 = por %p91, %p92
      %p95 = scmp.ne.s32.totalorder %s80, %s94
      %p96 = scmp.eq.s32.totalorder %s23, 0
      %p97 = por %p95, %p96
      %s99 = sadd.s32 %s98, 1
      %p102 = scmp.eq.s32.totalorder %s17, 1
      %p103 = scmp.ne.s32.totalorder %s98, %s100
      %p104 = scmp.eq.s32.totalorder %s17, 0
      %p105 = por %p103, %p104
      %p106 = scmp.ne.s32.totalorder %s98, %s100
      %p107 = scmp.eq.s32.totalorder %s22, 1
      %p108 = por %p106, %p107
      %p109 = scmp.ne.s32.totalorder %s100, %s101
      %p110 = scmp.eq.s32.totalorder %s22, 0
      %p111 = por %p109, %p110
      %p112 = scmp.ne.s32.totalorder %s100, %s101
      %p113 = scmp.eq.s32.totalorder %s23, 1
      %p114 = por %p112, %p113
      %p116 = scmp.ne.s32.totalorder %s101, %s115
      %p117 = scmp.eq.s32.totalorder %s23, 0
      %p118 = por %p116, %p117
      %s120 = sadd.s32 %s119, 1
      %p123 = scmp.eq.s32.totalorder %s17, 1
      %p124 = scmp.ne.s32.totalorder %s119, %s121
      %p125 = scmp.eq.s32.totalorder %s17, 0
      %p126 = por %p124, %p125
      %p127 = scmp.ne.s32.totalorder %s119, %s121
      %p128 = scmp.eq.s32.totalorder %s22, 1
      %p129 = por %p127, %p128
      %p130 = scmp.ne.s32.totalorder %s121, %s122
      %p131 = scmp.eq.s32.totalorder %s22, 0
      %p132 = por %p130, %p131
      %p133 = scmp.ne.s32.totalorder %s121, %s122
      %p134 = scmp.eq.s32.totalorder %s23, 1
      %p135 = por %p133, %p134
      %p137 = scmp.ne.s32.totalorder %s122, %s136
      %p138 = scmp.eq.s32.totalorder %s23, 0
      %p139 = por %p137, %p138
      %s141 = sadd.s32 %s140, 1
      %p144 = scmp.eq.s32.totalorder %s17, 1
      %p145 = scmp.ne.s32.totalorder %s140, %s142
      %p146 = scmp.eq.s32.totalorder %s17, 0
      %p147 = por %p145, %p146
      %p148 = scmp.ne.s32.totalorder %s140, %s142
      %p149 = scmp.eq.s32.totalorder %s22, 1
      %p150 = por %p148, %p149
      %p151 = scmp.ne.s32.totalorder %s142, %s143
      %p152 = scmp.eq.s32.totalorder %s22, 0
      %p153 = por %p151, %p152
      %p154 = scmp.ne.s32.totalorder %s142, %s143
      %p155 = scmp.eq.s32.totalorder %s23, 1
      %p156 = por %p154, %p155
      %p158 = scmp.ne.s32.totalorder %s143, %s157
      %p159 = scmp.eq.s32.totalorder %s23, 0
      %p160 = por %p158, %p159
      %s162 = sadd.s32 %s161, 1
      %p165 = scmp.eq.s32.totalorder %s17, 1
      %p166 = scmp.ne.s32.totalorder %s161, %s163
      %p167 = scmp.eq.s32.totalorder %s17, 0
      %p168 = por %p166, %p167
      %p169 = scmp.ne.s32.totalorder %s161, %s163
      %p170 = scmp.eq.s32.totalorder %s22, 1
      %p171 = por %p169, %p170
      %p172 = scmp.ne.s32.totalorder %s163, %s164
      %p173 = scmp.eq.s32.totalorder %s22, 0
      %p174 = por %p172, %p173
      %p175 = scmp.ne.s32.totalorder %s163, %s164
      %p176 = scmp.eq.s32.totalorder %s23, 1
      %p177 = por %p175, %p176
      %p179 = scmp.ne.s32.totalorder %s164, %s178
      %p180 = scmp.eq.s32.totalorder %s23, 0
      %p181 = por %p179, %p180
      %s182 = ssub.s32 %s17, %s24
      %p183 = scmp.eq.s32.totalorder %s182, 0
      %s185 = sadd.s32 %s184, 1
      %s186 = scalar_select %p183, %s184, %s185
      %p189 = pneg %p183
      %p190 = scmp.eq.s32.totalorder %s17, 1
      %p191 = por %p189, %p190
      %p192 = scmp.ne.s32.totalorder %s184, %s187
      %p193 = scmp.eq.s32.totalorder %s17, 0
      %p194 = por %p192, %p193
      %p195 = scmp.ne.s32.totalorder %s184, %s187
      %p196 = scmp.eq.s32.totalorder %s22, 1
      %p197 = por %p195, %p196
      %p198 = scmp.ne.s32.totalorder %s187, %s188
      %p199 = scmp.eq.s32.totalorder %s22, 0
      %p200 = por %p198, %p199
      %p201 = scmp.ne.s32.totalorder %s187, %s188
      %p202 = scmp.eq.s32.totalorder %s23, 1
      %p203 = por %p201, %p202
      %p205 = scmp.ne.s32.totalorder %s188, %s204
      %p206 = scmp.eq.s32.totalorder %s23, 0
      %p207 = por %p205, %p206
      %p208 = scmp.le.s32.totalorder 1, %s17
      %p209 = scmp.lt.s32.totalorder %s17, 3
      %p210 = pnand %p208, %p209
      %p211 = pneg %p210
      // Predicated region
      $region9: #{tpu_custom_call.1} parent=5 // pred_check
        _
      $region10: #{tpu_custom_call.1} parent=5 // pred_check_branch
        %213 = sbr.rel (%p210) target = $region12
      $region11: #{tpu_custom_call.1} parent=5 // pred_region
        %s214 = ssub.s32 %s17, 1
        // Predicated region
        $region13: #{tpu_custom_call.1} parent=11 // pred_check
          %p215 = pneg %p90
        $region14: #{tpu_custom_call.1} parent=11 // pred_check_branch
          %217 = sbr.rel (%p215) target = $region16
        $region15: #{tpu_custom_call.1} parent=11 // pred_region
          %219 = vsyncadd [#allocation3], 0
          %s220 = sshll.u32 %s2, 4
          %s221 = int_to_ptr.hbm [resolvable:$true] %s220
          %s222 = sshll.u32 [#allocation2], 4
          %s223 = int_to_ptr.vmem [resolvable:$true] %s222
          %228 = dma.hbm_to_vmem [thread:$0]  %s221, 8192, %s223, [#allocation3], 512, 512, 32
        $region16: #{tpu_custom_call.1} parent=11 // pred_fallthru
          _
        // Predicated region
        $region17: #{tpu_custom_call.1} parent=11 // pred_check
          %p229 = pneg %p111
        $region18: #{tpu_custom_call.1} parent=11 // pred_check_branch
          %231 = sbr.rel (%p229) target = $region20
        $region19: #{tpu_custom_call.1} parent=11 // pred_region
          _
        $region20: #{tpu_custom_call.1} parent=11 // pred_fallthru
          _
        // Predicated region
        $region21: #{tpu_custom_call.1} parent=11 // pred_check
          %p232 = pneg %p132
        $region22: #{tpu_custom_call.1} parent=11 // pred_check_branch
          %234 = sbr.rel (%p232) target = $region24
        $region23: #{tpu_custom_call.1} parent=11 // pred_region
          _
        $region24: #{tpu_custom_call.1} parent=11 // pred_fallthru
          _
        // Predicated region
        $region25: #{tpu_custom_call.1} parent=11 // pred_check
          %p235 = pneg %p153
        $region26: #{tpu_custom_call.1} parent=11 // pred_check_branch
          %237 = sbr.rel (%p235) target = $region28
        $region27: #{tpu_custom_call.1} parent=11 // pred_region
          _
        $region28: #{tpu_custom_call.1} parent=11 // pred_fallthru
          _
        // Predicated region
        $region29: #{tpu_custom_call.1} parent=11 // pred_check
          %p238 = pneg %p174
        $region30: #{tpu_custom_call.1} parent=11 // pred_check_branch
          %240 = sbr.rel (%p238) target = $region32
        $region31: #{tpu_custom_call.1} parent=11 // pred_region
          _
        $region32: #{tpu_custom_call.1} parent=11 // pred_fallthru
          _
      $region12: #{tpu_custom_call.1} parent=5 // pred_fallthru
        _
      %p241 = scmp.lt.s32.totalorder %s17, 2
      // Predicated region
      $region33: #{tpu_custom_call.1} parent=5 // pred_check
        %p242 = pneg %p241
      $region34: #{tpu_custom_call.1} parent=5 // pred_check_branch
        %244 = sbr.rel (%p242) target = $region36
      $region35: #{tpu_custom_call.1} parent=5 // pred_region
        // Predicated region
        $region37: #{tpu_custom_call.1} parent=35 // pred_check
          %p245 = pneg %p37
        $region38: #{tpu_custom_call.1} parent=35 // pred_check_branch
          %247 = sbr.rel (%p245) target = $region40
        $region39: #{tpu_custom_call.1} parent=35 // pred_region
          %s248 = smul.u32 4, %s17
          %p249 = scmp.lt.s32.totalorder %s248, 7
          %s250 = scalar_select %p249, %s248, 7
          %s251 = smul.addr %s250, 8
          %s252 = scalar_lea.vmem %s0, %s251
          %s253 = smul.u32 4, %s17
        $region40: #{tpu_custom_call.1} parent=35 // pred_fallthru
          _
        // Predicated region
        $region41: #{tpu_custom_call.1} parent=35 // pred_check
          %p254 = pneg %p63
        $region42: #{tpu_custom_call.1} parent=35 // pred_check_branch
          %256 = sbr.rel (%p254) target = $region44
        $region43: #{tpu_custom_call.1} parent=35 // pred_region
          %s257 = smul.u32 4, %s17
          %p258 = scmp.lt.s32.totalorder %s257, 7
          %s259 = scalar_select %p258, %s257, 7
          %s260 = scalar_lea.vmem %s1, %s259
          %s261 = smul.u32 4, %s17
        $region44: #{tpu_custom_call.1} parent=35 // pred_fallthru
          _
      $region36: #{tpu_custom_call.1} parent=5 // pred_fallthru
        _
      %p262 = scmp.le.s32.totalorder 1, %s17
      %p263 = scmp.lt.s32.totalorder %s17, 3
      %p264 = pnand %p262, %p263
      %p265 = pneg %p264
      // Predicated region
      $region45: #{tpu_custom_call.1} parent=5 // pred_check
        _
      $region46: #{tpu_custom_call.1} parent=5 // pred_check_branch
        %267 = sbr.rel (%p264) target = $region48
      $region47: #{tpu_custom_call.1} parent=5 // pred_region
        %s268 = ssub.s32 %s17, 1
        // Predicated region
        $region49: #{tpu_custom_call.1} parent=47 // pred_check
          %p269 = pneg %p90
        $region50: #{tpu_custom_call.1} parent=47 // pred_check_branch
          %271 = sbr.rel (%p269) target = $region52
        $region51: #{tpu_custom_call.1} parent=47 // pred_region
          %273 = dma.done [#allocation3], 8192
        $region52: #{tpu_custom_call.1} parent=47 // pred_fallthru
          _
        %s274 = smul.u32 4, %s22
        %p275 = scmp.lt.s32.totalorder %s274, 7
        %s276 = scalar_select %p275, %s274, 7
        %s277 = smul.addr %s276, 8
        %s278 = scalar_lea.vmem %s0, %s277
        %p279 = pneg %p43
        %p280 = pneg %p40
        %s281 = smul.u32 4, %s22
        %p282 = scmp.lt.s32.totalorder %s281, 7
        %s283 = scalar_select %p282, %s281, 7
        %s284 = scalar_lea.vmem %s1, %s283
        %p285 = pneg %p69
        %p286 = pneg %p66
        %p287 = pneg %p90
        %p288 = pneg %p87
        %p289 = pneg %p111
        %p290 = pneg %p108
        %p291 = pneg %p132
        %p292 = pneg %p129
        %p293 = pneg %p153
        %p294 = pneg %p150
        %p295 = pneg %p174
        %p296 = pneg %p171
        %p297 = pneg %p200
        %p298 = pneg %p197
        %s299 = sand.u32 %s187, 1
        %s300 = scalar_lea.sflag [#allocation4], %s299
        %s301 = sand.u32 %s187, 1
        %s302 = smul.addr %s301, 4
        %s303 = scalar_lea.vmem [#allocation5], %s302
        %s304 = smul.u32 4, %s22
        %p305 = scmp.lt.s32.totalorder %s304, 7
        %s306 = scalar_select %p305, %s304, 7
        %s307 = smul.addr %s306, 8
        %s308 = scalar_lea.vmem %s0, %s307
        %s309 = smul.u32 4, %s22
        %s310 = smul.u32 4, %s22
        %p311 = scmp.lt.s32.totalorder %s310, 7
        %s312 = scalar_select %p311, %s310, 7
        %s313 = scalar_lea.vmem %s1, %s312
        %s314 = smul.u32 4, %s22
        %v315 = vld [vmem:[%s6] sm:$0xf]
        %v316 = vld [vmem:[%s308] sm:$0xff]
        %v317 = vld [vmem:[%s308 + $0x8] sm:$0xff]
        %v318 = vld [vmem:[%s308 + $0x10] sm:$0xff]
        %v319 = vld [vmem:[%s308 + $0x18] sm:$0xff]
        %vm320 = vcmask 523264
        %v321 = vsel %vm320, %v316, 0.0
        %322 = vadd.xlane.f32.xlu0 %v321
        %v323 = vpop.xlane.xlu0 %322
        %v324 = vsel %vm320, %v317, 0.0
        %325 = vadd.xlane.f32.xlu0 %v324
        %v326 = vpop.xlane.xlu0 %325
        %v327 = vsel %vm320, %v318, 0.0
        %328 = vadd.xlane.f32.xlu0 %v327
        %v329 = vpop.xlane.xlu0 %328
        %v330 = vsel %vm320, %v319, 0.0
        %331 = vadd.xlane.f32.xlu0 %v330
        %v332 = vpop.xlane.xlu0 %331
        %v333 = vrcp.pop 64.0
        %v334 = vmul.f32 64.0, %v333
        %v335 = vsub.f32 1.0, %v334
        %v336 = vmul.f32 %v333, %v335
        %v337 = vadd.f32 %v333, %v336
        %vm338 = vweird.f32 %v333
        %v339 = vsel %vm338, %v333, %v337
        %v340 = vmul.f32 %v323, %v339
        %v341 = vmul.f32 %v326, %v339
        %v342 = vmul.f32 %v329, %v339
        %v343 = vmul.f32 %v332, %v339
        %v344 = vsub.f32 %v316, %v340
        %v345 = vsub.f32 %v317, %v341
        %v346 = vsub.f32 %v318, %v342
        %v347 = vsub.f32 %v319, %v343
        %v348 = vmul.f32 %v344, %v344
        %v349 = vmul.f32 %v345, %v345
        %v350 = vmul.f32 %v346, %v346
        %v351 = vmul.f32 %v347, %v347
        %v352 = vsel %vm320, %v348, 0.0
        %353 = vadd.xlane.f32.xlu0 %v352
        %v354 = vpop.xlane.xlu0 %353
        %v355 = vsel %vm320, %v349, 0.0
        %356 = vadd.xlane.f32.xlu0 %v355
        %v357 = vpop.xlane.xlu0 %356
        %v358 = vsel %vm320, %v350, 0.0
        %359 = vadd.xlane.f32.xlu0 %v358
        %v360 = vpop.xlane.xlu0 %359
        %v361 = vsel %vm320, %v351, 0.0
        %362 = vadd.xlane.f32.xlu0 %v361
        %v363 = vpop.xlane.xlu0 %362
        %v364 = vmul.f32 %v354, %v339
        %v365 = vmul.f32 %v357, %v339
        %v366 = vmul.f32 %v360, %v339
        %v367 = vmul.f32 %v363, %v339
        %v368 = vadd.f32 %v364, 1e-12
        %v369 = vadd.f32 %v365, 1e-12
        %v370 = vadd.f32 %v366, 1e-12
        %v371 = vadd.f32 %v367, 1e-12
        %v372 = vrsqrt.pop %v368
        %v373 = vmul.f32 %v372, %v368
        %v374 = vmul.f32 %v373, %v372
        %v375 = vmul.f32 0.5, %v374
        %v376 = vsub.f32 1.5, %v375
        %v377 = vmul.f32 %v372, %v376
        %vm378 = vweird.f32 %v368
        %vm379 = vweird.f32 %v372
        %vm380 = vmor %vm378, %vm379
        %v381 = vsel %vm380, %v372, %v377
        %v382 = vrsqrt.pop %v369
        %v383 = vmul.f32 %v382, %v369
        %v384 = vmul.f32 %v383, %v382
        %v385 = vmul.f32 0.5, %v384
        %v386 = vsub.f32 1.5, %v385
        %v387 = vmul.f32 %v382, %v386
        %vm388 = vweird.f32 %v369
        %vm389 = vweird.f32 %v382
        %vm390 = vmor %vm388, %vm389
        %v391 = vsel %vm390, %v382, %v387
        %v392 = vrsqrt.pop %v370
        %v393 = vmul.f32 %v392, %v370
        %v394 = vmul.f32 %v393, %v392
        %v395 = vmul.f32 0.5, %v394
        %v396 = vsub.f32 1.5, %v395
        %v397 = vmul.f32 %v392, %v396
        %vm398 = vweird.f32 %v370
        %vm399 = vweird.f32 %v392
        %vm400 = vmor %vm398, %vm399
        %v401 = vsel %vm400, %v392, %v397
        %v402 = vrsqrt.pop %v371
        %v403 = vmul.f32 %v402, %v371
        %v404 = vmul.f32 %v403, %v402
        %v405 = vmul.f32 0.5, %v404
        %v406 = vsub.f32 1.5, %v405
        %v407 = vmul.f32 %v402, %v406
        %vm408 = vweird.f32 %v371
        %vm409 = vweird.f32 %v402
        %vm410 = vmor %vm408, %vm409
        %v411 = vsel %vm410, %v402, %v407
        %v412 = vmul.f32 %v344, %v381
        %v413 = vmul.f32 %v345, %v391
        %v414 = vmul.f32 %v346, %v401
        %v415 = vmul.f32 %v347, %v411
        %v416 = vperm.slane %v315, 0
        %v417 = vmul.f32 %v412, %v416
        %v418 = vmul.f32 %v413, %v416
        %v419 = vmul.f32 %v414, %v416
        %v420 = vmul.f32 %v415, %v416
        %v421 = vperm.slane %v315, 1
        %v422 = vadd.f32 %v417, %v421
        %v423 = vadd.f32 %v418, %v421
        %v424 = vadd.f32 %v419, %v421
        %v425 = vadd.f32 %v420, %v421
        %v426 = vld [vmem:[%s313] sm:$0x1]
        %v427 = vld [vmem:[%s313 + $0x1] sm:$0x1]
        %v428 = vld [vmem:[%s313 + $0x2] sm:$0x1]
        %v429 = vld [vmem:[%s313 + $0x3] sm:$0x1]
        %v430 = vld [vmem:[%s4] sm:$0xff]
        %v431 = vld [vmem:[%s4 + $0x8] sm:$0xff]
        %v432 = vld [vmem:[#allocation2] sm:$0xff]
        %v433 = vld [vmem:[#allocation2 + $0x8] sm:$0xff]
        %v434 = vld [vmem:[#allocation2 + $0x20] sm:$0xff]
        %v435 = vld [vmem:[#allocation2 + $0x28] sm:$0xff]
        %v436 = vld [vmem:[#allocation2 + $0x40] sm:$0xff]
        %v437 = vld [vmem:[#allocation2 + $0x48] sm:$0xff]
        %v438 = vld [vmem:[#allocation2 + $0x60] sm:$0xff]
        %v439 = vld [vmem:[#allocation2 + $0x68] sm:$0xff]
        %v440 = vld [vmem:[#allocation2 + $0x80] sm:$0xff]
        %v441 = vld [vmem:[#allocation2 + $0x88] sm:$0xff]
        %v442 = vld [vmem:[#allocation2 + $0xa0] sm:$0xff]
        %v443 = vld [vmem:[#allocation2 + $0xa8] sm:$0xff]
        %v444 = vld [vmem:[#allocation2 + $0xc0] sm:$0xff]
        %v445 = vld [vmem:[#allocation2 + $0xc8] sm:$0xff]
        %v446 = vld [vmem:[#allocation2 + $0xe0] sm:$0xff]
        %v447 = vld [vmem:[#allocation2 + $0xe8] sm:$0xff]
        %v448 = vperm.slane %v430, 0
        %v449 = vperm.slane %v431, 0
        %v451 = vsel %vm320, %v422, 0
        %v454 = vsel %vm320, %v423, 0
        %v457 = vsel %vm320, %v424, 0
        %v460 = vsel %vm320, %v425, 0
        %462 = vmatpush.msra.mxu0 0.0
        %463 = vmatpush.msra.mxu0 0.0
        %464 = vmatpush.msra.mxu0 0.0
        %465 = vmatpush.msra.mxu0 0.0
        %466 = vmatpush.msra.mxu0 0.0
        %467 = vmatpush.msra.mxu0 0.0
        %468 = vmatpush.msra.mxu0 0.0
        %469 = vmatpush.msra.mxu0 0.0
        %470 = vmatpush.msra.mxu0 %v446
        %471 = vmatpush.msra.mxu0 %v444
        %472 = vmatpush.msra.mxu0 %v442
        %473 = vmatpush.msra.mxu0 %v440
        %474 = vmatpush.msra.mxu0 %v438
        %475 = vmatpush.msra.mxu0 %v436
        %476 = vmatpush.msra.mxu0 %v434
        %477 = vmatpush.msra.mxu0 %v432
        %478 = vmatmul.f32.gmra.mxu0 %v451
        %v479 = vpop.f32.mrf.mxu0
        %v480 = vadd.f32 %v448, %v479
        %481 = vmatmul.f32.gmra.mxu0 %v454
        %v482 = vpop.f32.mrf.mxu0
        %v483 = vadd.f32 %v448, %v482
        %484 = vmatmul.f32.gmra.mxu0 %v457
        %v485 = vpop.f32.mrf.mxu0
        %v486 = vadd.f32 %v448, %v485
        %487 = vmatmul.f32.gmra.mxu0 %v460
        %v488 = vpop.f32.mrf.mxu0
        %v489 = vadd.f32 %v448, %v488
        %490 = vdwg.mxu0
        %491 = vmatpush.msra.mxu0 0.0
        %492 = vmatpush.msra.mxu0 0.0
        %493 = vmatpush.msra.mxu0 0.0
        %494 = vmatpush.msra.mxu0 0.0
        %495 = vmatpush.msra.mxu0 0.0
        %496 = vmatpush.msra.mxu0 0.0
        %497 = vmatpush.msra.mxu0 0.0
        %498 = vmatpush.msra.mxu0 0.0
        %499 = vmatpush.msra.mxu0 %v447
        %500 = vmatpush.msra.mxu0 %v445
        %501 = vmatpush.msra.mxu0 %v443
        %502 = vmatpush.msra.mxu0 %v441
        %503 = vmatpush.msra.mxu0 %v439
        %504 = vmatpush.msra.mxu0 %v437
        %505 = vmatpush.msra.mxu0 %v435
        %506 = vmatpush.msra.mxu0 %v433
        %507 = vmatmul.f32.gmra.mxu0 %v451
        %v508 = vpop.f32.mrf.mxu0
        %v509 = vadd.f32 %v449, %v508
        %510 = vmatmul.f32.gmra.mxu0 %v454
        %v511 = vpop.f32.mrf.mxu0
        %v512 = vadd.f32 %v449, %v511
        %513 = vmatmul.f32.gmra.mxu0 %v457
        %v514 = vpop.f32.mrf.mxu0
        %v515 = vadd.f32 %v449, %v514
        %516 = vmatmul.f32.gmra.mxu0 %v460
        %v517 = vpop.f32.mrf.mxu0
        %v518 = vadd.f32 %v449, %v517
        %519 = vdwg.mxu0
        %521 = vrot.lane.b32.xlu0 %v480, 64
        %v522 = vpop.permute.xlu0 %521
        %vm523 = vcmask 130048
        %v524 = vsel %vm523, %v480, 0
        %v526 = vsel %vm523, %v522, 0
        %528 = vmatpush.xpose.msra.mxu0 0.0
        %529 = vmatpush.xpose.msra.mxu0 0.0
        %530 = vmatpush.xpose.msra.mxu0 0.0
        %531 = vmatpush.xpose.msra.mxu0 0.0
        %532 = vmatpush.xpose.msra.mxu0 0.0
        %533 = vmatpush.xpose.msra.mxu0 0.0
        %534 = vmatpush.xpose.msra.mxu0 0.0
        %535 = vmatpush.xpose.msra.mxu0 0.0
        %536 = vmatpush.xpose.msra.mxu0 0.0
        %537 = vmatpush.xpose.msra.mxu0 0.0
        %538 = vmatpush.xpose.msra.mxu0 0.0
        %539 = vmatpush.xpose.msra.mxu0 0.0
        %540 = vmatpush.xpose.msra.mxu0 0.0
        %541 = vmatpush.xpose.msra.mxu0 0.0
        %542 = vmatpush.xpose.msra.mxu0 0.0
        %543 = vmatpush.xpose.msra.mxu0 %v526
        %544 = vmatmul.f32.gmra.mxu0 %v524
        %v545 = vpop.f32.mrf.mxu0
        %v546 = vadd.f32 0.0, %v545
        %547 = vdwg.mxu0
        %549 = vrot.lane.b32.xlu0 %v483, 64
        %v550 = vpop.permute.xlu0 %549
        %v551 = vsel %vm523, %v483, 0
        %v553 = vsel %vm523, %v550, 0
        %555 = vmatpush.xpose.msra.mxu0 0.0
        %556 = vmatpush.xpose.msra.mxu0 0.0
        %557 = vmatpush.xpose.msra.mxu0 0.0
        %558 = vmatpush.xpose.msra.mxu0 0.0
        %559 = vmatpush.xpose.msra.mxu0 0.0
        %560 = vmatpush.xpose.msra.mxu0 0.0
        %561 = vmatpush.xpose.msra.mxu0 0.0
        %562 = vmatpush.xpose.msra.mxu0 0.0
        %563 = vmatpush.xpose.msra.mxu0 0.0
        %564 = vmatpush.xpose.msra.mxu0 0.0
        %565 = vmatpush.xpose.msra.mxu0 0.0
        %566 = vmatpush.xpose.msra.mxu0 0.0
        %567 = vmatpush.xpose.msra.mxu0 0.0
        %568 = vmatpush.xpose.msra.mxu0 0.0
        %569 = vmatpush.xpose.msra.mxu0 0.0
        %570 = vmatpush.xpose.msra.mxu0 %v553
        %571 = vmatmul.f32.gmra.mxu0 %v551
        %v572 = vpop.f32.mrf.mxu0
        %v573 = vadd.f32 0.0, %v572
        %574 = vdwg.mxu0
        %576 = vrot.lane.b32.xlu0 %v486, 64
        %v577 = vpop.permute.xlu0 %576
        %v578 = vsel %vm523, %v486, 0
        %v580 = vsel %vm523, %v577, 0
        %582 = vmatpush.xpose.msra.mxu0 0.0
        %583 = vmatpush.xpose.msra.mxu0 0.0
        %584 = vmatpush.xpose.msra.mxu0 0.0
        %585 = vmatpush.xpose.msra.mxu0 0.0
        %586 = vmatpush.xpose.msra.mxu0 0.0
        %587 = vmatpush.xpose.msra.mxu0 0.0
        %588 = vmatpush.xpose.msra.mxu0 0.0
        %589 = vmatpush.xpose.msra.mxu0 0.0
        %590 = vmatpush.xpose.msra.mxu0 0.0
        %591 = vmatpush.xpose.msra.mxu0 0.0
        %592 = vmatpush.xpose.msra.mxu0 0.0
        %593 = vmatpush.xpose.msra.mxu0 0.0
        %594 = vmatpush.xpose.msra.mxu0 0.0
        %595 = vmatpush.xpose.msra.mxu0 0.0
        %596 = vmatpush.xpose.msra.mxu0 0.0
        %597 = vmatpush.xpose.msra.mxu0 %v580
        %598 = vmatmul.f32.gmra.mxu0 %v578
        %v599 = vpop.f32.mrf.mxu0
        %v600 = vadd.f32 0.0, %v599
        %601 = vdwg.mxu0
        %603 = vrot.lane.b32.xlu0 %v489, 64
        %v604 = vpop.permute.xlu0 %603
        %v605 = vsel %vm523, %v489, 0
        %v607 = vsel %vm523, %v604, 0
        %609 = vmatpush.xpose.msra.mxu0 0.0
        %610 = vmatpush.xpose.msra.mxu0 0.0
        %611 = vmatpush.xpose.msra.mxu0 0.0
        %612 = vmatpush.xpose.msra.mxu0 0.0
        %613 = vmatpush.xpose.msra.mxu0 0.0
        %614 = vmatpush.xpose.msra.mxu0 0.0
        %615 = vmatpush.xpose.msra.mxu0 0.0
        %616 = vmatpush.xpose.msra.mxu0 0.0
        %617 = vmatpush.xpose.msra.mxu0 0.0
        %618 = vmatpush.xpose.msra.mxu0 0.0
        %619 = vmatpush.xpose.msra.mxu0 0.0
        %620 = vmatpush.xpose.msra.mxu0 0.0
        %621 = vmatpush.xpose.msra.mxu0 0.0
        %622 = vmatpush.xpose.msra.mxu0 0.0
        %623 = vmatpush.xpose.msra.mxu0 0.0
        %624 = vmatpush.xpose.msra.mxu0 %v607
        %625 = vmatmul.f32.gmra.mxu0 %v605
        %v626 = vpop.f32.mrf.mxu0
        %v627 = vadd.f32 0.0, %v626
        %628 = vdwg.mxu0
        %v629 = vmul.f32 %v546, 0.25
        %v630 = vmul.f32 %v573, 0.25
        %v631 = vmul.f32 %v600, 0.25
        %v632 = vmul.f32 %v627, 0.25
        %v637 = vperm.slane %v426, 0
        %v638 = vperm.slane %v427, 0
        %v639 = vperm.slane %v428, 0
        %v640 = vperm.slane %v429, 0
        %v645 = vadd.f32 %v629, %v637
        %v646 = vadd.f32 %v630, %v638
        %v647 = vadd.f32 %v631, %v639
        %v648 = vadd.f32 %v632, %v640
        %vm649 = vcmask 64512
        %v650 = vsel %vm649, %v645, -inf
        %651 = vmax.xlane.f32.xlu0 %v650
        %v652 = vpop.xlane.xlu0 %651
        %v653 = vsel %vm649, %v646, -inf
        %654 = vmax.xlane.f32.xlu0 %v653
        %v655 = vpop.xlane.xlu0 %654
        %v656 = vsel %vm649, %v647, -inf
        %657 = vmax.xlane.f32.xlu0 %v656
        %v658 = vpop.xlane.xlu0 %657
        %v659 = vsel %vm649, %v648, -inf
        %660 = vmax.xlane.f32.xlu0 %v659
        %v661 = vpop.xlane.xlu0 %660
        %v662 = vsub.f32 %v645, %v652
        %v663 = vsub.f32 %v646, %v655
        %v664 = vsub.f32 %v647, %v658
        %v665 = vsub.f32 %v648, %v661
        %v666 = vmul.f32 %v662, 1.442695
        %v667 = vpow.pop %v666
        %v668 = vmul.f32 %v663, 1.442695
        %v669 = vpow.pop %v668
        %v670 = vmul.f32 %v664, 1.442695
        %v671 = vpow.pop %v670
        %v672 = vmul.f32 %v665, 1.442695
        %v673 = vpow.pop %v672
        %v674 = vsel %vm649, %v667, 0.0
        %675 = vadd.xlane.f32.xlu0 %v674
        %v676 = vpop.xlane.xlu0 %675
        %v677 = vsel %vm649, %v669, 0.0
        %678 = vadd.xlane.f32.xlu0 %v677
        %v679 = vpop.xlane.xlu0 %678
        %v680 = vsel %vm649, %v671, 0.0
        %681 = vadd.xlane.f32.xlu0 %v680
        %v682 = vpop.xlane.xlu0 %681
        %v683 = vsel %vm649, %v673, 0.0
        %684 = vadd.xlane.f32.xlu0 %v683
        %v685 = vpop.xlane.xlu0 %684
        %v686 = vrcp.pop %v676
        %v687 = vrcp.pop %v679
        %v688 = vrcp.pop %v682
        %v689 = vrcp.pop %v685
        %v690 = vmul.f32 %v667, %v686
        %v691 = vmul.f32 %v669, %v687
        %v692 = vmul.f32 %v671, %v688
        %v693 = vmul.f32 %v673, %v689
        %v695 = vsel %vm649, %v690, 0
        %697 = vmatpush.msra.mxu0 0.0
        %698 = vmatpush.msra.mxu0 0.0
        %699 = vmatpush.msra.mxu0 0.0
        %700 = vmatpush.msra.mxu0 0.0
        %701 = vmatpush.msra.mxu0 0.0
        %702 = vmatpush.msra.mxu0 0.0
        %703 = vmatpush.msra.mxu0 0.0
        %704 = vmatpush.msra.mxu0 0.0
        %705 = vmatpush.msra.mxu0 0.0
        %706 = vmatpush.msra.mxu0 0.0
        %707 = vmatpush.msra.mxu0 0.0
        %708 = vmatpush.msra.mxu0 0.0
        %709 = vmatpush.msra.mxu0 0.0
        %710 = vmatpush.msra.mxu0 0.0
        %711 = vmatpush.msra.mxu0 0.0
        %712 = vmatpush.msra.mxu0 %v509
        %713 = vmatmul.f32.gmra.mxu0 %v695
        %v714 = vpop.f32.mrf.mxu0
        %v715 = vadd.f32 0.0, %v714
        %716 = vdwg.mxu0
        %v718 = vsel %vm649, %v691, 0
        %720 = vmatpush.msra.mxu0 0.0
        %721 = vmatpush.msra.mxu0 0.0
        %722 = vmatpush.msra.mxu0 0.0
        %723 = vmatpush.msra.mxu0 0.0
        %724 = vmatpush.msra.mxu0 0.0
        %725 = vmatpush.msra.mxu0 0.0
        %726 = vmatpush.msra.mxu0 0.0
        %727 = vmatpush.msra.mxu0 0.0
        %728 = vmatpush.msra.mxu0 0.0
        %729 = vmatpush.msra.mxu0 0.0
        %730 = vmatpush.msra.mxu0 0.0
        %731 = vmatpush.msra.mxu0 0.0
        %732 = vmatpush.msra.mxu0 0.0
        %733 = vmatpush.msra.mxu0 0.0
        %734 = vmatpush.msra.mxu0 0.0
        %735 = vmatpush.msra.mxu0 %v512
        %736 = vmatmul.f32.gmra.mxu0 %v718
        %v737 = vpop.f32.mrf.mxu0
        %v738 = vadd.f32 0.0, %v737
        %739 = vdwg.mxu0
        %v741 = vsel %vm649, %v692, 0
        %743 = vmatpush.msra.mxu0 0.0
        %744 = vmatpush.msra.mxu0 0.0
        %745 = vmatpush.msra.mxu0 0.0
        %746 = vmatpush.msra.mxu0 0.0
        %747 = vmatpush.msra.mxu0 0.0
        %748 = vmatpush.msra.mxu0 0.0
        %749 = vmatpush.msra.mxu0 0.0
        %750 = vmatpush.msra.mxu0 0.0
        %751 = vmatpush.msra.mxu0 0.0
        %752 = vmatpush.msra.mxu0 0.0
        %753 = vmatpush.msra.mxu0 0.0
        %754 = vmatpush.msra.mxu0 0.0
        %755 = vmatpush.msra.mxu0 0.0
        %756 = vmatpush.msra.mxu0 0.0
        %757 = vmatpush.msra.mxu0 0.0
        %758 = vmatpush.msra.mxu0 %v515
        %759 = vmatmul.f32.gmra.mxu0 %v741
        %v760 = vpop.f32.mrf.mxu0
        %v761 = vadd.f32 0.0, %v760
        %762 = vdwg.mxu0
        %v764 = vsel %vm649, %v693, 0
        %766 = vmatpush.msra.mxu0 0.0
        %767 = vmatpush.msra.mxu0 0.0
        %768 = vmatpush.msra.mxu0 0.0
        %769 = vmatpush.msra.mxu0 0.0
        %770 = vmatpush.msra.mxu0 0.0
        %771 = vmatpush.msra.mxu0 0.0
        %772 = vmatpush.msra.mxu0 0.0
        %773 = vmatpush.msra.mxu0 0.0
        %774 = vmatpush.msra.mxu0 0.0
        %775 = vmatpush.msra.mxu0 0.0
        %776 = vmatpush.msra.mxu0 0.0
        %777 = vmatpush.msra.mxu0 0.0
        %778 = vmatpush.msra.mxu0 0.0
        %779 = vmatpush.msra.mxu0 0.0
        %780 = vmatpush.msra.mxu0 0.0
        %781 = vmatpush.msra.mxu0 %v518
        %782 = vmatmul.f32.gmra.mxu0 %v764
        %v783 = vpop.f32.mrf.mxu0
        %v784 = vadd.f32 0.0, %v783
        %785 = vdwg.mxu0
        %786 = vrot.lane.b32.xlu0 %v480, 112
        %v787 = vpop.permute.xlu0 %786
        %788 = vrot.lane.b32.xlu0 %v480, 48
        %v789 = vpop.permute.xlu0 %788
        %v790 = vsel %vm523, %v787, 0
        %v792 = vsel %vm523, %v789, 0
        %794 = vmatpush.xpose.msra.mxu0 0.0
        %795 = vmatpush.xpose.msra.mxu0 0.0
        %796 = vmatpush.xpose.msra.mxu0 0.0
        %797 = vmatpush.xpose.msra.mxu0 0.0
        %798 = vmatpush.xpose.msra.mxu0 0.0
        %799 = vmatpush.xpose.msra.mxu0 0.0
        %800 = vmatpush.xpose.msra.mxu0 0.0
        %801 = vmatpush.xpose.msra.mxu0 0.0
        %802 = vmatpush.xpose.msra.mxu0 0.0
        %803 = vmatpush.xpose.msra.mxu0 0.0
        %804 = vmatpush.xpose.msra.mxu0 0.0
        %805 = vmatpush.xpose.msra.mxu0 0.0
        %806 = vmatpush.xpose.msra.mxu0 0.0
        %807 = vmatpush.xpose.msra.mxu0 0.0
        %808 = vmatpush.xpose.msra.mxu0 0.0
        %809 = vmatpush.xpose.msra.mxu0 %v792
        %810 = vmatmul.f32.gmra.mxu0 %v790
        %v811 = vpop.f32.mrf.mxu0
        %v812 = vadd.f32 0.0, %v811
        %813 = vdwg.mxu0
        %814 = vrot.lane.b32.xlu0 %v483, 112
        %v815 = vpop.permute.xlu0 %814
        %816 = vrot.lane.b32.xlu0 %v483, 48
        %v817 = vpop.permute.xlu0 %816
        %v818 = vsel %vm523, %v815, 0
        %v820 = vsel %vm523, %v817, 0
        %822 = vmatpush.xpose.msra.mxu0 0.0
        %823 = vmatpush.xpose.msra.mxu0 0.0
        %824 = vmatpush.xpose.msra.mxu0 0.0
        %825 = vmatpush.xpose.msra.mxu0 0.0
        %826 = vmatpush.xpose.msra.mxu0 0.0
        %827 = vmatpush.xpose.msra.mxu0 0.0
        %828 = vmatpush.xpose.msra.mxu0 0.0
        %829 = vmatpush.xpose.msra.mxu0 0.0
        %830 = vmatpush.xpose.msra.mxu0 0.0
        %831 = vmatpush.xpose.msra.mxu0 0.0
        %832 = vmatpush.xpose.msra.mxu0 0.0
        %833 = vmatpush.xpose.msra.mxu0 0.0
        %834 = vmatpush.xpose.msra.mxu0 0.0
        %835 = vmatpush.xpose.msra.mxu0 0.0
        %836 = vmatpush.xpose.msra.mxu0 0.0
        %837 = vmatpush.xpose.msra.mxu0 %v820
        %838 = vmatmul.f32.gmra.mxu0 %v818
        %v839 = vpop.f32.mrf.mxu0
        %v840 = vadd.f32 0.0, %v839
        %841 = vdwg.mxu0
        %842 = vrot.lane.b32.xlu0 %v486, 112
        %v843 = vpop.permute.xlu0 %842
        %844 = vrot.lane.b32.xlu0 %v486, 48
        %v845 = vpop.permute.xlu0 %844
        %v846 = vsel %vm523, %v843, 0
        %v848 = vsel %vm523, %v845, 0
        %850 = vmatpush.xpose.msra.mxu0 0.0
        %851 = vmatpush.xpose.msra.mxu0 0.0
        %852 = vmatpush.xpose.msra.mxu0 0.0
        %853 = vmatpush.xpose.msra.mxu0 0.0
        %854 = vmatpush.xpose.msra.mxu0 0.0
        %855 = vmatpush.xpose.msra.mxu0 0.0
        %856 = vmatpush.xpose.msra.mxu0 0.0
        %857 = vmatpush.xpose.msra.mxu0 0.0
        %858 = vmatpush.xpose.msra.mxu0 0.0
        %859 = vmatpush.xpose.msra.mxu0 0.0
        %860 = vmatpush.xpose.msra.mxu0 0.0
        %861 = vmatpush.xpose.msra.mxu0 0.0
        %862 = vmatpush.xpose.msra.mxu0 0.0
        %863 = vmatpush.xpose.msra.mxu0 0.0
        %864 = vmatpush.xpose.msra.mxu0 0.0
        %865 = vmatpush.xpose.msra.mxu0 %v848
        %866 = vmatmul.f32.gmra.mxu0 %v846
        %v867 = vpop.f32.mrf.mxu0
        %v868 = vadd.f32 0.0, %v867
        %869 = vdwg.mxu0
        %870 = vrot.lane.b32.xlu0 %v489, 112
        %v871 = vpop.permute.xlu0 %870
        %872 = vrot.lane.b32.xlu0 %v489, 48
        %v873 = vpop.permute.xlu0 %872
        %v874 = vsel %vm523, %v871, 0
        %v876 = vsel %vm523, %v873, 0
        %878 = vmatpush.xpose.msra.mxu0 0.0
        %879 = vmatpush.xpose.msra.mxu0 0.0
        %880 = vmatpush.xpose.msra.mxu0 0.0
        %881 = vmatpush.xpose.msra.mxu0 0.0
        %882 = vmatpush.xpose.msra.mxu0 0.0
        %883 = vmatpush.xpose.msra.mxu0 0.0
        %884 = vmatpush.xpose.msra.mxu0 0.0
        %885 = vmatpush.xpose.msra.mxu0 0.0
        %886 = vmatpush.xpose.msra.mxu0 0.0
        %887 = vmatpush.xpose.msra.mxu0 0.0
        %888 = vmatpush.xpose.msra.mxu0 0.0
        %889 = vmatpush.xpose.msra.mxu0 0.0
        %890 = vmatpush.xpose.msra.mxu0 0.0
        %891 = vmatpush.xpose.msra.mxu0 0.0
        %892 = vmatpush.xpose.msra.mxu0 0.0
        %893 = vmatpush.xpose.msra.mxu0 %v876
        %894 = vmatmul.f32.gmra.mxu0 %v874
        %v895 = vpop.f32.mrf.mxu0
        %v896 = vadd.f32 0.0, %v895
        %897 = vdwg.mxu0
        %v898 = vmul.f32 %v812, 0.25
        %v899 = vmul.f32 %v840, 0.25
        %v900 = vmul.f32 %v868, 0.25
        %v901 = vmul.f32 %v896, 0.25
        %v902 = vadd.f32 %v898, %v637
        %v903 = vadd.f32 %v899, %v638
        %v904 = vadd.f32 %v900, %v639
        %v905 = vadd.f32 %v901, %v640
        %v906 = vsel %vm649, %v902, -inf
        %907 = vmax.xlane.f32.xlu0 %v906
        %v908 = vpop.xlane.xlu0 %907
        %v909 = vsel %vm649, %v903, -inf
        %910 = vmax.xlane.f32.xlu0 %v909
        %v911 = vpop.xlane.xlu0 %910
        %v912 = vsel %vm649, %v904, -inf
        %913 = vmax.xlane.f32.xlu0 %v912
        %v914 = vpop.xlane.xlu0 %913
        %v915 = vsel %vm649, %v905, -inf
        %916 = vmax.xlane.f32.xlu0 %v915
        %v917 = vpop.xlane.xlu0 %916
        %v918 = vsub.f32 %v902, %v908
        %v919 = vsub.f32 %v903, %v911
        %v920 = vsub.f32 %v904, %v914
        %v921 = vsub.f32 %v905, %v917
        %v922 = vmul.f32 %v918, 1.442695
        %v923 = vpow.pop %v922
        %v924 = vmul.f32 %v919, 1.442695
        %v925 = vpow.pop %v924
        %v926 = vmul.f32 %v920, 1.442695
        %v927 = vpow.pop %v926
        %v928 = vmul.f32 %v921, 1.442695
        %v929 = vpow.pop %v928
        %v930 = vsel %vm649, %v923, 0.0
        %931 = vadd.xlane.f32.xlu0 %v930
        %v932 = vpop.xlane.xlu0 %931
        %v933 = vsel %vm649, %v925, 0.0
        %934 = vadd.xlane.f32.xlu0 %v933
        %v935 = vpop.xlane.xlu0 %934
        %v936 = vsel %vm649, %v927, 0.0
        %937 = vadd.xlane.f32.xlu0 %v936
        %v938 = vpop.xlane.xlu0 %937
        %v939 = vsel %vm649, %v929, 0.0
        %940 = vadd.xlane.f32.xlu0 %v939
        %v941 = vpop.xlane.xlu0 %940
        %v942 = vrcp.pop %v932
        %v943 = vrcp.pop %v935
        %v944 = vrcp.pop %v938
        %v945 = vrcp.pop %v941
        %v946 = vmul.f32 %v923, %v942
        %v947 = vmul.f32 %v925, %v943
        %v948 = vmul.f32 %v927, %v944
        %v949 = vmul.f32 %v929, %v945
        %951 = vrot.lane.b32.xlu0 %v509, 112
        %v952 = vpop.permute.xlu0 %951
        %v955 = vsel %vm649, %v946, 0
        %957 = vmatpush.msra.mxu0 0.0
        %958 = vmatpush.msra.mxu0 0.0
        %959 = vmatpush.msra.mxu0 0.0
        %960 = vmatpush.msra.mxu0 0.0
        %961 = vmatpush.msra.mxu0 0.0
        %962 = vmatpush.msra.mxu0 0.0
        %963 = vmatpush.msra.mxu0 0.0
        %964 = vmatpush.msra.mxu0 0.0
        %965 = vmatpush.msra.mxu0 0.0
        %966 = vmatpush.msra.mxu0 0.0
        %967 = vmatpush.msra.mxu0 0.0
        %968 = vmatpush.msra.mxu0 0.0
        %969 = vmatpush.msra.mxu0 0.0
        %970 = vmatpush.msra.mxu0 0.0
        %971 = vmatpush.msra.mxu0 0.0
        %972 = vmatpush.msra.mxu0 %v952
        %973 = vmatmul.f32.gmra.mxu0 %v955
        %v974 = vpop.f32.mrf.mxu0
        %v975 = vadd.f32 0.0, %v974
        %976 = vdwg.mxu0
        %978 = vrot.lane.b32.xlu0 %v512, 112
        %v979 = vpop.permute.xlu0 %978
        %v982 = vsel %vm649, %v947, 0
        %984 = vmatpush.msra.mxu0 0.0
        %985 = vmatpush.msra.mxu0 0.0
        %986 = vmatpush.msra.mxu0 0.0
        %987 = vmatpush.msra.mxu0 0.0
        %988 = vmatpush.msra.mxu0 0.0
        %989 = vmatpush.msra.mxu0 0.0
        %990 = vmatpush.msra.mxu0 0.0
        %991 = vmatpush.msra.mxu0 0.0
        %992 = vmatpush.msra.mxu0 0.0
        %993 = vmatpush.msra.mxu0 0.0
        %994 = vmatpush.msra.mxu0 0.0
        %995 = vmatpush.msra.mxu0 0.0
        %996 = vmatpush.msra.mxu0 0.0
        %997 = vmatpush.msra.mxu0 0.0
        %998 = vmatpush.msra.mxu0 0.0
        %999 = vmatpush.msra.mxu0 %v979
        %1000 = vmatmul.f32.gmra.mxu0 %v982
        %v1001 = vpop.f32.mrf.mxu0
        %v1002 = vadd.f32 0.0, %v1001
        %1003 = vdwg.mxu0
        %1005 = vrot.lane.b32.xlu0 %v515, 112
        %v1006 = vpop.permute.xlu0 %1005
        %v1009 = vsel %vm649, %v948, 0
        %1011 = vmatpush.msra.mxu0 0.0
        %1012 = vmatpush.msra.mxu0 0.0
        %1013 = vmatpush.msra.mxu0 0.0
        %1014 = vmatpush.msra.mxu0 0.0
        %1015 = vmatpush.msra.mxu0 0.0
        %1016 = vmatpush.msra.mxu0 0.0
        %1017 = vmatpush.msra.mxu0 0.0
        %1018 = vmatpush.msra.mxu0 0.0
        %1019 = vmatpush.msra.mxu0 0.0
        %1020 = vmatpush.msra.mxu0 0.0
        %1021 = vmatpush.msra.mxu0 0.0
        %1022 = vmatpush.msra.mxu0 0.0
        %1023 = vmatpush.msra.mxu0 0.0
        %1024 = vmatpush.msra.mxu0 0.0
        %1025 = vmatpush.msra.mxu0 0.0
        %1026 = vmatpush.msra.mxu0 %v1006
        %1027 = vmatmul.f32.gmra.mxu0 %v1009
        %v1028 = vpop.f32.mrf.mxu0
        %v1029 = vadd.f32 0.0, %v1028
        %1030 = vdwg.mxu0
        %1032 = vrot.lane.b32.xlu0 %v518, 112
        %v1033 = vpop.permute.xlu0 %1032
        %v1036 = vsel %vm649, %v949, 0
        %1038 = vmatpush.msra.mxu0 0.0
        %1039 = vmatpush.msra.mxu0 0.0
        %1040 = vmatpush.msra.mxu0 0.0
        %1041 = vmatpush.msra.mxu0 0.0
        %1042 = vmatpush.msra.mxu0 0.0
        %1043 = vmatpush.msra.mxu0 0.0
        %1044 = vmatpush.msra.mxu0 0.0
        %1045 = vmatpush.msra.mxu0 0.0
        %1046 = vmatpush.msra.mxu0 0.0
        %1047 = vmatpush.msra.mxu0 0.0
        %1048 = vmatpush.msra.mxu0 0.0
        %1049 = vmatpush.msra.mxu0 0.0
        %1050 = vmatpush.msra.mxu0 0.0
        %1051 = vmatpush.msra.mxu0 0.0
        %1052 = vmatpush.msra.mxu0 0.0
        %1053 = vmatpush.msra.mxu0 %v1033
        %1054 = vmatmul.f32.gmra.mxu0 %v1036
        %v1055 = vpop.f32.mrf.mxu0
        %v1056 = vadd.f32 0.0, %v1055
        %1057 = vdwg.mxu0
        %1058 = vrot.lane.b32.xlu0 %v480, 96
        %v1059 = vpop.permute.xlu0 %1058
        %1060 = vrot.lane.b32.xlu0 %v480, 32
        %v1061 = vpop.permute.xlu0 %1060
        %v1062 = vsel %vm523, %v1059, 0
        %v1064 = vsel %vm523, %v1061, 0
        %1066 = vmatpush.xpose.msra.mxu0 0.0
        %1067 = vmatpush.xpose.msra.mxu0 0.0
        %1068 = vmatpush.xpose.msra.mxu0 0.0
        %1069 = vmatpush.xpose.msra.mxu0 0.0
        %1070 = vmatpush.xpose.msra.mxu0 0.0
        %1071 = vmatpush.xpose.msra.mxu0 0.0
        %1072 = vmatpush.xpose.msra.mxu0 0.0
        %1073 = vmatpush.xpose.msra.mxu0 0.0
        %1074 = vmatpush.xpose.msra.mxu0 0.0
        %1075 = vmatpush.xpose.msra.mxu0 0.0
        %1076 = vmatpush.xpose.msra.mxu0 0.0
        %1077 = vmatpush.xpose.msra.mxu0 0.0
        %1078 = vmatpush.xpose.msra.mxu0 0.0
        %1079 = vmatpush.xpose.msra.mxu0 0.0
        %1080 = vmatpush.xpose.msra.mxu0 0.0
        %1081 = vmatpush.xpose.msra.mxu0 %v1064
        %1082 = vmatmul.f32.gmra.mxu0 %v1062
        %v1083 = vpop.f32.mrf.mxu0
        %v1084 = vadd.f32 0.0, %v1083
        %1085 = vdwg.mxu0
        %1086 = vrot.lane.b32.xlu0 %v483, 96
        %v1087 = vpop.permute.xlu0 %1086
        %1088 = vrot.lane.b32.xlu0 %v483, 32
        %v1089 = vpop.permute.xlu0 %1088
        %v1090 = vsel %vm523, %v1087, 0
        %v1092 = vsel %vm523, %v1089, 0
        %1094 = vmatpush.xpose.msra.mxu0 0.0
        %1095 = vmatpush.xpose.msra.mxu0 0.0
        %1096 = vmatpush.xpose.msra.mxu0 0.0
        %1097 = vmatpush.xpose.msra.mxu0 0.0
        %1098 = vmatpush.xpose.msra.mxu0 0.0
        %1099 = vmatpush.xpose.msra.mxu0 0.0
        %1100 = vmatpush.xpose.msra.mxu0 0.0
        %1101 = vmatpush.xpose.msra.mxu0 0.0
        %1102 = vmatpush.xpose.msra.mxu0 0.0
        %1103 = vmatpush.xpose.msra.mxu0 0.0
        %1104 = vmatpush.xpose.msra.mxu0 0.0
        %1105 = vmatpush.xpose.msra.mxu0 0.0
        %1106 = vmatpush.xpose.msra.mxu0 0.0
        %1107 = vmatpush.xpose.msra.mxu0 0.0
        %1108 = vmatpush.xpose.msra.mxu0 0.0
        %1109 = vmatpush.xpose.msra.mxu0 %v1092
        %1110 = vmatmul.f32.gmra.mxu0 %v1090
        %v1111 = vpop.f32.mrf.mxu0
        %v1112 = vadd.f32 0.0, %v1111
        %1113 = vdwg.mxu0
        %1114 = vrot.lane.b32.xlu0 %v486, 96
        %v1115 = vpop.permute.xlu0 %1114
        %1116 = vrot.lane.b32.xlu0 %v486, 32
        %v1117 = vpop.permute.xlu0 %1116
        %v1118 = vsel %vm523, %v1115, 0
        %v1120 = vsel %vm523, %v1117, 0
        %1122 = vmatpush.xpose.msra.mxu0 0.0
        %1123 = vmatpush.xpose.msra.mxu0 0.0
        %1124 = vmatpush.xpose.msra.mxu0 0.0
        %1125 = vmatpush.xpose.msra.mxu0 0.0
        %1126 = vmatpush.xpose.msra.mxu0 0.0
        %1127 = vmatpush.xpose.msra.mxu0 0.0
        %1128 = vmatpush.xpose.msra.mxu0 0.0
        %1129 = vmatpush.xpose.msra.mxu0 0.0
        %1130 = vmatpush.xpose.msra.mxu0 0.0
        %1131 = vmatpush.xpose.msra.mxu0 0.0
        %1132 = vmatpush.xpose.msra.mxu0 0.0
        %1133 = vmatpush.xpose.msra.mxu0 0.0
        %1134 = vmatpush.xpose.msra.mxu0 0.0
        %1135 = vmatpush.xpose.msra.mxu0 0.0
        %1136 = vmatpush.xpose.msra.mxu0 0.0
        %1137 = vmatpush.xpose.msra.mxu0 %v1120
        %1138 = vmatmul.f32.gmra.mxu0 %v1118
        %v1139 = vpop.f32.mrf.mxu0
        %v1140 = vadd.f32 0.0, %v1139
        %1141 = vdwg.mxu0
        %1142 = vrot.lane.b32.xlu0 %v489, 96
        %v1143 = vpop.permute.xlu0 %1142
        %1144 = vrot.lane.b32.xlu0 %v489, 32
        %v1145 = vpop.permute.xlu0 %1144
        %v1146 = vsel %vm523, %v1143, 0
        %v1148 = vsel %vm523, %v1145, 0
        %1150 = vmatpush.xpose.msra.mxu0 0.0
        %1151 = vmatpush.xpose.msra.mxu0 0.0
        %1152 = vmatpush.xpose.msra.mxu0 0.0
        %1153 = vmatpush.xpose.msra.mxu0 0.0
        %1154 = vmatpush.xpose.msra.mxu0 0.0
        %1155 = vmatpush.xpose.msra.mxu0 0.0
        %1156 = vmatpush.xpose.msra.mxu0 0.0
        %1157 = vmatpush.xpose.msra.mxu0 0.0
        %1158 = vmatpush.xpose.msra.mxu0 0.0
        %1159 = vmatpush.xpose.msra.mxu0 0.0
        %1160 = vmatpush.xpose.msra.mxu0 0.0
        %1161 = vmatpush.xpose.msra.mxu0 0.0
        %1162 = vmatpush.xpose.msra.mxu0 0.0
        %1163 = vmatpush.xpose.msra.mxu0 0.0
        %1164 = vmatpush.xpose.msra.mxu0 0.0
        %1165 = vmatpush.xpose.msra.mxu0 %v1148
        %1166 = vmatmul.f32.gmra.mxu0 %v1146
        %v1167 = vpop.f32.mrf.mxu0
        %v1168 = vadd.f32 0.0, %v1167
        %1169 = vdwg.mxu0
        %v1170 = vmul.f32 %v1084, 0.25
        %v1171 = vmul.f32 %v1112, 0.25
        %v1172 = vmul.f32 %v1140, 0.25
        %v1173 = vmul.f32 %v1168, 0.25
        %v1174 = vadd.f32 %v1170, %v637
        %v1175 = vadd.f32 %v1171, %v638
        %v1176 = vadd.f32 %v1172, %v639
        %v1177 = vadd.f32 %v1173, %v640
        %v1178 = vsel %vm649, %v1174, -inf
        %1179 = vmax.xlane.f32.xlu0 %v1178
        %v1180 = vpop.xlane.xlu0 %1179
        %v1181 = vsel %vm649, %v1175, -inf
        %1182 = vmax.xlane.f32.xlu0 %v1181
        %v1183 = vpop.xlane.xlu0 %1182
        %v1184 = vsel %vm649, %v1176, -inf
        %1185 = vmax.xlane.f32.xlu0 %v1184
        %v1186 = vpop.xlane.xlu0 %1185
        %v1187 = vsel %vm649, %v1177, -inf
        %1188 = vmax.xlane.f32.xlu0 %v1187
        %v1189 = vpop.xlane.xlu0 %1188
        %v1190 = vsub.f32 %v1174, %v1180
        %v1191 = vsub.f32 %v1175, %v1183
        %v1192 = vsub.f32 %v1176, %v1186
        %v1193 = vsub.f32 %v1177, %v1189
        %v1194 = vmul.f32 %v1190, 1.442695
        %v1195 = vpow.pop %v1194
        %v1196 = vmul.f32 %v1191, 1.442695
        %v1197 = vpow.pop %v1196
        %v1198 = vmul.f32 %v1192, 1.442695
        %v1199 = vpow.pop %v1198
        %v1200 = vmul.f32 %v1193, 1.442695
        %v1201 = vpow.pop %v1200
        %v1202 = vsel %vm649, %v1195, 0.0
        %1203 = vadd.xlane.f32.xlu0 %v1202
        %v1204 = vpop.xlane.xlu0 %1203
        %v1205 = vsel %vm649, %v1197, 0.0
        %1206 = vadd.xlane.f32.xlu0 %v1205
        %v1207 = vpop.xlane.xlu0 %1206
        %v1208 = vsel %vm649, %v1199, 0.0
        %1209 = vadd.xlane.f32.xlu0 %v1208
        %v1210 = vpop.xlane.xlu0 %1209
        %v1211 = vsel %vm649, %v1201, 0.0
        %1212 = vadd.xlane.f32.xlu0 %v1211
        %v1213 = vpop.xlane.xlu0 %1212
        %v1214 = vrcp.pop %v1204
        %v1215 = vrcp.pop %v1207
        %v1216 = vrcp.pop %v1210
        %v1217 = vrcp.pop %v1213
        %v1218 = vmul.f32 %v1195, %v1214
        %v1219 = vmul.f32 %v1197, %v1215
        %v1220 = vmul.f32 %v1199, %v1216
        %v1221 = vmul.f32 %v1201, %v1217
        %1222 = vrot.lane.b32.xlu0 %v509, 96
        %v1223 = vpop.permute.xlu0 %1222
        %v1226 = vsel %vm649, %v1218, 0
        %1228 = vmatpush.msra.mxu0 0.0
        %1229 = vmatpush.msra.mxu0 0.0
        %1230 = vmatpush.msra.mxu0 0.0
        %1231 = vmatpush.msra.mxu0 0.0
        %1232 = vmatpush.msra.mxu0 0.0
        %1233 = vmatpush.msra.mxu0 0.0
        %1234 = vmatpush.msra.mxu0 0.0
        %1235 = vmatpush.msra.mxu0 0.0
        %1236 = vmatpush.msra.mxu0 0.0
        %1237 = vmatpush.msra.mxu0 0.0
        %1238 = vmatpush.msra.mxu0 0.0
        %1239 = vmatpush.msra.mxu0 0.0
        %1240 = vmatpush.msra.mxu0 0.0
        %1241 = vmatpush.msra.mxu0 0.0
        %1242 = vmatpush.msra.mxu0 0.0
        %1243 = vmatpush.msra.mxu0 %v1223
        %1244 = vmatmul.f32.gmra.mxu0 %v1226
        %v1245 = vpop.f32.mrf.mxu0
        %v1246 = vadd.f32 0.0, %v1245
        %1247 = vdwg.mxu0
        %1248 = vrot.lane.b32.xlu0 %v512, 96
        %v1249 = vpop.permute.xlu0 %1248
        %v1252 = vsel %vm649, %v1219, 0
        %1254 = vmatpush.msra.mxu0 0.0
        %1255 = vmatpush.msra.mxu0 0.0
        %1256 = vmatpush.msra.mxu0 0.0
        %1257 = vmatpush.msra.mxu0 0.0
        %1258 = vmatpush.msra.mxu0 0.0
        %1259 = vmatpush.msra.mxu0 0.0
        %1260 = vmatpush.msra.mxu0 0.0
        %1261 = vmatpush.msra.mxu0 0.0
        %1262 = vmatpush.msra.mxu0 0.0
        %1263 = vmatpush.msra.mxu0 0.0
        %1264 = vmatpush.msra.mxu0 0.0
        %1265 = vmatpush.msra.mxu0 0.0
        %1266 = vmatpush.msra.mxu0 0.0
        %1267 = vmatpush.msra.mxu0 0.0
        %1268 = vmatpush.msra.mxu0 0.0
        %1269 = vmatpush.msra.mxu0 %v1249
        %1270 = vmatmul.f32.gmra.mxu0 %v1252
        %v1271 = vpop.f32.mrf.mxu0
        %v1272 = vadd.f32 0.0, %v1271
        %1273 = vdwg.mxu0
        %1274 = vrot.lane.b32.xlu0 %v515, 96
        %v1275 = vpop.permute.xlu0 %1274
        %v1278 = vsel %vm649, %v1220, 0
        %1280 = vmatpush.msra.mxu0 0.0
        %1281 = vmatpush.msra.mxu0 0.0
        %1282 = vmatpush.msra.mxu0 0.0
        %1283 = vmatpush.msra.mxu0 0.0
        %1284 = vmatpush.msra.mxu0 0.0
        %1285 = vmatpush.msra.mxu0 0.0
        %1286 = vmatpush.msra.mxu0 0.0
        %1287 = vmatpush.msra.mxu0 0.0
        %1288 = vmatpush.msra.mxu0 0.0
        %1289 = vmatpush.msra.mxu0 0.0
        %1290 = vmatpush.msra.mxu0 0.0
        %1291 = vmatpush.msra.mxu0 0.0
        %1292 = vmatpush.msra.mxu0 0.0
        %1293 = vmatpush.msra.mxu0 0.0
        %1294 = vmatpush.msra.mxu0 0.0
        %1295 = vmatpush.msra.mxu0 %v1275
        %1296 = vmatmul.f32.gmra.mxu0 %v1278
        %v1297 = vpop.f32.mrf.mxu0
        %v1298 = vadd.f32 0.0, %v1297
        %1299 = vdwg.mxu0
        %1300 = vrot.lane.b32.xlu0 %v518, 96
        %v1301 = vpop.permute.xlu0 %1300
        %v1304 = vsel %vm649, %v1221, 0
        %1306 = vmatpush.msra.mxu0 0.0
        %1307 = vmatpush.msra.mxu0 0.0
        %1308 = vmatpush.msra.mxu0 0.0
        %1309 = vmatpush.msra.mxu0 0.0
        %1310 = vmatpush.msra.mxu0 0.0
        %1311 = vmatpush.msra.mxu0 0.0
        %1312 = vmatpush.msra.mxu0 0.0
        %1313 = vmatpush.msra.mxu0 0.0
        %1314 = vmatpush.msra.mxu0 0.0
        %1315 = vmatpush.msra.mxu0 0.0
        %1316 = vmatpush.msra.mxu0 0.0
        %1317 = vmatpush.msra.mxu0 0.0
        %1318 = vmatpush.msra.mxu0 0.0
        %1319 = vmatpush.msra.mxu0 0.0
        %1320 = vmatpush.msra.mxu0 0.0
        %1321 = vmatpush.msra.mxu0 %v1301
        %1322 = vmatmul.f32.gmra.mxu0 %v1304
        %v1323 = vpop.f32.mrf.mxu0
        %v1324 = vadd.f32 0.0, %v1323
        %1325 = vdwg.mxu0
        %1326 = vrot.lane.b32.xlu0 %v480, 80
        %v1327 = vpop.permute.xlu0 %1326
        %1328 = vrot.lane.b32.xlu0 %v480, 16
        %v1329 = vpop.permute.xlu0 %1328
        %v1330 = vsel %vm523, %v1327, 0
        %v1332 = vsel %vm523, %v1329, 0
        %1334 = vmatpush.xpose.msra.mxu0 0.0
        %1335 = vmatpush.xpose.msra.mxu0 0.0
        %1336 = vmatpush.xpose.msra.mxu0 0.0
        %1337 = vmatpush.xpose.msra.mxu0 0.0
        %1338 = vmatpush.xpose.msra.mxu0 0.0
        %1339 = vmatpush.xpose.msra.mxu0 0.0
        %1340 = vmatpush.xpose.msra.mxu0 0.0
        %1341 = vmatpush.xpose.msra.mxu0 0.0
        %1342 = vmatpush.xpose.msra.mxu0 0.0
        %1343 = vmatpush.xpose.msra.mxu0 0.0
        %1344 = vmatpush.xpose.msra.mxu0 0.0
        %1345 = vmatpush.xpose.msra.mxu0 0.0
        %1346 = vmatpush.xpose.msra.mxu0 0.0
        %1347 = vmatpush.xpose.msra.mxu0 0.0
        %1348 = vmatpush.xpose.msra.mxu0 0.0
        %1349 = vmatpush.xpose.msra.mxu0 %v1332
        %1350 = vmatmul.f32.gmra.mxu0 %v1330
        %v1351 = vpop.f32.mrf.mxu0
        %v1352 = vadd.f32 0.0, %v1351
        %1353 = vdwg.mxu0
        %1354 = vrot.lane.b32.xlu0 %v483, 80
        %v1355 = vpop.permute.xlu0 %1354
        %1356 = vrot.lane.b32.xlu0 %v483, 16
        %v1357 = vpop.permute.xlu0 %1356
        %v1358 = vsel %vm523, %v1355, 0
        %v1360 = vsel %vm523, %v1357, 0
        %1362 = vmatpush.xpose.msra.mxu0 0.0
        %1363 = vmatpush.xpose.msra.mxu0 0.0
        %1364 = vmatpush.xpose.msra.mxu0 0.0
        %1365 = vmatpush.xpose.msra.mxu0 0.0
        %1366 = vmatpush.xpose.msra.mxu0 0.0
        %1367 = vmatpush.xpose.msra.mxu0 0.0
        %1368 = vmatpush.xpose.msra.mxu0 0.0
        %1369 = vmatpush.xpose.msra.mxu0 0.0
        %1370 = vmatpush.xpose.msra.mxu0 0.0
        %1371 = vmatpush.xpose.msra.mxu0 0.0
        %1372 = vmatpush.xpose.msra.mxu0 0.0
        %1373 = vmatpush.xpose.msra.mxu0 0.0
        %1374 = vmatpush.xpose.msra.mxu0 0.0
        %1375 = vmatpush.xpose.msra.mxu0 0.0
        %1376 = vmatpush.xpose.msra.mxu0 0.0
        %1377 = vmatpush.xpose.msra.mxu0 %v1360
        %1378 = vmatmul.f32.gmra.mxu0 %v1358
        %v1379 = vpop.f32.mrf.mxu0
        %v1380 = vadd.f32 0.0, %v1379
        %1381 = vdwg.mxu0
        %1382 = vrot.lane.b32.xlu0 %v486, 80
        %v1383 = vpop.permute.xlu0 %1382
        %1384 = vrot.lane.b32.xlu0 %v486, 16
        %v1385 = vpop.permute.xlu0 %1384
        %v1386 = vsel %vm523, %v1383, 0
        %v1388 = vsel %vm523, %v1385, 0
        %1390 = vmatpush.xpose.msra.mxu0 0.0
        %1391 = vmatpush.xpose.msra.mxu0 0.0
        %1392 = vmatpush.xpose.msra.mxu0 0.0
        %1393 = vmatpush.xpose.msra.mxu0 0.0
        %1394 = vmatpush.xpose.msra.mxu0 0.0
        %1395 = vmatpush.xpose.msra.mxu0 0.0
        %1396 = vmatpush.xpose.msra.mxu0 0.0
        %1397 = vmatpush.xpose.msra.mxu0 0.0
        %1398 = vmatpush.xpose.msra.mxu0 0.0
        %1399 = vmatpush.xpose.msra.mxu0 0.0
        %1400 = vmatpush.xpose.msra.mxu0 0.0
        %1401 = vmatpush.xpose.msra.mxu0 0.0
        %1402 = vmatpush.xpose.msra.mxu0 0.0
        %1403 = vmatpush.xpose.msra.mxu0 0.0
        %1404 = vmatpush.xpose.msra.mxu0 0.0
        %1405 = vmatpush.xpose.msra.mxu0 %v1388
        %1406 = vmatmul.f32.gmra.mxu0 %v1386
        %v1407 = vpop.f32.mrf.mxu0
        %v1408 = vadd.f32 0.0, %v1407
        %1409 = vdwg.mxu0
        %1410 = vrot.lane.b32.xlu0 %v489, 80
        %v1411 = vpop.permute.xlu0 %1410
        %1412 = vrot.lane.b32.xlu0 %v489, 16
        %v1413 = vpop.permute.xlu0 %1412
        %v1414 = vsel %vm523, %v1411, 0
        %v1416 = vsel %vm523, %v1413, 0
        %1418 = vmatpush.xpose.msra.mxu0 0.0
        %1419 = vmatpush.xpose.msra.mxu0 0.0
        %1420 = vmatpush.xpose.msra.mxu0 0.0
        %1421 = vmatpush.xpose.msra.mxu0 0.0
        %1422 = vmatpush.xpose.msra.mxu0 0.0
        %1423 = vmatpush.xpose.msra.mxu0 0.0
        %1424 = vmatpush.xpose.msra.mxu0 0.0
        %1425 = vmatpush.xpose.msra.mxu0 0.0
        %1426 = vmatpush.xpose.msra.mxu0 0.0
        %1427 = vmatpush.xpose.msra.mxu0 0.0
        %1428 = vmatpush.xpose.msra.mxu0 0.0
        %1429 = vmatpush.xpose.msra.mxu0 0.0
        %1430 = vmatpush.xpose.msra.mxu0 0.0
        %1431 = vmatpush.xpose.msra.mxu0 0.0
        %1432 = vmatpush.xpose.msra.mxu0 0.0
        %1433 = vmatpush.xpose.msra.mxu0 %v1416
        %1434 = vmatmul.f32.gmra.mxu0 %v1414
        %v1435 = vpop.f32.mrf.mxu0
        %v1436 = vadd.f32 0.0, %v1435
        %1437 = vdwg.mxu0
        %v1438 = vmul.f32 %v1352, 0.25
        %v1439 = vmul.f32 %v1380, 0.25
        %v1440 = vmul.f32 %v1408, 0.25
        %v1441 = vmul.f32 %v1436, 0.25
        %v1442 = vadd.f32 %v1438, %v637
        %v1443 = vadd.f32 %v1439, %v638
        %v1444 = vadd.f32 %v1440, %v639
        %v1445 = vadd.f32 %v1441, %v640
        %v1446 = vsel %vm649, %v1442, -inf
        %1447 = vmax.xlane.f32.xlu0 %v1446
        %v1448 = vpop.xlane.xlu0 %1447
        %v1449 = vsel %vm649, %v1443, -inf
        %1450 = vmax.xlane.f32.xlu0 %v1449
        %v1451 = vpop.xlane.xlu0 %1450
        %v1452 = vsel %vm649, %v1444, -inf
        %1453 = vmax.xlane.f32.xlu0 %v1452
        %v1454 = vpop.xlane.xlu0 %1453
        %v1455 = vsel %vm649, %v1445, -inf
        %1456 = vmax.xlane.f32.xlu0 %v1455
        %v1457 = vpop.xlane.xlu0 %1456
        %v1458 = vsub.f32 %v1442, %v1448
        %v1459 = vsub.f32 %v1443, %v1451
        %v1460 = vsub.f32 %v1444, %v1454
        %v1461 = vsub.f32 %v1445, %v1457
        %v1462 = vmul.f32 %v1458, 1.442695
        %v1463 = vpow.pop %v1462
        %v1464 = vmul.f32 %v1459, 1.442695
        %v1465 = vpow.pop %v1464
        %v1466 = vmul.f32 %v1460, 1.442695
        %v1467 = vpow.pop %v1466
        %v1468 = vmul.f32 %v1461, 1.442695
        %v1469 = vpow.pop %v1468
        %v1470 = vsel %vm649, %v1463, 0.0
        %1471 = vadd.xlane.f32.xlu0 %v1470
        %v1472 = vpop.xlane.xlu0 %1471
        %v1473 = vsel %vm649, %v1465, 0.0
        %1474 = vadd.xlane.f32.xlu0 %v1473
        %v1475 = vpop.xlane.xlu0 %1474
        %v1476 = vsel %vm649, %v1467, 0.0
        %1477 = vadd.xlane.f32.xlu0 %v1476
        %v1478 = vpop.xlane.xlu0 %1477
        %v1479 = vsel %vm649, %v1469, 0.0
        %1480 = vadd.xlane.f32.xlu0 %v1479
        %v1481 = vpop.xlane.xlu0 %1480
        %v1482 = vrcp.pop %v1472
        %v1483 = vrcp.pop %v1475
        %v1484 = vrcp.pop %v1478
        %v1485 = vrcp.pop %v1481
        %v1486 = vmul.f32 %v1463, %v1482
        %v1487 = vmul.f32 %v1465, %v1483
        %v1488 = vmul.f32 %v1467, %v1484
        %v1489 = vmul.f32 %v1469, %v1485
        %1490 = vrot.lane.b32.xlu0 %v509, 80
        %v1491 = vpop.permute.xlu0 %1490
        %v1494 = vsel %vm649, %v1486, 0
        %1496 = vmatpush.msra.mxu0 0.0
        %1497 = vmatpush.msra.mxu0 0.0
        %1498 = vmatpush.msra.mxu0 0.0
        %1499 = vmatpush.msra.mxu0 0.0
        %1500 = vmatpush.msra.mxu0 0.0
        %1501 = vmatpush.msra.mxu0 0.0
        %1502 = vmatpush.msra.mxu0 0.0
        %1503 = vmatpush.msra.mxu0 0.0
        %1504 = vmatpush.msra.mxu0 0.0
        %1505 = vmatpush.msra.mxu0 0.0
        %1506 = vmatpush.msra.mxu0 0.0
        %1507 = vmatpush.msra.mxu0 0.0
        %1508 = vmatpush.msra.mxu0 0.0
        %1509 = vmatpush.msra.mxu0 0.0
        %1510 = vmatpush.msra.mxu0 0.0
        %1511 = vmatpush.msra.mxu0 %v1491
        %1512 = vmatmul.f32.gmra.mxu0 %v1494
        %v1513 = vpop.f32.mrf.mxu0
        %v1514 = vadd.f32 0.0, %v1513
        %1515 = vdwg.mxu0
        %1516 = vrot.lane.b32.xlu0 %v512, 80
        %v1517 = vpop.permute.xlu0 %1516
        %v1520 = vsel %vm649, %v1487, 0
        %1522 = vmatpush.msra.mxu0 0.0
        %1523 = vmatpush.msra.mxu0 0.0
        %1524 = vmatpush.msra.mxu0 0.0
        %1525 = vmatpush.msra.mxu0 0.0
        %1526 = vmatpush.msra.mxu0 0.0
        %1527 = vmatpush.msra.mxu0 0.0
        %1528 = vmatpush.msra.mxu0 0.0
        %1529 = vmatpush.msra.mxu0 0.0
        %1530 = vmatpush.msra.mxu0 0.0
        %1531 = vmatpush.msra.mxu0 0.0
        %1532 = vmatpush.msra.mxu0 0.0
        %1533 = vmatpush.msra.mxu0 0.0
        %1534 = vmatpush.msra.mxu0 0.0
        %1535 = vmatpush.msra.mxu0 0.0
        %1536 = vmatpush.msra.mxu0 0.0
        %1537 = vmatpush.msra.mxu0 %v1517
        %1538 = vmatmul.f32.gmra.mxu0 %v1520
        %v1539 = vpop.f32.mrf.mxu0
        %v1540 = vadd.f32 0.0, %v1539
        %1541 = vdwg.mxu0
        %1542 = vrot.lane.b32.xlu0 %v515, 80
        %v1543 = vpop.permute.xlu0 %1542
        %v1546 = vsel %vm649, %v1488, 0
        %1548 = vmatpush.msra.mxu0 0.0
        %1549 = vmatpush.msra.mxu0 0.0
        %1550 = vmatpush.msra.mxu0 0.0
        %1551 = vmatpush.msra.mxu0 0.0
        %1552 = vmatpush.msra.mxu0 0.0
        %1553 = vmatpush.msra.mxu0 0.0
        %1554 = vmatpush.msra.mxu0 0.0
        %1555 = vmatpush.msra.mxu0 0.0
        %1556 = vmatpush.msra.mxu0 0.0
        %1557 = vmatpush.msra.mxu0 0.0
        %1558 = vmatpush.msra.mxu0 0.0
        %1559 = vmatpush.msra.mxu0 0.0
        %1560 = vmatpush.msra.mxu0 0.0
        %1561 = vmatpush.msra.mxu0 0.0
        %1562 = vmatpush.msra.mxu0 0.0
        %1563 = vmatpush.msra.mxu0 %v1543
        %1564 = vmatmul.f32.gmra.mxu0 %v1546
        %v1565 = vpop.f32.mrf.mxu0
        %v1566 = vadd.f32 0.0, %v1565
        %1567 = vdwg.mxu0
        %1568 = vrot.lane.b32.xlu0 %v518, 80
        %v1569 = vpop.permute.xlu0 %1568
        %v1572 = vsel %vm649, %v1489, 0
        %1574 = vmatpush.msra.mxu0 0.0
        %1575 = vmatpush.msra.mxu0 0.0
        %1576 = vmatpush.msra.mxu0 0.0
        %1577 = vmatpush.msra.mxu0 0.0
        %1578 = vmatpush.msra.mxu0 0.0
        %1579 = vmatpush.msra.mxu0 0.0
        %1580 = vmatpush.msra.mxu0 0.0
        %1581 = vmatpush.msra.mxu0 0.0
        %1582 = vmatpush.msra.mxu0 0.0
        %1583 = vmatpush.msra.mxu0 0.0
        %1584 = vmatpush.msra.mxu0 0.0
        %1585 = vmatpush.msra.mxu0 0.0
        %1586 = vmatpush.msra.mxu0 0.0
        %1587 = vmatpush.msra.mxu0 0.0
        %1588 = vmatpush.msra.mxu0 0.0
        %1589 = vmatpush.msra.mxu0 %v1569
        %1590 = vmatmul.f32.gmra.mxu0 %v1572
        %v1591 = vpop.f32.mrf.mxu0
        %v1592 = vadd.f32 0.0, %v1591
        %1593 = vdwg.mxu0
        %1598 = vrot.lane.b32.xlu0 %v975, 16
        %v1599 = vpop.permute.xlu0 %1598
        %1600 = vrot.lane.b32.xlu0 %v1002, 16
        %v1601 = vpop.permute.xlu0 %1600
        %1602 = vrot.lane.b32.xlu0 %v1029, 16
        %v1603 = vpop.permute.xlu0 %1602
        %1604 = vrot.lane.b32.xlu0 %v1056, 16
        %v1605 = vpop.permute.xlu0 %1604
        %1614 = vrot.lane.b32.xlu0 %v1246, 32
        %v1615 = vpop.permute.xlu0 %1614
        %1616 = vrot.lane.b32.xlu0 %v1272, 32
        %v1617 = vpop.permute.xlu0 %1616
        %1618 = vrot.lane.b32.xlu0 %v1298, 32
        %v1619 = vpop.permute.xlu0 %1618
        %1620 = vrot.lane.b32.xlu0 %v1324, 32
        %v1621 = vpop.permute.xlu0 %1620
        %1630 = vrot.lane.b32.xlu0 %v1514, 48
        %v1631 = vpop.permute.xlu0 %1630
        %1632 = vrot.lane.b32.xlu0 %v1540, 48
        %v1633 = vpop.permute.xlu0 %1632
        %1634 = vrot.lane.b32.xlu0 %v1566, 48
        %v1635 = vpop.permute.xlu0 %1634
        %1636 = vrot.lane.b32.xlu0 %v1592, 48
        %v1637 = vpop.permute.xlu0 %1636
        %v1642 = vsel %vm523, %v715, %v1599
        %v1643 = vsel %vm523, %v738, %v1601
        %v1644 = vsel %vm523, %v761, %v1603
        %v1645 = vsel %vm523, %v784, %v1605
        %vm1646 = vcmask 261120
        %v1647 = vsel %vm1646, %v1642, %v1615
        %v1648 = vsel %vm1646, %v1643, %v1617
        %v1649 = vsel %vm1646, %v1644, %v1619
        %v1650 = vsel %vm1646, %v1645, %v1621
        %vm1651 = vcmask 392192
        %v1652 = vsel %vm1651, %v1647, %v1631
        %v1653 = vsel %vm1651, %v1648, %v1633
        %v1654 = vsel %vm1651, %v1649, %v1635
        %v1655 = vsel %vm1651, %v1650, %v1637
        %v1656 = vld [vmem:[#allocation2 + $0x10] sm:$0xff]
        %v1657 = vld [vmem:[#allocation2 + $0x30] sm:$0xff]
        %v1658 = vld [vmem:[#allocation2 + $0x50] sm:$0xff]
        %v1659 = vld [vmem:[#allocation2 + $0x70] sm:$0xff]
        %v1660 = vld [vmem:[#allocation2 + $0x90] sm:$0xff]
        %v1661 = vld [vmem:[#allocation2 + $0xb0] sm:$0xff]
        %v1662 = vld [vmem:[#allocation2 + $0xd0] sm:$0xff]
        %v1663 = vld [vmem:[#allocation2 + $0xf0] sm:$0xff]
        %v1664 = vperm.slane %v430, 1
        %v1666 = vsel %vm320, %v1652, 0
        %v1669 = vsel %vm320, %v1653, 0
        %v1672 = vsel %vm320, %v1654, 0
        %v1675 = vsel %vm320, %v1655, 0
        %1677 = vmatpush.msra.mxu0 0.0
        %1678 = vmatpush.msra.mxu0 0.0
        %1679 = vmatpush.msra.mxu0 0.0
        %1680 = vmatpush.msra.mxu0 0.0
        %1681 = vmatpush.msra.mxu0 0.0
        %1682 = vmatpush.msra.mxu0 0.0
        %1683 = vmatpush.msra.mxu0 0.0
        %1684 = vmatpush.msra.mxu0 0.0
        %1685 = vmatpush.msra.mxu0 %v1663
        %1686 = vmatpush.msra.mxu0 %v1662
        %1687 = vmatpush.msra.mxu0 %v1661
        %1688 = vmatpush.msra.mxu0 %v1660
        %1689 = vmatpush.msra.mxu0 %v1659
        %1690 = vmatpush.msra.mxu0 %v1658
        %1691 = vmatpush.msra.mxu0 %v1657
        %1692 = vmatpush.msra.mxu0 %v1656
        %1693 = vmatmul.f32.gmra.mxu0 %v1666
        %v1694 = vpop.f32.mrf.mxu0
        %v1695 = vadd.f32 %v1664, %v1694
        %1696 = vmatmul.f32.gmra.mxu0 %v1669
        %v1697 = vpop.f32.mrf.mxu0
        %v1698 = vadd.f32 %v1664, %v1697
        %1699 = vmatmul.f32.gmra.mxu0 %v1672
        %v1700 = vpop.f32.mrf.mxu0
        %v1701 = vadd.f32 %v1664, %v1700
        %1702 = vmatmul.f32.gmra.mxu0 %v1675
        %v1703 = vpop.f32.mrf.mxu0
        %v1704 = vadd.f32 %v1664, %v1703
        %1705 = vdwg.mxu0
        %v1706 = vadd.f32 %v1695, %v422
        %v1707 = vadd.f32 %v1698, %v423
        %v1708 = vadd.f32 %v1701, %v424
        %v1709 = vadd.f32 %v1704, %v425
        %v1710 = vsel %vm320, %v1706, 0.0
        %1711 = vadd.xlane.f32.xlu0 %v1710
        %v1712 = vpop.xlane.xlu0 %1711
        %v1713 = vsel %vm320, %v1707, 0.0
        %1714 = vadd.xlane.f32.xlu0 %v1713
        %v1715 = vpop.xlane.xlu0 %1714
        %v1716 = vsel %vm320, %v1708, 0.0
        %1717 = vadd.xlane.f32.xlu0 %v1716
        %v1718 = vpop.xlane.xlu0 %1717
        %v1719 = vsel %vm320, %v1709, 0.0
        %1720 = vadd.xlane.f32.xlu0 %v1719
        %v1721 = vpop.xlane.xlu0 %1720
        %v1722 = vmul.f32 %v1712, %v339
        %v1723 = vmul.f32 %v1715, %v339
        %v1724 = vmul.f32 %v1718, %v339
        %v1725 = vmul.f32 %v1721, %v339
        %v1726 = vsub.f32 %v1706, %v1722
        %v1727 = vsub.f32 %v1707, %v1723
        %v1728 = vsub.f32 %v1708, %v1724
        %v1729 = vsub.f32 %v1709, %v1725
        %v1730 = vmul.f32 %v1726, %v1726
        %v1731 = vmul.f32 %v1727, %v1727
        %v1732 = vmul.f32 %v1728, %v1728
        %v1733 = vmul.f32 %v1729, %v1729
        %v1734 = vsel %vm320, %v1730, 0.0
        %1735 = vadd.xlane.f32.xlu0 %v1734
        %v1736 = vpop.xlane.xlu0 %1735
        %v1737 = vsel %vm320, %v1731, 0.0
        %1738 = vadd.xlane.f32.xlu0 %v1737
        %v1739 = vpop.xlane.xlu0 %1738
        %v1740 = vsel %vm320, %v1732, 0.0
        %1741 = vadd.xlane.f32.xlu0 %v1740
        %v1742 = vpop.xlane.xlu0 %1741
        %v1743 = vsel %vm320, %v1733, 0.0
        %1744 = vadd.xlane.f32.xlu0 %v1743
        %v1745 = vpop.xlane.xlu0 %1744
        %v1746 = vmul.f32 %v1736, %v339
        %v1747 = vmul.f32 %v1739, %v339
        %v1748 = vmul.f32 %v1742, %v339
        %v1749 = vmul.f32 %v1745, %v339
        %v1750 = vadd.f32 %v1746, 1e-12
        %v1751 = vadd.f32 %v1747, 1e-12
        %v1752 = vadd.f32 %v1748, 1e-12
        %v1753 = vadd.f32 %v1749, 1e-12
        %v1754 = vrsqrt.pop %v1750
        %v1755 = vmul.f32 %v1754, %v1750
        %v1756 = vmul.f32 %v1755, %v1754
        %v1757 = vmul.f32 0.5, %v1756
        %v1758 = vsub.f32 1.5, %v1757
        %v1759 = vmul.f32 %v1754, %v1758
        %vm1760 = vweird.f32 %v1750
        %vm1761 = vweird.f32 %v1754
        %vm1762 = vmor %vm1760, %vm1761
        %v1763 = vsel %vm1762, %v1754, %v1759
        %v1764 = vrsqrt.pop %v1751
        %v1765 = vmul.f32 %v1764, %v1751
        %v1766 = vmul.f32 %v1765, %v1764
        %v1767 = vmul.f32 0.5, %v1766
        %v1768 = vsub.f32 1.5, %v1767
        %v1769 = vmul.f32 %v1764, %v1768
        %vm1770 = vweird.f32 %v1751
        %vm1771 = vweird.f32 %v1764
        %vm1772 = vmor %vm1770, %vm1771
        %v1773 = vsel %vm1772, %v1764, %v1769
        %v1774 = vrsqrt.pop %v1752
        %v1775 = vmul.f32 %v1774, %v1752
        %v1776 = vmul.f32 %v1775, %v1774
        %v1777 = vmul.f32 0.5, %v1776
        %v1778 = vsub.f32 1.5, %v1777
        %v1779 = vmul.f32 %v1774, %v1778
        %vm1780 = vweird.f32 %v1752
        %vm1781 = vweird.f32 %v1774
        %vm1782 = vmor %vm1780, %vm1781
        %v1783 = vsel %vm1782, %v1774, %v1779
        %v1784 = vrsqrt.pop %v1753
        %v1785 = vmul.f32 %v1784, %v1753
        %v1786 = vmul.f32 %v1785, %v1784
        %v1787 = vmul.f32 0.5, %v1786
        %v1788 = vsub.f32 1.5, %v1787
        %v1789 = vmul.f32 %v1784, %v1788
        %vm1790 = vweird.f32 %v1753
        %vm1791 = vweird.f32 %v1784
        %vm1792 = vmor %vm1790, %vm1791
        %v1793 = vsel %vm1792, %v1784, %v1789
        %v1794 = vmul.f32 %v1726, %v1763
        %v1795 = vmul.f32 %v1727, %v1773
        %v1796 = vmul.f32 %v1728, %v1783
        %v1797 = vmul.f32 %v1729, %v1793
        %v1798 = vperm.slane %v430, 2
        %v1799 = vmul.f32 %v1794, %v1798
        %v1800 = vmul.f32 %v1795, %v1798
        %v1801 = vmul.f32 %v1796, %v1798
        %v1802 = vmul.f32 %v1797, %v1798
        %v1803 = vperm.slane %v430, 3
        %v1804 = vadd.f32 %v1799, %v1803
        %v1805 = vadd.f32 %v1800, %v1803
        %v1806 = vadd.f32 %v1801, %v1803
        %v1807 = vadd.f32 %v1802, %v1803
        %v1808 = vld [vmem:[#allocation2 + $0x18] sm:$0xff]
        %v1809 = vld [vmem:[#allocation2 + $0x38] sm:$0xff]
        %v1810 = vld [vmem:[#allocation2 + $0x58] sm:$0xff]
        %v1811 = vld [vmem:[#allocation2 + $0x78] sm:$0xff]
        %v1812 = vld [vmem:[#allocation2 + $0x98] sm:$0xff]
        %v1813 = vld [vmem:[#allocation2 + $0xb8] sm:$0xff]
        %v1814 = vld [vmem:[#allocation2 + $0xd8] sm:$0xff]
        %v1815 = vld [vmem:[#allocation2 + $0xf8] sm:$0xff]
        %v1816 = vperm.slane %v430, 4
        %v1818 = vsel %vm320, %v1804, 0
        %v1821 = vsel %vm320, %v1805, 0
        %v1824 = vsel %vm320, %v1806, 0
        %v1827 = vsel %vm320, %v1807, 0
        %1829 = vmatpush.msra.mxu0 0.0
        %1830 = vmatpush.msra.mxu0 0.0
        %1831 = vmatpush.msra.mxu0 0.0
        %1832 = vmatpush.msra.mxu0 0.0
        %1833 = vmatpush.msra.mxu0 0.0
        %1834 = vmatpush.msra.mxu0 0.0
        %1835 = vmatpush.msra.mxu0 0.0
        %1836 = vmatpush.msra.mxu0 0.0
        %1837 = vmatpush.msra.mxu0 %v1815
        %1838 = vmatpush.msra.mxu0 %v1814
        %1839 = vmatpush.msra.mxu0 %v1813
        %1840 = vmatpush.msra.mxu0 %v1812
        %1841 = vmatpush.msra.mxu0 %v1811
        %1842 = vmatpush.msra.mxu0 %v1810
        %1843 = vmatpush.msra.mxu0 %v1809
        %1844 = vmatpush.msra.mxu0 %v1808
        %1845 = vmatmul.f32.gmra.mxu0 %v1818
        %v1846 = vpop.f32.mrf.mxu0
        %v1847 = vadd.f32 %v1816, %v1846
        %1848 = vmatmul.f32.gmra.mxu0 %v1821
        %v1849 = vpop.f32.mrf.mxu0
        %v1850 = vadd.f32 %v1816, %v1849
        %1851 = vmatmul.f32.gmra.mxu0 %v1824
        %v1852 = vpop.f32.mrf.mxu0
        %v1853 = vadd.f32 %v1816, %v1852
        %1854 = vmatmul.f32.gmra.mxu0 %v1827
        %v1855 = vpop.f32.mrf.mxu0
        %v1856 = vadd.f32 %v1816, %v1855
        %1857 = vdwg.mxu0
        %v1858 = vmul.f32 %v1847, 0.5
        %v1859 = vmul.f32 %v1850, 0.5
        %v1860 = vmul.f32 %v1853, 0.5
        %v1861 = vmul.f32 %v1856, 0.5
        %v1862 = vmul.f32 %v1847, 0.044715
        %v1863 = vmul.f32 %v1850, 0.044715
        %v1864 = vmul.f32 %v1853, 0.044715
        %v1865 = vmul.f32 %v1856, 0.044715
        %v1866 = vmul.f32 %v1862, %v1847
        %v1867 = vmul.f32 %v1863, %v1850
        %v1868 = vmul.f32 %v1864, %v1853
        %v1869 = vmul.f32 %v1865, %v1856
        %v1870 = vmul.f32 %v1866, %v1847
        %v1871 = vmul.f32 %v1867, %v1850
        %v1872 = vmul.f32 %v1868, %v1853
        %v1873 = vmul.f32 %v1869, %v1856
        %v1874 = vadd.f32 %v1847, %v1870
        %v1875 = vadd.f32 %v1850, %v1871
        %v1876 = vadd.f32 %v1853, %v1872
        %v1877 = vadd.f32 %v1856, %v1873
        %v1878 = vmul.f32 %v1874, 0.7978846
        %v1879 = vmul.f32 %v1875, 0.7978846
        %v1880 = vmul.f32 %v1876, 0.7978846
        %v1881 = vmul.f32 %v1877, 0.7978846
        %v1882 = vtanh.pop %v1878
        %v1883 = vtanh.pop %v1879
        %v1884 = vtanh.pop %v1880
        %v1885 = vtanh.pop %v1881
        %v1886 = vadd.f32 %v1882, 1.0
        %v1887 = vadd.f32 %v1883, 1.0
        %v1888 = vadd.f32 %v1884, 1.0
        %v1889 = vadd.f32 %v1885, 1.0
        %v1890 = vmul.f32 %v1858, %v1886
        %v1891 = vmul.f32 %v1859, %v1887
        %v1892 = vmul.f32 %v1860, %v1888
        %v1893 = vmul.f32 %v1861, %v1889
        %v1894 = vld [vmem:[%s3] sm:$0xff]
        %v1895 = vld [vmem:[%s3 + $0x8] sm:$0xff]
        %v1896 = vld [vmem:[%s3 + $0x10] sm:$0xff]
        %v1897 = vld [vmem:[%s3 + $0x18] sm:$0xff]
        %v1898 = vld [vmem:[%s3 + $0x20] sm:$0xff]
        %v1899 = vld [vmem:[%s3 + $0x28] sm:$0xff]
        %v1900 = vld [vmem:[%s3 + $0x30] sm:$0xff]
        %v1901 = vld [vmem:[%s3 + $0x38] sm:$0xff]
        %v1902 = vld [vmem:[%s3 + $0x40] sm:$0xff]
        %v1903 = vld [vmem:[%s3 + $0x48] sm:$0xff]
        %v1904 = vld [vmem:[%s3 + $0x50] sm:$0xff]
        %v1905 = vld [vmem:[%s3 + $0x58] sm:$0xff]
        %v1906 = vld [vmem:[%s3 + $0x60] sm:$0xff]
        %v1907 = vld [vmem:[%s3 + $0x68] sm:$0xff]
        %v1908 = vld [vmem:[%s3 + $0x70] sm:$0xff]
        %v1909 = vld [vmem:[%s3 + $0x78] sm:$0xff]
        %v1910 = vperm.slane %v430, 5
        %1911 = vmatpush.msra.mxu0 %v1909
        %1912 = vmatpush.msra.mxu0 %v1908
        %1913 = vmatpush.msra.mxu0 %v1907
        %1914 = vmatpush.msra.mxu0 %v1906
        %1915 = vmatpush.msra.mxu0 %v1905
        %1916 = vmatpush.msra.mxu0 %v1904
        %1917 = vmatpush.msra.mxu0 %v1903
        %1918 = vmatpush.msra.mxu0 %v1902
        %1919 = vmatpush.msra.mxu0 %v1901
        %1920 = vmatpush.msra.mxu0 %v1900
        %1921 = vmatpush.msra.mxu0 %v1899
        %1922 = vmatpush.msra.mxu0 %v1898
        %1923 = vmatpush.msra.mxu0 %v1897
        %1924 = vmatpush.msra.mxu0 %v1896
        %1925 = vmatpush.msra.mxu0 %v1895
        %1926 = vmatpush.msra.mxu0 %v1894
        %1927 = vmatmul.f32.gmra.mxu0 %v1890
        %v1928 = vpop.f32.mrf.mxu0
        %v1929 = vadd.f32 %v1910, %v1928
        %1930 = vmatmul.f32.gmra.mxu0 %v1891
        %v1931 = vpop.f32.mrf.mxu0
        %v1932 = vadd.f32 %v1910, %v1931
        %1933 = vmatmul.f32.gmra.mxu0 %v1892
        %v1934 = vpop.f32.mrf.mxu0
        %v1935 = vadd.f32 %v1910, %v1934
        %1936 = vmatmul.f32.gmra.mxu0 %v1893
        %v1937 = vpop.f32.mrf.mxu0
        %v1938 = vadd.f32 %v1910, %v1937
        %1939 = vdwg.mxu0
        %v1940 = vadd.f32 %v1929, %v1804
        %v1941 = vadd.f32 %v1932, %v1805
        %v1942 = vadd.f32 %v1935, %v1806
        %v1943 = vadd.f32 %v1938, %v1807
        %v1944 = vsel %vm320, %v1940, 0.0
        %1945 = vadd.xlane.f32.xlu0 %v1944
        %v1946 = vpop.xlane.xlu0 %1945
        %v1947 = vsel %vm320, %v1941, 0.0
        %1948 = vadd.xlane.f32.xlu0 %v1947
        %v1949 = vpop.xlane.xlu0 %1948
        %v1950 = vsel %vm320, %v1942, 0.0
        %1951 = vadd.xlane.f32.xlu0 %v1950
        %v1952 = vpop.xlane.xlu0 %1951
        %v1953 = vsel %vm320, %v1943, 0.0
        %1954 = vadd.xlane.f32.xlu0 %v1953
        %v1955 = vpop.xlane.xlu0 %1954
        %v1956 = vmul.f32 %v1946, %v339
        %v1957 = vmul.f32 %v1949, %v339
        %v1958 = vmul.f32 %v1952, %v339
        %v1959 = vmul.f32 %v1955, %v339
        %v1960 = vsub.f32 %v1940, %v1956
        %v1961 = vsub.f32 %v1941, %v1957
        %v1962 = vsub.f32 %v1942, %v1958
        %v1963 = vsub.f32 %v1943, %v1959
        %v1964 = vmul.f32 %v1960, %v1960
        %v1965 = vmul.f32 %v1961, %v1961
        %v1966 = vmul.f32 %v1962, %v1962
        %v1967 = vmul.f32 %v1963, %v1963
        %v1968 = vsel %vm320, %v1964, 0.0
        %1969 = vadd.xlane.f32.xlu0 %v1968
        %v1970 = vpop.xlane.xlu0 %1969
        %v1971 = vsel %vm320, %v1965, 0.0
        %1972 = vadd.xlane.f32.xlu0 %v1971
        %v1973 = vpop.xlane.xlu0 %1972
        %v1974 = vsel %vm320, %v1966, 0.0
        %1975 = vadd.xlane.f32.xlu0 %v1974
        %v1976 = vpop.xlane.xlu0 %1975
        %v1977 = vsel %vm320, %v1967, 0.0
        %1978 = vadd.xlane.f32.xlu0 %v1977
        %v1979 = vpop.xlane.xlu0 %1978
        %v1980 = vmul.f32 %v1970, %v339
        %v1981 = vmul.f32 %v1973, %v339
        %v1982 = vmul.f32 %v1976, %v339
        %v1983 = vmul.f32 %v1979, %v339
        %v1984 = vadd.f32 %v1980, 1e-12
        %v1985 = vadd.f32 %v1981, 1e-12
        %v1986 = vadd.f32 %v1982, 1e-12
        %v1987 = vadd.f32 %v1983, 1e-12
        %v1988 = vrsqrt.pop %v1984
        %v1989 = vmul.f32 %v1988, %v1984
        %v1990 = vmul.f32 %v1989, %v1988
        %v1991 = vmul.f32 0.5, %v1990
        %v1992 = vsub.f32 1.5, %v1991
        %v1993 = vmul.f32 %v1988, %v1992
        %vm1994 = vweird.f32 %v1984
        %vm1995 = vweird.f32 %v1988
        %vm1996 = vmor %vm1994, %vm1995
        %v1997 = vsel %vm1996, %v1988, %v1993
        %v1998 = vrsqrt.pop %v1985
        %v1999 = vmul.f32 %v1998, %v1985
        %v2000 = vmul.f32 %v1999, %v1998
        %v2001 = vmul.f32 0.5, %v2000
        %v2002 = vsub.f32 1.5, %v2001
        %v2003 = vmul.f32 %v1998, %v2002
        %vm2004 = vweird.f32 %v1985
        %vm2005 = vweird.f32 %v1998
        %vm2006 = vmor %vm2004, %vm2005
        %v2007 = vsel %vm2006, %v1998, %v2003
        %v2008 = vrsqrt.pop %v1986
        %v2009 = vmul.f32 %v2008, %v1986
        %v2010 = vmul.f32 %v2009, %v2008
        %v2011 = vmul.f32 0.5, %v2010
        %v2012 = vsub.f32 1.5, %v2011
        %v2013 = vmul.f32 %v2008, %v2012
        %vm2014 = vweird.f32 %v1986
        %vm2015 = vweird.f32 %v2008
        %vm2016 = vmor %vm2014, %vm2015
        %v2017 = vsel %vm2016, %v2008, %v2013
        %v2018 = vrsqrt.pop %v1987
        %v2019 = vmul.f32 %v2018, %v1987
        %v2020 = vmul.f32 %v2019, %v2018
        %v2021 = vmul.f32 0.5, %v2020
        %v2022 = vsub.f32 1.5, %v2021
        %v2023 = vmul.f32 %v2018, %v2022
        %vm2024 = vweird.f32 %v1987
        %vm2025 = vweird.f32 %v2018
        %vm2026 = vmor %vm2024, %vm2025
        %v2027 = vsel %vm2026, %v2018, %v2023
        %v2028 = vmul.f32 %v1960, %v1997
        %v2029 = vmul.f32 %v1961, %v2007
        %v2030 = vmul.f32 %v1962, %v2017
        %v2031 = vmul.f32 %v1963, %v2027
        %v2032 = vperm.slane %v430, 6
        %v2033 = vmul.f32 %v2028, %v2032
        %v2034 = vmul.f32 %v2029, %v2032
        %v2035 = vmul.f32 %v2030, %v2032
        %v2036 = vmul.f32 %v2031, %v2032
        %v2037 = vperm.slane %v430, 7
        %v2038 = vadd.f32 %v2033, %v2037
        %v2039 = vadd.f32 %v2034, %v2037
        %v2040 = vadd.f32 %v2035, %v2037
        %v2041 = vadd.f32 %v2036, %v2037
        %s2042 = scalar_lea.vmem %s4, 16
        %v2043 = vld [vmem:[%s2042] sm:$0xff]
        %v2044 = vld [vmem:[%s2042 + $0x8] sm:$0xff]
        %s2045 = scalar_lea.vmem [#allocation2], 256
        %v2046 = vld [vmem:[%s2045] sm:$0xff]
        %v2047 = vld [vmem:[%s2045 + $0x8] sm:$0xff]
        %v2048 = vld [vmem:[%s2045 + $0x20] sm:$0xff]
        %v2049 = vld [vmem:[%s2045 + $0x28] sm:$0xff]
        %v2050 = vld [vmem:[%s2045 + $0x40] sm:$0xff]
        %v2051 = vld [vmem:[%s2045 + $0x48] sm:$0xff]
        %v2052 = vld [vmem:[%s2045 + $0x60] sm:$0xff]
        %v2053 = vld [vmem:[%s2045 + $0x68] sm:$0xff]
        %v2054 = vld [vmem:[%s2045 + $0x80] sm:$0xff]
        %v2055 = vld [vmem:[%s2045 + $0x88] sm:$0xff]
        %v2056 = vld [vmem:[%s2045 + $0xa0] sm:$0xff]
        %v2057 = vld [vmem:[%s2045 + $0xa8] sm:$0xff]
        %v2058 = vld [vmem:[%s2045 + $0xc0] sm:$0xff]
        %v2059 = vld [vmem:[%s2045 + $0xc8] sm:$0xff]
        %v2060 = vld [vmem:[%s2045 + $0xe0] sm:$0xff]
        %v2061 = vld [vmem:[%s2045 + $0xe8] sm:$0xff]
        %v2062 = vperm.slane %v2043, 0
        %v2063 = vperm.slane %v2044, 0
        %v2065 = vsel %vm320, %v2038, 0
        %v2068 = vsel %vm320, %v2039, 0
        %v2071 = vsel %vm320, %v2040, 0
        %v2074 = vsel %vm320, %v2041, 0
        %2076 = vmatpush.msra.mxu0 0.0
        %2077 = vmatpush.msra.mxu0 0.0
        %2078 = vmatpush.msra.mxu0 0.0
        %2079 = vmatpush.msra.mxu0 0.0
        %2080 = vmatpush.msra.mxu0 0.0
        %2081 = vmatpush.msra.mxu0 0.0
        %2082 = vmatpush.msra.mxu0 0.0
        %2083 = vmatpush.msra.mxu0 0.0
        %2084 = vmatpush.msra.mxu0 %v2060
        %2085 = vmatpush.msra.mxu0 %v2058
        %2086 = vmatpush.msra.mxu0 %v2056
        %2087 = vmatpush.msra.mxu0 %v2054
        %2088 = vmatpush.msra.mxu0 %v2052
        %2089 = vmatpush.msra.mxu0 %v2050
        %2090 = vmatpush.msra.mxu0 %v2048
        %2091 = vmatpush.msra.mxu0 %v2046
        %2092 = vmatmul.f32.gmra.mxu0 %v2065
        %v2093 = vpop.f32.mrf.mxu0
        %v2094 = vadd.f32 %v2062, %v2093
        %2095 = vmatmul.f32.gmra.mxu0 %v2068
        %v2096 = vpop.f32.mrf.mxu0
        %v2097 = vadd.f32 %v2062, %v2096
        %2098 = vmatmul.f32.gmra.mxu0 %v2071
        %v2099 = vpop.f32.mrf.mxu0
        %v2100 = vadd.f32 %v2062, %v2099
        %2101 = vmatmul.f32.gmra.mxu0 %v2074
        %v2102 = vpop.f32.mrf.mxu0
        %v2103 = vadd.f32 %v2062, %v2102
        %2104 = vdwg.mxu0
        %2105 = vmatpush.msra.mxu0 0.0
        %2106 = vmatpush.msra.mxu0 0.0
        %2107 = vmatpush.msra.mxu0 0.0
        %2108 = vmatpush.msra.mxu0 0.0
        %2109 = vmatpush.msra.mxu0 0.0
        %2110 = vmatpush.msra.mxu0 0.0
        %2111 = vmatpush.msra.mxu0 0.0
        %2112 = vmatpush.msra.mxu0 0.0
        %2113 = vmatpush.msra.mxu0 %v2061
        %2114 = vmatpush.msra.mxu0 %v2059
        %2115 = vmatpush.msra.mxu0 %v2057
        %2116 = vmatpush.msra.mxu0 %v2055
        %2117 = vmatpush.msra.mxu0 %v2053
        %2118 = vmatpush.msra.mxu0 %v2051
        %2119 = vmatpush.msra.mxu0 %v2049
        %2120 = vmatpush.msra.mxu0 %v2047
        %2121 = vmatmul.f32.gmra.mxu0 %v2065
        %v2122 = vpop.f32.mrf.mxu0
        %v2123 = vadd.f32 %v2063, %v2122
        %2124 = vmatmul.f32.gmra.mxu0 %v2068
        %v2125 = vpop.f32.mrf.mxu0
        %v2126 = vadd.f32 %v2063, %v2125
        %2127 = vmatmul.f32.gmra.mxu0 %v2071
        %v2128 = vpop.f32.mrf.mxu0
        %v2129 = vadd.f32 %v2063, %v2128
        %2130 = vmatmul.f32.gmra.mxu0 %v2074
        %v2131 = vpop.f32.mrf.mxu0
        %v2132 = vadd.f32 %v2063, %v2131
        %2133 = vdwg.mxu0
        %2135 = vrot.lane.b32.xlu0 %v2094, 64
        %v2136 = vpop.permute.xlu0 %2135
        %v2137 = vsel %vm523, %v2094, 0
        %v2139 = vsel %vm523, %v2136, 0
        %2141 = vmatpush.xpose.msra.mxu0 0.0
        %2142 = vmatpush.xpose.msra.mxu0 0.0
        %2143 = vmatpush.xpose.msra.mxu0 0.0
        %2144 = vmatpush.xpose.msra.mxu0 0.0
        %2145 = vmatpush.xpose.msra.mxu0 0.0
        %2146 = vmatpush.xpose.msra.mxu0 0.0
        %2147 = vmatpush.xpose.msra.mxu0 0.0
        %2148 = vmatpush.xpose.msra.mxu0 0.0
        %2149 = vmatpush.xpose.msra.mxu0 0.0
        %2150 = vmatpush.xpose.msra.mxu0 0.0
        %2151 = vmatpush.xpose.msra.mxu0 0.0
        %2152 = vmatpush.xpose.msra.mxu0 0.0
        %2153 = vmatpush.xpose.msra.mxu0 0.0
        %2154 = vmatpush.xpose.msra.mxu0 0.0
        %2155 = vmatpush.xpose.msra.mxu0 0.0
        %2156 = vmatpush.xpose.msra.mxu0 %v2139
        %2157 = vmatmul.f32.gmra.mxu0 %v2137
        %v2158 = vpop.f32.mrf.mxu0
        %v2159 = vadd.f32 0.0, %v2158
        %2160 = vdwg.mxu0
        %2162 = vrot.lane.b32.xlu0 %v2097, 64
        %v2163 = vpop.permute.xlu0 %2162
        %v2164 = vsel %vm523, %v2097, 0
        %v2166 = vsel %vm523, %v2163, 0
        %2168 = vmatpush.xpose.msra.mxu0 0.0
        %2169 = vmatpush.xpose.msra.mxu0 0.0
        %2170 = vmatpush.xpose.msra.mxu0 0.0
        %2171 = vmatpush.xpose.msra.mxu0 0.0
        %2172 = vmatpush.xpose.msra.mxu0 0.0
        %2173 = vmatpush.xpose.msra.mxu0 0.0
        %2174 = vmatpush.xpose.msra.mxu0 0.0
        %2175 = vmatpush.xpose.msra.mxu0 0.0
        %2176 = vmatpush.xpose.msra.mxu0 0.0
        %2177 = vmatpush.xpose.msra.mxu0 0.0
        %2178 = vmatpush.xpose.msra.mxu0 0.0
        %2179 = vmatpush.xpose.msra.mxu0 0.0
        %2180 = vmatpush.xpose.msra.mxu0 0.0
        %2181 = vmatpush.xpose.msra.mxu0 0.0
        %2182 = vmatpush.xpose.msra.mxu0 0.0
        %2183 = vmatpush.xpose.msra.mxu0 %v2166
        %2184 = vmatmul.f32.gmra.mxu0 %v2164
        %v2185 = vpop.f32.mrf.mxu0
        %v2186 = vadd.f32 0.0, %v2185
        %2187 = vdwg.mxu0
        %2189 = vrot.lane.b32.xlu0 %v2100, 64
        %v2190 = vpop.permute.xlu0 %2189
        %v2191 = vsel %vm523, %v2100, 0
        %v2193 = vsel %vm523, %v2190, 0
        %2195 = vmatpush.xpose.msra.mxu0 0.0
        %2196 = vmatpush.xpose.msra.mxu0 0.0
        %2197 = vmatpush.xpose.msra.mxu0 0.0
        %2198 = vmatpush.xpose.msra.mxu0 0.0
        %2199 = vmatpush.xpose.msra.mxu0 0.0
        %2200 = vmatpush.xpose.msra.mxu0 0.0
        %2201 = vmatpush.xpose.msra.mxu0 0.0
        %2202 = vmatpush.xpose.msra.mxu0 0.0
        %2203 = vmatpush.xpose.msra.mxu0 0.0
        %2204 = vmatpush.xpose.msra.mxu0 0.0
        %2205 = vmatpush.xpose.msra.mxu0 0.0
        %2206 = vmatpush.xpose.msra.mxu0 0.0
        %2207 = vmatpush.xpose.msra.mxu0 0.0
        %2208 = vmatpush.xpose.msra.mxu0 0.0
        %2209 = vmatpush.xpose.msra.mxu0 0.0
        %2210 = vmatpush.xpose.msra.mxu0 %v2193
        %2211 = vmatmul.f32.gmra.mxu0 %v2191
        %v2212 = vpop.f32.mrf.mxu0
        %v2213 = vadd.f32 0.0, %v2212
        %2214 = vdwg.mxu0
        %2216 = vrot.lane.b32.xlu0 %v2103, 64
        %v2217 = vpop.permute.xlu0 %2216
        %v2218 = vsel %vm523, %v2103, 0
        %v2220 = vsel %vm523, %v2217, 0
        %2222 = vmatpush.xpose.msra.mxu0 0.0
        %2223 = vmatpush.xpose.msra.mxu0 0.0
        %2224 = vmatpush.xpose.msra.mxu0 0.0
        %2225 = vmatpush.xpose.msra.mxu0 0.0
        %2226 = vmatpush.xpose.msra.mxu0 0.0
        %2227 = vmatpush.xpose.msra.mxu0 0.0
        %2228 = vmatpush.xpose.msra.mxu0 0.0
        %2229 = vmatpush.xpose.msra.mxu0 0.0
        %2230 = vmatpush.xpose.msra.mxu0 0.0
        %2231 = vmatpush.xpose.msra.mxu0 0.0
        %2232 = vmatpush.xpose.msra.mxu0 0.0
        %2233 = vmatpush.xpose.msra.mxu0 0.0
        %2234 = vmatpush.xpose.msra.mxu0 0.0
        %2235 = vmatpush.xpose.msra.mxu0 0.0
        %2236 = vmatpush.xpose.msra.mxu0 0.0
        %2237 = vmatpush.xpose.msra.mxu0 %v2220
        %2238 = vmatmul.f32.gmra.mxu0 %v2218
        %v2239 = vpop.f32.mrf.mxu0
        %v2240 = vadd.f32 0.0, %v2239
        %2241 = vdwg.mxu0
        %v2242 = vmul.f32 %v2159, 0.25
        %v2243 = vmul.f32 %v2186, 0.25
        %v2244 = vmul.f32 %v2213, 0.25
        %v2245 = vmul.f32 %v2240, 0.25
        %v2246 = vadd.f32 %v2242, %v637
        %v2247 = vadd.f32 %v2243, %v638
        %v2248 = vadd.f32 %v2244, %v639
        %v2249 = vadd.f32 %v2245, %v640
        %v2250 = vsel %vm649, %v2246, -inf
        %2251 = vmax.xlane.f32.xlu0 %v2250
        %v2252 = vpop.xlane.xlu0 %2251
        %v2253 = vsel %vm649, %v2247, -inf
        %2254 = vmax.xlane.f32.xlu0 %v2253
        %v2255 = vpop.xlane.xlu0 %2254
        %v2256 = vsel %vm649, %v2248, -inf
        %2257 = vmax.xlane.f32.xlu0 %v2256
        %v2258 = vpop.xlane.xlu0 %2257
        %v2259 = vsel %vm649, %v2249, -inf
        %2260 = vmax.xlane.f32.xlu0 %v2259
        %v2261 = vpop.xlane.xlu0 %2260
        %v2262 = vsub.f32 %v2246, %v2252
        %v2263 = vsub.f32 %v2247, %v2255
        %v2264 = vsub.f32 %v2248, %v2258
        %v2265 = vsub.f32 %v2249, %v2261
        %v2266 = vmul.f32 %v2262, 1.442695
        %v2267 = vpow.pop %v2266
        %v2268 = vmul.f32 %v2263, 1.442695
        %v2269 = vpow.pop %v2268
        %v2270 = vmul.f32 %v2264, 1.442695
        %v2271 = vpow.pop %v2270
        %v2272 = vmul.f32 %v2265, 1.442695
        %v2273 = vpow.pop %v2272
        %v2274 = vsel %vm649, %v2267, 0.0
        %2275 = vadd.xlane.f32.xlu0 %v2274
        %v2276 = vpop.xlane.xlu0 %2275
        %v2277 = vsel %vm649, %v2269, 0.0
        %2278 = vadd.xlane.f32.xlu0 %v2277
        %v2279 = vpop.xlane.xlu0 %2278
        %v2280 = vsel %vm649, %v2271, 0.0
        %2281 = vadd.xlane.f32.xlu0 %v2280
        %v2282 = vpop.xlane.xlu0 %2281
        %v2283 = vsel %vm649, %v2273, 0.0
        %2284 = vadd.xlane.f32.xlu0 %v2283
        %v2285 = vpop.xlane.xlu0 %2284
        %v2286 = vrcp.pop %v2276
        %v2287 = vrcp.pop %v2279
        %v2288 = vrcp.pop %v2282
        %v2289 = vrcp.pop %v2285
        %v2290 = vmul.f32 %v2267, %v2286
        %v2291 = vmul.f32 %v2269, %v2287
        %v2292 = vmul.f32 %v2271, %v2288
        %v2293 = vmul.f32 %v2273, %v2289
        %v2295 = vsel %vm649, %v2290, 0
        %2297 = vmatpush.msra.mxu0 0.0
        %2298 = vmatpush.msra.mxu0 0.0
        %2299 = vmatpush.msra.mxu0 0.0
        %2300 = vmatpush.msra.mxu0 0.0
        %2301 = vmatpush.msra.mxu0 0.0
        %2302 = vmatpush.msra.mxu0 0.0
        %2303 = vmatpush.msra.mxu0 0.0
        %2304 = vmatpush.msra.mxu0 0.0
        %2305 = vmatpush.msra.mxu0 0.0
        %2306 = vmatpush.msra.mxu0 0.0
        %2307 = vmatpush.msra.mxu0 0.0
        %2308 = vmatpush.msra.mxu0 0.0
        %2309 = vmatpush.msra.mxu0 0.0
        %2310 = vmatpush.msra.mxu0 0.0
        %2311 = vmatpush.msra.mxu0 0.0
        %2312 = vmatpush.msra.mxu0 %v2123
        %2313 = vmatmul.f32.gmra.mxu0 %v2295
        %v2314 = vpop.f32.mrf.mxu0
        %v2315 = vadd.f32 0.0, %v2314
        %2316 = vdwg.mxu0
        %v2318 = vsel %vm649, %v2291, 0
        %2320 = vmatpush.msra.mxu0 0.0
        %2321 = vmatpush.msra.mxu0 0.0
        %2322 = vmatpush.msra.mxu0 0.0
        %2323 = vmatpush.msra.mxu0 0.0
        %2324 = vmatpush.msra.mxu0 0.0
        %2325 = vmatpush.msra.mxu0 0.0
        %2326 = vmatpush.msra.mxu0 0.0
        %2327 = vmatpush.msra.mxu0 0.0
        %2328 = vmatpush.msra.mxu0 0.0
        %2329 = vmatpush.msra.mxu0 0.0
        %2330 = vmatpush.msra.mxu0 0.0
        %2331 = vmatpush.msra.mxu0 0.0
        %2332 = vmatpush.msra.mxu0 0.0
        %2333 = vmatpush.msra.mxu0 0.0
        %2334 = vmatpush.msra.mxu0 0.0
        %2335 = vmatpush.msra.mxu0 %v2126
        %2336 = vmatmul.f32.gmra.mxu0 %v2318
        %v2337 = vpop.f32.mrf.mxu0
        %v2338 = vadd.f32 0.0, %v2337
        %2339 = vdwg.mxu0
        %v2341 = vsel %vm649, %v2292, 0
        %2343 = vmatpush.msra.mxu0 0.0
        %2344 = vmatpush.msra.mxu0 0.0
        %2345 = vmatpush.msra.mxu0 0.0
        %2346 = vmatpush.msra.mxu0 0.0
        %2347 = vmatpush.msra.mxu0 0.0
        %2348 = vmatpush.msra.mxu0 0.0
        %2349 = vmatpush.msra.mxu0 0.0
        %2350 = vmatpush.msra.mxu0 0.0
        %2351 = vmatpush.msra.mxu0 0.0
        %2352 = vmatpush.msra.mxu0 0.0
        %2353 = vmatpush.msra.mxu0 0.0
        %2354 = vmatpush.msra.mxu0 0.0
        %2355 = vmatpush.msra.mxu0 0.0
        %2356 = vmatpush.msra.mxu0 0.0
        %2357 = vmatpush.msra.mxu0 0.0
        %2358 = vmatpush.msra.mxu0 %v2129
        %2359 = vmatmul.f32.gmra.mxu0 %v2341
        %v2360 = vpop.f32.mrf.mxu0
        %v2361 = vadd.f32 0.0, %v2360
        %2362 = vdwg.mxu0
        %v2364 = vsel %vm649, %v2293, 0
        %2366 = vmatpush.msra.mxu0 0.0
        %2367 = vmatpush.msra.mxu0 0.0
        %2368 = vmatpush.msra.mxu0 0.0
        %2369 = vmatpush.msra.mxu0 0.0
        %2370 = vmatpush.msra.mxu0 0.0
        %2371 = vmatpush.msra.mxu0 0.0
        %2372 = vmatpush.msra.mxu0 0.0
        %2373 = vmatpush.msra.mxu0 0.0
        %2374 = vmatpush.msra.mxu0 0.0
        %2375 = vmatpush.msra.mxu0 0.0
        %2376 = vmatpush.msra.mxu0 0.0
        %2377 = vmatpush.msra.mxu0 0.0
        %2378 = vmatpush.msra.mxu0 0.0
        %2379 = vmatpush.msra.mxu0 0.0
        %2380 = vmatpush.msra.mxu0 0.0
        %2381 = vmatpush.msra.mxu0 %v2132
        %2382 = vmatmul.f32.gmra.mxu0 %v2364
        %v2383 = vpop.f32.mrf.mxu0
        %v2384 = vadd.f32 0.0, %v2383
        %2385 = vdwg.mxu0
        %2386 = vrot.lane.b32.xlu0 %v2094, 112
        %v2387 = vpop.permute.xlu0 %2386
        %2388 = vrot.lane.b32.xlu0 %v2094, 48
        %v2389 = vpop.permute.xlu0 %2388
        %v2390 = vsel %vm523, %v2387, 0
        %v2392 = vsel %vm523, %v2389, 0
        %2394 = vmatpush.xpose.msra.mxu0 0.0
        %2395 = vmatpush.xpose.msra.mxu0 0.0
        %2396 = vmatpush.xpose.msra.mxu0 0.0
        %2397 = vmatpush.xpose.msra.mxu0 0.0
        %2398 = vmatpush.xpose.msra.mxu0 0.0
        %2399 = vmatpush.xpose.msra.mxu0 0.0
        %2400 = vmatpush.xpose.msra.mxu0 0.0
        %2401 = vmatpush.xpose.msra.mxu0 0.0
        %2402 = vmatpush.xpose.msra.mxu0 0.0
        %2403 = vmatpush.xpose.msra.mxu0 0.0
        %2404 = vmatpush.xpose.msra.mxu0 0.0
        %2405 = vmatpush.xpose.msra.mxu0 0.0
        %2406 = vmatpush.xpose.msra.mxu0 0.0
        %2407 = vmatpush.xpose.msra.mxu0 0.0
        %2408 = vmatpush.xpose.msra.mxu0 0.0
        %2409 = vmatpush.xpose.msra.mxu0 %v2392
        %2410 = vmatmul.f32.gmra.mxu0 %v2390
        %v2411 = vpop.f32.mrf.mxu0
        %v2412 = vadd.f32 0.0, %v2411
        %2413 = vdwg.mxu0
        %2414 = vrot.lane.b32.xlu0 %v2097, 112
        %v2415 = vpop.permute.xlu0 %2414
        %2416 = vrot.lane.b32.xlu0 %v2097, 48
        %v2417 = vpop.permute.xlu0 %2416
        %v2418 = vsel %vm523, %v2415, 0
        %v2420 = vsel %vm523, %v2417, 0
        %2422 = vmatpush.xpose.msra.mxu0 0.0
        %2423 = vmatpush.xpose.msra.mxu0 0.0
        %2424 = vmatpush.xpose.msra.mxu0 0.0
        %2425 = vmatpush.xpose.msra.mxu0 0.0
        %2426 = vmatpush.xpose.msra.mxu0 0.0
        %2427 = vmatpush.xpose.msra.mxu0 0.0
        %2428 = vmatpush.xpose.msra.mxu0 0.0
        %2429 = vmatpush.xpose.msra.mxu0 0.0
        %2430 = vmatpush.xpose.msra.mxu0 0.0
        %2431 = vmatpush.xpose.msra.mxu0 0.0
        %2432 = vmatpush.xpose.msra.mxu0 0.0
        %2433 = vmatpush.xpose.msra.mxu0 0.0
        %2434 = vmatpush.xpose.msra.mxu0 0.0
        %2435 = vmatpush.xpose.msra.mxu0 0.0
        %2436 = vmatpush.xpose.msra.mxu0 0.0
        %2437 = vmatpush.xpose.msra.mxu0 %v2420
        %2438 = vmatmul.f32.gmra.mxu0 %v2418
        %v2439 = vpop.f32.mrf.mxu0
        %v2440 = vadd.f32 0.0, %v2439
        %2441 = vdwg.mxu0
        %2442 = vrot.lane.b32.xlu0 %v2100, 112
        %v2443 = vpop.permute.xlu0 %2442
        %2444 = vrot.lane.b32.xlu0 %v2100, 48
        %v2445 = vpop.permute.xlu0 %2444
        %v2446 = vsel %vm523, %v2443, 0
        %v2448 = vsel %vm523, %v2445, 0
        %2450 = vmatpush.xpose.msra.mxu0 0.0
        %2451 = vmatpush.xpose.msra.mxu0 0.0
        %2452 = vmatpush.xpose.msra.mxu0 0.0
        %2453 = vmatpush.xpose.msra.mxu0 0.0
        %2454 = vmatpush.xpose.msra.mxu0 0.0
        %2455 = vmatpush.xpose.msra.mxu0 0.0
        %2456 = vmatpush.xpose.msra.mxu0 0.0
        %2457 = vmatpush.xpose.msra.mxu0 0.0
        %2458 = vmatpush.xpose.msra.mxu0 0.0
        %2459 = vmatpush.xpose.msra.mxu0 0.0
        %2460 = vmatpush.xpose.msra.mxu0 0.0
        %2461 = vmatpush.xpose.msra.mxu0 0.0
        %2462 = vmatpush.xpose.msra.mxu0 0.0
        %2463 = vmatpush.xpose.msra.mxu0 0.0
        %2464 = vmatpush.xpose.msra.mxu0 0.0
        %2465 = vmatpush.xpose.msra.mxu0 %v2448
        %2466 = vmatmul.f32.gmra.mxu0 %v2446
        %v2467 = vpop.f32.mrf.mxu0
        %v2468 = vadd.f32 0.0, %v2467
        %2469 = vdwg.mxu0
        %2470 = vrot.lane.b32.xlu0 %v2103, 112
        %v2471 = vpop.permute.xlu0 %2470
        %2472 = vrot.lane.b32.xlu0 %v2103, 48
        %v2473 = vpop.permute.xlu0 %2472
        %v2474 = vsel %vm523, %v2471, 0
        %v2476 = vsel %vm523, %v2473, 0
        %2478 = vmatpush.xpose.msra.mxu0 0.0
        %2479 = vmatpush.xpose.msra.mxu0 0.0
        %2480 = vmatpush.xpose.msra.mxu0 0.0
        %2481 = vmatpush.xpose.msra.mxu0 0.0
        %2482 = vmatpush.xpose.msra.mxu0 0.0
        %2483 = vmatpush.xpose.msra.mxu0 0.0
        %2484 = vmatpush.xpose.msra.mxu0 0.0
        %2485 = vmatpush.xpose.msra.mxu0 0.0
        %2486 = vmatpush.xpose.msra.mxu0 0.0
        %2487 = vmatpush.xpose.msra.mxu0 0.0
        %2488 = vmatpush.xpose.msra.mxu0 0.0
        %2489 = vmatpush.xpose.msra.mxu0 0.0
        %2490 = vmatpush.xpose.msra.mxu0 0.0
        %2491 = vmatpush.xpose.msra.mxu0 0.0
        %2492 = vmatpush.xpose.msra.mxu0 0.0
        %2493 = vmatpush.xpose.msra.mxu0 %v2476
        %2494 = vmatmul.f32.gmra.mxu0 %v2474
        %v2495 = vpop.f32.mrf.mxu0
        %v2496 = vadd.f32 0.0, %v2495
        %2497 = vdwg.mxu0
        %v2498 = vmul.f32 %v2412, 0.25
        %v2499 = vmul.f32 %v2440, 0.25
        %v2500 = vmul.f32 %v2468, 0.25
        %v2501 = vmul.f32 %v2496, 0.25
        %v2502 = vadd.f32 %v2498, %v637
        %v2503 = vadd.f32 %v2499, %v638
        %v2504 = vadd.f32 %v2500, %v639
        %v2505 = vadd.f32 %v2501, %v640
        %v2506 = vsel %vm649, %v2502, -inf
        %2507 = vmax.xlane.f32.xlu0 %v2506
        %v2508 = vpop.xlane.xlu0 %2507
        %v2509 = vsel %vm649, %v2503, -inf
        %2510 = vmax.xlane.f32.xlu0 %v2509
        %v2511 = vpop.xlane.xlu0 %2510
        %v2512 = vsel %vm649, %v2504, -inf
        %2513 = vmax.xlane.f32.xlu0 %v2512
        %v2514 = vpop.xlane.xlu0 %2513
        %v2515 = vsel %vm649, %v2505, -inf
        %2516 = vmax.xlane.f32.xlu0 %v2515
        %v2517 = vpop.xlane.xlu0 %2516
        %v2518 = vsub.f32 %v2502, %v2508
        %v2519 = vsub.f32 %v2503, %v2511
        %v2520 = vsub.f32 %v2504, %v2514
        %v2521 = vsub.f32 %v2505, %v2517
        %v2522 = vmul.f32 %v2518, 1.442695
        %v2523 = vpow.pop %v2522
        %v2524 = vmul.f32 %v2519, 1.442695
        %v2525 = vpow.pop %v2524
        %v2526 = vmul.f32 %v2520, 1.442695
        %v2527 = vpow.pop %v2526
        %v2528 = vmul.f32 %v2521, 1.442695
        %v2529 = vpow.pop %v2528
        %v2530 = vsel %vm649, %v2523, 0.0
        %2531 = vadd.xlane.f32.xlu0 %v2530
        %v2532 = vpop.xlane.xlu0 %2531
        %v2533 = vsel %vm649, %v2525, 0.0
        %2534 = vadd.xlane.f32.xlu0 %v2533
        %v2535 = vpop.xlane.xlu0 %2534
        %v2536 = vsel %vm649, %v2527, 0.0
        %2537 = vadd.xlane.f32.xlu0 %v2536
        %v2538 = vpop.xlane.xlu0 %2537
        %v2539 = vsel %vm649, %v2529, 0.0
        %2540 = vadd.xlane.f32.xlu0 %v2539
        %v2541 = vpop.xlane.xlu0 %2540
        %v2542 = vrcp.pop %v2532
        %v2543 = vrcp.pop %v2535
        %v2544 = vrcp.pop %v2538
        %v2545 = vrcp.pop %v2541
        %v2546 = vmul.f32 %v2523, %v2542
        %v2547 = vmul.f32 %v2525, %v2543
        %v2548 = vmul.f32 %v2527, %v2544
        %v2549 = vmul.f32 %v2529, %v2545
        %2551 = vrot.lane.b32.xlu0 %v2123, 112
        %v2552 = vpop.permute.xlu0 %2551
        %v2555 = vsel %vm649, %v2546, 0
        %2557 = vmatpush.msra.mxu0 0.0
        %2558 = vmatpush.msra.mxu0 0.0
        %2559 = vmatpush.msra.mxu0 0.0
        %2560 = vmatpush.msra.mxu0 0.0
        %2561 = vmatpush.msra.mxu0 0.0
        %2562 = vmatpush.msra.mxu0 0.0
        %2563 = vmatpush.msra.mxu0 0.0
        %2564 = vmatpush.msra.mxu0 0.0
        %2565 = vmatpush.msra.mxu0 0.0
        %2566 = vmatpush.msra.mxu0 0.0
        %2567 = vmatpush.msra.mxu0 0.0
        %2568 = vmatpush.msra.mxu0 0.0
        %2569 = vmatpush.msra.mxu0 0.0
        %2570 = vmatpush.msra.mxu0 0.0
        %2571 = vmatpush.msra.mxu0 0.0
        %2572 = vmatpush.msra.mxu0 %v2552
        %2573 = vmatmul.f32.gmra.mxu0 %v2555
        %v2574 = vpop.f32.mrf.mxu0
        %v2575 = vadd.f32 0.0, %v2574
        %2576 = vdwg.mxu0
        %2578 = vrot.lane.b32.xlu0 %v2126, 112
        %v2579 = vpop.permute.xlu0 %2578
        %v2582 = vsel %vm649, %v2547, 0
        %2584 = vmatpush.msra.mxu0 0.0
        %2585 = vmatpush.msra.mxu0 0.0
        %2586 = vmatpush.msra.mxu0 0.0
        %2587 = vmatpush.msra.mxu0 0.0
        %2588 = vmatpush.msra.mxu0 0.0
        %2589 = vmatpush.msra.mxu0 0.0
        %2590 = vmatpush.msra.mxu0 0.0
        %2591 = vmatpush.msra.mxu0 0.0
        %2592 = vmatpush.msra.mxu0 0.0
        %2593 = vmatpush.msra.mxu0 0.0
        %2594 = vmatpush.msra.mxu0 0.0
        %2595 = vmatpush.msra.mxu0 0.0
        %2596 = vmatpush.msra.mxu0 0.0
        %2597 = vmatpush.msra.mxu0 0.0
        %2598 = vmatpush.msra.mxu0 0.0
        %2599 = vmatpush.msra.mxu0 %v2579
        %2600 = vmatmul.f32.gmra.mxu0 %v2582
        %v2601 = vpop.f32.mrf.mxu0
        %v2602 = vadd.f32 0.0, %v2601
        %2603 = vdwg.mxu0
        %2605 = vrot.lane.b32.xlu0 %v2129, 112
        %v2606 = vpop.permute.xlu0 %2605
        %v2609 = vsel %vm649, %v2548, 0
        %2611 = vmatpush.msra.mxu0 0.0
        %2612 = vmatpush.msra.mxu0 0.0
        %2613 = vmatpush.msra.mxu0 0.0
        %2614 = vmatpush.msra.mxu0 0.0
        %2615 = vmatpush.msra.mxu0 0.0
        %2616 = vmatpush.msra.mxu0 0.0
        %2617 = vmatpush.msra.mxu0 0.0
        %2618 = vmatpush.msra.mxu0 0.0
        %2619 = vmatpush.msra.mxu0 0.0
        %2620 = vmatpush.msra.mxu0 0.0
        %2621 = vmatpush.msra.mxu0 0.0
        %2622 = vmatpush.msra.mxu0 0.0
        %2623 = vmatpush.msra.mxu0 0.0
        %2624 = vmatpush.msra.mxu0 0.0
        %2625 = vmatpush.msra.mxu0 0.0
        %2626 = vmatpush.msra.mxu0 %v2606
        %2627 = vmatmul.f32.gmra.mxu0 %v2609
        %v2628 = vpop.f32.mrf.mxu0
        %v2629 = vadd.f32 0.0, %v2628
        %2630 = vdwg.mxu0
        %2632 = vrot.lane.b32.xlu0 %v2132, 112
        %v2633 = vpop.permute.xlu0 %2632
        %v2636 = vsel %vm649, %v2549, 0
        %2638 = vmatpush.msra.mxu0 0.0
        %2639 = vmatpush.msra.mxu0 0.0
        %2640 = vmatpush.msra.mxu0 0.0
        %2641 = vmatpush.msra.mxu0 0.0
        %2642 = vmatpush.msra.mxu0 0.0
        %2643 = vmatpush.msra.mxu0 0.0
        %2644 = vmatpush.msra.mxu0 0.0
        %2645 = vmatpush.msra.mxu0 0.0
        %2646 = vmatpush.msra.mxu0 0.0
        %2647 = vmatpush.msra.mxu0 0.0
        %2648 = vmatpush.msra.mxu0 0.0
        %2649 = vmatpush.msra.mxu0 0.0
        %2650 = vmatpush.msra.mxu0 0.0
        %2651 = vmatpush.msra.mxu0 0.0
        %2652 = vmatpush.msra.mxu0 0.0
        %2653 = vmatpush.msra.mxu0 %v2633
        %2654 = vmatmul.f32.gmra.mxu0 %v2636
        %v2655 = vpop.f32.mrf.mxu0
        %v2656 = vadd.f32 0.0, %v2655
        %2657 = vdwg.mxu0
        %2658 = vrot.lane.b32.xlu0 %v2094, 96
        %v2659 = vpop.permute.xlu0 %2658
        %2660 = vrot.lane.b32.xlu0 %v2094, 32
        %v2661 = vpop.permute.xlu0 %2660
        %v2662 = vsel %vm523, %v2659, 0
        %v2664 = vsel %vm523, %v2661, 0
        %2666 = vmatpush.xpose.msra.mxu0 0.0
        %2667 = vmatpush.xpose.msra.mxu0 0.0
        %2668 = vmatpush.xpose.msra.mxu0 0.0
        %2669 = vmatpush.xpose.msra.mxu0 0.0
        %2670 = vmatpush.xpose.msra.mxu0 0.0
        %2671 = vmatpush.xpose.msra.mxu0 0.0
        %2672 = vmatpush.xpose.msra.mxu0 0.0
        %2673 = vmatpush.xpose.msra.mxu0 0.0
        %2674 = vmatpush.xpose.msra.mxu0 0.0
        %2675 = vmatpush.xpose.msra.mxu0 0.0
        %2676 = vmatpush.xpose.msra.mxu0 0.0
        %2677 = vmatpush.xpose.msra.mxu0 0.0
        %2678 = vmatpush.xpose.msra.mxu0 0.0
        %2679 = vmatpush.xpose.msra.mxu0 0.0
        %2680 = vmatpush.xpose.msra.mxu0 0.0
        %2681 = vmatpush.xpose.msra.mxu0 %v2664
        %2682 = vmatmul.f32.gmra.mxu0 %v2662
        %v2683 = vpop.f32.mrf.mxu0
        %v2684 = vadd.f32 0.0, %v2683
        %2685 = vdwg.mxu0
        %2686 = vrot.lane.b32.xlu0 %v2097, 96
        %v2687 = vpop.permute.xlu0 %2686
        %2688 = vrot.lane.b32.xlu0 %v2097, 32
        %v2689 = vpop.permute.xlu0 %2688
        %v2690 = vsel %vm523, %v2687, 0
        %v2692 = vsel %vm523, %v2689, 0
        %2694 = vmatpush.xpose.msra.mxu0 0.0
        %2695 = vmatpush.xpose.msra.mxu0 0.0
        %2696 = vmatpush.xpose.msra.mxu0 0.0
        %2697 = vmatpush.xpose.msra.mxu0 0.0
        %2698 = vmatpush.xpose.msra.mxu0 0.0
        %2699 = vmatpush.xpose.msra.mxu0 0.0
        %2700 = vmatpush.xpose.msra.mxu0 0.0
        %2701 = vmatpush.xpose.msra.mxu0 0.0
        %2702 = vmatpush.xpose.msra.mxu0 0.0
        %2703 = vmatpush.xpose.msra.mxu0 0.0
        %2704 = vmatpush.xpose.msra.mxu0 0.0
        %2705 = vmatpush.xpose.msra.mxu0 0.0
        %2706 = vmatpush.xpose.msra.mxu0 0.0
        %2707 = vmatpush.xpose.msra.mxu0 0.0
        %2708 = vmatpush.xpose.msra.mxu0 0.0
        %2709 = vmatpush.xpose.msra.mxu0 %v2692
        %2710 = vmatmul.f32.gmra.mxu0 %v2690
        %v2711 = vpop.f32.mrf.mxu0
        %v2712 = vadd.f32 0.0, %v2711
        %2713 = vdwg.mxu0
        %2714 = vrot.lane.b32.xlu0 %v2100, 96
        %v2715 = vpop.permute.xlu0 %2714
        %2716 = vrot.lane.b32.xlu0 %v2100, 32
        %v2717 = vpop.permute.xlu0 %2716
        %v2718 = vsel %vm523, %v2715, 0
        %v2720 = vsel %vm523, %v2717, 0
        %2722 = vmatpush.xpose.msra.mxu0 0.0
        %2723 = vmatpush.xpose.msra.mxu0 0.0
        %2724 = vmatpush.xpose.msra.mxu0 0.0
        %2725 = vmatpush.xpose.msra.mxu0 0.0
        %2726 = vmatpush.xpose.msra.mxu0 0.0
        %2727 = vmatpush.xpose.msra.mxu0 0.0
        %2728 = vmatpush.xpose.msra.mxu0 0.0
        %2729 = vmatpush.xpose.msra.mxu0 0.0
        %2730 = vmatpush.xpose.msra.mxu0 0.0
        %2731 = vmatpush.xpose.msra.mxu0 0.0
        %2732 = vmatpush.xpose.msra.mxu0 0.0
        %2733 = vmatpush.xpose.msra.mxu0 0.0
        %2734 = vmatpush.xpose.msra.mxu0 0.0
        %2735 = vmatpush.xpose.msra.mxu0 0.0
        %2736 = vmatpush.xpose.msra.mxu0 0.0
        %2737 = vmatpush.xpose.msra.mxu0 %v2720
        %2738 = vmatmul.f32.gmra.mxu0 %v2718
        %v2739 = vpop.f32.mrf.mxu0
        %v2740 = vadd.f32 0.0, %v2739
        %2741 = vdwg.mxu0
        %2742 = vrot.lane.b32.xlu0 %v2103, 96
        %v2743 = vpop.permute.xlu0 %2742
        %2744 = vrot.lane.b32.xlu0 %v2103, 32
        %v2745 = vpop.permute.xlu0 %2744
        %v2746 = vsel %vm523, %v2743, 0
        %v2748 = vsel %vm523, %v2745, 0
        %2750 = vmatpush.xpose.msra.mxu0 0.0
        %2751 = vmatpush.xpose.msra.mxu0 0.0
        %2752 = vmatpush.xpose.msra.mxu0 0.0
        %2753 = vmatpush.xpose.msra.mxu0 0.0
        %2754 = vmatpush.xpose.msra.mxu0 0.0
        %2755 = vmatpush.xpose.msra.mxu0 0.0
        %2756 = vmatpush.xpose.msra.mxu0 0.0
        %2757 = vmatpush.xpose.msra.mxu0 0.0
        %2758 = vmatpush.xpose.msra.mxu0 0.0
        %2759 = vmatpush.xpose.msra.mxu0 0.0
        %2760 = vmatpush.xpose.msra.mxu0 0.0
        %2761 = vmatpush.xpose.msra.mxu0 0.0
        %2762 = vmatpush.xpose.msra.mxu0 0.0
        %2763 = vmatpush.xpose.msra.mxu0 0.0
        %2764 = vmatpush.xpose.msra.mxu0 0.0
        %2765 = vmatpush.xpose.msra.mxu0 %v2748
        %2766 = vmatmul.f32.gmra.mxu0 %v2746
        %v2767 = vpop.f32.mrf.mxu0
        %v2768 = vadd.f32 0.0, %v2767
        %2769 = vdwg.mxu0
        %v2770 = vmul.f32 %v2684, 0.25
        %v2771 = vmul.f32 %v2712, 0.25
        %v2772 = vmul.f32 %v2740, 0.25
        %v2773 = vmul.f32 %v2768, 0.25
        %v2774 = vadd.f32 %v2770, %v637
        %v2775 = vadd.f32 %v2771, %v638
        %v2776 = vadd.f32 %v2772, %v639
        %v2777 = vadd.f32 %v2773, %v640
        %v2778 = vsel %vm649, %v2774, -inf
        %2779 = vmax.xlane.f32.xlu0 %v2778
        %v2780 = vpop.xlane.xlu0 %2779
        %v2781 = vsel %vm649, %v2775, -inf
        %2782 = vmax.xlane.f32.xlu0 %v2781
        %v2783 = vpop.xlane.xlu0 %2782
        %v2784 = vsel %vm649, %v2776, -inf
        %2785 = vmax.xlane.f32.xlu0 %v2784
        %v2786 = vpop.xlane.xlu0 %2785
        %v2787 = vsel %vm649, %v2777, -inf
        %2788 = vmax.xlane.f32.xlu0 %v2787
        %v2789 = vpop.xlane.xlu0 %2788
        %v2790 = vsub.f32 %v2774, %v2780
        %v2791 = vsub.f32 %v2775, %v2783
        %v2792 = vsub.f32 %v2776, %v2786
        %v2793 = vsub.f32 %v2777, %v2789
        %v2794 = vmul.f32 %v2790, 1.442695
        %v2795 = vpow.pop %v2794
        %v2796 = vmul.f32 %v2791, 1.442695
        %v2797 = vpow.pop %v2796
        %v2798 = vmul.f32 %v2792, 1.442695
        %v2799 = vpow.pop %v2798
        %v2800 = vmul.f32 %v2793, 1.442695
        %v2801 = vpow.pop %v2800
        %v2802 = vsel %vm649, %v2795, 0.0
        %2803 = vadd.xlane.f32.xlu0 %v2802
        %v2804 = vpop.xlane.xlu0 %2803
        %v2805 = vsel %vm649, %v2797, 0.0
        %2806 = vadd.xlane.f32.xlu0 %v2805
        %v2807 = vpop.xlane.xlu0 %2806
        %v2808 = vsel %vm649, %v2799, 0.0
        %2809 = vadd.xlane.f32.xlu0 %v2808
        %v2810 = vpop.xlane.xlu0 %2809
        %v2811 = vsel %vm649, %v2801, 0.0
        %2812 = vadd.xlane.f32.xlu0 %v2811
        %v2813 = vpop.xlane.xlu0 %2812
        %v2814 = vrcp.pop %v2804
        %v2815 = vrcp.pop %v2807
        %v2816 = vrcp.pop %v2810
        %v2817 = vrcp.pop %v2813
        %v2818 = vmul.f32 %v2795, %v2814
        %v2819 = vmul.f32 %v2797, %v2815
        %v2820 = vmul.f32 %v2799, %v2816
        %v2821 = vmul.f32 %v2801, %v2817
        %2822 = vrot.lane.b32.xlu0 %v2123, 96
        %v2823 = vpop.permute.xlu0 %2822
        %v2826 = vsel %vm649, %v2818, 0
        %2828 = vmatpush.msra.mxu0 0.0
        %2829 = vmatpush.msra.mxu0 0.0
        %2830 = vmatpush.msra.mxu0 0.0
        %2831 = vmatpush.msra.mxu0 0.0
        %2832 = vmatpush.msra.mxu0 0.0
        %2833 = vmatpush.msra.mxu0 0.0
        %2834 = vmatpush.msra.mxu0 0.0
        %2835 = vmatpush.msra.mxu0 0.0
        %2836 = vmatpush.msra.mxu0 0.0
        %2837 = vmatpush.msra.mxu0 0.0
        %2838 = vmatpush.msra.mxu0 0.0
        %2839 = vmatpush.msra.mxu0 0.0
        %2840 = vmatpush.msra.mxu0 0.0
        %2841 = vmatpush.msra.mxu0 0.0
        %2842 = vmatpush.msra.mxu0 0.0
        %2843 = vmatpush.msra.mxu0 %v2823
        %2844 = vmatmul.f32.gmra.mxu0 %v2826
        %v2845 = vpop.f32.mrf.mxu0
        %v2846 = vadd.f32 0.0, %v2845
        %2847 = vdwg.mxu0
        %2848 = vrot.lane.b32.xlu0 %v2126, 96
        %v2849 = vpop.permute.xlu0 %2848
        %v2852 = vsel %vm649, %v2819, 0
        %2854 = vmatpush.msra.mxu0 0.0
        %2855 = vmatpush.msra.mxu0 0.0
        %2856 = vmatpush.msra.mxu0 0.0
        %2857 = vmatpush.msra.mxu0 0.0
        %2858 = vmatpush.msra.mxu0 0.0
        %2859 = vmatpush.msra.mxu0 0.0
        %2860 = vmatpush.msra.mxu0 0.0
        %2861 = vmatpush.msra.mxu0 0.0
        %2862 = vmatpush.msra.mxu0 0.0
        %2863 = vmatpush.msra.mxu0 0.0
        %2864 = vmatpush.msra.mxu0 0.0
        %2865 = vmatpush.msra.mxu0 0.0
        %2866 = vmatpush.msra.mxu0 0.0
        %2867 = vmatpush.msra.mxu0 0.0
        %2868 = vmatpush.msra.mxu0 0.0
        %2869 = vmatpush.msra.mxu0 %v2849
        %2870 = vmatmul.f32.gmra.mxu0 %v2852
        %v2871 = vpop.f32.mrf.mxu0
        %v2872 = vadd.f32 0.0, %v2871
        %2873 = vdwg.mxu0
        %2874 = vrot.lane.b32.xlu0 %v2129, 96
        %v2875 = vpop.permute.xlu0 %2874
        %v2878 = vsel %vm649, %v2820, 0
        %2880 = vmatpush.msra.mxu0 0.0
        %2881 = vmatpush.msra.mxu0 0.0
        %2882 = vmatpush.msra.mxu0 0.0
        %2883 = vmatpush.msra.mxu0 0.0
        %2884 = vmatpush.msra.mxu0 0.0
        %2885 = vmatpush.msra.mxu0 0.0
        %2886 = vmatpush.msra.mxu0 0.0
        %2887 = vmatpush.msra.mxu0 0.0
        %2888 = vmatpush.msra.mxu0 0.0
        %2889 = vmatpush.msra.mxu0 0.0
        %2890 = vmatpush.msra.mxu0 0.0
        %2891 = vmatpush.msra.mxu0 0.0
        %2892 = vmatpush.msra.mxu0 0.0
        %2893 = vmatpush.msra.mxu0 0.0
        %2894 = vmatpush.msra.mxu0 0.0
        %2895 = vmatpush.msra.mxu0 %v2875
        %2896 = vmatmul.f32.gmra.mxu0 %v2878
        %v2897 = vpop.f32.mrf.mxu0
        %v2898 = vadd.f32 0.0, %v2897
        %2899 = vdwg.mxu0
        %2900 = vrot.lane.b32.xlu0 %v2132, 96
        %v2901 = vpop.permute.xlu0 %2900
        %v2904 = vsel %vm649, %v2821, 0
        %2906 = vmatpush.msra.mxu0 0.0
        %2907 = vmatpush.msra.mxu0 0.0
        %2908 = vmatpush.msra.mxu0 0.0
        %2909 = vmatpush.msra.mxu0 0.0
        %2910 = vmatpush.msra.mxu0 0.0
        %2911 = vmatpush.msra.mxu0 0.0
        %2912 = vmatpush.msra.mxu0 0.0
        %2913 = vmatpush.msra.mxu0 0.0
        %2914 = vmatpush.msra.mxu0 0.0
        %2915 = vmatpush.msra.mxu0 0.0
        %2916 = vmatpush.msra.mxu0 0.0
        %2917 = vmatpush.msra.mxu0 0.0
        %2918 = vmatpush.msra.mxu0 0.0
        %2919 = vmatpush.msra.mxu0 0.0
        %2920 = vmatpush.msra.mxu0 0.0
        %2921 = vmatpush.msra.mxu0 %v2901
        %2922 = vmatmul.f32.gmra.mxu0 %v2904
        %v2923 = vpop.f32.mrf.mxu0
        %v2924 = vadd.f32 0.0, %v2923
        %2925 = vdwg.mxu0
        %2926 = vrot.lane.b32.xlu0 %v2094, 80
        %v2927 = vpop.permute.xlu0 %2926
        %2928 = vrot.lane.b32.xlu0 %v2094, 16
        %v2929 = vpop.permute.xlu0 %2928
        %v2930 = vsel %vm523, %v2927, 0
        %v2932 = vsel %vm523, %v2929, 0
        %2934 = vmatpush.xpose.msra.mxu0 0.0
        %2935 = vmatpush.xpose.msra.mxu0 0.0
        %2936 = vmatpush.xpose.msra.mxu0 0.0
        %2937 = vmatpush.xpose.msra.mxu0 0.0
        %2938 = vmatpush.xpose.msra.mxu0 0.0
        %2939 = vmatpush.xpose.msra.mxu0 0.0
        %2940 = vmatpush.xpose.msra.mxu0 0.0
        %2941 = vmatpush.xpose.msra.mxu0 0.0
        %2942 = vmatpush.xpose.msra.mxu0 0.0
        %2943 = vmatpush.xpose.msra.mxu0 0.0
        %2944 = vmatpush.xpose.msra.mxu0 0.0
        %2945 = vmatpush.xpose.msra.mxu0 0.0
        %2946 = vmatpush.xpose.msra.mxu0 0.0
        %2947 = vmatpush.xpose.msra.mxu0 0.0
        %2948 = vmatpush.xpose.msra.mxu0 0.0
        %2949 = vmatpush.xpose.msra.mxu0 %v2932
        %2950 = vmatmul.f32.gmra.mxu0 %v2930
        %v2951 = vpop.f32.mrf.mxu0
        %v2952 = vadd.f32 0.0, %v2951
        %2953 = vdwg.mxu0
        %2954 = vrot.lane.b32.xlu0 %v2097, 80
        %v2955 = vpop.permute.xlu0 %2954
        %2956 = vrot.lane.b32.xlu0 %v2097, 16
        %v2957 = vpop.permute.xlu0 %2956
        %v2958 = vsel %vm523, %v2955, 0
        %v2960 = vsel %vm523, %v2957, 0
        %2962 = vmatpush.xpose.msra.mxu0 0.0
        %2963 = vmatpush.xpose.msra.mxu0 0.0
        %2964 = vmatpush.xpose.msra.mxu0 0.0
        %2965 = vmatpush.xpose.msra.mxu0 0.0
        %2966 = vmatpush.xpose.msra.mxu0 0.0
        %2967 = vmatpush.xpose.msra.mxu0 0.0
        %2968 = vmatpush.xpose.msra.mxu0 0.0
        %2969 = vmatpush.xpose.msra.mxu0 0.0
        %2970 = vmatpush.xpose.msra.mxu0 0.0
        %2971 = vmatpush.xpose.msra.mxu0 0.0
        %2972 = vmatpush.xpose.msra.mxu0 0.0
        %2973 = vmatpush.xpose.msra.mxu0 0.0
        %2974 = vmatpush.xpose.msra.mxu0 0.0
        %2975 = vmatpush.xpose.msra.mxu0 0.0
        %2976 = vmatpush.xpose.msra.mxu0 0.0
        %2977 = vmatpush.xpose.msra.mxu0 %v2960
        %2978 = vmatmul.f32.gmra.mxu0 %v2958
        %v2979 = vpop.f32.mrf.mxu0
        %v2980 = vadd.f32 0.0, %v2979
        %2981 = vdwg.mxu0
        %2982 = vrot.lane.b32.xlu0 %v2100, 80
        %v2983 = vpop.permute.xlu0 %2982
        %2984 = vrot.lane.b32.xlu0 %v2100, 16
        %v2985 = vpop.permute.xlu0 %2984
        %v2986 = vsel %vm523, %v2983, 0
        %v2988 = vsel %vm523, %v2985, 0
        %2990 = vmatpush.xpose.msra.mxu0 0.0
        %2991 = vmatpush.xpose.msra.mxu0 0.0
        %2992 = vmatpush.xpose.msra.mxu0 0.0
        %2993 = vmatpush.xpose.msra.mxu0 0.0
        %2994 = vmatpush.xpose.msra.mxu0 0.0
        %2995 = vmatpush.xpose.msra.mxu0 0.0
        %2996 = vmatpush.xpose.msra.mxu0 0.0
        %2997 = vmatpush.xpose.msra.mxu0 0.0
        %2998 = vmatpush.xpose.msra.mxu0 0.0
        %2999 = vmatpush.xpose.msra.mxu0 0.0
        %3000 = vmatpush.xpose.msra.mxu0 0.0
        %3001 = vmatpush.xpose.msra.mxu0 0.0
        %3002 = vmatpush.xpose.msra.mxu0 0.0
        %3003 = vmatpush.xpose.msra.mxu0 0.0
        %3004 = vmatpush.xpose.msra.mxu0 0.0
        %3005 = vmatpush.xpose.msra.mxu0 %v2988
        %3006 = vmatmul.f32.gmra.mxu0 %v2986
        %v3007 = vpop.f32.mrf.mxu0
        %v3008 = vadd.f32 0.0, %v3007
        %3009 = vdwg.mxu0
        %3010 = vrot.lane.b32.xlu0 %v2103, 80
        %v3011 = vpop.permute.xlu0 %3010
        %3012 = vrot.lane.b32.xlu0 %v2103, 16
        %v3013 = vpop.permute.xlu0 %3012
        %v3014 = vsel %vm523, %v3011, 0
        %v3016 = vsel %vm523, %v3013, 0
        %3018 = vmatpush.xpose.msra.mxu0 0.0
        %3019 = vmatpush.xpose.msra.mxu0 0.0
        %3020 = vmatpush.xpose.msra.mxu0 0.0
        %3021 = vmatpush.xpose.msra.mxu0 0.0
        %3022 = vmatpush.xpose.msra.mxu0 0.0
        %3023 = vmatpush.xpose.msra.mxu0 0.0
        %3024 = vmatpush.xpose.msra.mxu0 0.0
        %3025 = vmatpush.xpose.msra.mxu0 0.0
        %3026 = vmatpush.xpose.msra.mxu0 0.0
        %3027 = vmatpush.xpose.msra.mxu0 0.0
        %3028 = vmatpush.xpose.msra.mxu0 0.0
        %3029 = vmatpush.xpose.msra.mxu0 0.0
        %3030 = vmatpush.xpose.msra.mxu0 0.0
        %3031 = vmatpush.xpose.msra.mxu0 0.0
        %3032 = vmatpush.xpose.msra.mxu0 0.0
        %3033 = vmatpush.xpose.msra.mxu0 %v3016
        %3034 = vmatmul.f32.gmra.mxu0 %v3014
        %v3035 = vpop.f32.mrf.mxu0
        %v3036 = vadd.f32 0.0, %v3035
        %3037 = vdwg.mxu0
        %v3038 = vmul.f32 %v2952, 0.25
        %v3039 = vmul.f32 %v2980, 0.25
        %v3040 = vmul.f32 %v3008, 0.25
        %v3041 = vmul.f32 %v3036, 0.25
        %v3042 = vadd.f32 %v3038, %v637
        %v3043 = vadd.f32 %v3039, %v638
        %v3044 = vadd.f32 %v3040, %v639
        %v3045 = vadd.f32 %v3041, %v640
        %v3046 = vsel %vm649, %v3042, -inf
        %3047 = vmax.xlane.f32.xlu0 %v3046
        %v3048 = vpop.xlane.xlu0 %3047
        %v3049 = vsel %vm649, %v3043, -inf
        %3050 = vmax.xlane.f32.xlu0 %v3049
        %v3051 = vpop.xlane.xlu0 %3050
        %v3052 = vsel %vm649, %v3044, -inf
        %3053 = vmax.xlane.f32.xlu0 %v3052
        %v3054 = vpop.xlane.xlu0 %3053
        %v3055 = vsel %vm649, %v3045, -inf
        %3056 = vmax.xlane.f32.xlu0 %v3055
        %v3057 = vpop.xlane.xlu0 %3056
        %v3058 = vsub.f32 %v3042, %v3048
        %v3059 = vsub.f32 %v3043, %v3051
        %v3060 = vsub.f32 %v3044, %v3054
        %v3061 = vsub.f32 %v3045, %v3057
        %v3062 = vmul.f32 %v3058, 1.442695
        %v3063 = vpow.pop %v3062
        %v3064 = vmul.f32 %v3059, 1.442695
        %v3065 = vpow.pop %v3064
        %v3066 = vmul.f32 %v3060, 1.442695
        %v3067 = vpow.pop %v3066
        %v3068 = vmul.f32 %v3061, 1.442695
        %v3069 = vpow.pop %v3068
        %v3070 = vsel %vm649, %v3063, 0.0
        %3071 = vadd.xlane.f32.xlu0 %v3070
        %v3072 = vpop.xlane.xlu0 %3071
        %v3073 = vsel %vm649, %v3065, 0.0
        %3074 = vadd.xlane.f32.xlu0 %v3073
        %v3075 = vpop.xlane.xlu0 %3074
        %v3076 = vsel %vm649, %v3067, 0.0
        %3077 = vadd.xlane.f32.xlu0 %v3076
        %v3078 = vpop.xlane.xlu0 %3077
        %v3079 = vsel %vm649, %v3069, 0.0
        %3080 = vadd.xlane.f32.xlu0 %v3079
        %v3081 = vpop.xlane.xlu0 %3080
        %v3082 = vrcp.pop %v3072
        %v3083 = vrcp.pop %v3075
        %v3084 = vrcp.pop %v3078
        %v3085 = vrcp.pop %v3081
        %v3086 = vmul.f32 %v3063, %v3082
        %v3087 = vmul.f32 %v3065, %v3083
        %v3088 = vmul.f32 %v3067, %v3084
        %v3089 = vmul.f32 %v3069, %v3085
        %3090 = vrot.lane.b32.xlu0 %v2123, 80
        %v3091 = vpop.permute.xlu0 %3090
        %v3094 = vsel %vm649, %v3086, 0
        %3096 = vmatpush.msra.mxu0 0.0
        %3097 = vmatpush.msra.mxu0 0.0
        %3098 = vmatpush.msra.mxu0 0.0
        %3099 = vmatpush.msra.mxu0 0.0
        %3100 = vmatpush.msra.mxu0 0.0
        %3101 = vmatpush.msra.mxu0 0.0
        %3102 = vmatpush.msra.mxu0 0.0
        %3103 = vmatpush.msra.mxu0 0.0
        %3104 = vmatpush.msra.mxu0 0.0
        %3105 = vmatpush.msra.mxu0 0.0
        %3106 = vmatpush.msra.mxu0 0.0
        %3107 = vmatpush.msra.mxu0 0.0
        %3108 = vmatpush.msra.mxu0 0.0
        %3109 = vmatpush.msra.mxu0 0.0
        %3110 = vmatpush.msra.mxu0 0.0
        %3111 = vmatpush.msra.mxu0 %v3091
        %3112 = vmatmul.f32.gmra.mxu0 %v3094
        %v3113 = vpop.f32.mrf.mxu0
        %v3114 = vadd.f32 0.0, %v3113
        %3115 = vdwg.mxu0
        %3116 = vrot.lane.b32.xlu0 %v2126, 80
        %v3117 = vpop.permute.xlu0 %3116
        %v3120 = vsel %vm649, %v3087, 0
        %3122 = vmatpush.msra.mxu0 0.0
        %3123 = vmatpush.msra.mxu0 0.0
        %3124 = vmatpush.msra.mxu0 0.0
        %3125 = vmatpush.msra.mxu0 0.0
        %3126 = vmatpush.msra.mxu0 0.0
        %3127 = vmatpush.msra.mxu0 0.0
        %3128 = vmatpush.msra.mxu0 0.0
        %3129 = vmatpush.msra.mxu0 0.0
        %3130 = vmatpush.msra.mxu0 0.0
        %3131 = vmatpush.msra.mxu0 0.0
        %3132 = vmatpush.msra.mxu0 0.0
        %3133 = vmatpush.msra.mxu0 0.0
        %3134 = vmatpush.msra.mxu0 0.0
        %3135 = vmatpush.msra.mxu0 0.0
        %3136 = vmatpush.msra.mxu0 0.0
        %3137 = vmatpush.msra.mxu0 %v3117
        %3138 = vmatmul.f32.gmra.mxu0 %v3120
        %v3139 = vpop.f32.mrf.mxu0
        %v3140 = vadd.f32 0.0, %v3139
        %3141 = vdwg.mxu0
        %3142 = vrot.lane.b32.xlu0 %v2129, 80
        %v3143 = vpop.permute.xlu0 %3142
        %v3146 = vsel %vm649, %v3088, 0
        %3148 = vmatpush.msra.mxu0 0.0
        %3149 = vmatpush.msra.mxu0 0.0
        %3150 = vmatpush.msra.mxu0 0.0
        %3151 = vmatpush.msra.mxu0 0.0
        %3152 = vmatpush.msra.mxu0 0.0
        %3153 = vmatpush.msra.mxu0 0.0
        %3154 = vmatpush.msra.mxu0 0.0
        %3155 = vmatpush.msra.mxu0 0.0
        %3156 = vmatpush.msra.mxu0 0.0
        %3157 = vmatpush.msra.mxu0 0.0
        %3158 = vmatpush.msra.mxu0 0.0
        %3159 = vmatpush.msra.mxu0 0.0
        %3160 = vmatpush.msra.mxu0 0.0
        %3161 = vmatpush.msra.mxu0 0.0
        %3162 = vmatpush.msra.mxu0 0.0
        %3163 = vmatpush.msra.mxu0 %v3143
        %3164 = vmatmul.f32.gmra.mxu0 %v3146
        %v3165 = vpop.f32.mrf.mxu0
        %v3166 = vadd.f32 0.0, %v3165
        %3167 = vdwg.mxu0
        %3168 = vrot.lane.b32.xlu0 %v2132, 80
        %v3169 = vpop.permute.xlu0 %3168
        %v3172 = vsel %vm649, %v3089, 0
        %3174 = vmatpush.msra.mxu0 0.0
        %3175 = vmatpush.msra.mxu0 0.0
        %3176 = vmatpush.msra.mxu0 0.0
        %3177 = vmatpush.msra.mxu0 0.0
        %3178 = vmatpush.msra.mxu0 0.0
        %3179 = vmatpush.msra.mxu0 0.0
        %3180 = vmatpush.msra.mxu0 0.0
        %3181 = vmatpush.msra.mxu0 0.0
        %3182 = vmatpush.msra.mxu0 0.0
        %3183 = vmatpush.msra.mxu0 0.0
        %3184 = vmatpush.msra.mxu0 0.0
        %3185 = vmatpush.msra.mxu0 0.0
        %3186 = vmatpush.msra.mxu0 0.0
        %3187 = vmatpush.msra.mxu0 0.0
        %3188 = vmatpush.msra.mxu0 0.0
        %3189 = vmatpush.msra.mxu0 %v3169
        %3190 = vmatmul.f32.gmra.mxu0 %v3172
        %v3191 = vpop.f32.mrf.mxu0
        %v3192 = vadd.f32 0.0, %v3191
        %3193 = vdwg.mxu0
        %3198 = vrot.lane.b32.xlu0 %v2575, 16
        %v3199 = vpop.permute.xlu0 %3198
        %3200 = vrot.lane.b32.xlu0 %v2602, 16
        %v3201 = vpop.permute.xlu0 %3200
        %3202 = vrot.lane.b32.xlu0 %v2629, 16
        %v3203 = vpop.permute.xlu0 %3202
        %3204 = vrot.lane.b32.xlu0 %v2656, 16
        %v3205 = vpop.permute.xlu0 %3204
        %3214 = vrot.lane.b32.xlu0 %v2846, 32
        %v3215 = vpop.permute.xlu0 %3214
        %3216 = vrot.lane.b32.xlu0 %v2872, 32
        %v3217 = vpop.permute.xlu0 %3216
        %3218 = vrot.lane.b32.xlu0 %v2898, 32
        %v3219 = vpop.permute.xlu0 %3218
        %3220 = vrot.lane.b32.xlu0 %v2924, 32
        %v3221 = vpop.permute.xlu0 %3220
        %3230 = vrot.lane.b32.xlu0 %v3114, 48
        %v3231 = vpop.permute.xlu0 %3230
        %3232 = vrot.lane.b32.xlu0 %v3140, 48
        %v3233 = vpop.permute.xlu0 %3232
        %3234 = vrot.lane.b32.xlu0 %v3166, 48
        %v3235 = vpop.permute.xlu0 %3234
        %3236 = vrot.lane.b32.xlu0 %v3192, 48
        %v3237 = vpop.permute.xlu0 %3236
        %v3242 = vsel %vm523, %v2315, %v3199
        %v3243 = vsel %vm523, %v2338, %v3201
        %v3244 = vsel %vm523, %v2361, %v3203
        %v3245 = vsel %vm523, %v2384, %v3205
        %v3246 = vsel %vm1646, %v3242, %v3215
        %v3247 = vsel %vm1646, %v3243, %v3217
        %v3248 = vsel %vm1646, %v3244, %v3219
        %v3249 = vsel %vm1646, %v3245, %v3221
        %v3250 = vsel %vm1651, %v3246, %v3231
        %v3251 = vsel %vm1651, %v3247, %v3233
        %v3252 = vsel %vm1651, %v3248, %v3235
        %v3253 = vsel %vm1651, %v3249, %v3237
        %v3254 = vld [vmem:[%s2045 + $0x10] sm:$0xff]
        %v3255 = vld [vmem:[%s2045 + $0x30] sm:$0xff]
        %v3256 = vld [vmem:[%s2045 + $0x50] sm:$0xff]
        %v3257 = vld [vmem:[%s2045 + $0x70] sm:$0xff]
        %v3258 = vld [vmem:[%s2045 + $0x90] sm:$0xff]
        %v3259 = vld [vmem:[%s2045 + $0xb0] sm:$0xff]
        %v3260 = vld [vmem:[%s2045 + $0xd0] sm:$0xff]
        %v3261 = vld [vmem:[%s2045 + $0xf0] sm:$0xff]
        %v3262 = vperm.slane %v2043, 1
        %v3264 = vsel %vm320, %v3250, 0
        %v3267 = vsel %vm320, %v3251, 0
        %v3270 = vsel %vm320, %v3252, 0
        %v3273 = vsel %vm320, %v3253, 0
        %3275 = vmatpush.msra.mxu0 0.0
        %3276 = vmatpush.msra.mxu0 0.0
        %3277 = vmatpush.msra.mxu0 0.0
        %3278 = vmatpush.msra.mxu0 0.0
        %3279 = vmatpush.msra.mxu0 0.0
        %3280 = vmatpush.msra.mxu0 0.0
        %3281 = vmatpush.msra.mxu0 0.0
        %3282 = vmatpush.msra.mxu0 0.0
        %3283 = vmatpush.msra.mxu0 %v3261
        %3284 = vmatpush.msra.mxu0 %v3260
        %3285 = vmatpush.msra.mxu0 %v3259
        %3286 = vmatpush.msra.mxu0 %v3258
        %3287 = vmatpush.msra.mxu0 %v3257
        %3288 = vmatpush.msra.mxu0 %v3256
        %3289 = vmatpush.msra.mxu0 %v3255
        %3290 = vmatpush.msra.mxu0 %v3254
        %3291 = vmatmul.f32.gmra.mxu0 %v3264
        %v3292 = vpop.f32.mrf.mxu0
        %v3293 = vadd.f32 %v3262, %v3292
        %3294 = vmatmul.f32.gmra.mxu0 %v3267
        %v3295 = vpop.f32.mrf.mxu0
        %v3296 = vadd.f32 %v3262, %v3295
        %3297 = vmatmul.f32.gmra.mxu0 %v3270
        %v3298 = vpop.f32.mrf.mxu0
        %v3299 = vadd.f32 %v3262, %v3298
        %3300 = vmatmul.f32.gmra.mxu0 %v3273
        %v3301 = vpop.f32.mrf.mxu0
        %v3302 = vadd.f32 %v3262, %v3301
        %3303 = vdwg.mxu0
        %v3304 = vadd.f32 %v3293, %v2038
        %v3305 = vadd.f32 %v3296, %v2039
        %v3306 = vadd.f32 %v3299, %v2040
        %v3307 = vadd.f32 %v3302, %v2041
        %v3308 = vsel %vm320, %v3304, 0.0
        %3309 = vadd.xlane.f32.xlu0 %v3308
        %v3310 = vpop.xlane.xlu0 %3309
        %v3311 = vsel %vm320, %v3305, 0.0
        %3312 = vadd.xlane.f32.xlu0 %v3311
        %v3313 = vpop.xlane.xlu0 %3312
        %v3314 = vsel %vm320, %v3306, 0.0
        %3315 = vadd.xlane.f32.xlu0 %v3314
        %v3316 = vpop.xlane.xlu0 %3315
        %v3317 = vsel %vm320, %v3307, 0.0
        %3318 = vadd.xlane.f32.xlu0 %v3317
        %v3319 = vpop.xlane.xlu0 %3318
        %v3320 = vmul.f32 %v3310, %v339
        %v3321 = vmul.f32 %v3313, %v339
        %v3322 = vmul.f32 %v3316, %v339
        %v3323 = vmul.f32 %v3319, %v339
        %v3324 = vsub.f32 %v3304, %v3320
        %v3325 = vsub.f32 %v3305, %v3321
        %v3326 = vsub.f32 %v3306, %v3322
        %v3327 = vsub.f32 %v3307, %v3323
        %v3328 = vmul.f32 %v3324, %v3324
        %v3329 = vmul.f32 %v3325, %v3325
        %v3330 = vmul.f32 %v3326, %v3326
        %v3331 = vmul.f32 %v3327, %v3327
        %v3332 = vsel %vm320, %v3328, 0.0
        %3333 = vadd.xlane.f32.xlu0 %v3332
        %v3334 = vpop.xlane.xlu0 %3333
        %v3335 = vsel %vm320, %v3329, 0.0
        %3336 = vadd.xlane.f32.xlu0 %v3335
        %v3337 = vpop.xlane.xlu0 %3336
        %v3338 = vsel %vm320, %v3330, 0.0
        %3339 = vadd.xlane.f32.xlu0 %v3338
        %v3340 = vpop.xlane.xlu0 %3339
        %v3341 = vsel %vm320, %v3331, 0.0
        %3342 = vadd.xlane.f32.xlu0 %v3341
        %v3343 = vpop.xlane.xlu0 %3342
        %v3344 = vmul.f32 %v3334, %v339
        %v3345 = vmul.f32 %v3337, %v339
        %v3346 = vmul.f32 %v3340, %v339
        %v3347 = vmul.f32 %v3343, %v339
        %v3348 = vadd.f32 %v3344, 1e-12
        %v3349 = vadd.f32 %v3345, 1e-12
        %v3350 = vadd.f32 %v3346, 1e-12
        %v3351 = vadd.f32 %v3347, 1e-12
        %v3352 = vrsqrt.pop %v3348
        %v3353 = vmul.f32 %v3352, %v3348
        %v3354 = vmul.f32 %v3353, %v3352
        %v3355 = vmul.f32 0.5, %v3354
        %v3356 = vsub.f32 1.5, %v3355
        %v3357 = vmul.f32 %v3352, %v3356
        %vm3358 = vweird.f32 %v3348
        %vm3359 = vweird.f32 %v3352
        %vm3360 = vmor %vm3358, %vm3359
        %v3361 = vsel %vm3360, %v3352, %v3357
        %v3362 = vrsqrt.pop %v3349
        %v3363 = vmul.f32 %v3362, %v3349
        %v3364 = vmul.f32 %v3363, %v3362
        %v3365 = vmul.f32 0.5, %v3364
        %v3366 = vsub.f32 1.5, %v3365
        %v3367 = vmul.f32 %v3362, %v3366
        %vm3368 = vweird.f32 %v3349
        %vm3369 = vweird.f32 %v3362
        %vm3370 = vmor %vm3368, %vm3369
        %v3371 = vsel %vm3370, %v3362, %v3367
        %v3372 = vrsqrt.pop %v3350
        %v3373 = vmul.f32 %v3372, %v3350
        %v3374 = vmul.f32 %v3373, %v3372
        %v3375 = vmul.f32 0.5, %v3374
        %v3376 = vsub.f32 1.5, %v3375
        %v3377 = vmul.f32 %v3372, %v3376
        %vm3378 = vweird.f32 %v3350
        %vm3379 = vweird.f32 %v3372
        %vm3380 = vmor %vm3378, %vm3379
        %v3381 = vsel %vm3380, %v3372, %v3377
        %v3382 = vrsqrt.pop %v3351
        %v3383 = vmul.f32 %v3382, %v3351
        %v3384 = vmul.f32 %v3383, %v3382
        %v3385 = vmul.f32 0.5, %v3384
        %v3386 = vsub.f32 1.5, %v3385
        %v3387 = vmul.f32 %v3382, %v3386
        %vm3388 = vweird.f32 %v3351
        %vm3389 = vweird.f32 %v3382
        %vm3390 = vmor %vm3388, %vm3389
        %v3391 = vsel %vm3390, %v3382, %v3387
        %v3392 = vmul.f32 %v3324, %v3361
        %v3393 = vmul.f32 %v3325, %v3371
        %v3394 = vmul.f32 %v3326, %v3381
        %v3395 = vmul.f32 %v3327, %v3391
        %v3396 = vperm.slane %v2043, 2
        %v3397 = vmul.f32 %v3392, %v3396
        %v3398 = vmul.f32 %v3393, %v3396
        %v3399 = vmul.f32 %v3394, %v3396
        %v3400 = vmul.f32 %v3395, %v3396
        %v3401 = vperm.slane %v2043, 3
        %v3402 = vadd.f32 %v3397, %v3401
        %v3403 = vadd.f32 %v3398, %v3401
        %v3404 = vadd.f32 %v3399, %v3401
        %v3405 = vadd.f32 %v3400, %v3401
        %v3406 = vld [vmem:[%s2045 + $0x18] sm:$0xff]
        %v3407 = vld [vmem:[%s2045 + $0x38] sm:$0xff]
        %v3408 = vld [vmem:[%s2045 + $0x58] sm:$0xff]
        %v3409 = vld [vmem:[%s2045 + $0x78] sm:$0xff]
        %v3410 = vld [vmem:[%s2045 + $0x98] sm:$0xff]
        %v3411 = vld [vmem:[%s2045 + $0xb8] sm:$0xff]
        %v3412 = vld [vmem:[%s2045 + $0xd8] sm:$0xff]
        %v3413 = vld [vmem:[%s2045 + $0xf8] sm:$0xff]
        %v3414 = vperm.slane %v2043, 4
        %v3416 = vsel %vm320, %v3402, 0
        %v3419 = vsel %vm320, %v3403, 0
        %v3422 = vsel %vm320, %v3404, 0
        %v3425 = vsel %vm320, %v3405, 0
        %3427 = vmatpush.msra.mxu0 0.0
        %3428 = vmatpush.msra.mxu0 0.0
        %3429 = vmatpush.msra.mxu0 0.0
        %3430 = vmatpush.msra.mxu0 0.0
        %3431 = vmatpush.msra.mxu0 0.0
        %3432 = vmatpush.msra.mxu0 0.0
        %3433 = vmatpush.msra.mxu0 0.0
        %3434 = vmatpush.msra.mxu0 0.0
        %3435 = vmatpush.msra.mxu0 %v3413
        %3436 = vmatpush.msra.mxu0 %v3412
        %3437 = vmatpush.msra.mxu0 %v3411
        %3438 = vmatpush.msra.mxu0 %v3410
        %3439 = vmatpush.msra.mxu0 %v3409
        %3440 = vmatpush.msra.mxu0 %v3408
        %3441 = vmatpush.msra.mxu0 %v3407
        %3442 = vmatpush.msra.mxu0 %v3406
        %3443 = vmatmul.f32.gmra.mxu0 %v3416
        %v3444 = vpop.f32.mrf.mxu0
        %v3445 = vadd.f32 %v3414, %v3444
        %3446 = vmatmul.f32.gmra.mxu0 %v3419
        %v3447 = vpop.f32.mrf.mxu0
        %v3448 = vadd.f32 %v3414, %v3447
        %3449 = vmatmul.f32.gmra.mxu0 %v3422
        %v3450 = vpop.f32.mrf.mxu0
        %v3451 = vadd.f32 %v3414, %v3450
        %3452 = vmatmul.f32.gmra.mxu0 %v3425
        %v3453 = vpop.f32.mrf.mxu0
        %v3454 = vadd.f32 %v3414, %v3453
        %3455 = vdwg.mxu0
        %v3456 = vmul.f32 %v3445, 0.5
        %v3457 = vmul.f32 %v3448, 0.5
        %v3458 = vmul.f32 %v3451, 0.5
        %v3459 = vmul.f32 %v3454, 0.5
        %v3460 = vmul.f32 %v3445, 0.044715
        %v3461 = vmul.f32 %v3448, 0.044715
        %v3462 = vmul.f32 %v3451, 0.044715
        %v3463 = vmul.f32 %v3454, 0.044715
        %v3464 = vmul.f32 %v3460, %v3445
        %v3465 = vmul.f32 %v3461, %v3448
        %v3466 = vmul.f32 %v3462, %v3451
        %v3467 = vmul.f32 %v3463, %v3454
        %v3468 = vmul.f32 %v3464, %v3445
        %v3469 = vmul.f32 %v3465, %v3448
        %v3470 = vmul.f32 %v3466, %v3451
        %v3471 = vmul.f32 %v3467, %v3454
        %v3472 = vadd.f32 %v3445, %v3468
        %v3473 = vadd.f32 %v3448, %v3469
        %v3474 = vadd.f32 %v3451, %v3470
        %v3475 = vadd.f32 %v3454, %v3471
        %v3476 = vmul.f32 %v3472, 0.7978846
        %v3477 = vmul.f32 %v3473, 0.7978846
        %v3478 = vmul.f32 %v3474, 0.7978846
        %v3479 = vmul.f32 %v3475, 0.7978846
        %v3480 = vtanh.pop %v3476
        %v3481 = vtanh.pop %v3477
        %v3482 = vtanh.pop %v3478
        %v3483 = vtanh.pop %v3479
        %v3484 = vadd.f32 %v3480, 1.0
        %v3485 = vadd.f32 %v3481, 1.0
        %v3486 = vadd.f32 %v3482, 1.0
        %v3487 = vadd.f32 %v3483, 1.0
        %v3488 = vmul.f32 %v3456, %v3484
        %v3489 = vmul.f32 %v3457, %v3485
        %v3490 = vmul.f32 %v3458, %v3486
        %v3491 = vmul.f32 %v3459, %v3487
        %s3492 = scalar_lea.vmem %s3, 128
        %v3493 = vld [vmem:[%s3492] sm:$0xff]
        %v3494 = vld [vmem:[%s3492 + $0x8] sm:$0xff]
        %v3495 = vld [vmem:[%s3492 + $0x10] sm:$0xff]
        %v3496 = vld [vmem:[%s3492 + $0x18] sm:$0xff]
        %v3497 = vld [vmem:[%s3492 + $0x20] sm:$0xff]
        %v3498 = vld [vmem:[%s3492 + $0x28] sm:$0xff]
        %v3499 = vld [vmem:[%s3492 + $0x30] sm:$0xff]
        %v3500 = vld [vmem:[%s3492 + $0x38] sm:$0xff]
        %v3501 = vld [vmem:[%s3492 + $0x40] sm:$0xff]
        %v3502 = vld [vmem:[%s3492 + $0x48] sm:$0xff]
        %v3503 = vld [vmem:[%s3492 + $0x50] sm:$0xff]
        %v3504 = vld [vmem:[%s3492 + $0x58] sm:$0xff]
        %v3505 = vld [vmem:[%s3492 + $0x60] sm:$0xff]
        %v3506 = vld [vmem:[%s3492 + $0x68] sm:$0xff]
        %v3507 = vld [vmem:[%s3492 + $0x70] sm:$0xff]
        %v3508 = vld [vmem:[%s3492 + $0x78] sm:$0xff]
        %v3509 = vperm.slane %v2043, 5
        %3510 = vmatpush.msra.mxu0 %v3508
        %3511 = vmatpush.msra.mxu0 %v3507
        %3512 = vmatpush.msra.mxu0 %v3506
        %3513 = vmatpush.msra.mxu0 %v3505
        %3514 = vmatpush.msra.mxu0 %v3504
        %3515 = vmatpush.msra.mxu0 %v3503
        %3516 = vmatpush.msra.mxu0 %v3502
        %3517 = vmatpush.msra.mxu0 %v3501
        %3518 = vmatpush.msra.mxu0 %v3500
        %3519 = vmatpush.msra.mxu0 %v3499
        %3520 = vmatpush.msra.mxu0 %v3498
        %3521 = vmatpush.msra.mxu0 %v3497
        %3522 = vmatpush.msra.mxu0 %v3496
        %3523 = vmatpush.msra.mxu0 %v3495
        %3524 = vmatpush.msra.mxu0 %v3494
        %3525 = vmatpush.msra.mxu0 %v3493
        %3526 = vmatmul.f32.gmra.mxu0 %v3488
        %v3527 = vpop.f32.mrf.mxu0
        %v3528 = vadd.f32 %v3509, %v3527
        %3529 = vmatmul.f32.gmra.mxu0 %v3489
        %v3530 = vpop.f32.mrf.mxu0
        %v3531 = vadd.f32 %v3509, %v3530
        %3532 = vmatmul.f32.gmra.mxu0 %v3490
        %v3533 = vpop.f32.mrf.mxu0
        %v3534 = vadd.f32 %v3509, %v3533
        %3535 = vmatmul.f32.gmra.mxu0 %v3491
        %v3536 = vpop.f32.mrf.mxu0
        %v3537 = vadd.f32 %v3509, %v3536
        %3538 = vdwg.mxu0
        %v3539 = vadd.f32 %v3528, %v3402
        %v3540 = vadd.f32 %v3531, %v3403
        %v3541 = vadd.f32 %v3534, %v3404
        %v3542 = vadd.f32 %v3537, %v3405
        %v3543 = vsel %vm320, %v3539, 0.0
        %3544 = vadd.xlane.f32.xlu0 %v3543
        %v3545 = vpop.xlane.xlu0 %3544
        %v3546 = vsel %vm320, %v3540, 0.0
        %3547 = vadd.xlane.f32.xlu0 %v3546
        %v3548 = vpop.xlane.xlu0 %3547
        %v3549 = vsel %vm320, %v3541, 0.0
        %3550 = vadd.xlane.f32.xlu0 %v3549
        %v3551 = vpop.xlane.xlu0 %3550
        %v3552 = vsel %vm320, %v3542, 0.0
        %3553 = vadd.xlane.f32.xlu0 %v3552
        %v3554 = vpop.xlane.xlu0 %3553
        %v3555 = vmul.f32 %v3545, %v339
        %v3556 = vmul.f32 %v3548, %v339
        %v3557 = vmul.f32 %v3551, %v339
        %v3558 = vmul.f32 %v3554, %v339
        %v3559 = vsub.f32 %v3539, %v3555
        %v3560 = vsub.f32 %v3540, %v3556
        %v3561 = vsub.f32 %v3541, %v3557
        %v3562 = vsub.f32 %v3542, %v3558
        %v3563 = vmul.f32 %v3559, %v3559
        %v3564 = vmul.f32 %v3560, %v3560
        %v3565 = vmul.f32 %v3561, %v3561
        %v3566 = vmul.f32 %v3562, %v3562
        %v3567 = vsel %vm320, %v3563, 0.0
        %3568 = vadd.xlane.f32.xlu0 %v3567
        %v3569 = vpop.xlane.xlu0 %3568
        %v3570 = vsel %vm320, %v3564, 0.0
        %3571 = vadd.xlane.f32.xlu0 %v3570
        %v3572 = vpop.xlane.xlu0 %3571
        %v3573 = vsel %vm320, %v3565, 0.0
        %3574 = vadd.xlane.f32.xlu0 %v3573
        %v3575 = vpop.xlane.xlu0 %3574
        %v3576 = vsel %vm320, %v3566, 0.0
        %3577 = vadd.xlane.f32.xlu0 %v3576
        %v3578 = vpop.xlane.xlu0 %3577
        %v3579 = vmul.f32 %v3569, %v339
        %v3580 = vmul.f32 %v3572, %v339
        %v3581 = vmul.f32 %v3575, %v339
        %v3582 = vmul.f32 %v3578, %v339
        %v3583 = vadd.f32 %v3579, 1e-12
        %v3584 = vadd.f32 %v3580, 1e-12
        %v3585 = vadd.f32 %v3581, 1e-12
        %v3586 = vadd.f32 %v3582, 1e-12
        %v3587 = vrsqrt.pop %v3583
        %v3588 = vmul.f32 %v3587, %v3583
        %v3589 = vmul.f32 %v3588, %v3587
        %v3590 = vmul.f32 0.5, %v3589
        %v3591 = vsub.f32 1.5, %v3590
        %v3592 = vmul.f32 %v3587, %v3591
        %vm3593 = vweird.f32 %v3583
        %vm3594 = vweird.f32 %v3587
        %vm3595 = vmor %vm3593, %vm3594
        %v3596 = vsel %vm3595, %v3587, %v3592
        %v3597 = vrsqrt.pop %v3584
        %v3598 = vmul.f32 %v3597, %v3584
        %v3599 = vmul.f32 %v3598, %v3597
        %v3600 = vmul.f32 0.5, %v3599
        %v3601 = vsub.f32 1.5, %v3600
        %v3602 = vmul.f32 %v3597, %v3601
        %vm3603 = vweird.f32 %v3584
        %vm3604 = vweird.f32 %v3597
        %vm3605 = vmor %vm3603, %vm3604
        %v3606 = vsel %vm3605, %v3597, %v3602
        %v3607 = vrsqrt.pop %v3585
        %v3608 = vmul.f32 %v3607, %v3585
        %v3609 = vmul.f32 %v3608, %v3607
        %v3610 = vmul.f32 0.5, %v3609
        %v3611 = vsub.f32 1.5, %v3610
        %v3612 = vmul.f32 %v3607, %v3611
        %vm3613 = vweird.f32 %v3585
        %vm3614 = vweird.f32 %v3607
        %vm3615 = vmor %vm3613, %vm3614
        %v3616 = vsel %vm3615, %v3607, %v3612
        %v3617 = vrsqrt.pop %v3586
        %v3618 = vmul.f32 %v3617, %v3586
        %v3619 = vmul.f32 %v3618, %v3617
        %v3620 = vmul.f32 0.5, %v3619
        %v3621 = vsub.f32 1.5, %v3620
        %v3622 = vmul.f32 %v3617, %v3621
        %vm3623 = vweird.f32 %v3586
        %vm3624 = vweird.f32 %v3617
        %vm3625 = vmor %vm3623, %vm3624
        %v3626 = vsel %vm3625, %v3617, %v3622
        %v3627 = vmul.f32 %v3559, %v3596
        %v3628 = vmul.f32 %v3560, %v3606
        %v3629 = vmul.f32 %v3561, %v3616
        %v3630 = vmul.f32 %v3562, %v3626
        %v3631 = vperm.slane %v2043, 6
        %v3632 = vmul.f32 %v3627, %v3631
        %v3633 = vmul.f32 %v3628, %v3631
        %v3634 = vmul.f32 %v3629, %v3631
        %v3635 = vmul.f32 %v3630, %v3631
        %v3636 = vperm.slane %v2043, 7
        %v3637 = vadd.f32 %v3632, %v3636
        %v3638 = vadd.f32 %v3633, %v3636
        %v3639 = vadd.f32 %v3634, %v3636
        %v3640 = vadd.f32 %v3635, %v3636
        %v3641 = vld [vmem:[%s5] sm:$0xff]
        %v3642 = vld [vmem:[%s5 + $0x10] sm:$0xff]
        %v3643 = vld [vmem:[%s5 + $0x20] sm:$0xff]
        %v3644 = vld [vmem:[%s5 + $0x30] sm:$0xff]
        %v3645 = vld [vmem:[%s5 + $0x40] sm:$0xff]
        %v3646 = vld [vmem:[%s5 + $0x50] sm:$0xff]
        %v3647 = vld [vmem:[%s5 + $0x60] sm:$0xff]
        %v3648 = vld [vmem:[%s5 + $0x70] sm:$0xff]
        %v3649 = vperm.slane %v315, 2
        %v3654 = vrot.slane %v3638, 7
        %vm3655 = vcmask 1041409
        %v3656 = vsel %vm3655, %v3654, %v3637
        %v3657 = vrot.slane %v3639, 6
        %vm3658 = vcmask 1042434
        %v3659 = vsel %vm3658, %v3657, %v3656
        %v3660 = vrot.slane %v3640, 5
        %vm3661 = vcmask 1043459
        %v3662 = vsel %vm3661, %v3660, %v3659
        %v3663 = vsel %vm320, %v3662, 0
        %3665 = vmatpush.msra.mxu0 0.0
        %3666 = vmatpush.msra.mxu0 0.0
        %3667 = vmatpush.msra.mxu0 0.0
        %3668 = vmatpush.msra.mxu0 0.0
        %3669 = vmatpush.msra.mxu0 0.0
        %3670 = vmatpush.msra.mxu0 0.0
        %3671 = vmatpush.msra.mxu0 0.0
        %3672 = vmatpush.msra.mxu0 0.0
        %3673 = vmatpush.msra.mxu0 %v3648
        %3674 = vmatpush.msra.mxu0 %v3647
        %3675 = vmatpush.msra.mxu0 %v3646
        %3676 = vmatpush.msra.mxu0 %v3645
        %3677 = vmatpush.msra.mxu0 %v3644
        %3678 = vmatpush.msra.mxu0 %v3643
        %3679 = vmatpush.msra.mxu0 %v3642
        %3680 = vmatpush.msra.mxu0 %v3641
        %3681 = vmatmul.f32.gmra.mxu0 %v3663
        %v3682 = vpop.f32.mrf.mxu0
        %v3683 = vadd.f32 %v3649, %v3682
        %3684 = vdwg.mxu0
        %v3685 = vtanh.pop %v3683
        %v3686 = vld [vmem:[%s5 + $0x8] sm:$0xff]
        %v3687 = vld [vmem:[%s5 + $0x18] sm:$0xff]
        %v3688 = vld [vmem:[%s5 + $0x28] sm:$0xff]
        %v3689 = vld [vmem:[%s5 + $0x38] sm:$0xff]
        %v3690 = vld [vmem:[%s5 + $0x48] sm:$0xff]
        %v3691 = vld [vmem:[%s5 + $0x58] sm:$0xff]
        %v3692 = vld [vmem:[%s5 + $0x68] sm:$0xff]
        %v3693 = vld [vmem:[%s5 + $0x78] sm:$0xff]
        %v3694 = vperm.slane %v315, 3
        %v3696 = vsel %vm320, %v3685, 0
        %3698 = vmatpush.msra.mxu0 0.0
        %3699 = vmatpush.msra.mxu0 0.0
        %3700 = vmatpush.msra.mxu0 0.0
        %3701 = vmatpush.msra.mxu0 0.0
        %3702 = vmatpush.msra.mxu0 0.0
        %3703 = vmatpush.msra.mxu0 0.0
        %3704 = vmatpush.msra.mxu0 0.0
        %3705 = vmatpush.msra.mxu0 0.0
        %3706 = vmatpush.msra.mxu0 %v3693
        %3707 = vmatpush.msra.mxu0 %v3692
        %3708 = vmatpush.msra.mxu0 %v3691
        %3709 = vmatpush.msra.mxu0 %v3690
        %3710 = vmatpush.msra.mxu0 %v3689
        %3711 = vmatpush.msra.mxu0 %v3688
        %3712 = vmatpush.msra.mxu0 %v3687
        %3713 = vmatpush.msra.mxu0 %v3686
        %3714 = vmatmul.f32.gmra.mxu0 %v3696
        %v3715 = vpop.f32.mrf.mxu0
        %v3716 = vadd.f32 %v3694, %v3715
        %3717 = vdwg.mxu0
        %3718 = vst [vmem:[%s303] sm:$0xf] %v3716
        %s3719 = sand.u32 %s187, 1
        %s3720 = scalar_lea.sflag [#allocation4], %s3719
        %s3721 = sand.u32 %s187, 1
        %s3722 = smul.addr %s3721, 4
        %s3723 = scalar_lea.vmem [#allocation5], %s3722
        // Predicated region
        $region53: #{tpu_custom_call.1} parent=47 // pred_check
          %p3724 = pneg %p197
        $region54: #{tpu_custom_call.1} parent=47 // pred_check_branch
          %3726 = sbr.rel (%p3724) target = $region56
        $region55: #{tpu_custom_call.1} parent=47 // pred_region
          %3728 = vsyncadd %s3720, 0
          %s3729 = smul.addr %s22, 4
          %s3730 = scalar_lea.hbm %s7, %s3729
          %s3732 = sshll.u32 %s3723, 4
          %s3733 = int_to_ptr.vmem [resolvable:$true] %s3732
          %s3734 = sshll.u32 %s3730, 4
          %s3735 = int_to_ptr.hbm [resolvable:$true] %s3734
          %3737 = dma.vmem_to_hbm [thread:$0]  %s3733, 64, %s3735, %s3720
        $region56: #{tpu_custom_call.1} parent=47 // pred_fallthru
          _
      $region48: #{tpu_custom_call.1} parent=5 // pred_fallthru
        _
      %p3738 = scmp.le.s32.totalorder 2, %s17
      // Predicated region
      $region57: #{tpu_custom_call.1} parent=5 // pred_check
        %p3739 = pneg %p3738
      $region58: #{tpu_custom_call.1} parent=5 // pred_check_branch
        %3741 = sbr.rel (%p3739) target = $region60
      $region59: #{tpu_custom_call.1} parent=5 // pred_region
        %s3742 = ssub.s32 %s17, 2
        // Predicated region
        $region61: #{tpu_custom_call.1} parent=59 // pred_check
          %p3743 = pneg %p203
        $region62: #{tpu_custom_call.1} parent=59 // pred_check_branch
          %3745 = sbr.rel (%p3743) target = $region64
        $region63: #{tpu_custom_call.1} parent=59 // pred_region
          %s3746 = sand.u32 %s188, 1
          %s3747 = scalar_lea.sflag [#allocation4], %s3746
          %s3748 = sand.u32 %s188, 1
          %s3749 = smul.addr %s3748, 4
          %s3750 = scalar_lea.vmem [#allocation5], %s3749
          %3752 = dma.done %s3747, 64
        $region64: #{tpu_custom_call.1} parent=59 // pred_fallthru
          _
      $region60: #{tpu_custom_call.1} parent=5 // pred_fallthru
        _
    $region6: #{tpu_custom_call.1} parent=1 // loop_footer
      %s21 = sadd.s32 1, %s17
    $region7: #{tpu_custom_call.1} parent=1 // loop_footer_branch
      %16 = sbr.rel target = $region3
    $region8: #{tpu_custom_call.1} parent=1 // loop_exit
      _
    %3753 = vsyncpa [#allocation3], 1
    %s3754 = scalar_lea.sflag [#allocation3], 1
    %3755 = vsyncpa %s3754, 1
    %3756 = vsyncpa [#allocation4], 1
    %s3757 = scalar_lea.sflag [#allocation4], 1
    %3758 = vsyncpa %s3757, 1

</llo_original>
